<compile_context>
chip_gen: v5e
topology: v5e:2x2
jax: 0.10.0
libtpu: 0.0.40
codegen_flags: <defaults>
</compile_context>

<pallas_src>
import jax
import jax.numpy as jnp
from jax.experimental import pallas as pl
from jax.experimental.pallas import tpu as pltpu

CIN, COUT = 3, 4
KSIZES = (1, 3, 5, 7)
K = 7                 # merged kernel size
PAD = K // 2          # "same" padding for the merged 7x7 kernel
T = K * K * CIN       # 147 taps, ordered t = (kh*K + kw)*CIN + ci
LANES = 128


def conv_taps_kernel(w_ref, b_ref, x_ref, o_ref):
    """Fused (conv1+conv2+conv3+conv4)/4 as one merged 7x7 conv.

    w_ref : SMEM [COUT*T] f32   merged, pre-scaled weights (co-major, tap minor)
    b_ref : SMEM [COUT]   f32   summed, pre-scaled bias
    x_ref : VMEM [T, RB, 128]   lane-dense, pre-shifted tap stack block
    o_ref : VMEM [COUT, RB, 128] lane-dense output block
    """
    n_taps, rb, lanes = x_ref.shape
    cout = o_ref.shape[0]

    # Per-output-channel accumulators, initialized with the pre-scaled bias.
    accs = [jnp.full((rb, lanes), b_ref[co], dtype=jnp.float32)
            for co in range(cout)]

    # Pure aligned-load + scalar-operand VPU FMA stream (no slices, no shifts).
    for t in range(n_taps):
        patch = x_ref[t]                                   # [RB, 128] slab
        for co in range(cout):
            accs[co] = accs[co] + w_ref[co * n_taps + t] * patch

    for co in range(cout):
        o_ref[co] = accs[co].astype(o_ref.dtype)


def _pick_row_block(r):
    """r is a multiple of 8.  Prefer >=2 grid steps (v7x: 2 TCs) with the
    largest block; single-TC chips also win from large blocks (~0.35us/step
    pipeline overhead amortization)."""
    for rb in (64, 32, 16, 8):
        if r % rb == 0 and r // rb >= 2:
            return rb
    for rb in (64, 32, 16, 8):
        if r % rb == 0:
            return rb
    return r


def model_forward(x_nchw, params):
    """params = (w1, w2, w3, w4, b1, b2, b3, b4); torch layouts (OIHW / [O])."""
    w1, w2, w3, w4, b1, b2, b3, b4 = params
    n, c, h, w = x_nchw.shape
    assert c == CIN

    # Merge the 4 branches into one 7x7 kernel (stride-1, "same" padding,
    # centered zero-embedding is exact) and fold the /4 into weights & bias.
    wm = jnp.zeros((COUT, CIN, K, K), jnp.float32)
    for w_t, k in zip((w1, w2, w3, w4), KSIZES):
        off = (K - k) // 2
        wm = wm.at[:, :, off:off + k, off:off + k].add(w_t.astype(jnp.float32))
    # Reorder to tap order t = (kh*K + kw)*CIN + ci, flatten co-major.
    w_flat = (jnp.transpose(wm, (0, 2, 3, 1)).reshape(COUT, T) * 0.25).reshape(-1)
    b_sum = ((b1 + b2 + b3 + b4) * 0.25).astype(jnp.float32)

    # Lane-dense pre-shifted tap stack:
    #   X[t, p] = x_pad[nn, ci, y+kh, x+kw],  p = (nn*H + y)*W + x.
    # All unaligned shifts happen here (wrapper layout plumbing), so the
    # kernel body is pure aligned VALU work.
    x_pad = jnp.pad(x_nchw.astype(jnp.float32),
                    ((0, 0), (0, 0), (PAD, PAD), (PAD, PAD)))
    taps = []
    for kh in range(K):
        for kw in range(K):
            for ci in range(CIN):
                taps.append(x_pad[:, ci, kh:kh + h, kw:kw + w].reshape(n * h * w))
    x_taps = jnp.stack(taps, axis=0)                       # [T, N*H*W]

    p = n * h * w
    p_pad = ((p + 8 * LANES - 1) // (8 * LANES)) * (8 * LANES)
    if p_pad != p:
        x_taps = jnp.pad(x_taps, ((0, 0), (0, p_pad - p)))
    r = p_pad // LANES                                     # multiple of 8
    x_taps = x_taps.reshape(T, r, LANES)

    rb = _pick_row_block(r)
    out = pl.pallas_call(
        conv_taps_kernel,
        out_shape=jax.ShapeDtypeStruct((COUT, r, LANES), jnp.float32),
        grid=(r // rb,),
        in_specs=[
            pl.BlockSpec(memory_space=pltpu.MemorySpace.SMEM),   # merged weights
            pl.BlockSpec(memory_space=pltpu.MemorySpace.SMEM),   # merged bias
            pl.BlockSpec((T, rb, LANES), lambda i: (0, i, 0)),   # tap stack
        ],
        out_specs=pl.BlockSpec((COUT, rb, LANES), lambda i: (0, i, 0)),
        compiler_params=pltpu.CompilerParams(
            dimension_semantics=("parallel",)),
    )(w_flat, b_sum, x_taps)

    out = out.reshape(COUT, p_pad)[:, :p].reshape(COUT, n, h, w)
    return jnp.transpose(out, (1, 0, 2, 3)).astype(x_nchw.dtype)


def ref_forward(x_nchw, params):
    """Pure-JAX reference (lax conv, f32-exact) for correctness checking."""
    w1, w2, w3, w4, b1, b2, b3, b4 = params

    def conv(wt, bt):
        y = jax.lax.conv_general_dilated(
            x_nchw.astype(jnp.float32), wt.astype(jnp.float32),
            window_strides=(1, 1), padding="SAME",
            dimension_numbers=("NCHW", "OIHW", "NCHW"),
            precision=jax.lax.Precision.HIGHEST)
        return y + bt.reshape(1, -1, 1, 1)

    t5 = conv(w1, b1) + conv(w2, b2) + conv(w3, b3) + conv(w4, b4)
    return (t5 / 4.0).astype(x_nchw.dtype)


def make_params(key):
    """Deterministic Conv2d-style init (uniform +/- 1/sqrt(fan_in))."""
    keys = jax.random.split(key, 2 * len(KSIZES))
    weights, biases = [], []
    for i, k in enumerate(KSIZES):
        bound = 1.0 / ((CIN * k * k) ** 0.5)
        weights.append(jax.random.uniform(keys[i], (COUT, CIN, k, k),
                                          jnp.float32, -bound, bound))
        biases.append(jax.random.uniform(keys[len(KSIZES) + i], (COUT,),
                                         jnp.float32, -bound, bound))
    return tuple(weights) + tuple(biases)


if __name__ == "__main__":
    key = jax.random.PRNGKey(0)
    k_x, k_p = jax.random.split(key)

    H = W = 16  # small spatial size consistent with the module (orig. 128)
    x = jax.random.normal(k_x, (1, CIN, H, W), jnp.float32)
    params = make_params(k_p)

    fwd = jax.jit(model_forward)
    out = jax.block_until_ready(fwd(x, params))
    ref = jax.block_until_ready(ref_forward(x, params))

    assert out.shape == (1, COUT, H, W), out.shape
    max_err = float(jnp.max(jnp.abs(out - ref)))
    assert jnp.allclose(out, ref, atol=1e-4, rtol=1e-4), max_err

    print("KERNEL_OK")
</pallas_src>

<mosaic_0001>
module attributes {stable_mosaic.version = 11 : i64} {
  func.func @conv_taps_kernel(%arg0: i32, %arg1: memref<588xf32, #tpu.memory_space<smem>>, %arg2: memref<4xf32, #tpu.memory_space<smem>>, %arg3: memref<147x8x128xf32, #tpu.memory_space<vmem>>, %arg4: memref<4x8x128xf32, #tpu.memory_space<vmem>>) attributes {dimension_semantics = [#tpu.dimension_semantics<parallel>], iteration_bounds = array<i64: 1>, scalar_prefetch = 0 : i64, scratch_operands = 0 : i64, tpu.core_type = #tpu.core_type<tc>, window_params = [{transform_indices = @transform_0, window_bounds = array<i64: 588>}, {transform_indices = @transform_1, window_bounds = array<i64: 4>}, {transform_indices = @transform_2, window_bounds = array<i64: 147, 8, 128>}, {transform_indices = @transform_3, window_bounds = array<i64: 4, 8, 128>}]} {
    %c0 = arith.constant 0 : index
    %0 = memref.load %arg2[%c0] : memref<4xf32, #tpu.memory_space<smem>>
    %1 = vector.broadcast %0 : f32 to vector<8x128xf32>
    %c1 = arith.constant 1 : index
    %2 = memref.load %arg2[%c1] : memref<4xf32, #tpu.memory_space<smem>>
    %3 = vector.broadcast %2 : f32 to vector<8x128xf32>
    %c2 = arith.constant 2 : index
    %4 = memref.load %arg2[%c2] : memref<4xf32, #tpu.memory_space<smem>>
    %5 = vector.broadcast %4 : f32 to vector<8x128xf32>
    %c3 = arith.constant 3 : index
    %6 = memref.load %arg2[%c3] : memref<4xf32, #tpu.memory_space<smem>>
    %7 = vector.broadcast %6 : f32 to vector<8x128xf32>
    %c0_0 = arith.constant 0 : index
    %c0_1 = arith.constant 0 : index
    %c0_2 = arith.constant 0 : index
    %8 = vector.load %arg3[%c0_0, %c0_1, %c0_2] : memref<147x8x128xf32, #tpu.memory_space<vmem>>, vector<1x8x128xf32>
    %9 = vector.shape_cast %8 : vector<1x8x128xf32> to vector<8x128xf32>
    %c0_3 = arith.constant 0 : index
    %10 = memref.load %arg1[%c0_3] : memref<588xf32, #tpu.memory_space<smem>>
    %11 = vector.broadcast %10 : f32 to vector<8x128xf32>
    %12 = arith.mulf %11, %9 : vector<8x128xf32>
    %13 = arith.addf %1, %12 : vector<8x128xf32>
    %c147 = arith.constant 147 : index
    %14 = memref.load %arg1[%c147] : memref<588xf32, #tpu.memory_space<smem>>
    %15 = vector.broadcast %14 : f32 to vector<8x128xf32>
    %16 = arith.mulf %15, %9 : vector<8x128xf32>
    %17 = arith.addf %3, %16 : vector<8x128xf32>
    %c294 = arith.constant 294 : index
    %18 = memref.load %arg1[%c294] : memref<588xf32, #tpu.memory_space<smem>>
    %19 = vector.broadcast %18 : f32 to vector<8x128xf32>
    %20 = arith.mulf %19, %9 : vector<8x128xf32>
    %21 = arith.addf %5, %20 : vector<8x128xf32>
    %c441 = arith.constant 441 : index
    %22 = memref.load %arg1[%c441] : memref<588xf32, #tpu.memory_space<smem>>
    %23 = vector.broadcast %22 : f32 to vector<8x128xf32>
    %24 = arith.mulf %23, %9 : vector<8x128xf32>
    %25 = arith.addf %7, %24 : vector<8x128xf32>
    %c1_4 = arith.constant 1 : index
    %c0_5 = arith.constant 0 : index
    %c0_6 = arith.constant 0 : index
    %26 = vector.load %arg3[%c1_4, %c0_5, %c0_6] : memref<147x8x128xf32, #tpu.memory_space<vmem>>, vector<1x8x128xf32>
    %27 = vector.shape_cast %26 : vector<1x8x128xf32> to vector<8x128xf32>
    %c1_7 = arith.constant 1 : index
    %28 = memref.load %arg1[%c1_7] : memref<588xf32, #tpu.memory_space<smem>>
    %29 = vector.broadcast %28 : f32 to vector<8x128xf32>
    %30 = arith.mulf %29, %27 : vector<8x128xf32>
    %31 = arith.addf %13, %30 : vector<8x128xf32>
    %c148 = arith.constant 148 : index
    %32 = memref.load %arg1[%c148] : memref<588xf32, #tpu.memory_space<smem>>
    %33 = vector.broadcast %32 : f32 to vector<8x128xf32>
    %34 = arith.mulf %33, %27 : vector<8x128xf32>
    %35 = arith.addf %17, %34 : vector<8x128xf32>
    %c295 = arith.constant 295 : index
    %36 = memref.load %arg1[%c295] : memref<588xf32, #tpu.memory_space<smem>>
    %37 = vector.broadcast %36 : f32 to vector<8x128xf32>
    %38 = arith.mulf %37, %27 : vector<8x128xf32>
    %39 = arith.addf %21, %38 : vector<8x128xf32>
    %c442 = arith.constant 442 : index
    %40 = memref.load %arg1[%c442] : memref<588xf32, #tpu.memory_space<smem>>
    %41 = vector.broadcast %40 : f32 to vector<8x128xf32>
    %42 = arith.mulf %41, %27 : vector<8x128xf32>
    %43 = arith.addf %25, %42 : vector<8x128xf32>
    %c2_8 = arith.constant 2 : index
    %c0_9 = arith.constant 0 : index
    %c0_10 = arith.constant 0 : index
    %44 = vector.load %arg3[%c2_8, %c0_9, %c0_10] : memref<147x8x128xf32, #tpu.memory_space<vmem>>, vector<1x8x128xf32>
    %45 = vector.shape_cast %44 : vector<1x8x128xf32> to vector<8x128xf32>
    %c2_11 = arith.constant 2 : index
    %46 = memref.load %arg1[%c2_11] : memref<588xf32, #tpu.memory_space<smem>>
    %47 = vector.broadcast %46 : f32 to vector<8x128xf32>
    %48 = arith.mulf %47, %45 : vector<8x128xf32>
    %49 = arith.addf %31, %48 : vector<8x128xf32>
    %c149 = arith.constant 149 : index
    %50 = memref.load %arg1[%c149] : memref<588xf32, #tpu.memory_space<smem>>
    %51 = vector.broadcast %50 : f32 to vector<8x128xf32>
    %52 = arith.mulf %51, %45 : vector<8x128xf32>
    %53 = arith.addf %35, %52 : vector<8x128xf32>
    %c296 = arith.constant 296 : index
    %54 = memref.load %arg1[%c296] : memref<588xf32, #tpu.memory_space<smem>>
    %55 = vector.broadcast %54 : f32 to vector<8x128xf32>
    %56 = arith.mulf %55, %45 : vector<8x128xf32>
    %57 = arith.addf %39, %56 : vector<8x128xf32>
    %c443 = arith.constant 443 : index
    %58 = memref.load %arg1[%c443] : memref<588xf32, #tpu.memory_space<smem>>
    %59 = vector.broadcast %58 : f32 to vector<8x128xf32>
    %60 = arith.mulf %59, %45 : vector<8x128xf32>
    %61 = arith.addf %43, %60 : vector<8x128xf32>
    %c3_12 = arith.constant 3 : index
    %c0_13 = arith.constant 0 : index
    %c0_14 = arith.constant 0 : index
    %62 = vector.load %arg3[%c3_12, %c0_13, %c0_14] : memref<147x8x128xf32, #tpu.memory_space<vmem>>, vector<1x8x128xf32>
    %63 = vector.shape_cast %62 : vector<1x8x128xf32> to vector<8x128xf32>
    %c3_15 = arith.constant 3 : index
    %64 = memref.load %arg1[%c3_15] : memref<588xf32, #tpu.memory_space<smem>>
    %65 = vector.broadcast %64 : f32 to vector<8x128xf32>
    %66 = arith.mulf %65, %63 : vector<8x128xf32>
    %67 = arith.addf %49, %66 : vector<8x128xf32>
    %c150 = arith.constant 150 : index
    %68 = memref.load %arg1[%c150] : memref<588xf32, #tpu.memory_space<smem>>
    %69 = vector.broadcast %68 : f32 to vector<8x128xf32>
    %70 = arith.mulf %69, %63 : vector<8x128xf32>
    %71 = arith.addf %53, %70 : vector<8x128xf32>
    %c297 = arith.constant 297 : index
    %72 = memref.load %arg1[%c297] : memref<588xf32, #tpu.memory_space<smem>>
    %73 = vector.broadcast %72 : f32 to vector<8x128xf32>
    %74 = arith.mulf %73, %63 : vector<8x128xf32>
    %75 = arith.addf %57, %74 : vector<8x128xf32>
    %c444 = arith.constant 444 : index
    %76 = memref.load %arg1[%c444] : memref<588xf32, #tpu.memory_space<smem>>
    %77 = vector.broadcast %76 : f32 to vector<8x128xf32>
    %78 = arith.mulf %77, %63 : vector<8x128xf32>
    %79 = arith.addf %61, %78 : vector<8x128xf32>
    %c4 = arith.constant 4 : index
    %c0_16 = arith.constant 0 : index
    %c0_17 = arith.constant 0 : index
    %80 = vector.load %arg3[%c4, %c0_16, %c0_17] : memref<147x8x128xf32, #tpu.memory_space<vmem>>, vector<1x8x128xf32>
    %81 = vector.shape_cast %80 : vector<1x8x128xf32> to vector<8x128xf32>
    %c4_18 = arith.constant 4 : index
    %82 = memref.load %arg1[%c4_18] : memref<588xf32, #tpu.memory_space<smem>>
    %83 = vector.broadcast %82 : f32 to vector<8x128xf32>
    %84 = arith.mulf %83, %81 : vector<8x128xf32>
    %85 = arith.addf %67, %84 : vector<8x128xf32>
    %c151 = arith.constant 151 : index
    %86 = memref.load %arg1[%c151] : memref<588xf32, #tpu.memory_space<smem>>
    %87 = vector.broadcast %86 : f32 to vector<8x128xf32>
    %88 = arith.mulf %87, %81 : vector<8x128xf32>
    %89 = arith.addf %71, %88 : vector<8x128xf32>
    %c298 = arith.constant 298 : index
    %90 = memref.load %arg1[%c298] : memref<588xf32, #tpu.memory_space<smem>>
    %91 = vector.broadcast %90 : f32 to vector<8x128xf32>
    %92 = arith.mulf %91, %81 : vector<8x128xf32>
    %93 = arith.addf %75, %92 : vector<8x128xf32>
    %c445 = arith.constant 445 : index
    %94 = memref.load %arg1[%c445] : memref<588xf32, #tpu.memory_space<smem>>
    %95 = vector.broadcast %94 : f32 to vector<8x128xf32>
    %96 = arith.mulf %95, %81 : vector<8x128xf32>
    %97 = arith.addf %79, %96 : vector<8x128xf32>
    %c5 = arith.constant 5 : index
    %c0_19 = arith.constant 0 : index
    %c0_20 = arith.constant 0 : index
    %98 = vector.load %arg3[%c5, %c0_19, %c0_20] : memref<147x8x128xf32, #tpu.memory_space<vmem>>, vector<1x8x128xf32>
    %99 = vector.shape_cast %98 : vector<1x8x128xf32> to vector<8x128xf32>
    %c5_21 = arith.constant 5 : index
    %100 = memref.load %arg1[%c5_21] : memref<588xf32, #tpu.memory_space<smem>>
    %101 = vector.broadcast %100 : f32 to vector<8x128xf32>
    %102 = arith.mulf %101, %99 : vector<8x128xf32>
    %103 = arith.addf %85, %102 : vector<8x128xf32>
    %c152 = arith.constant 152 : index
    %104 = memref.load %arg1[%c152] : memref<588xf32, #tpu.memory_space<smem>>
    %105 = vector.broadcast %104 : f32 to vector<8x128xf32>
    %106 = arith.mulf %105, %99 : vector<8x128xf32>
    %107 = arith.addf %89, %106 : vector<8x128xf32>
    %c299 = arith.constant 299 : index
    %108 = memref.load %arg1[%c299] : memref<588xf32, #tpu.memory_space<smem>>
    %109 = vector.broadcast %108 : f32 to vector<8x128xf32>
    %110 = arith.mulf %109, %99 : vector<8x128xf32>
    %111 = arith.addf %93, %110 : vector<8x128xf32>
    %c446 = arith.constant 446 : index
    %112 = memref.load %arg1[%c446] : memref<588xf32, #tpu.memory_space<smem>>
    %113 = vector.broadcast %112 : f32 to vector<8x128xf32>
    %114 = arith.mulf %113, %99 : vector<8x128xf32>
    %115 = arith.addf %97, %114 : vector<8x128xf32>
    %c6 = arith.constant 6 : index
    %c0_22 = arith.constant 0 : index
    %c0_23 = arith.constant 0 : index
    %116 = vector.load %arg3[%c6, %c0_22, %c0_23] : memref<147x8x128xf32, #tpu.memory_space<vmem>>, vector<1x8x128xf32>
    %117 = vector.shape_cast %116 : vector<1x8x128xf32> to vector<8x128xf32>
    %c6_24 = arith.constant 6 : index
    %118 = memref.load %arg1[%c6_24] : memref<588xf32, #tpu.memory_space<smem>>
    %119 = vector.broadcast %118 : f32 to vector<8x128xf32>
    %120 = arith.mulf %119, %117 : vector<8x128xf32>
    %121 = arith.addf %103, %120 : vector<8x128xf32>
    %c153 = arith.constant 153 : index
    %122 = memref.load %arg1[%c153] : memref<588xf32, #tpu.memory_space<smem>>
    %123 = vector.broadcast %122 : f32 to vector<8x128xf32>
    %124 = arith.mulf %123, %117 : vector<8x128xf32>
    %125 = arith.addf %107, %124 : vector<8x128xf32>
    %c300 = arith.constant 300 : index
    %126 = memref.load %arg1[%c300] : memref<588xf32, #tpu.memory_space<smem>>
    %127 = vector.broadcast %126 : f32 to vector<8x128xf32>
    %128 = arith.mulf %127, %117 : vector<8x128xf32>
    %129 = arith.addf %111, %128 : vector<8x128xf32>
    %c447 = arith.constant 447 : index
    %130 = memref.load %arg1[%c447] : memref<588xf32, #tpu.memory_space<smem>>
    %131 = vector.broadcast %130 : f32 to vector<8x128xf32>
    %132 = arith.mulf %131, %117 : vector<8x128xf32>
    %133 = arith.addf %115, %132 : vector<8x128xf32>
    %c7 = arith.constant 7 : index
    %c0_25 = arith.constant 0 : index
    %c0_26 = arith.constant 0 : index
    %134 = vector.load %arg3[%c7, %c0_25, %c0_26] : memref<147x8x128xf32, #tpu.memory_space<vmem>>, vector<1x8x128xf32>
    %135 = vector.shape_cast %134 : vector<1x8x128xf32> to vector<8x128xf32>
    %c7_27 = arith.constant 7 : index
    %136 = memref.load %arg1[%c7_27] : memref<588xf32, #tpu.memory_space<smem>>
    %137 = vector.broadcast %136 : f32 to vector<8x128xf32>
    %138 = arith.mulf %137, %135 : vector<8x128xf32>
    %139 = arith.addf %121, %138 : vector<8x128xf32>
    %c154 = arith.constant 154 : index
    %140 = memref.load %arg1[%c154] : memref<588xf32, #tpu.memory_space<smem>>
    %141 = vector.broadcast %140 : f32 to vector<8x128xf32>
    %142 = arith.mulf %141, %135 : vector<8x128xf32>
    %143 = arith.addf %125, %142 : vector<8x128xf32>
    %c301 = arith.constant 301 : index
    %144 = memref.load %arg1[%c301] : memref<588xf32, #tpu.memory_space<smem>>
    %145 = vector.broadcast %144 : f32 to vector<8x128xf32>
    %146 = arith.mulf %145, %135 : vector<8x128xf32>
    %147 = arith.addf %129, %146 : vector<8x128xf32>
    %c448 = arith.constant 448 : index
    %148 = memref.load %arg1[%c448] : memref<588xf32, #tpu.memory_space<smem>>
    %149 = vector.broadcast %148 : f32 to vector<8x128xf32>
    %150 = arith.mulf %149, %135 : vector<8x128xf32>
    %151 = arith.addf %133, %150 : vector<8x128xf32>
    %c8 = arith.constant 8 : index
    %c0_28 = arith.constant 0 : index
    %c0_29 = arith.constant 0 : index
    %152 = vector.load %arg3[%c8, %c0_28, %c0_29] : memref<147x8x128xf32, #tpu.memory_space<vmem>>, vector<1x8x128xf32>
    %153 = vector.shape_cast %152 : vector<1x8x128xf32> to vector<8x128xf32>
    %c8_30 = arith.constant 8 : index
    %154 = memref.load %arg1[%c8_30] : memref<588xf32, #tpu.memory_space<smem>>
    %155 = vector.broadcast %154 : f32 to vector<8x128xf32>
    %156 = arith.mulf %155, %153 : vector<8x128xf32>
    %157 = arith.addf %139, %156 : vector<8x128xf32>
    %c155 = arith.constant 155 : index
    %158 = memref.load %arg1[%c155] : memref<588xf32, #tpu.memory_space<smem>>
    %159 = vector.broadcast %158 : f32 to vector<8x128xf32>
    %160 = arith.mulf %159, %153 : vector<8x128xf32>
    %161 = arith.addf %143, %160 : vector<8x128xf32>
    %c302 = arith.constant 302 : index
    %162 = memref.load %arg1[%c302] : memref<588xf32, #tpu.memory_space<smem>>
    %163 = vector.broadcast %162 : f32 to vector<8x128xf32>
    %164 = arith.mulf %163, %153 : vector<8x128xf32>
    %165 = arith.addf %147, %164 : vector<8x128xf32>
    %c449 = arith.constant 449 : index
    %166 = memref.load %arg1[%c449] : memref<588xf32, #tpu.memory_space<smem>>
    %167 = vector.broadcast %166 : f32 to vector<8x128xf32>
    %168 = arith.mulf %167, %153 : vector<8x128xf32>
    %169 = arith.addf %151, %168 : vector<8x128xf32>
    %c9 = arith.constant 9 : index
    %c0_31 = arith.constant 0 : index
    %c0_32 = arith.constant 0 : index
    %170 = vector.load %arg3[%c9, %c0_31, %c0_32] : memref<147x8x128xf32, #tpu.memory_space<vmem>>, vector<1x8x128xf32>
    %171 = vector.shape_cast %170 : vector<1x8x128xf32> to vector<8x128xf32>
    %c9_33 = arith.constant 9 : index
    %172 = memref.load %arg1[%c9_33] : memref<588xf32, #tpu.memory_space<smem>>
    %173 = vector.broadcast %172 : f32 to vector<8x128xf32>
    %174 = arith.mulf %173, %171 : vector<8x128xf32>
    %175 = arith.addf %157, %174 : vector<8x128xf32>
    %c156 = arith.constant 156 : index
    %176 = memref.load %arg1[%c156] : memref<588xf32, #tpu.memory_space<smem>>
    %177 = vector.broadcast %176 : f32 to vector<8x128xf32>
    %178 = arith.mulf %177, %171 : vector<8x128xf32>
    %179 = arith.addf %161, %178 : vector<8x128xf32>
    %c303 = arith.constant 303 : index
    %180 = memref.load %arg1[%c303] : memref<588xf32, #tpu.memory_space<smem>>
    %181 = vector.broadcast %180 : f32 to vector<8x128xf32>
    %182 = arith.mulf %181, %171 : vector<8x128xf32>
    %183 = arith.addf %165, %182 : vector<8x128xf32>
    %c450 = arith.constant 450 : index
    %184 = memref.load %arg1[%c450] : memref<588xf32, #tpu.memory_space<smem>>
    %185 = vector.broadcast %184 : f32 to vector<8x128xf32>
    %186 = arith.mulf %185, %171 : vector<8x128xf32>
    %187 = arith.addf %169, %186 : vector<8x128xf32>
    %c10 = arith.constant 10 : index
    %c0_34 = arith.constant 0 : index
    %c0_35 = arith.constant 0 : index
    %188 = vector.load %arg3[%c10, %c0_34, %c0_35] : memref<147x8x128xf32, #tpu.memory_space<vmem>>, vector<1x8x128xf32>
    %189 = vector.shape_cast %188 : vector<1x8x128xf32> to vector<8x128xf32>
    %c10_36 = arith.constant 10 : index
    %190 = memref.load %arg1[%c10_36] : memref<588xf32, #tpu.memory_space<smem>>
    %191 = vector.broadcast %190 : f32 to vector<8x128xf32>
    %192 = arith.mulf %191, %189 : vector<8x128xf32>
    %193 = arith.addf %175, %192 : vector<8x128xf32>
    %c157 = arith.constant 157 : index
    %194 = memref.load %arg1[%c157] : memref<588xf32, #tpu.memory_space<smem>>
    %195 = vector.broadcast %194 : f32 to vector<8x128xf32>
    %196 = arith.mulf %195, %189 : vector<8x128xf32>
    %197 = arith.addf %179, %196 : vector<8x128xf32>
    %c304 = arith.constant 304 : index
    %198 = memref.load %arg1[%c304] : memref<588xf32, #tpu.memory_space<smem>>
    %199 = vector.broadcast %198 : f32 to vector<8x128xf32>
    %200 = arith.mulf %199, %189 : vector<8x128xf32>
    %201 = arith.addf %183, %200 : vector<8x128xf32>
    %c451 = arith.constant 451 : index
    %202 = memref.load %arg1[%c451] : memref<588xf32, #tpu.memory_space<smem>>
    %203 = vector.broadcast %202 : f32 to vector<8x128xf32>
    %204 = arith.mulf %203, %189 : vector<8x128xf32>
    %205 = arith.addf %187, %204 : vector<8x128xf32>
    %c11 = arith.constant 11 : index
    %c0_37 = arith.constant 0 : index
    %c0_38 = arith.constant 0 : index
    %206 = vector.load %arg3[%c11, %c0_37, %c0_38] : memref<147x8x128xf32, #tpu.memory_space<vmem>>, vector<1x8x128xf32>
    %207 = vector.shape_cast %206 : vector<1x8x128xf32> to vector<8x128xf32>
    %c11_39 = arith.constant 11 : index
    %208 = memref.load %arg1[%c11_39] : memref<588xf32, #tpu.memory_space<smem>>
    %209 = vector.broadcast %208 : f32 to vector<8x128xf32>
    %210 = arith.mulf %209, %207 : vector<8x128xf32>
    %211 = arith.addf %193, %210 : vector<8x128xf32>
    %c158 = arith.constant 158 : index
    %212 = memref.load %arg1[%c158] : memref<588xf32, #tpu.memory_space<smem>>
    %213 = vector.broadcast %212 : f32 to vector<8x128xf32>
    %214 = arith.mulf %213, %207 : vector<8x128xf32>
    %215 = arith.addf %197, %214 : vector<8x128xf32>
    %c305 = arith.constant 305 : index
    %216 = memref.load %arg1[%c305] : memref<588xf32, #tpu.memory_space<smem>>
    %217 = vector.broadcast %216 : f32 to vector<8x128xf32>
    %218 = arith.mulf %217, %207 : vector<8x128xf32>
    %219 = arith.addf %201, %218 : vector<8x128xf32>
    %c452 = arith.constant 452 : index
    %220 = memref.load %arg1[%c452] : memref<588xf32, #tpu.memory_space<smem>>
    %221 = vector.broadcast %220 : f32 to vector<8x128xf32>
    %222 = arith.mulf %221, %207 : vector<8x128xf32>
    %223 = arith.addf %205, %222 : vector<8x128xf32>
    %c12 = arith.constant 12 : index
    %c0_40 = arith.constant 0 : index
    %c0_41 = arith.constant 0 : index
    %224 = vector.load %arg3[%c12, %c0_40, %c0_41] : memref<147x8x128xf32, #tpu.memory_space<vmem>>, vector<1x8x128xf32>
    %225 = vector.shape_cast %224 : vector<1x8x128xf32> to vector<8x128xf32>
    %c12_42 = arith.constant 12 : index
    %226 = memref.load %arg1[%c12_42] : memref<588xf32, #tpu.memory_space<smem>>
    %227 = vector.broadcast %226 : f32 to vector<8x128xf32>
    %228 = arith.mulf %227, %225 : vector<8x128xf32>
    %229 = arith.addf %211, %228 : vector<8x128xf32>
    %c159 = arith.constant 159 : index
    %230 = memref.load %arg1[%c159] : memref<588xf32, #tpu.memory_space<smem>>
    %231 = vector.broadcast %230 : f32 to vector<8x128xf32>
    %232 = arith.mulf %231, %225 : vector<8x128xf32>
    %233 = arith.addf %215, %232 : vector<8x128xf32>
    %c306 = arith.constant 306 : index
    %234 = memref.load %arg1[%c306] : memref<588xf32, #tpu.memory_space<smem>>
    %235 = vector.broadcast %234 : f32 to vector<8x128xf32>
    %236 = arith.mulf %235, %225 : vector<8x128xf32>
    %237 = arith.addf %219, %236 : vector<8x128xf32>
    %c453 = arith.constant 453 : index
    %238 = memref.load %arg1[%c453] : memref<588xf32, #tpu.memory_space<smem>>
    %239 = vector.broadcast %238 : f32 to vector<8x128xf32>
    %240 = arith.mulf %239, %225 : vector<8x128xf32>
    %241 = arith.addf %223, %240 : vector<8x128xf32>
    %c13 = arith.constant 13 : index
    %c0_43 = arith.constant 0 : index
    %c0_44 = arith.constant 0 : index
    %242 = vector.load %arg3[%c13, %c0_43, %c0_44] : memref<147x8x128xf32, #tpu.memory_space<vmem>>, vector<1x8x128xf32>
    %243 = vector.shape_cast %242 : vector<1x8x128xf32> to vector<8x128xf32>
    %c13_45 = arith.constant 13 : index
    %244 = memref.load %arg1[%c13_45] : memref<588xf32, #tpu.memory_space<smem>>
    %245 = vector.broadcast %244 : f32 to vector<8x128xf32>
    %246 = arith.mulf %245, %243 : vector<8x128xf32>
    %247 = arith.addf %229, %246 : vector<8x128xf32>
    %c160 = arith.constant 160 : index
    %248 = memref.load %arg1[%c160] : memref<588xf32, #tpu.memory_space<smem>>
    %249 = vector.broadcast %248 : f32 to vector<8x128xf32>
    %250 = arith.mulf %249, %243 : vector<8x128xf32>
    %251 = arith.addf %233, %250 : vector<8x128xf32>
    %c307 = arith.constant 307 : index
    %252 = memref.load %arg1[%c307] : memref<588xf32, #tpu.memory_space<smem>>
    %253 = vector.broadcast %252 : f32 to vector<8x128xf32>
    %254 = arith.mulf %253, %243 : vector<8x128xf32>
    %255 = arith.addf %237, %254 : vector<8x128xf32>
    %c454 = arith.constant 454 : index
    %256 = memref.load %arg1[%c454] : memref<588xf32, #tpu.memory_space<smem>>
    %257 = vector.broadcast %256 : f32 to vector<8x128xf32>
    %258 = arith.mulf %257, %243 : vector<8x128xf32>
    %259 = arith.addf %241, %258 : vector<8x128xf32>
    %c14 = arith.constant 14 : index
    %c0_46 = arith.constant 0 : index
    %c0_47 = arith.constant 0 : index
    %260 = vector.load %arg3[%c14, %c0_46, %c0_47] : memref<147x8x128xf32, #tpu.memory_space<vmem>>, vector<1x8x128xf32>
    %261 = vector.shape_cast %260 : vector<1x8x128xf32> to vector<8x128xf32>
    %c14_48 = arith.constant 14 : index
    %262 = memref.load %arg1[%c14_48] : memref<588xf32, #tpu.memory_space<smem>>
    %263 = vector.broadcast %262 : f32 to vector<8x128xf32>
    %264 = arith.mulf %263, %261 : vector<8x128xf32>
    %265 = arith.addf %247, %264 : vector<8x128xf32>
    %c161 = arith.constant 161 : index
    %266 = memref.load %arg1[%c161] : memref<588xf32, #tpu.memory_space<smem>>
    %267 = vector.broadcast %266 : f32 to vector<8x128xf32>
    %268 = arith.mulf %267, %261 : vector<8x128xf32>
    %269 = arith.addf %251, %268 : vector<8x128xf32>
    %c308 = arith.constant 308 : index
    %270 = memref.load %arg1[%c308] : memref<588xf32, #tpu.memory_space<smem>>
    %271 = vector.broadcast %270 : f32 to vector<8x128xf32>
    %272 = arith.mulf %271, %261 : vector<8x128xf32>
    %273 = arith.addf %255, %272 : vector<8x128xf32>
    %c455 = arith.constant 455 : index
    %274 = memref.load %arg1[%c455] : memref<588xf32, #tpu.memory_space<smem>>
    %275 = vector.broadcast %274 : f32 to vector<8x128xf32>
    %276 = arith.mulf %275, %261 : vector<8x128xf32>
    %277 = arith.addf %259, %276 : vector<8x128xf32>
    %c15 = arith.constant 15 : index
    %c0_49 = arith.constant 0 : index
    %c0_50 = arith.constant 0 : index
    %278 = vector.load %arg3[%c15, %c0_49, %c0_50] : memref<147x8x128xf32, #tpu.memory_space<vmem>>, vector<1x8x128xf32>
    %279 = vector.shape_cast %278 : vector<1x8x128xf32> to vector<8x128xf32>
    %c15_51 = arith.constant 15 : index
    %280 = memref.load %arg1[%c15_51] : memref<588xf32, #tpu.memory_space<smem>>
    %281 = vector.broadcast %280 : f32 to vector<8x128xf32>
    %282 = arith.mulf %281, %279 : vector<8x128xf32>
    %283 = arith.addf %265, %282 : vector<8x128xf32>
    %c162 = arith.constant 162 : index
    %284 = memref.load %arg1[%c162] : memref<588xf32, #tpu.memory_space<smem>>
    %285 = vector.broadcast %284 : f32 to vector<8x128xf32>
    %286 = arith.mulf %285, %279 : vector<8x128xf32>
    %287 = arith.addf %269, %286 : vector<8x128xf32>
    %c309 = arith.constant 309 : index
    %288 = memref.load %arg1[%c309] : memref<588xf32, #tpu.memory_space<smem>>
    %289 = vector.broadcast %288 : f32 to vector<8x128xf32>
    %290 = arith.mulf %289, %279 : vector<8x128xf32>
    %291 = arith.addf %273, %290 : vector<8x128xf32>
    %c456 = arith.constant 456 : index
    %292 = memref.load %arg1[%c456] : memref<588xf32, #tpu.memory_space<smem>>
    %293 = vector.broadcast %292 : f32 to vector<8x128xf32>
    %294 = arith.mulf %293, %279 : vector<8x128xf32>
    %295 = arith.addf %277, %294 : vector<8x128xf32>
    %c16 = arith.constant 16 : index
    %c0_52 = arith.constant 0 : index
    %c0_53 = arith.constant 0 : index
    %296 = vector.load %arg3[%c16, %c0_52, %c0_53] : memref<147x8x128xf32, #tpu.memory_space<vmem>>, vector<1x8x128xf32>
    %297 = vector.shape_cast %296 : vector<1x8x128xf32> to vector<8x128xf32>
    %c16_54 = arith.constant 16 : index
    %298 = memref.load %arg1[%c16_54] : memref<588xf32, #tpu.memory_space<smem>>
    %299 = vector.broadcast %298 : f32 to vector<8x128xf32>
    %300 = arith.mulf %299, %297 : vector<8x128xf32>
    %301 = arith.addf %283, %300 : vector<8x128xf32>
    %c163 = arith.constant 163 : index
    %302 = memref.load %arg1[%c163] : memref<588xf32, #tpu.memory_space<smem>>
    %303 = vector.broadcast %302 : f32 to vector<8x128xf32>
    %304 = arith.mulf %303, %297 : vector<8x128xf32>
    %305 = arith.addf %287, %304 : vector<8x128xf32>
    %c310 = arith.constant 310 : index
    %306 = memref.load %arg1[%c310] : memref<588xf32, #tpu.memory_space<smem>>
    %307 = vector.broadcast %306 : f32 to vector<8x128xf32>
    %308 = arith.mulf %307, %297 : vector<8x128xf32>
    %309 = arith.addf %291, %308 : vector<8x128xf32>
    %c457 = arith.constant 457 : index
    %310 = memref.load %arg1[%c457] : memref<588xf32, #tpu.memory_space<smem>>
    %311 = vector.broadcast %310 : f32 to vector<8x128xf32>
    %312 = arith.mulf %311, %297 : vector<8x128xf32>
    %313 = arith.addf %295, %312 : vector<8x128xf32>
    %c17 = arith.constant 17 : index
    %c0_55 = arith.constant 0 : index
    %c0_56 = arith.constant 0 : index
    %314 = vector.load %arg3[%c17, %c0_55, %c0_56] : memref<147x8x128xf32, #tpu.memory_space<vmem>>, vector<1x8x128xf32>
    %315 = vector.shape_cast %314 : vector<1x8x128xf32> to vector<8x128xf32>
    %c17_57 = arith.constant 17 : index
    %316 = memref.load %arg1[%c17_57] : memref<588xf32, #tpu.memory_space<smem>>
    %317 = vector.broadcast %316 : f32 to vector<8x128xf32>
    %318 = arith.mulf %317, %315 : vector<8x128xf32>
    %319 = arith.addf %301, %318 : vector<8x128xf32>
    %c164 = arith.constant 164 : index
    %320 = memref.load %arg1[%c164] : memref<588xf32, #tpu.memory_space<smem>>
    %321 = vector.broadcast %320 : f32 to vector<8x128xf32>
    %322 = arith.mulf %321, %315 : vector<8x128xf32>
    %323 = arith.addf %305, %322 : vector<8x128xf32>
    %c311 = arith.constant 311 : index
    %324 = memref.load %arg1[%c311] : memref<588xf32, #tpu.memory_space<smem>>
    %325 = vector.broadcast %324 : f32 to vector<8x128xf32>
    %326 = arith.mulf %325, %315 : vector<8x128xf32>
    %327 = arith.addf %309, %326 : vector<8x128xf32>
    %c458 = arith.constant 458 : index
    %328 = memref.load %arg1[%c458] : memref<588xf32, #tpu.memory_space<smem>>
    %329 = vector.broadcast %328 : f32 to vector<8x128xf32>
    %330 = arith.mulf %329, %315 : vector<8x128xf32>
    %331 = arith.addf %313, %330 : vector<8x128xf32>
    %c18 = arith.constant 18 : index
    %c0_58 = arith.constant 0 : index
    %c0_59 = arith.constant 0 : index
    %332 = vector.load %arg3[%c18, %c0_58, %c0_59] : memref<147x8x128xf32, #tpu.memory_space<vmem>>, vector<1x8x128xf32>
    %333 = vector.shape_cast %332 : vector<1x8x128xf32> to vector<8x128xf32>
    %c18_60 = arith.constant 18 : index
    %334 = memref.load %arg1[%c18_60] : memref<588xf32, #tpu.memory_space<smem>>
    %335 = vector.broadcast %334 : f32 to vector<8x128xf32>
    %336 = arith.mulf %335, %333 : vector<8x128xf32>
    %337 = arith.addf %319, %336 : vector<8x128xf32>
    %c165 = arith.constant 165 : index
    %338 = memref.load %arg1[%c165] : memref<588xf32, #tpu.memory_space<smem>>
    %339 = vector.broadcast %338 : f32 to vector<8x128xf32>
    %340 = arith.mulf %339, %333 : vector<8x128xf32>
    %341 = arith.addf %323, %340 : vector<8x128xf32>
    %c312 = arith.constant 312 : index
    %342 = memref.load %arg1[%c312] : memref<588xf32, #tpu.memory_space<smem>>
    %343 = vector.broadcast %342 : f32 to vector<8x128xf32>
    %344 = arith.mulf %343, %333 : vector<8x128xf32>
    %345 = arith.addf %327, %344 : vector<8x128xf32>
    %c459 = arith.constant 459 : index
    %346 = memref.load %arg1[%c459] : memref<588xf32, #tpu.memory_space<smem>>
    %347 = vector.broadcast %346 : f32 to vector<8x128xf32>
    %348 = arith.mulf %347, %333 : vector<8x128xf32>
    %349 = arith.addf %331, %348 : vector<8x128xf32>
    %c19 = arith.constant 19 : index
    %c0_61 = arith.constant 0 : index
    %c0_62 = arith.constant 0 : index
    %350 = vector.load %arg3[%c19, %c0_61, %c0_62] : memref<147x8x128xf32, #tpu.memory_space<vmem>>, vector<1x8x128xf32>
    %351 = vector.shape_cast %350 : vector<1x8x128xf32> to vector<8x128xf32>
    %c19_63 = arith.constant 19 : index
    %352 = memref.load %arg1[%c19_63] : memref<588xf32, #tpu.memory_space<smem>>
    %353 = vector.broadcast %352 : f32 to vector<8x128xf32>
    %354 = arith.mulf %353, %351 : vector<8x128xf32>
    %355 = arith.addf %337, %354 : vector<8x128xf32>
    %c166 = arith.constant 166 : index
    %356 = memref.load %arg1[%c166] : memref<588xf32, #tpu.memory_space<smem>>
    %357 = vector.broadcast %356 : f32 to vector<8x128xf32>
    %358 = arith.mulf %357, %351 : vector<8x128xf32>
    %359 = arith.addf %341, %358 : vector<8x128xf32>
    %c313 = arith.constant 313 : index
    %360 = memref.load %arg1[%c313] : memref<588xf32, #tpu.memory_space<smem>>
    %361 = vector.broadcast %360 : f32 to vector<8x128xf32>
    %362 = arith.mulf %361, %351 : vector<8x128xf32>
    %363 = arith.addf %345, %362 : vector<8x128xf32>
    %c460 = arith.constant 460 : index
    %364 = memref.load %arg1[%c460] : memref<588xf32, #tpu.memory_space<smem>>
    %365 = vector.broadcast %364 : f32 to vector<8x128xf32>
    %366 = arith.mulf %365, %351 : vector<8x128xf32>
    %367 = arith.addf %349, %366 : vector<8x128xf32>
    %c20 = arith.constant 20 : index
    %c0_64 = arith.constant 0 : index
    %c0_65 = arith.constant 0 : index
    %368 = vector.load %arg3[%c20, %c0_64, %c0_65] : memref<147x8x128xf32, #tpu.memory_space<vmem>>, vector<1x8x128xf32>
    %369 = vector.shape_cast %368 : vector<1x8x128xf32> to vector<8x128xf32>
    %c20_66 = arith.constant 20 : index
    %370 = memref.load %arg1[%c20_66] : memref<588xf32, #tpu.memory_space<smem>>
    %371 = vector.broadcast %370 : f32 to vector<8x128xf32>
    %372 = arith.mulf %371, %369 : vector<8x128xf32>
    %373 = arith.addf %355, %372 : vector<8x128xf32>
    %c167 = arith.constant 167 : index
    %374 = memref.load %arg1[%c167] : memref<588xf32, #tpu.memory_space<smem>>
    %375 = vector.broadcast %374 : f32 to vector<8x128xf32>
    %376 = arith.mulf %375, %369 : vector<8x128xf32>
    %377 = arith.addf %359, %376 : vector<8x128xf32>
    %c314 = arith.constant 314 : index
    %378 = memref.load %arg1[%c314] : memref<588xf32, #tpu.memory_space<smem>>
    %379 = vector.broadcast %378 : f32 to vector<8x128xf32>
    %380 = arith.mulf %379, %369 : vector<8x128xf32>
    %381 = arith.addf %363, %380 : vector<8x128xf32>
    %c461 = arith.constant 461 : index
    %382 = memref.load %arg1[%c461] : memref<588xf32, #tpu.memory_space<smem>>
    %383 = vector.broadcast %382 : f32 to vector<8x128xf32>
    %384 = arith.mulf %383, %369 : vector<8x128xf32>
    %385 = arith.addf %367, %384 : vector<8x128xf32>
    %c21 = arith.constant 21 : index
    %c0_67 = arith.constant 0 : index
    %c0_68 = arith.constant 0 : index
    %386 = vector.load %arg3[%c21, %c0_67, %c0_68] : memref<147x8x128xf32, #tpu.memory_space<vmem>>, vector<1x8x128xf32>
    %387 = vector.shape_cast %386 : vector<1x8x128xf32> to vector<8x128xf32>
    %c21_69 = arith.constant 21 : index
    %388 = memref.load %arg1[%c21_69] : memref<588xf32, #tpu.memory_space<smem>>
    %389 = vector.broadcast %388 : f32 to vector<8x128xf32>
    %390 = arith.mulf %389, %387 : vector<8x128xf32>
    %391 = arith.addf %373, %390 : vector<8x128xf32>
    %c168 = arith.constant 168 : index
    %392 = memref.load %arg1[%c168] : memref<588xf32, #tpu.memory_space<smem>>
    %393 = vector.broadcast %392 : f32 to vector<8x128xf32>
    %394 = arith.mulf %393, %387 : vector<8x128xf32>
    %395 = arith.addf %377, %394 : vector<8x128xf32>
    %c315 = arith.constant 315 : index
    %396 = memref.load %arg1[%c315] : memref<588xf32, #tpu.memory_space<smem>>
    %397 = vector.broadcast %396 : f32 to vector<8x128xf32>
    %398 = arith.mulf %397, %387 : vector<8x128xf32>
    %399 = arith.addf %381, %398 : vector<8x128xf32>
    %c462 = arith.constant 462 : index
    %400 = memref.load %arg1[%c462] : memref<588xf32, #tpu.memory_space<smem>>
    %401 = vector.broadcast %400 : f32 to vector<8x128xf32>
    %402 = arith.mulf %401, %387 : vector<8x128xf32>
    %403 = arith.addf %385, %402 : vector<8x128xf32>
    %c22 = arith.constant 22 : index
    %c0_70 = arith.constant 0 : index
    %c0_71 = arith.constant 0 : index
    %404 = vector.load %arg3[%c22, %c0_70, %c0_71] : memref<147x8x128xf32, #tpu.memory_space<vmem>>, vector<1x8x128xf32>
    %405 = vector.shape_cast %404 : vector<1x8x128xf32> to vector<8x128xf32>
    %c22_72 = arith.constant 22 : index
    %406 = memref.load %arg1[%c22_72] : memref<588xf32, #tpu.memory_space<smem>>
    %407 = vector.broadcast %406 : f32 to vector<8x128xf32>
    %408 = arith.mulf %407, %405 : vector<8x128xf32>
    %409 = arith.addf %391, %408 : vector<8x128xf32>
    %c169 = arith.constant 169 : index
    %410 = memref.load %arg1[%c169] : memref<588xf32, #tpu.memory_space<smem>>
    %411 = vector.broadcast %410 : f32 to vector<8x128xf32>
    %412 = arith.mulf %411, %405 : vector<8x128xf32>
    %413 = arith.addf %395, %412 : vector<8x128xf32>
    %c316 = arith.constant 316 : index
    %414 = memref.load %arg1[%c316] : memref<588xf32, #tpu.memory_space<smem>>
    %415 = vector.broadcast %414 : f32 to vector<8x128xf32>
    %416 = arith.mulf %415, %405 : vector<8x128xf32>
    %417 = arith.addf %399, %416 : vector<8x128xf32>
    %c463 = arith.constant 463 : index
    %418 = memref.load %arg1[%c463] : memref<588xf32, #tpu.memory_space<smem>>
    %419 = vector.broadcast %418 : f32 to vector<8x128xf32>
    %420 = arith.mulf %419, %405 : vector<8x128xf32>
    %421 = arith.addf %403, %420 : vector<8x128xf32>
    %c23 = arith.constant 23 : index
    %c0_73 = arith.constant 0 : index
    %c0_74 = arith.constant 0 : index
    %422 = vector.load %arg3[%c23, %c0_73, %c0_74] : memref<147x8x128xf32, #tpu.memory_space<vmem>>, vector<1x8x128xf32>
    %423 = vector.shape_cast %422 : vector<1x8x128xf32> to vector<8x128xf32>
    %c23_75 = arith.constant 23 : index
    %424 = memref.load %arg1[%c23_75] : memref<588xf32, #tpu.memory_space<smem>>
    %425 = vector.broadcast %424 : f32 to vector<8x128xf32>
    %426 = arith.mulf %425, %423 : vector<8x128xf32>
    %427 = arith.addf %409, %426 : vector<8x128xf32>
    %c170 = arith.constant 170 : index
    %428 = memref.load %arg1[%c170] : memref<588xf32, #tpu.memory_space<smem>>
    %429 = vector.broadcast %428 : f32 to vector<8x128xf32>
    %430 = arith.mulf %429, %423 : vector<8x128xf32>
    %431 = arith.addf %413, %430 : vector<8x128xf32>
    %c317 = arith.constant 317 : index
    %432 = memref.load %arg1[%c317] : memref<588xf32, #tpu.memory_space<smem>>
    %433 = vector.broadcast %432 : f32 to vector<8x128xf32>
    %434 = arith.mulf %433, %423 : vector<8x128xf32>
    %435 = arith.addf %417, %434 : vector<8x128xf32>
    %c464 = arith.constant 464 : index
    %436 = memref.load %arg1[%c464] : memref<588xf32, #tpu.memory_space<smem>>
    %437 = vector.broadcast %436 : f32 to vector<8x128xf32>
    %438 = arith.mulf %437, %423 : vector<8x128xf32>
    %439 = arith.addf %421, %438 : vector<8x128xf32>
    %c24 = arith.constant 24 : index
    %c0_76 = arith.constant 0 : index
    %c0_77 = arith.constant 0 : index
    %440 = vector.load %arg3[%c24, %c0_76, %c0_77] : memref<147x8x128xf32, #tpu.memory_space<vmem>>, vector<1x8x128xf32>
    %441 = vector.shape_cast %440 : vector<1x8x128xf32> to vector<8x128xf32>
    %c24_78 = arith.constant 24 : index
    %442 = memref.load %arg1[%c24_78] : memref<588xf32, #tpu.memory_space<smem>>
    %443 = vector.broadcast %442 : f32 to vector<8x128xf32>
    %444 = arith.mulf %443, %441 : vector<8x128xf32>
    %445 = arith.addf %427, %444 : vector<8x128xf32>
    %c171 = arith.constant 171 : index
    %446 = memref.load %arg1[%c171] : memref<588xf32, #tpu.memory_space<smem>>
    %447 = vector.broadcast %446 : f32 to vector<8x128xf32>
    %448 = arith.mulf %447, %441 : vector<8x128xf32>
    %449 = arith.addf %431, %448 : vector<8x128xf32>
    %c318 = arith.constant 318 : index
    %450 = memref.load %arg1[%c318] : memref<588xf32, #tpu.memory_space<smem>>
    %451 = vector.broadcast %450 : f32 to vector<8x128xf32>
    %452 = arith.mulf %451, %441 : vector<8x128xf32>
    %453 = arith.addf %435, %452 : vector<8x128xf32>
    %c465 = arith.constant 465 : index
    %454 = memref.load %arg1[%c465] : memref<588xf32, #tpu.memory_space<smem>>
    %455 = vector.broadcast %454 : f32 to vector<8x128xf32>
    %456 = arith.mulf %455, %441 : vector<8x128xf32>
    %457 = arith.addf %439, %456 : vector<8x128xf32>
    %c25 = arith.constant 25 : index
    %c0_79 = arith.constant 0 : index
    %c0_80 = arith.constant 0 : index
    %458 = vector.load %arg3[%c25, %c0_79, %c0_80] : memref<147x8x128xf32, #tpu.memory_space<vmem>>, vector<1x8x128xf32>
    %459 = vector.shape_cast %458 : vector<1x8x128xf32> to vector<8x128xf32>
    %c25_81 = arith.constant 25 : index
    %460 = memref.load %arg1[%c25_81] : memref<588xf32, #tpu.memory_space<smem>>
    %461 = vector.broadcast %460 : f32 to vector<8x128xf32>
    %462 = arith.mulf %461, %459 : vector<8x128xf32>
    %463 = arith.addf %445, %462 : vector<8x128xf32>
    %c172 = arith.constant 172 : index
    %464 = memref.load %arg1[%c172] : memref<588xf32, #tpu.memory_space<smem>>
    %465 = vector.broadcast %464 : f32 to vector<8x128xf32>
    %466 = arith.mulf %465, %459 : vector<8x128xf32>
    %467 = arith.addf %449, %466 : vector<8x128xf32>
    %c319 = arith.constant 319 : index
    %468 = memref.load %arg1[%c319] : memref<588xf32, #tpu.memory_space<smem>>
    %469 = vector.broadcast %468 : f32 to vector<8x128xf32>
    %470 = arith.mulf %469, %459 : vector<8x128xf32>
    %471 = arith.addf %453, %470 : vector<8x128xf32>
    %c466 = arith.constant 466 : index
    %472 = memref.load %arg1[%c466] : memref<588xf32, #tpu.memory_space<smem>>
    %473 = vector.broadcast %472 : f32 to vector<8x128xf32>
    %474 = arith.mulf %473, %459 : vector<8x128xf32>
    %475 = arith.addf %457, %474 : vector<8x128xf32>
    %c26 = arith.constant 26 : index
    %c0_82 = arith.constant 0 : index
    %c0_83 = arith.constant 0 : index
    %476 = vector.load %arg3[%c26, %c0_82, %c0_83] : memref<147x8x128xf32, #tpu.memory_space<vmem>>, vector<1x8x128xf32>
    %477 = vector.shape_cast %476 : vector<1x8x128xf32> to vector<8x128xf32>
    %c26_84 = arith.constant 26 : index
    %478 = memref.load %arg1[%c26_84] : memref<588xf32, #tpu.memory_space<smem>>
    %479 = vector.broadcast %478 : f32 to vector<8x128xf32>
    %480 = arith.mulf %479, %477 : vector<8x128xf32>
    %481 = arith.addf %463, %480 : vector<8x128xf32>
    %c173 = arith.constant 173 : index
    %482 = memref.load %arg1[%c173] : memref<588xf32, #tpu.memory_space<smem>>
    %483 = vector.broadcast %482 : f32 to vector<8x128xf32>
    %484 = arith.mulf %483, %477 : vector<8x128xf32>
    %485 = arith.addf %467, %484 : vector<8x128xf32>
    %c320 = arith.constant 320 : index
    %486 = memref.load %arg1[%c320] : memref<588xf32, #tpu.memory_space<smem>>
    %487 = vector.broadcast %486 : f32 to vector<8x128xf32>
    %488 = arith.mulf %487, %477 : vector<8x128xf32>
    %489 = arith.addf %471, %488 : vector<8x128xf32>
    %c467 = arith.constant 467 : index
    %490 = memref.load %arg1[%c467] : memref<588xf32, #tpu.memory_space<smem>>
    %491 = vector.broadcast %490 : f32 to vector<8x128xf32>
    %492 = arith.mulf %491, %477 : vector<8x128xf32>
    %493 = arith.addf %475, %492 : vector<8x128xf32>
    %c27 = arith.constant 27 : index
    %c0_85 = arith.constant 0 : index
    %c0_86 = arith.constant 0 : index
    %494 = vector.load %arg3[%c27, %c0_85, %c0_86] : memref<147x8x128xf32, #tpu.memory_space<vmem>>, vector<1x8x128xf32>
    %495 = vector.shape_cast %494 : vector<1x8x128xf32> to vector<8x128xf32>
    %c27_87 = arith.constant 27 : index
    %496 = memref.load %arg1[%c27_87] : memref<588xf32, #tpu.memory_space<smem>>
    %497 = vector.broadcast %496 : f32 to vector<8x128xf32>
    %498 = arith.mulf %497, %495 : vector<8x128xf32>
    %499 = arith.addf %481, %498 : vector<8x128xf32>
    %c174 = arith.constant 174 : index
    %500 = memref.load %arg1[%c174] : memref<588xf32, #tpu.memory_space<smem>>
    %501 = vector.broadcast %500 : f32 to vector<8x128xf32>
    %502 = arith.mulf %501, %495 : vector<8x128xf32>
    %503 = arith.addf %485, %502 : vector<8x128xf32>
    %c321 = arith.constant 321 : index
    %504 = memref.load %arg1[%c321] : memref<588xf32, #tpu.memory_space<smem>>
    %505 = vector.broadcast %504 : f32 to vector<8x128xf32>
    %506 = arith.mulf %505, %495 : vector<8x128xf32>
    %507 = arith.addf %489, %506 : vector<8x128xf32>
    %c468 = arith.constant 468 : index
    %508 = memref.load %arg1[%c468] : memref<588xf32, #tpu.memory_space<smem>>
    %509 = vector.broadcast %508 : f32 to vector<8x128xf32>
    %510 = arith.mulf %509, %495 : vector<8x128xf32>
    %511 = arith.addf %493, %510 : vector<8x128xf32>
    %c28 = arith.constant 28 : index
    %c0_88 = arith.constant 0 : index
    %c0_89 = arith.constant 0 : index
    %512 = vector.load %arg3[%c28, %c0_88, %c0_89] : memref<147x8x128xf32, #tpu.memory_space<vmem>>, vector<1x8x128xf32>
    %513 = vector.shape_cast %512 : vector<1x8x128xf32> to vector<8x128xf32>
    %c28_90 = arith.constant 28 : index
    %514 = memref.load %arg1[%c28_90] : memref<588xf32, #tpu.memory_space<smem>>
    %515 = vector.broadcast %514 : f32 to vector<8x128xf32>
    %516 = arith.mulf %515, %513 : vector<8x128xf32>
    %517 = arith.addf %499, %516 : vector<8x128xf32>
    %c175 = arith.constant 175 : index
    %518 = memref.load %arg1[%c175] : memref<588xf32, #tpu.memory_space<smem>>
    %519 = vector.broadcast %518 : f32 to vector<8x128xf32>
    %520 = arith.mulf %519, %513 : vector<8x128xf32>
    %521 = arith.addf %503, %520 : vector<8x128xf32>
    %c322 = arith.constant 322 : index
    %522 = memref.load %arg1[%c322] : memref<588xf32, #tpu.memory_space<smem>>
    %523 = vector.broadcast %522 : f32 to vector<8x128xf32>
    %524 = arith.mulf %523, %513 : vector<8x128xf32>
    %525 = arith.addf %507, %524 : vector<8x128xf32>
    %c469 = arith.constant 469 : index
    %526 = memref.load %arg1[%c469] : memref<588xf32, #tpu.memory_space<smem>>
    %527 = vector.broadcast %526 : f32 to vector<8x128xf32>
    %528 = arith.mulf %527, %513 : vector<8x128xf32>
    %529 = arith.addf %511, %528 : vector<8x128xf32>
    %c29 = arith.constant 29 : index
    %c0_91 = arith.constant 0 : index
    %c0_92 = arith.constant 0 : index
    %530 = vector.load %arg3[%c29, %c0_91, %c0_92] : memref<147x8x128xf32, #tpu.memory_space<vmem>>, vector<1x8x128xf32>
    %531 = vector.shape_cast %530 : vector<1x8x128xf32> to vector<8x128xf32>
    %c29_93 = arith.constant 29 : index
    %532 = memref.load %arg1[%c29_93] : memref<588xf32, #tpu.memory_space<smem>>
    %533 = vector.broadcast %532 : f32 to vector<8x128xf32>
    %534 = arith.mulf %533, %531 : vector<8x128xf32>
    %535 = arith.addf %517, %534 : vector<8x128xf32>
    %c176 = arith.constant 176 : index
    %536 = memref.load %arg1[%c176] : memref<588xf32, #tpu.memory_space<smem>>
    %537 = vector.broadcast %536 : f32 to vector<8x128xf32>
    %538 = arith.mulf %537, %531 : vector<8x128xf32>
    %539 = arith.addf %521, %538 : vector<8x128xf32>
    %c323 = arith.constant 323 : index
    %540 = memref.load %arg1[%c323] : memref<588xf32, #tpu.memory_space<smem>>
    %541 = vector.broadcast %540 : f32 to vector<8x128xf32>
    %542 = arith.mulf %541, %531 : vector<8x128xf32>
    %543 = arith.addf %525, %542 : vector<8x128xf32>
    %c470 = arith.constant 470 : index
    %544 = memref.load %arg1[%c470] : memref<588xf32, #tpu.memory_space<smem>>
    %545 = vector.broadcast %544 : f32 to vector<8x128xf32>
    %546 = arith.mulf %545, %531 : vector<8x128xf32>
    %547 = arith.addf %529, %546 : vector<8x128xf32>
    %c30 = arith.constant 30 : index
    %c0_94 = arith.constant 0 : index
    %c0_95 = arith.constant 0 : index
    %548 = vector.load %arg3[%c30, %c0_94, %c0_95] : memref<147x8x128xf32, #tpu.memory_space<vmem>>, vector<1x8x128xf32>
    %549 = vector.shape_cast %548 : vector<1x8x128xf32> to vector<8x128xf32>
    %c30_96 = arith.constant 30 : index
    %550 = memref.load %arg1[%c30_96] : memref<588xf32, #tpu.memory_space<smem>>
    %551 = vector.broadcast %550 : f32 to vector<8x128xf32>
    %552 = arith.mulf %551, %549 : vector<8x128xf32>
    %553 = arith.addf %535, %552 : vector<8x128xf32>
    %c177 = arith.constant 177 : index
    %554 = memref.load %arg1[%c177] : memref<588xf32, #tpu.memory_space<smem>>
    %555 = vector.broadcast %554 : f32 to vector<8x128xf32>
    %556 = arith.mulf %555, %549 : vector<8x128xf32>
    %557 = arith.addf %539, %556 : vector<8x128xf32>
    %c324 = arith.constant 324 : index
    %558 = memref.load %arg1[%c324] : memref<588xf32, #tpu.memory_space<smem>>
    %559 = vector.broadcast %558 : f32 to vector<8x128xf32>
    %560 = arith.mulf %559, %549 : vector<8x128xf32>
    %561 = arith.addf %543, %560 : vector<8x128xf32>
    %c471 = arith.constant 471 : index
    %562 = memref.load %arg1[%c471] : memref<588xf32, #tpu.memory_space<smem>>
    %563 = vector.broadcast %562 : f32 to vector<8x128xf32>
    %564 = arith.mulf %563, %549 : vector<8x128xf32>
    %565 = arith.addf %547, %564 : vector<8x128xf32>
    %c31 = arith.constant 31 : index
    %c0_97 = arith.constant 0 : index
    %c0_98 = arith.constant 0 : index
    %566 = vector.load %arg3[%c31, %c0_97, %c0_98] : memref<147x8x128xf32, #tpu.memory_space<vmem>>, vector<1x8x128xf32>
    %567 = vector.shape_cast %566 : vector<1x8x128xf32> to vector<8x128xf32>
    %c31_99 = arith.constant 31 : index
    %568 = memref.load %arg1[%c31_99] : memref<588xf32, #tpu.memory_space<smem>>
    %569 = vector.broadcast %568 : f32 to vector<8x128xf32>
    %570 = arith.mulf %569, %567 : vector<8x128xf32>
    %571 = arith.addf %553, %570 : vector<8x128xf32>
    %c178 = arith.constant 178 : index
    %572 = memref.load %arg1[%c178] : memref<588xf32, #tpu.memory_space<smem>>
    %573 = vector.broadcast %572 : f32 to vector<8x128xf32>
    %574 = arith.mulf %573, %567 : vector<8x128xf32>
    %575 = arith.addf %557, %574 : vector<8x128xf32>
    %c325 = arith.constant 325 : index
    %576 = memref.load %arg1[%c325] : memref<588xf32, #tpu.memory_space<smem>>
    %577 = vector.broadcast %576 : f32 to vector<8x128xf32>
    %578 = arith.mulf %577, %567 : vector<8x128xf32>
    %579 = arith.addf %561, %578 : vector<8x128xf32>
    %c472 = arith.constant 472 : index
    %580 = memref.load %arg1[%c472] : memref<588xf32, #tpu.memory_space<smem>>
    %581 = vector.broadcast %580 : f32 to vector<8x128xf32>
    %582 = arith.mulf %581, %567 : vector<8x128xf32>
    %583 = arith.addf %565, %582 : vector<8x128xf32>
    %c32 = arith.constant 32 : index
    %c0_100 = arith.constant 0 : index
    %c0_101 = arith.constant 0 : index
    %584 = vector.load %arg3[%c32, %c0_100, %c0_101] : memref<147x8x128xf32, #tpu.memory_space<vmem>>, vector<1x8x128xf32>
    %585 = vector.shape_cast %584 : vector<1x8x128xf32> to vector<8x128xf32>
    %c32_102 = arith.constant 32 : index
    %586 = memref.load %arg1[%c32_102] : memref<588xf32, #tpu.memory_space<smem>>
    %587 = vector.broadcast %586 : f32 to vector<8x128xf32>
    %588 = arith.mulf %587, %585 : vector<8x128xf32>
    %589 = arith.addf %571, %588 : vector<8x128xf32>
    %c179 = arith.constant 179 : index
    %590 = memref.load %arg1[%c179] : memref<588xf32, #tpu.memory_space<smem>>
    %591 = vector.broadcast %590 : f32 to vector<8x128xf32>
    %592 = arith.mulf %591, %585 : vector<8x128xf32>
    %593 = arith.addf %575, %592 : vector<8x128xf32>
    %c326 = arith.constant 326 : index
    %594 = memref.load %arg1[%c326] : memref<588xf32, #tpu.memory_space<smem>>
    %595 = vector.broadcast %594 : f32 to vector<8x128xf32>
    %596 = arith.mulf %595, %585 : vector<8x128xf32>
    %597 = arith.addf %579, %596 : vector<8x128xf32>
    %c473 = arith.constant 473 : index
    %598 = memref.load %arg1[%c473] : memref<588xf32, #tpu.memory_space<smem>>
    %599 = vector.broadcast %598 : f32 to vector<8x128xf32>
    %600 = arith.mulf %599, %585 : vector<8x128xf32>
    %601 = arith.addf %583, %600 : vector<8x128xf32>
    %c33 = arith.constant 33 : index
    %c0_103 = arith.constant 0 : index
    %c0_104 = arith.constant 0 : index
    %602 = vector.load %arg3[%c33, %c0_103, %c0_104] : memref<147x8x128xf32, #tpu.memory_space<vmem>>, vector<1x8x128xf32>
    %603 = vector.shape_cast %602 : vector<1x8x128xf32> to vector<8x128xf32>
    %c33_105 = arith.constant 33 : index
    %604 = memref.load %arg1[%c33_105] : memref<588xf32, #tpu.memory_space<smem>>
    %605 = vector.broadcast %604 : f32 to vector<8x128xf32>
    %606 = arith.mulf %605, %603 : vector<8x128xf32>
    %607 = arith.addf %589, %606 : vector<8x128xf32>
    %c180 = arith.constant 180 : index
    %608 = memref.load %arg1[%c180] : memref<588xf32, #tpu.memory_space<smem>>
    %609 = vector.broadcast %608 : f32 to vector<8x128xf32>
    %610 = arith.mulf %609, %603 : vector<8x128xf32>
    %611 = arith.addf %593, %610 : vector<8x128xf32>
    %c327 = arith.constant 327 : index
    %612 = memref.load %arg1[%c327] : memref<588xf32, #tpu.memory_space<smem>>
    %613 = vector.broadcast %612 : f32 to vector<8x128xf32>
    %614 = arith.mulf %613, %603 : vector<8x128xf32>
    %615 = arith.addf %597, %614 : vector<8x128xf32>
    %c474 = arith.constant 474 : index
    %616 = memref.load %arg1[%c474] : memref<588xf32, #tpu.memory_space<smem>>
    %617 = vector.broadcast %616 : f32 to vector<8x128xf32>
    %618 = arith.mulf %617, %603 : vector<8x128xf32>
    %619 = arith.addf %601, %618 : vector<8x128xf32>
    %c34 = arith.constant 34 : index
    %c0_106 = arith.constant 0 : index
    %c0_107 = arith.constant 0 : index
    %620 = vector.load %arg3[%c34, %c0_106, %c0_107] : memref<147x8x128xf32, #tpu.memory_space<vmem>>, vector<1x8x128xf32>
    %621 = vector.shape_cast %620 : vector<1x8x128xf32> to vector<8x128xf32>
    %c34_108 = arith.constant 34 : index
    %622 = memref.load %arg1[%c34_108] : memref<588xf32, #tpu.memory_space<smem>>
    %623 = vector.broadcast %622 : f32 to vector<8x128xf32>
    %624 = arith.mulf %623, %621 : vector<8x128xf32>
    %625 = arith.addf %607, %624 : vector<8x128xf32>
    %c181 = arith.constant 181 : index
    %626 = memref.load %arg1[%c181] : memref<588xf32, #tpu.memory_space<smem>>
    %627 = vector.broadcast %626 : f32 to vector<8x128xf32>
    %628 = arith.mulf %627, %621 : vector<8x128xf32>
    %629 = arith.addf %611, %628 : vector<8x128xf32>
    %c328 = arith.constant 328 : index
    %630 = memref.load %arg1[%c328] : memref<588xf32, #tpu.memory_space<smem>>
    %631 = vector.broadcast %630 : f32 to vector<8x128xf32>
    %632 = arith.mulf %631, %621 : vector<8x128xf32>
    %633 = arith.addf %615, %632 : vector<8x128xf32>
    %c475 = arith.constant 475 : index
    %634 = memref.load %arg1[%c475] : memref<588xf32, #tpu.memory_space<smem>>
    %635 = vector.broadcast %634 : f32 to vector<8x128xf32>
    %636 = arith.mulf %635, %621 : vector<8x128xf32>
    %637 = arith.addf %619, %636 : vector<8x128xf32>
    %c35 = arith.constant 35 : index
    %c0_109 = arith.constant 0 : index
    %c0_110 = arith.constant 0 : index
    %638 = vector.load %arg3[%c35, %c0_109, %c0_110] : memref<147x8x128xf32, #tpu.memory_space<vmem>>, vector<1x8x128xf32>
    %639 = vector.shape_cast %638 : vector<1x8x128xf32> to vector<8x128xf32>
    %c35_111 = arith.constant 35 : index
    %640 = memref.load %arg1[%c35_111] : memref<588xf32, #tpu.memory_space<smem>>
    %641 = vector.broadcast %640 : f32 to vector<8x128xf32>
    %642 = arith.mulf %641, %639 : vector<8x128xf32>
    %643 = arith.addf %625, %642 : vector<8x128xf32>
    %c182 = arith.constant 182 : index
    %644 = memref.load %arg1[%c182] : memref<588xf32, #tpu.memory_space<smem>>
    %645 = vector.broadcast %644 : f32 to vector<8x128xf32>
    %646 = arith.mulf %645, %639 : vector<8x128xf32>
    %647 = arith.addf %629, %646 : vector<8x128xf32>
    %c329 = arith.constant 329 : index
    %648 = memref.load %arg1[%c329] : memref<588xf32, #tpu.memory_space<smem>>
    %649 = vector.broadcast %648 : f32 to vector<8x128xf32>
    %650 = arith.mulf %649, %639 : vector<8x128xf32>
    %651 = arith.addf %633, %650 : vector<8x128xf32>
    %c476 = arith.constant 476 : index
    %652 = memref.load %arg1[%c476] : memref<588xf32, #tpu.memory_space<smem>>
    %653 = vector.broadcast %652 : f32 to vector<8x128xf32>
    %654 = arith.mulf %653, %639 : vector<8x128xf32>
    %655 = arith.addf %637, %654 : vector<8x128xf32>
    %c36 = arith.constant 36 : index
    %c0_112 = arith.constant 0 : index
    %c0_113 = arith.constant 0 : index
    %656 = vector.load %arg3[%c36, %c0_112, %c0_113] : memref<147x8x128xf32, #tpu.memory_space<vmem>>, vector<1x8x128xf32>
    %657 = vector.shape_cast %656 : vector<1x8x128xf32> to vector<8x128xf32>
    %c36_114 = arith.constant 36 : index
    %658 = memref.load %arg1[%c36_114] : memref<588xf32, #tpu.memory_space<smem>>
    %659 = vector.broadcast %658 : f32 to vector<8x128xf32>
    %660 = arith.mulf %659, %657 : vector<8x128xf32>
    %661 = arith.addf %643, %660 : vector<8x128xf32>
    %c183 = arith.constant 183 : index
    %662 = memref.load %arg1[%c183] : memref<588xf32, #tpu.memory_space<smem>>
    %663 = vector.broadcast %662 : f32 to vector<8x128xf32>
    %664 = arith.mulf %663, %657 : vector<8x128xf32>
    %665 = arith.addf %647, %664 : vector<8x128xf32>
    %c330 = arith.constant 330 : index
    %666 = memref.load %arg1[%c330] : memref<588xf32, #tpu.memory_space<smem>>
    %667 = vector.broadcast %666 : f32 to vector<8x128xf32>
    %668 = arith.mulf %667, %657 : vector<8x128xf32>
    %669 = arith.addf %651, %668 : vector<8x128xf32>
    %c477 = arith.constant 477 : index
    %670 = memref.load %arg1[%c477] : memref<588xf32, #tpu.memory_space<smem>>
    %671 = vector.broadcast %670 : f32 to vector<8x128xf32>
    %672 = arith.mulf %671, %657 : vector<8x128xf32>
    %673 = arith.addf %655, %672 : vector<8x128xf32>
    %c37 = arith.constant 37 : index
    %c0_115 = arith.constant 0 : index
    %c0_116 = arith.constant 0 : index
    %674 = vector.load %arg3[%c37, %c0_115, %c0_116] : memref<147x8x128xf32, #tpu.memory_space<vmem>>, vector<1x8x128xf32>
    %675 = vector.shape_cast %674 : vector<1x8x128xf32> to vector<8x128xf32>
    %c37_117 = arith.constant 37 : index
    %676 = memref.load %arg1[%c37_117] : memref<588xf32, #tpu.memory_space<smem>>
    %677 = vector.broadcast %676 : f32 to vector<8x128xf32>
    %678 = arith.mulf %677, %675 : vector<8x128xf32>
    %679 = arith.addf %661, %678 : vector<8x128xf32>
    %c184 = arith.constant 184 : index
    %680 = memref.load %arg1[%c184] : memref<588xf32, #tpu.memory_space<smem>>
    %681 = vector.broadcast %680 : f32 to vector<8x128xf32>
    %682 = arith.mulf %681, %675 : vector<8x128xf32>
    %683 = arith.addf %665, %682 : vector<8x128xf32>
    %c331 = arith.constant 331 : index
    %684 = memref.load %arg1[%c331] : memref<588xf32, #tpu.memory_space<smem>>
    %685 = vector.broadcast %684 : f32 to vector<8x128xf32>
    %686 = arith.mulf %685, %675 : vector<8x128xf32>
    %687 = arith.addf %669, %686 : vector<8x128xf32>
    %c478 = arith.constant 478 : index
    %688 = memref.load %arg1[%c478] : memref<588xf32, #tpu.memory_space<smem>>
    %689 = vector.broadcast %688 : f32 to vector<8x128xf32>
    %690 = arith.mulf %689, %675 : vector<8x128xf32>
    %691 = arith.addf %673, %690 : vector<8x128xf32>
    %c38 = arith.constant 38 : index
    %c0_118 = arith.constant 0 : index
    %c0_119 = arith.constant 0 : index
    %692 = vector.load %arg3[%c38, %c0_118, %c0_119] : memref<147x8x128xf32, #tpu.memory_space<vmem>>, vector<1x8x128xf32>
    %693 = vector.shape_cast %692 : vector<1x8x128xf32> to vector<8x128xf32>
    %c38_120 = arith.constant 38 : index
    %694 = memref.load %arg1[%c38_120] : memref<588xf32, #tpu.memory_space<smem>>
    %695 = vector.broadcast %694 : f32 to vector<8x128xf32>
    %696 = arith.mulf %695, %693 : vector<8x128xf32>
    %697 = arith.addf %679, %696 : vector<8x128xf32>
    %c185 = arith.constant 185 : index
    %698 = memref.load %arg1[%c185] : memref<588xf32, #tpu.memory_space<smem>>
    %699 = vector.broadcast %698 : f32 to vector<8x128xf32>
    %700 = arith.mulf %699, %693 : vector<8x128xf32>
    %701 = arith.addf %683, %700 : vector<8x128xf32>
    %c332 = arith.constant 332 : index
    %702 = memref.load %arg1[%c332] : memref<588xf32, #tpu.memory_space<smem>>
    %703 = vector.broadcast %702 : f32 to vector<8x128xf32>
    %704 = arith.mulf %703, %693 : vector<8x128xf32>
    %705 = arith.addf %687, %704 : vector<8x128xf32>
    %c479 = arith.constant 479 : index
    %706 = memref.load %arg1[%c479] : memref<588xf32, #tpu.memory_space<smem>>
    %707 = vector.broadcast %706 : f32 to vector<8x128xf32>
    %708 = arith.mulf %707, %693 : vector<8x128xf32>
    %709 = arith.addf %691, %708 : vector<8x128xf32>
    %c39 = arith.constant 39 : index
    %c0_121 = arith.constant 0 : index
    %c0_122 = arith.constant 0 : index
    %710 = vector.load %arg3[%c39, %c0_121, %c0_122] : memref<147x8x128xf32, #tpu.memory_space<vmem>>, vector<1x8x128xf32>
    %711 = vector.shape_cast %710 : vector<1x8x128xf32> to vector<8x128xf32>
    %c39_123 = arith.constant 39 : index
    %712 = memref.load %arg1[%c39_123] : memref<588xf32, #tpu.memory_space<smem>>
    %713 = vector.broadcast %712 : f32 to vector<8x128xf32>
    %714 = arith.mulf %713, %711 : vector<8x128xf32>
    %715 = arith.addf %697, %714 : vector<8x128xf32>
    %c186 = arith.constant 186 : index
    %716 = memref.load %arg1[%c186] : memref<588xf32, #tpu.memory_space<smem>>
    %717 = vector.broadcast %716 : f32 to vector<8x128xf32>
    %718 = arith.mulf %717, %711 : vector<8x128xf32>
    %719 = arith.addf %701, %718 : vector<8x128xf32>
    %c333 = arith.constant 333 : index
    %720 = memref.load %arg1[%c333] : memref<588xf32, #tpu.memory_space<smem>>
    %721 = vector.broadcast %720 : f32 to vector<8x128xf32>
    %722 = arith.mulf %721, %711 : vector<8x128xf32>
    %723 = arith.addf %705, %722 : vector<8x128xf32>
    %c480 = arith.constant 480 : index
    %724 = memref.load %arg1[%c480] : memref<588xf32, #tpu.memory_space<smem>>
    %725 = vector.broadcast %724 : f32 to vector<8x128xf32>
    %726 = arith.mulf %725, %711 : vector<8x128xf32>
    %727 = arith.addf %709, %726 : vector<8x128xf32>
    %c40 = arith.constant 40 : index
    %c0_124 = arith.constant 0 : index
    %c0_125 = arith.constant 0 : index
    %728 = vector.load %arg3[%c40, %c0_124, %c0_125] : memref<147x8x128xf32, #tpu.memory_space<vmem>>, vector<1x8x128xf32>
    %729 = vector.shape_cast %728 : vector<1x8x128xf32> to vector<8x128xf32>
    %c40_126 = arith.constant 40 : index
    %730 = memref.load %arg1[%c40_126] : memref<588xf32, #tpu.memory_space<smem>>
    %731 = vector.broadcast %730 : f32 to vector<8x128xf32>
    %732 = arith.mulf %731, %729 : vector<8x128xf32>
    %733 = arith.addf %715, %732 : vector<8x128xf32>
    %c187 = arith.constant 187 : index
    %734 = memref.load %arg1[%c187] : memref<588xf32, #tpu.memory_space<smem>>
    %735 = vector.broadcast %734 : f32 to vector<8x128xf32>
    %736 = arith.mulf %735, %729 : vector<8x128xf32>
    %737 = arith.addf %719, %736 : vector<8x128xf32>
    %c334 = arith.constant 334 : index
    %738 = memref.load %arg1[%c334] : memref<588xf32, #tpu.memory_space<smem>>
    %739 = vector.broadcast %738 : f32 to vector<8x128xf32>
    %740 = arith.mulf %739, %729 : vector<8x128xf32>
    %741 = arith.addf %723, %740 : vector<8x128xf32>
    %c481 = arith.constant 481 : index
    %742 = memref.load %arg1[%c481] : memref<588xf32, #tpu.memory_space<smem>>
    %743 = vector.broadcast %742 : f32 to vector<8x128xf32>
    %744 = arith.mulf %743, %729 : vector<8x128xf32>
    %745 = arith.addf %727, %744 : vector<8x128xf32>
    %c41 = arith.constant 41 : index
    %c0_127 = arith.constant 0 : index
    %c0_128 = arith.constant 0 : index
    %746 = vector.load %arg3[%c41, %c0_127, %c0_128] : memref<147x8x128xf32, #tpu.memory_space<vmem>>, vector<1x8x128xf32>
    %747 = vector.shape_cast %746 : vector<1x8x128xf32> to vector<8x128xf32>
    %c41_129 = arith.constant 41 : index
    %748 = memref.load %arg1[%c41_129] : memref<588xf32, #tpu.memory_space<smem>>
    %749 = vector.broadcast %748 : f32 to vector<8x128xf32>
    %750 = arith.mulf %749, %747 : vector<8x128xf32>
    %751 = arith.addf %733, %750 : vector<8x128xf32>
    %c188 = arith.constant 188 : index
    %752 = memref.load %arg1[%c188] : memref<588xf32, #tpu.memory_space<smem>>
    %753 = vector.broadcast %752 : f32 to vector<8x128xf32>
    %754 = arith.mulf %753, %747 : vector<8x128xf32>
    %755 = arith.addf %737, %754 : vector<8x128xf32>
    %c335 = arith.constant 335 : index
    %756 = memref.load %arg1[%c335] : memref<588xf32, #tpu.memory_space<smem>>
    %757 = vector.broadcast %756 : f32 to vector<8x128xf32>
    %758 = arith.mulf %757, %747 : vector<8x128xf32>
    %759 = arith.addf %741, %758 : vector<8x128xf32>
    %c482 = arith.constant 482 : index
    %760 = memref.load %arg1[%c482] : memref<588xf32, #tpu.memory_space<smem>>
    %761 = vector.broadcast %760 : f32 to vector<8x128xf32>
    %762 = arith.mulf %761, %747 : vector<8x128xf32>
    %763 = arith.addf %745, %762 : vector<8x128xf32>
    %c42 = arith.constant 42 : index
    %c0_130 = arith.constant 0 : index
    %c0_131 = arith.constant 0 : index
    %764 = vector.load %arg3[%c42, %c0_130, %c0_131] : memref<147x8x128xf32, #tpu.memory_space<vmem>>, vector<1x8x128xf32>
    %765 = vector.shape_cast %764 : vector<1x8x128xf32> to vector<8x128xf32>
    %c42_132 = arith.constant 42 : index
    %766 = memref.load %arg1[%c42_132] : memref<588xf32, #tpu.memory_space<smem>>
    %767 = vector.broadcast %766 : f32 to vector<8x128xf32>
    %768 = arith.mulf %767, %765 : vector<8x128xf32>
    %769 = arith.addf %751, %768 : vector<8x128xf32>
    %c189 = arith.constant 189 : index
    %770 = memref.load %arg1[%c189] : memref<588xf32, #tpu.memory_space<smem>>
    %771 = vector.broadcast %770 : f32 to vector<8x128xf32>
    %772 = arith.mulf %771, %765 : vector<8x128xf32>
    %773 = arith.addf %755, %772 : vector<8x128xf32>
    %c336 = arith.constant 336 : index
    %774 = memref.load %arg1[%c336] : memref<588xf32, #tpu.memory_space<smem>>
    %775 = vector.broadcast %774 : f32 to vector<8x128xf32>
    %776 = arith.mulf %775, %765 : vector<8x128xf32>
    %777 = arith.addf %759, %776 : vector<8x128xf32>
    %c483 = arith.constant 483 : index
    %778 = memref.load %arg1[%c483] : memref<588xf32, #tpu.memory_space<smem>>
    %779 = vector.broadcast %778 : f32 to vector<8x128xf32>
    %780 = arith.mulf %779, %765 : vector<8x128xf32>
    %781 = arith.addf %763, %780 : vector<8x128xf32>
    %c43 = arith.constant 43 : index
    %c0_133 = arith.constant 0 : index
    %c0_134 = arith.constant 0 : index
    %782 = vector.load %arg3[%c43, %c0_133, %c0_134] : memref<147x8x128xf32, #tpu.memory_space<vmem>>, vector<1x8x128xf32>
    %783 = vector.shape_cast %782 : vector<1x8x128xf32> to vector<8x128xf32>
    %c43_135 = arith.constant 43 : index
    %784 = memref.load %arg1[%c43_135] : memref<588xf32, #tpu.memory_space<smem>>
    %785 = vector.broadcast %784 : f32 to vector<8x128xf32>
    %786 = arith.mulf %785, %783 : vector<8x128xf32>
    %787 = arith.addf %769, %786 : vector<8x128xf32>
    %c190 = arith.constant 190 : index
    %788 = memref.load %arg1[%c190] : memref<588xf32, #tpu.memory_space<smem>>
    %789 = vector.broadcast %788 : f32 to vector<8x128xf32>
    %790 = arith.mulf %789, %783 : vector<8x128xf32>
    %791 = arith.addf %773, %790 : vector<8x128xf32>
    %c337 = arith.constant 337 : index
    %792 = memref.load %arg1[%c337] : memref<588xf32, #tpu.memory_space<smem>>
    %793 = vector.broadcast %792 : f32 to vector<8x128xf32>
    %794 = arith.mulf %793, %783 : vector<8x128xf32>
    %795 = arith.addf %777, %794 : vector<8x128xf32>
    %c484 = arith.constant 484 : index
    %796 = memref.load %arg1[%c484] : memref<588xf32, #tpu.memory_space<smem>>
    %797 = vector.broadcast %796 : f32 to vector<8x128xf32>
    %798 = arith.mulf %797, %783 : vector<8x128xf32>
    %799 = arith.addf %781, %798 : vector<8x128xf32>
    %c44 = arith.constant 44 : index
    %c0_136 = arith.constant 0 : index
    %c0_137 = arith.constant 0 : index
    %800 = vector.load %arg3[%c44, %c0_136, %c0_137] : memref<147x8x128xf32, #tpu.memory_space<vmem>>, vector<1x8x128xf32>
    %801 = vector.shape_cast %800 : vector<1x8x128xf32> to vector<8x128xf32>
    %c44_138 = arith.constant 44 : index
    %802 = memref.load %arg1[%c44_138] : memref<588xf32, #tpu.memory_space<smem>>
    %803 = vector.broadcast %802 : f32 to vector<8x128xf32>
    %804 = arith.mulf %803, %801 : vector<8x128xf32>
    %805 = arith.addf %787, %804 : vector<8x128xf32>
    %c191 = arith.constant 191 : index
    %806 = memref.load %arg1[%c191] : memref<588xf32, #tpu.memory_space<smem>>
    %807 = vector.broadcast %806 : f32 to vector<8x128xf32>
    %808 = arith.mulf %807, %801 : vector<8x128xf32>
    %809 = arith.addf %791, %808 : vector<8x128xf32>
    %c338 = arith.constant 338 : index
    %810 = memref.load %arg1[%c338] : memref<588xf32, #tpu.memory_space<smem>>
    %811 = vector.broadcast %810 : f32 to vector<8x128xf32>
    %812 = arith.mulf %811, %801 : vector<8x128xf32>
    %813 = arith.addf %795, %812 : vector<8x128xf32>
    %c485 = arith.constant 485 : index
    %814 = memref.load %arg1[%c485] : memref<588xf32, #tpu.memory_space<smem>>
    %815 = vector.broadcast %814 : f32 to vector<8x128xf32>
    %816 = arith.mulf %815, %801 : vector<8x128xf32>
    %817 = arith.addf %799, %816 : vector<8x128xf32>
    %c45 = arith.constant 45 : index
    %c0_139 = arith.constant 0 : index
    %c0_140 = arith.constant 0 : index
    %818 = vector.load %arg3[%c45, %c0_139, %c0_140] : memref<147x8x128xf32, #tpu.memory_space<vmem>>, vector<1x8x128xf32>
    %819 = vector.shape_cast %818 : vector<1x8x128xf32> to vector<8x128xf32>
    %c45_141 = arith.constant 45 : index
    %820 = memref.load %arg1[%c45_141] : memref<588xf32, #tpu.memory_space<smem>>
    %821 = vector.broadcast %820 : f32 to vector<8x128xf32>
    %822 = arith.mulf %821, %819 : vector<8x128xf32>
    %823 = arith.addf %805, %822 : vector<8x128xf32>
    %c192 = arith.constant 192 : index
    %824 = memref.load %arg1[%c192] : memref<588xf32, #tpu.memory_space<smem>>
    %825 = vector.broadcast %824 : f32 to vector<8x128xf32>
    %826 = arith.mulf %825, %819 : vector<8x128xf32>
    %827 = arith.addf %809, %826 : vector<8x128xf32>
    %c339 = arith.constant 339 : index
    %828 = memref.load %arg1[%c339] : memref<588xf32, #tpu.memory_space<smem>>
    %829 = vector.broadcast %828 : f32 to vector<8x128xf32>
    %830 = arith.mulf %829, %819 : vector<8x128xf32>
    %831 = arith.addf %813, %830 : vector<8x128xf32>
    %c486 = arith.constant 486 : index
    %832 = memref.load %arg1[%c486] : memref<588xf32, #tpu.memory_space<smem>>
    %833 = vector.broadcast %832 : f32 to vector<8x128xf32>
    %834 = arith.mulf %833, %819 : vector<8x128xf32>
    %835 = arith.addf %817, %834 : vector<8x128xf32>
    %c46 = arith.constant 46 : index
    %c0_142 = arith.constant 0 : index
    %c0_143 = arith.constant 0 : index
    %836 = vector.load %arg3[%c46, %c0_142, %c0_143] : memref<147x8x128xf32, #tpu.memory_space<vmem>>, vector<1x8x128xf32>
    %837 = vector.shape_cast %836 : vector<1x8x128xf32> to vector<8x128xf32>
    %c46_144 = arith.constant 46 : index
    %838 = memref.load %arg1[%c46_144] : memref<588xf32, #tpu.memory_space<smem>>
    %839 = vector.broadcast %838 : f32 to vector<8x128xf32>
    %840 = arith.mulf %839, %837 : vector<8x128xf32>
    %841 = arith.addf %823, %840 : vector<8x128xf32>
    %c193 = arith.constant 193 : index
    %842 = memref.load %arg1[%c193] : memref<588xf32, #tpu.memory_space<smem>>
    %843 = vector.broadcast %842 : f32 to vector<8x128xf32>
    %844 = arith.mulf %843, %837 : vector<8x128xf32>
    %845 = arith.addf %827, %844 : vector<8x128xf32>
    %c340 = arith.constant 340 : index
    %846 = memref.load %arg1[%c340] : memref<588xf32, #tpu.memory_space<smem>>
    %847 = vector.broadcast %846 : f32 to vector<8x128xf32>
    %848 = arith.mulf %847, %837 : vector<8x128xf32>
    %849 = arith.addf %831, %848 : vector<8x128xf32>
    %c487 = arith.constant 487 : index
    %850 = memref.load %arg1[%c487] : memref<588xf32, #tpu.memory_space<smem>>
    %851 = vector.broadcast %850 : f32 to vector<8x128xf32>
    %852 = arith.mulf %851, %837 : vector<8x128xf32>
    %853 = arith.addf %835, %852 : vector<8x128xf32>
    %c47 = arith.constant 47 : index
    %c0_145 = arith.constant 0 : index
    %c0_146 = arith.constant 0 : index
    %854 = vector.load %arg3[%c47, %c0_145, %c0_146] : memref<147x8x128xf32, #tpu.memory_space<vmem>>, vector<1x8x128xf32>
    %855 = vector.shape_cast %854 : vector<1x8x128xf32> to vector<8x128xf32>
    %c47_147 = arith.constant 47 : index
    %856 = memref.load %arg1[%c47_147] : memref<588xf32, #tpu.memory_space<smem>>
    %857 = vector.broadcast %856 : f32 to vector<8x128xf32>
    %858 = arith.mulf %857, %855 : vector<8x128xf32>
    %859 = arith.addf %841, %858 : vector<8x128xf32>
    %c194 = arith.constant 194 : index
    %860 = memref.load %arg1[%c194] : memref<588xf32, #tpu.memory_space<smem>>
    %861 = vector.broadcast %860 : f32 to vector<8x128xf32>
    %862 = arith.mulf %861, %855 : vector<8x128xf32>
    %863 = arith.addf %845, %862 : vector<8x128xf32>
    %c341 = arith.constant 341 : index
    %864 = memref.load %arg1[%c341] : memref<588xf32, #tpu.memory_space<smem>>
    %865 = vector.broadcast %864 : f32 to vector<8x128xf32>
    %866 = arith.mulf %865, %855 : vector<8x128xf32>
    %867 = arith.addf %849, %866 : vector<8x128xf32>
    %c488 = arith.constant 488 : index
    %868 = memref.load %arg1[%c488] : memref<588xf32, #tpu.memory_space<smem>>
    %869 = vector.broadcast %868 : f32 to vector<8x128xf32>
    %870 = arith.mulf %869, %855 : vector<8x128xf32>
    %871 = arith.addf %853, %870 : vector<8x128xf32>
    %c48 = arith.constant 48 : index
    %c0_148 = arith.constant 0 : index
    %c0_149 = arith.constant 0 : index
    %872 = vector.load %arg3[%c48, %c0_148, %c0_149] : memref<147x8x128xf32, #tpu.memory_space<vmem>>, vector<1x8x128xf32>
    %873 = vector.shape_cast %872 : vector<1x8x128xf32> to vector<8x128xf32>
    %c48_150 = arith.constant 48 : index
    %874 = memref.load %arg1[%c48_150] : memref<588xf32, #tpu.memory_space<smem>>
    %875 = vector.broadcast %874 : f32 to vector<8x128xf32>
    %876 = arith.mulf %875, %873 : vector<8x128xf32>
    %877 = arith.addf %859, %876 : vector<8x128xf32>
    %c195 = arith.constant 195 : index
    %878 = memref.load %arg1[%c195] : memref<588xf32, #tpu.memory_space<smem>>
    %879 = vector.broadcast %878 : f32 to vector<8x128xf32>
    %880 = arith.mulf %879, %873 : vector<8x128xf32>
    %881 = arith.addf %863, %880 : vector<8x128xf32>
    %c342 = arith.constant 342 : index
    %882 = memref.load %arg1[%c342] : memref<588xf32, #tpu.memory_space<smem>>
    %883 = vector.broadcast %882 : f32 to vector<8x128xf32>
    %884 = arith.mulf %883, %873 : vector<8x128xf32>
    %885 = arith.addf %867, %884 : vector<8x128xf32>
    %c489 = arith.constant 489 : index
    %886 = memref.load %arg1[%c489] : memref<588xf32, #tpu.memory_space<smem>>
    %887 = vector.broadcast %886 : f32 to vector<8x128xf32>
    %888 = arith.mulf %887, %873 : vector<8x128xf32>
    %889 = arith.addf %871, %888 : vector<8x128xf32>
    %c49 = arith.constant 49 : index
    %c0_151 = arith.constant 0 : index
    %c0_152 = arith.constant 0 : index
    %890 = vector.load %arg3[%c49, %c0_151, %c0_152] : memref<147x8x128xf32, #tpu.memory_space<vmem>>, vector<1x8x128xf32>
    %891 = vector.shape_cast %890 : vector<1x8x128xf32> to vector<8x128xf32>
    %c49_153 = arith.constant 49 : index
    %892 = memref.load %arg1[%c49_153] : memref<588xf32, #tpu.memory_space<smem>>
    %893 = vector.broadcast %892 : f32 to vector<8x128xf32>
    %894 = arith.mulf %893, %891 : vector<8x128xf32>
    %895 = arith.addf %877, %894 : vector<8x128xf32>
    %c196 = arith.constant 196 : index
    %896 = memref.load %arg1[%c196] : memref<588xf32, #tpu.memory_space<smem>>
    %897 = vector.broadcast %896 : f32 to vector<8x128xf32>
    %898 = arith.mulf %897, %891 : vector<8x128xf32>
    %899 = arith.addf %881, %898 : vector<8x128xf32>
    %c343 = arith.constant 343 : index
    %900 = memref.load %arg1[%c343] : memref<588xf32, #tpu.memory_space<smem>>
    %901 = vector.broadcast %900 : f32 to vector<8x128xf32>
    %902 = arith.mulf %901, %891 : vector<8x128xf32>
    %903 = arith.addf %885, %902 : vector<8x128xf32>
    %c490 = arith.constant 490 : index
    %904 = memref.load %arg1[%c490] : memref<588xf32, #tpu.memory_space<smem>>
    %905 = vector.broadcast %904 : f32 to vector<8x128xf32>
    %906 = arith.mulf %905, %891 : vector<8x128xf32>
    %907 = arith.addf %889, %906 : vector<8x128xf32>
    %c50 = arith.constant 50 : index
    %c0_154 = arith.constant 0 : index
    %c0_155 = arith.constant 0 : index
    %908 = vector.load %arg3[%c50, %c0_154, %c0_155] : memref<147x8x128xf32, #tpu.memory_space<vmem>>, vector<1x8x128xf32>
    %909 = vector.shape_cast %908 : vector<1x8x128xf32> to vector<8x128xf32>
    %c50_156 = arith.constant 50 : index
    %910 = memref.load %arg1[%c50_156] : memref<588xf32, #tpu.memory_space<smem>>
    %911 = vector.broadcast %910 : f32 to vector<8x128xf32>
    %912 = arith.mulf %911, %909 : vector<8x128xf32>
    %913 = arith.addf %895, %912 : vector<8x128xf32>
    %c197 = arith.constant 197 : index
    %914 = memref.load %arg1[%c197] : memref<588xf32, #tpu.memory_space<smem>>
    %915 = vector.broadcast %914 : f32 to vector<8x128xf32>
    %916 = arith.mulf %915, %909 : vector<8x128xf32>
    %917 = arith.addf %899, %916 : vector<8x128xf32>
    %c344 = arith.constant 344 : index
    %918 = memref.load %arg1[%c344] : memref<588xf32, #tpu.memory_space<smem>>
    %919 = vector.broadcast %918 : f32 to vector<8x128xf32>
    %920 = arith.mulf %919, %909 : vector<8x128xf32>
    %921 = arith.addf %903, %920 : vector<8x128xf32>
    %c491 = arith.constant 491 : index
    %922 = memref.load %arg1[%c491] : memref<588xf32, #tpu.memory_space<smem>>
    %923 = vector.broadcast %922 : f32 to vector<8x128xf32>
    %924 = arith.mulf %923, %909 : vector<8x128xf32>
    %925 = arith.addf %907, %924 : vector<8x128xf32>
    %c51 = arith.constant 51 : index
    %c0_157 = arith.constant 0 : index
    %c0_158 = arith.constant 0 : index
    %926 = vector.load %arg3[%c51, %c0_157, %c0_158] : memref<147x8x128xf32, #tpu.memory_space<vmem>>, vector<1x8x128xf32>
    %927 = vector.shape_cast %926 : vector<1x8x128xf32> to vector<8x128xf32>
    %c51_159 = arith.constant 51 : index
    %928 = memref.load %arg1[%c51_159] : memref<588xf32, #tpu.memory_space<smem>>
    %929 = vector.broadcast %928 : f32 to vector<8x128xf32>
    %930 = arith.mulf %929, %927 : vector<8x128xf32>
    %931 = arith.addf %913, %930 : vector<8x128xf32>
    %c198 = arith.constant 198 : index
    %932 = memref.load %arg1[%c198] : memref<588xf32, #tpu.memory_space<smem>>
    %933 = vector.broadcast %932 : f32 to vector<8x128xf32>
    %934 = arith.mulf %933, %927 : vector<8x128xf32>
    %935 = arith.addf %917, %934 : vector<8x128xf32>
    %c345 = arith.constant 345 : index
    %936 = memref.load %arg1[%c345] : memref<588xf32, #tpu.memory_space<smem>>
    %937 = vector.broadcast %936 : f32 to vector<8x128xf32>
    %938 = arith.mulf %937, %927 : vector<8x128xf32>
    %939 = arith.addf %921, %938 : vector<8x128xf32>
    %c492 = arith.constant 492 : index
    %940 = memref.load %arg1[%c492] : memref<588xf32, #tpu.memory_space<smem>>
    %941 = vector.broadcast %940 : f32 to vector<8x128xf32>
    %942 = arith.mulf %941, %927 : vector<8x128xf32>
    %943 = arith.addf %925, %942 : vector<8x128xf32>
    %c52 = arith.constant 52 : index
    %c0_160 = arith.constant 0 : index
    %c0_161 = arith.constant 0 : index
    %944 = vector.load %arg3[%c52, %c0_160, %c0_161] : memref<147x8x128xf32, #tpu.memory_space<vmem>>, vector<1x8x128xf32>
    %945 = vector.shape_cast %944 : vector<1x8x128xf32> to vector<8x128xf32>
    %c52_162 = arith.constant 52 : index
    %946 = memref.load %arg1[%c52_162] : memref<588xf32, #tpu.memory_space<smem>>
    %947 = vector.broadcast %946 : f32 to vector<8x128xf32>
    %948 = arith.mulf %947, %945 : vector<8x128xf32>
    %949 = arith.addf %931, %948 : vector<8x128xf32>
    %c199 = arith.constant 199 : index
    %950 = memref.load %arg1[%c199] : memref<588xf32, #tpu.memory_space<smem>>
    %951 = vector.broadcast %950 : f32 to vector<8x128xf32>
    %952 = arith.mulf %951, %945 : vector<8x128xf32>
    %953 = arith.addf %935, %952 : vector<8x128xf32>
    %c346 = arith.constant 346 : index
    %954 = memref.load %arg1[%c346] : memref<588xf32, #tpu.memory_space<smem>>
    %955 = vector.broadcast %954 : f32 to vector<8x128xf32>
    %956 = arith.mulf %955, %945 : vector<8x128xf32>
    %957 = arith.addf %939, %956 : vector<8x128xf32>
    %c493 = arith.constant 493 : index
    %958 = memref.load %arg1[%c493] : memref<588xf32, #tpu.memory_space<smem>>
    %959 = vector.broadcast %958 : f32 to vector<8x128xf32>
    %960 = arith.mulf %959, %945 : vector<8x128xf32>
    %961 = arith.addf %943, %960 : vector<8x128xf32>
    %c53 = arith.constant 53 : index
    %c0_163 = arith.constant 0 : index
    %c0_164 = arith.constant 0 : index
    %962 = vector.load %arg3[%c53, %c0_163, %c0_164] : memref<147x8x128xf32, #tpu.memory_space<vmem>>, vector<1x8x128xf32>
    %963 = vector.shape_cast %962 : vector<1x8x128xf32> to vector<8x128xf32>
    %c53_165 = arith.constant 53 : index
    %964 = memref.load %arg1[%c53_165] : memref<588xf32, #tpu.memory_space<smem>>
    %965 = vector.broadcast %964 : f32 to vector<8x128xf32>
    %966 = arith.mulf %965, %963 : vector<8x128xf32>
    %967 = arith.addf %949, %966 : vector<8x128xf32>
    %c200 = arith.constant 200 : index
    %968 = memref.load %arg1[%c200] : memref<588xf32, #tpu.memory_space<smem>>
    %969 = vector.broadcast %968 : f32 to vector<8x128xf32>
    %970 = arith.mulf %969, %963 : vector<8x128xf32>
    %971 = arith.addf %953, %970 : vector<8x128xf32>
    %c347 = arith.constant 347 : index
    %972 = memref.load %arg1[%c347] : memref<588xf32, #tpu.memory_space<smem>>
    %973 = vector.broadcast %972 : f32 to vector<8x128xf32>
    %974 = arith.mulf %973, %963 : vector<8x128xf32>
    %975 = arith.addf %957, %974 : vector<8x128xf32>
    %c494 = arith.constant 494 : index
    %976 = memref.load %arg1[%c494] : memref<588xf32, #tpu.memory_space<smem>>
    %977 = vector.broadcast %976 : f32 to vector<8x128xf32>
    %978 = arith.mulf %977, %963 : vector<8x128xf32>
    %979 = arith.addf %961, %978 : vector<8x128xf32>
    %c54 = arith.constant 54 : index
    %c0_166 = arith.constant 0 : index
    %c0_167 = arith.constant 0 : index
    %980 = vector.load %arg3[%c54, %c0_166, %c0_167] : memref<147x8x128xf32, #tpu.memory_space<vmem>>, vector<1x8x128xf32>
    %981 = vector.shape_cast %980 : vector<1x8x128xf32> to vector<8x128xf32>
    %c54_168 = arith.constant 54 : index
    %982 = memref.load %arg1[%c54_168] : memref<588xf32, #tpu.memory_space<smem>>
    %983 = vector.broadcast %982 : f32 to vector<8x128xf32>
    %984 = arith.mulf %983, %981 : vector<8x128xf32>
    %985 = arith.addf %967, %984 : vector<8x128xf32>
    %c201 = arith.constant 201 : index
    %986 = memref.load %arg1[%c201] : memref<588xf32, #tpu.memory_space<smem>>
    %987 = vector.broadcast %986 : f32 to vector<8x128xf32>
    %988 = arith.mulf %987, %981 : vector<8x128xf32>
    %989 = arith.addf %971, %988 : vector<8x128xf32>
    %c348 = arith.constant 348 : index
    %990 = memref.load %arg1[%c348] : memref<588xf32, #tpu.memory_space<smem>>
    %991 = vector.broadcast %990 : f32 to vector<8x128xf32>
    %992 = arith.mulf %991, %981 : vector<8x128xf32>
    %993 = arith.addf %975, %992 : vector<8x128xf32>
    %c495 = arith.constant 495 : index
    %994 = memref.load %arg1[%c495] : memref<588xf32, #tpu.memory_space<smem>>
    %995 = vector.broadcast %994 : f32 to vector<8x128xf32>
    %996 = arith.mulf %995, %981 : vector<8x128xf32>
    %997 = arith.addf %979, %996 : vector<8x128xf32>
    %c55 = arith.constant 55 : index
    %c0_169 = arith.constant 0 : index
    %c0_170 = arith.constant 0 : index
    %998 = vector.load %arg3[%c55, %c0_169, %c0_170] : memref<147x8x128xf32, #tpu.memory_space<vmem>>, vector<1x8x128xf32>
    %999 = vector.shape_cast %998 : vector<1x8x128xf32> to vector<8x128xf32>
    %c55_171 = arith.constant 55 : index
    %1000 = memref.load %arg1[%c55_171] : memref<588xf32, #tpu.memory_space<smem>>
    %1001 = vector.broadcast %1000 : f32 to vector<8x128xf32>
    %1002 = arith.mulf %1001, %999 : vector<8x128xf32>
    %1003 = arith.addf %985, %1002 : vector<8x128xf32>
    %c202 = arith.constant 202 : index
    %1004 = memref.load %arg1[%c202] : memref<588xf32, #tpu.memory_space<smem>>
    %1005 = vector.broadcast %1004 : f32 to vector<8x128xf32>
    %1006 = arith.mulf %1005, %999 : vector<8x128xf32>
    %1007 = arith.addf %989, %1006 : vector<8x128xf32>
    %c349 = arith.constant 349 : index
    %1008 = memref.load %arg1[%c349] : memref<588xf32, #tpu.memory_space<smem>>
    %1009 = vector.broadcast %1008 : f32 to vector<8x128xf32>
    %1010 = arith.mulf %1009, %999 : vector<8x128xf32>
    %1011 = arith.addf %993, %1010 : vector<8x128xf32>
    %c496 = arith.constant 496 : index
    %1012 = memref.load %arg1[%c496] : memref<588xf32, #tpu.memory_space<smem>>
    %1013 = vector.broadcast %1012 : f32 to vector<8x128xf32>
    %1014 = arith.mulf %1013, %999 : vector<8x128xf32>
    %1015 = arith.addf %997, %1014 : vector<8x128xf32>
    %c56 = arith.constant 56 : index
    %c0_172 = arith.constant 0 : index
    %c0_173 = arith.constant 0 : index
    %1016 = vector.load %arg3[%c56, %c0_172, %c0_173] : memref<147x8x128xf32, #tpu.memory_space<vmem>>, vector<1x8x128xf32>
    %1017 = vector.shape_cast %1016 : vector<1x8x128xf32> to vector<8x128xf32>
    %c56_174 = arith.constant 56 : index
    %1018 = memref.load %arg1[%c56_174] : memref<588xf32, #tpu.memory_space<smem>>
    %1019 = vector.broadcast %1018 : f32 to vector<8x128xf32>
    %1020 = arith.mulf %1019, %1017 : vector<8x128xf32>
    %1021 = arith.addf %1003, %1020 : vector<8x128xf32>
    %c203 = arith.constant 203 : index
    %1022 = memref.load %arg1[%c203] : memref<588xf32, #tpu.memory_space<smem>>
    %1023 = vector.broadcast %1022 : f32 to vector<8x128xf32>
    %1024 = arith.mulf %1023, %1017 : vector<8x128xf32>
    %1025 = arith.addf %1007, %1024 : vector<8x128xf32>
    %c350 = arith.constant 350 : index
    %1026 = memref.load %arg1[%c350] : memref<588xf32, #tpu.memory_space<smem>>
    %1027 = vector.broadcast %1026 : f32 to vector<8x128xf32>
    %1028 = arith.mulf %1027, %1017 : vector<8x128xf32>
    %1029 = arith.addf %1011, %1028 : vector<8x128xf32>
    %c497 = arith.constant 497 : index
    %1030 = memref.load %arg1[%c497] : memref<588xf32, #tpu.memory_space<smem>>
    %1031 = vector.broadcast %1030 : f32 to vector<8x128xf32>
    %1032 = arith.mulf %1031, %1017 : vector<8x128xf32>
    %1033 = arith.addf %1015, %1032 : vector<8x128xf32>
    %c57 = arith.constant 57 : index
    %c0_175 = arith.constant 0 : index
    %c0_176 = arith.constant 0 : index
    %1034 = vector.load %arg3[%c57, %c0_175, %c0_176] : memref<147x8x128xf32, #tpu.memory_space<vmem>>, vector<1x8x128xf32>
    %1035 = vector.shape_cast %1034 : vector<1x8x128xf32> to vector<8x128xf32>
    %c57_177 = arith.constant 57 : index
    %1036 = memref.load %arg1[%c57_177] : memref<588xf32, #tpu.memory_space<smem>>
    %1037 = vector.broadcast %1036 : f32 to vector<8x128xf32>
    %1038 = arith.mulf %1037, %1035 : vector<8x128xf32>
    %1039 = arith.addf %1021, %1038 : vector<8x128xf32>
    %c204 = arith.constant 204 : index
    %1040 = memref.load %arg1[%c204] : memref<588xf32, #tpu.memory_space<smem>>
    %1041 = vector.broadcast %1040 : f32 to vector<8x128xf32>
    %1042 = arith.mulf %1041, %1035 : vector<8x128xf32>
    %1043 = arith.addf %1025, %1042 : vector<8x128xf32>
    %c351 = arith.constant 351 : index
    %1044 = memref.load %arg1[%c351] : memref<588xf32, #tpu.memory_space<smem>>
    %1045 = vector.broadcast %1044 : f32 to vector<8x128xf32>
    %1046 = arith.mulf %1045, %1035 : vector<8x128xf32>
    %1047 = arith.addf %1029, %1046 : vector<8x128xf32>
    %c498 = arith.constant 498 : index
    %1048 = memref.load %arg1[%c498] : memref<588xf32, #tpu.memory_space<smem>>
    %1049 = vector.broadcast %1048 : f32 to vector<8x128xf32>
    %1050 = arith.mulf %1049, %1035 : vector<8x128xf32>
    %1051 = arith.addf %1033, %1050 : vector<8x128xf32>
    %c58 = arith.constant 58 : index
    %c0_178 = arith.constant 0 : index
    %c0_179 = arith.constant 0 : index
    %1052 = vector.load %arg3[%c58, %c0_178, %c0_179] : memref<147x8x128xf32, #tpu.memory_space<vmem>>, vector<1x8x128xf32>
    %1053 = vector.shape_cast %1052 : vector<1x8x128xf32> to vector<8x128xf32>
    %c58_180 = arith.constant 58 : index
    %1054 = memref.load %arg1[%c58_180] : memref<588xf32, #tpu.memory_space<smem>>
    %1055 = vector.broadcast %1054 : f32 to vector<8x128xf32>
    %1056 = arith.mulf %1055, %1053 : vector<8x128xf32>
    %1057 = arith.addf %1039, %1056 : vector<8x128xf32>
    %c205 = arith.constant 205 : index
    %1058 = memref.load %arg1[%c205] : memref<588xf32, #tpu.memory_space<smem>>
    %1059 = vector.broadcast %1058 : f32 to vector<8x128xf32>
    %1060 = arith.mulf %1059, %1053 : vector<8x128xf32>
    %1061 = arith.addf %1043, %1060 : vector<8x128xf32>
    %c352 = arith.constant 352 : index
    %1062 = memref.load %arg1[%c352] : memref<588xf32, #tpu.memory_space<smem>>
    %1063 = vector.broadcast %1062 : f32 to vector<8x128xf32>
    %1064 = arith.mulf %1063, %1053 : vector<8x128xf32>
    %1065 = arith.addf %1047, %1064 : vector<8x128xf32>
    %c499 = arith.constant 499 : index
    %1066 = memref.load %arg1[%c499] : memref<588xf32, #tpu.memory_space<smem>>
    %1067 = vector.broadcast %1066 : f32 to vector<8x128xf32>
    %1068 = arith.mulf %1067, %1053 : vector<8x128xf32>
    %1069 = arith.addf %1051, %1068 : vector<8x128xf32>
    %c59 = arith.constant 59 : index
    %c0_181 = arith.constant 0 : index
    %c0_182 = arith.constant 0 : index
    %1070 = vector.load %arg3[%c59, %c0_181, %c0_182] : memref<147x8x128xf32, #tpu.memory_space<vmem>>, vector<1x8x128xf32>
    %1071 = vector.shape_cast %1070 : vector<1x8x128xf32> to vector<8x128xf32>
    %c59_183 = arith.constant 59 : index
    %1072 = memref.load %arg1[%c59_183] : memref<588xf32, #tpu.memory_space<smem>>
    %1073 = vector.broadcast %1072 : f32 to vector<8x128xf32>
    %1074 = arith.mulf %1073, %1071 : vector<8x128xf32>
    %1075 = arith.addf %1057, %1074 : vector<8x128xf32>
    %c206 = arith.constant 206 : index
    %1076 = memref.load %arg1[%c206] : memref<588xf32, #tpu.memory_space<smem>>
    %1077 = vector.broadcast %1076 : f32 to vector<8x128xf32>
    %1078 = arith.mulf %1077, %1071 : vector<8x128xf32>
    %1079 = arith.addf %1061, %1078 : vector<8x128xf32>
    %c353 = arith.constant 353 : index
    %1080 = memref.load %arg1[%c353] : memref<588xf32, #tpu.memory_space<smem>>
    %1081 = vector.broadcast %1080 : f32 to vector<8x128xf32>
    %1082 = arith.mulf %1081, %1071 : vector<8x128xf32>
    %1083 = arith.addf %1065, %1082 : vector<8x128xf32>
    %c500 = arith.constant 500 : index
    %1084 = memref.load %arg1[%c500] : memref<588xf32, #tpu.memory_space<smem>>
    %1085 = vector.broadcast %1084 : f32 to vector<8x128xf32>
    %1086 = arith.mulf %1085, %1071 : vector<8x128xf32>
    %1087 = arith.addf %1069, %1086 : vector<8x128xf32>
    %c60 = arith.constant 60 : index
    %c0_184 = arith.constant 0 : index
    %c0_185 = arith.constant 0 : index
    %1088 = vector.load %arg3[%c60, %c0_184, %c0_185] : memref<147x8x128xf32, #tpu.memory_space<vmem>>, vector<1x8x128xf32>
    %1089 = vector.shape_cast %1088 : vector<1x8x128xf32> to vector<8x128xf32>
    %c60_186 = arith.constant 60 : index
    %1090 = memref.load %arg1[%c60_186] : memref<588xf32, #tpu.memory_space<smem>>
    %1091 = vector.broadcast %1090 : f32 to vector<8x128xf32>
    %1092 = arith.mulf %1091, %1089 : vector<8x128xf32>
    %1093 = arith.addf %1075, %1092 : vector<8x128xf32>
    %c207 = arith.constant 207 : index
    %1094 = memref.load %arg1[%c207] : memref<588xf32, #tpu.memory_space<smem>>
    %1095 = vector.broadcast %1094 : f32 to vector<8x128xf32>
    %1096 = arith.mulf %1095, %1089 : vector<8x128xf32>
    %1097 = arith.addf %1079, %1096 : vector<8x128xf32>
    %c354 = arith.constant 354 : index
    %1098 = memref.load %arg1[%c354] : memref<588xf32, #tpu.memory_space<smem>>
    %1099 = vector.broadcast %1098 : f32 to vector<8x128xf32>
    %1100 = arith.mulf %1099, %1089 : vector<8x128xf32>
    %1101 = arith.addf %1083, %1100 : vector<8x128xf32>
    %c501 = arith.constant 501 : index
    %1102 = memref.load %arg1[%c501] : memref<588xf32, #tpu.memory_space<smem>>
    %1103 = vector.broadcast %1102 : f32 to vector<8x128xf32>
    %1104 = arith.mulf %1103, %1089 : vector<8x128xf32>
    %1105 = arith.addf %1087, %1104 : vector<8x128xf32>
    %c61 = arith.constant 61 : index
    %c0_187 = arith.constant 0 : index
    %c0_188 = arith.constant 0 : index
    %1106 = vector.load %arg3[%c61, %c0_187, %c0_188] : memref<147x8x128xf32, #tpu.memory_space<vmem>>, vector<1x8x128xf32>
    %1107 = vector.shape_cast %1106 : vector<1x8x128xf32> to vector<8x128xf32>
    %c61_189 = arith.constant 61 : index
    %1108 = memref.load %arg1[%c61_189] : memref<588xf32, #tpu.memory_space<smem>>
    %1109 = vector.broadcast %1108 : f32 to vector<8x128xf32>
    %1110 = arith.mulf %1109, %1107 : vector<8x128xf32>
    %1111 = arith.addf %1093, %1110 : vector<8x128xf32>
    %c208 = arith.constant 208 : index
    %1112 = memref.load %arg1[%c208] : memref<588xf32, #tpu.memory_space<smem>>
    %1113 = vector.broadcast %1112 : f32 to vector<8x128xf32>
    %1114 = arith.mulf %1113, %1107 : vector<8x128xf32>
    %1115 = arith.addf %1097, %1114 : vector<8x128xf32>
    %c355 = arith.constant 355 : index
    %1116 = memref.load %arg1[%c355] : memref<588xf32, #tpu.memory_space<smem>>
    %1117 = vector.broadcast %1116 : f32 to vector<8x128xf32>
    %1118 = arith.mulf %1117, %1107 : vector<8x128xf32>
    %1119 = arith.addf %1101, %1118 : vector<8x128xf32>
    %c502 = arith.constant 502 : index
    %1120 = memref.load %arg1[%c502] : memref<588xf32, #tpu.memory_space<smem>>
    %1121 = vector.broadcast %1120 : f32 to vector<8x128xf32>
    %1122 = arith.mulf %1121, %1107 : vector<8x128xf32>
    %1123 = arith.addf %1105, %1122 : vector<8x128xf32>
    %c62 = arith.constant 62 : index
    %c0_190 = arith.constant 0 : index
    %c0_191 = arith.constant 0 : index
    %1124 = vector.load %arg3[%c62, %c0_190, %c0_191] : memref<147x8x128xf32, #tpu.memory_space<vmem>>, vector<1x8x128xf32>
    %1125 = vector.shape_cast %1124 : vector<1x8x128xf32> to vector<8x128xf32>
    %c62_192 = arith.constant 62 : index
    %1126 = memref.load %arg1[%c62_192] : memref<588xf32, #tpu.memory_space<smem>>
    %1127 = vector.broadcast %1126 : f32 to vector<8x128xf32>
    %1128 = arith.mulf %1127, %1125 : vector<8x128xf32>
    %1129 = arith.addf %1111, %1128 : vector<8x128xf32>
    %c209 = arith.constant 209 : index
    %1130 = memref.load %arg1[%c209] : memref<588xf32, #tpu.memory_space<smem>>
    %1131 = vector.broadcast %1130 : f32 to vector<8x128xf32>
    %1132 = arith.mulf %1131, %1125 : vector<8x128xf32>
    %1133 = arith.addf %1115, %1132 : vector<8x128xf32>
    %c356 = arith.constant 356 : index
    %1134 = memref.load %arg1[%c356] : memref<588xf32, #tpu.memory_space<smem>>
    %1135 = vector.broadcast %1134 : f32 to vector<8x128xf32>
    %1136 = arith.mulf %1135, %1125 : vector<8x128xf32>
    %1137 = arith.addf %1119, %1136 : vector<8x128xf32>
    %c503 = arith.constant 503 : index
    %1138 = memref.load %arg1[%c503] : memref<588xf32, #tpu.memory_space<smem>>
    %1139 = vector.broadcast %1138 : f32 to vector<8x128xf32>
    %1140 = arith.mulf %1139, %1125 : vector<8x128xf32>
    %1141 = arith.addf %1123, %1140 : vector<8x128xf32>
    %c63 = arith.constant 63 : index
    %c0_193 = arith.constant 0 : index
    %c0_194 = arith.constant 0 : index
    %1142 = vector.load %arg3[%c63, %c0_193, %c0_194] : memref<147x8x128xf32, #tpu.memory_space<vmem>>, vector<1x8x128xf32>
    %1143 = vector.shape_cast %1142 : vector<1x8x128xf32> to vector<8x128xf32>
    %c63_195 = arith.constant 63 : index
    %1144 = memref.load %arg1[%c63_195] : memref<588xf32, #tpu.memory_space<smem>>
    %1145 = vector.broadcast %1144 : f32 to vector<8x128xf32>
    %1146 = arith.mulf %1145, %1143 : vector<8x128xf32>
    %1147 = arith.addf %1129, %1146 : vector<8x128xf32>
    %c210 = arith.constant 210 : index
    %1148 = memref.load %arg1[%c210] : memref<588xf32, #tpu.memory_space<smem>>
    %1149 = vector.broadcast %1148 : f32 to vector<8x128xf32>
    %1150 = arith.mulf %1149, %1143 : vector<8x128xf32>
    %1151 = arith.addf %1133, %1150 : vector<8x128xf32>
    %c357 = arith.constant 357 : index
    %1152 = memref.load %arg1[%c357] : memref<588xf32, #tpu.memory_space<smem>>
    %1153 = vector.broadcast %1152 : f32 to vector<8x128xf32>
    %1154 = arith.mulf %1153, %1143 : vector<8x128xf32>
    %1155 = arith.addf %1137, %1154 : vector<8x128xf32>
    %c504 = arith.constant 504 : index
    %1156 = memref.load %arg1[%c504] : memref<588xf32, #tpu.memory_space<smem>>
    %1157 = vector.broadcast %1156 : f32 to vector<8x128xf32>
    %1158 = arith.mulf %1157, %1143 : vector<8x128xf32>
    %1159 = arith.addf %1141, %1158 : vector<8x128xf32>
    %c64 = arith.constant 64 : index
    %c0_196 = arith.constant 0 : index
    %c0_197 = arith.constant 0 : index
    %1160 = vector.load %arg3[%c64, %c0_196, %c0_197] : memref<147x8x128xf32, #tpu.memory_space<vmem>>, vector<1x8x128xf32>
    %1161 = vector.shape_cast %1160 : vector<1x8x128xf32> to vector<8x128xf32>
    %c64_198 = arith.constant 64 : index
    %1162 = memref.load %arg1[%c64_198] : memref<588xf32, #tpu.memory_space<smem>>
    %1163 = vector.broadcast %1162 : f32 to vector<8x128xf32>
    %1164 = arith.mulf %1163, %1161 : vector<8x128xf32>
    %1165 = arith.addf %1147, %1164 : vector<8x128xf32>
    %c211 = arith.constant 211 : index
    %1166 = memref.load %arg1[%c211] : memref<588xf32, #tpu.memory_space<smem>>
    %1167 = vector.broadcast %1166 : f32 to vector<8x128xf32>
    %1168 = arith.mulf %1167, %1161 : vector<8x128xf32>
    %1169 = arith.addf %1151, %1168 : vector<8x128xf32>
    %c358 = arith.constant 358 : index
    %1170 = memref.load %arg1[%c358] : memref<588xf32, #tpu.memory_space<smem>>
    %1171 = vector.broadcast %1170 : f32 to vector<8x128xf32>
    %1172 = arith.mulf %1171, %1161 : vector<8x128xf32>
    %1173 = arith.addf %1155, %1172 : vector<8x128xf32>
    %c505 = arith.constant 505 : index
    %1174 = memref.load %arg1[%c505] : memref<588xf32, #tpu.memory_space<smem>>
    %1175 = vector.broadcast %1174 : f32 to vector<8x128xf32>
    %1176 = arith.mulf %1175, %1161 : vector<8x128xf32>
    %1177 = arith.addf %1159, %1176 : vector<8x128xf32>
    %c65 = arith.constant 65 : index
    %c0_199 = arith.constant 0 : index
    %c0_200 = arith.constant 0 : index
    %1178 = vector.load %arg3[%c65, %c0_199, %c0_200] : memref<147x8x128xf32, #tpu.memory_space<vmem>>, vector<1x8x128xf32>
    %1179 = vector.shape_cast %1178 : vector<1x8x128xf32> to vector<8x128xf32>
    %c65_201 = arith.constant 65 : index
    %1180 = memref.load %arg1[%c65_201] : memref<588xf32, #tpu.memory_space<smem>>
    %1181 = vector.broadcast %1180 : f32 to vector<8x128xf32>
    %1182 = arith.mulf %1181, %1179 : vector<8x128xf32>
    %1183 = arith.addf %1165, %1182 : vector<8x128xf32>
    %c212 = arith.constant 212 : index
    %1184 = memref.load %arg1[%c212] : memref<588xf32, #tpu.memory_space<smem>>
    %1185 = vector.broadcast %1184 : f32 to vector<8x128xf32>
    %1186 = arith.mulf %1185, %1179 : vector<8x128xf32>
    %1187 = arith.addf %1169, %1186 : vector<8x128xf32>
    %c359 = arith.constant 359 : index
    %1188 = memref.load %arg1[%c359] : memref<588xf32, #tpu.memory_space<smem>>
    %1189 = vector.broadcast %1188 : f32 to vector<8x128xf32>
    %1190 = arith.mulf %1189, %1179 : vector<8x128xf32>
    %1191 = arith.addf %1173, %1190 : vector<8x128xf32>
    %c506 = arith.constant 506 : index
    %1192 = memref.load %arg1[%c506] : memref<588xf32, #tpu.memory_space<smem>>
    %1193 = vector.broadcast %1192 : f32 to vector<8x128xf32>
    %1194 = arith.mulf %1193, %1179 : vector<8x128xf32>
    %1195 = arith.addf %1177, %1194 : vector<8x128xf32>
    %c66 = arith.constant 66 : index
    %c0_202 = arith.constant 0 : index
    %c0_203 = arith.constant 0 : index
    %1196 = vector.load %arg3[%c66, %c0_202, %c0_203] : memref<147x8x128xf32, #tpu.memory_space<vmem>>, vector<1x8x128xf32>
    %1197 = vector.shape_cast %1196 : vector<1x8x128xf32> to vector<8x128xf32>
    %c66_204 = arith.constant 66 : index
    %1198 = memref.load %arg1[%c66_204] : memref<588xf32, #tpu.memory_space<smem>>
    %1199 = vector.broadcast %1198 : f32 to vector<8x128xf32>
    %1200 = arith.mulf %1199, %1197 : vector<8x128xf32>
    %1201 = arith.addf %1183, %1200 : vector<8x128xf32>
    %c213 = arith.constant 213 : index
    %1202 = memref.load %arg1[%c213] : memref<588xf32, #tpu.memory_space<smem>>
    %1203 = vector.broadcast %1202 : f32 to vector<8x128xf32>
    %1204 = arith.mulf %1203, %1197 : vector<8x128xf32>
    %1205 = arith.addf %1187, %1204 : vector<8x128xf32>
    %c360 = arith.constant 360 : index
    %1206 = memref.load %arg1[%c360] : memref<588xf32, #tpu.memory_space<smem>>
    %1207 = vector.broadcast %1206 : f32 to vector<8x128xf32>
    %1208 = arith.mulf %1207, %1197 : vector<8x128xf32>
    %1209 = arith.addf %1191, %1208 : vector<8x128xf32>
    %c507 = arith.constant 507 : index
    %1210 = memref.load %arg1[%c507] : memref<588xf32, #tpu.memory_space<smem>>
    %1211 = vector.broadcast %1210 : f32 to vector<8x128xf32>
    %1212 = arith.mulf %1211, %1197 : vector<8x128xf32>
    %1213 = arith.addf %1195, %1212 : vector<8x128xf32>
    %c67 = arith.constant 67 : index
    %c0_205 = arith.constant 0 : index
    %c0_206 = arith.constant 0 : index
    %1214 = vector.load %arg3[%c67, %c0_205, %c0_206] : memref<147x8x128xf32, #tpu.memory_space<vmem>>, vector<1x8x128xf32>
    %1215 = vector.shape_cast %1214 : vector<1x8x128xf32> to vector<8x128xf32>
    %c67_207 = arith.constant 67 : index
    %1216 = memref.load %arg1[%c67_207] : memref<588xf32, #tpu.memory_space<smem>>
    %1217 = vector.broadcast %1216 : f32 to vector<8x128xf32>
    %1218 = arith.mulf %1217, %1215 : vector<8x128xf32>
    %1219 = arith.addf %1201, %1218 : vector<8x128xf32>
    %c214 = arith.constant 214 : index
    %1220 = memref.load %arg1[%c214] : memref<588xf32, #tpu.memory_space<smem>>
    %1221 = vector.broadcast %1220 : f32 to vector<8x128xf32>
    %1222 = arith.mulf %1221, %1215 : vector<8x128xf32>
    %1223 = arith.addf %1205, %1222 : vector<8x128xf32>
    %c361 = arith.constant 361 : index
    %1224 = memref.load %arg1[%c361] : memref<588xf32, #tpu.memory_space<smem>>
    %1225 = vector.broadcast %1224 : f32 to vector<8x128xf32>
    %1226 = arith.mulf %1225, %1215 : vector<8x128xf32>
    %1227 = arith.addf %1209, %1226 : vector<8x128xf32>
    %c508 = arith.constant 508 : index
    %1228 = memref.load %arg1[%c508] : memref<588xf32, #tpu.memory_space<smem>>
    %1229 = vector.broadcast %1228 : f32 to vector<8x128xf32>
    %1230 = arith.mulf %1229, %1215 : vector<8x128xf32>
    %1231 = arith.addf %1213, %1230 : vector<8x128xf32>
    %c68 = arith.constant 68 : index
    %c0_208 = arith.constant 0 : index
    %c0_209 = arith.constant 0 : index
    %1232 = vector.load %arg3[%c68, %c0_208, %c0_209] : memref<147x8x128xf32, #tpu.memory_space<vmem>>, vector<1x8x128xf32>
    %1233 = vector.shape_cast %1232 : vector<1x8x128xf32> to vector<8x128xf32>
    %c68_210 = arith.constant 68 : index
    %1234 = memref.load %arg1[%c68_210] : memref<588xf32, #tpu.memory_space<smem>>
    %1235 = vector.broadcast %1234 : f32 to vector<8x128xf32>
    %1236 = arith.mulf %1235, %1233 : vector<8x128xf32>
    %1237 = arith.addf %1219, %1236 : vector<8x128xf32>
    %c215 = arith.constant 215 : index
    %1238 = memref.load %arg1[%c215] : memref<588xf32, #tpu.memory_space<smem>>
    %1239 = vector.broadcast %1238 : f32 to vector<8x128xf32>
    %1240 = arith.mulf %1239, %1233 : vector<8x128xf32>
    %1241 = arith.addf %1223, %1240 : vector<8x128xf32>
    %c362 = arith.constant 362 : index
    %1242 = memref.load %arg1[%c362] : memref<588xf32, #tpu.memory_space<smem>>
    %1243 = vector.broadcast %1242 : f32 to vector<8x128xf32>
    %1244 = arith.mulf %1243, %1233 : vector<8x128xf32>
    %1245 = arith.addf %1227, %1244 : vector<8x128xf32>
    %c509 = arith.constant 509 : index
    %1246 = memref.load %arg1[%c509] : memref<588xf32, #tpu.memory_space<smem>>
    %1247 = vector.broadcast %1246 : f32 to vector<8x128xf32>
    %1248 = arith.mulf %1247, %1233 : vector<8x128xf32>
    %1249 = arith.addf %1231, %1248 : vector<8x128xf32>
    %c69 = arith.constant 69 : index
    %c0_211 = arith.constant 0 : index
    %c0_212 = arith.constant 0 : index
    %1250 = vector.load %arg3[%c69, %c0_211, %c0_212] : memref<147x8x128xf32, #tpu.memory_space<vmem>>, vector<1x8x128xf32>
    %1251 = vector.shape_cast %1250 : vector<1x8x128xf32> to vector<8x128xf32>
    %c69_213 = arith.constant 69 : index
    %1252 = memref.load %arg1[%c69_213] : memref<588xf32, #tpu.memory_space<smem>>
    %1253 = vector.broadcast %1252 : f32 to vector<8x128xf32>
    %1254 = arith.mulf %1253, %1251 : vector<8x128xf32>
    %1255 = arith.addf %1237, %1254 : vector<8x128xf32>
    %c216 = arith.constant 216 : index
    %1256 = memref.load %arg1[%c216] : memref<588xf32, #tpu.memory_space<smem>>
    %1257 = vector.broadcast %1256 : f32 to vector<8x128xf32>
    %1258 = arith.mulf %1257, %1251 : vector<8x128xf32>
    %1259 = arith.addf %1241, %1258 : vector<8x128xf32>
    %c363 = arith.constant 363 : index
    %1260 = memref.load %arg1[%c363] : memref<588xf32, #tpu.memory_space<smem>>
    %1261 = vector.broadcast %1260 : f32 to vector<8x128xf32>
    %1262 = arith.mulf %1261, %1251 : vector<8x128xf32>
    %1263 = arith.addf %1245, %1262 : vector<8x128xf32>
    %c510 = arith.constant 510 : index
    %1264 = memref.load %arg1[%c510] : memref<588xf32, #tpu.memory_space<smem>>
    %1265 = vector.broadcast %1264 : f32 to vector<8x128xf32>
    %1266 = arith.mulf %1265, %1251 : vector<8x128xf32>
    %1267 = arith.addf %1249, %1266 : vector<8x128xf32>
    %c70 = arith.constant 70 : index
    %c0_214 = arith.constant 0 : index
    %c0_215 = arith.constant 0 : index
    %1268 = vector.load %arg3[%c70, %c0_214, %c0_215] : memref<147x8x128xf32, #tpu.memory_space<vmem>>, vector<1x8x128xf32>
    %1269 = vector.shape_cast %1268 : vector<1x8x128xf32> to vector<8x128xf32>
    %c70_216 = arith.constant 70 : index
    %1270 = memref.load %arg1[%c70_216] : memref<588xf32, #tpu.memory_space<smem>>
    %1271 = vector.broadcast %1270 : f32 to vector<8x128xf32>
    %1272 = arith.mulf %1271, %1269 : vector<8x128xf32>
    %1273 = arith.addf %1255, %1272 : vector<8x128xf32>
    %c217 = arith.constant 217 : index
    %1274 = memref.load %arg1[%c217] : memref<588xf32, #tpu.memory_space<smem>>
    %1275 = vector.broadcast %1274 : f32 to vector<8x128xf32>
    %1276 = arith.mulf %1275, %1269 : vector<8x128xf32>
    %1277 = arith.addf %1259, %1276 : vector<8x128xf32>
    %c364 = arith.constant 364 : index
    %1278 = memref.load %arg1[%c364] : memref<588xf32, #tpu.memory_space<smem>>
    %1279 = vector.broadcast %1278 : f32 to vector<8x128xf32>
    %1280 = arith.mulf %1279, %1269 : vector<8x128xf32>
    %1281 = arith.addf %1263, %1280 : vector<8x128xf32>
    %c511 = arith.constant 511 : index
    %1282 = memref.load %arg1[%c511] : memref<588xf32, #tpu.memory_space<smem>>
    %1283 = vector.broadcast %1282 : f32 to vector<8x128xf32>
    %1284 = arith.mulf %1283, %1269 : vector<8x128xf32>
    %1285 = arith.addf %1267, %1284 : vector<8x128xf32>
    %c71 = arith.constant 71 : index
    %c0_217 = arith.constant 0 : index
    %c0_218 = arith.constant 0 : index
    %1286 = vector.load %arg3[%c71, %c0_217, %c0_218] : memref<147x8x128xf32, #tpu.memory_space<vmem>>, vector<1x8x128xf32>
    %1287 = vector.shape_cast %1286 : vector<1x8x128xf32> to vector<8x128xf32>
    %c71_219 = arith.constant 71 : index
    %1288 = memref.load %arg1[%c71_219] : memref<588xf32, #tpu.memory_space<smem>>
    %1289 = vector.broadcast %1288 : f32 to vector<8x128xf32>
    %1290 = arith.mulf %1289, %1287 : vector<8x128xf32>
    %1291 = arith.addf %1273, %1290 : vector<8x128xf32>
    %c218 = arith.constant 218 : index
    %1292 = memref.load %arg1[%c218] : memref<588xf32, #tpu.memory_space<smem>>
    %1293 = vector.broadcast %1292 : f32 to vector<8x128xf32>
    %1294 = arith.mulf %1293, %1287 : vector<8x128xf32>
    %1295 = arith.addf %1277, %1294 : vector<8x128xf32>
    %c365 = arith.constant 365 : index
    %1296 = memref.load %arg1[%c365] : memref<588xf32, #tpu.memory_space<smem>>
    %1297 = vector.broadcast %1296 : f32 to vector<8x128xf32>
    %1298 = arith.mulf %1297, %1287 : vector<8x128xf32>
    %1299 = arith.addf %1281, %1298 : vector<8x128xf32>
    %c512 = arith.constant 512 : index
    %1300 = memref.load %arg1[%c512] : memref<588xf32, #tpu.memory_space<smem>>
    %1301 = vector.broadcast %1300 : f32 to vector<8x128xf32>
    %1302 = arith.mulf %1301, %1287 : vector<8x128xf32>
    %1303 = arith.addf %1285, %1302 : vector<8x128xf32>
    %c72 = arith.constant 72 : index
    %c0_220 = arith.constant 0 : index
    %c0_221 = arith.constant 0 : index
    %1304 = vector.load %arg3[%c72, %c0_220, %c0_221] : memref<147x8x128xf32, #tpu.memory_space<vmem>>, vector<1x8x128xf32>
    %1305 = vector.shape_cast %1304 : vector<1x8x128xf32> to vector<8x128xf32>
    %c72_222 = arith.constant 72 : index
    %1306 = memref.load %arg1[%c72_222] : memref<588xf32, #tpu.memory_space<smem>>
    %1307 = vector.broadcast %1306 : f32 to vector<8x128xf32>
    %1308 = arith.mulf %1307, %1305 : vector<8x128xf32>
    %1309 = arith.addf %1291, %1308 : vector<8x128xf32>
    %c219 = arith.constant 219 : index
    %1310 = memref.load %arg1[%c219] : memref<588xf32, #tpu.memory_space<smem>>
    %1311 = vector.broadcast %1310 : f32 to vector<8x128xf32>
    %1312 = arith.mulf %1311, %1305 : vector<8x128xf32>
    %1313 = arith.addf %1295, %1312 : vector<8x128xf32>
    %c366 = arith.constant 366 : index
    %1314 = memref.load %arg1[%c366] : memref<588xf32, #tpu.memory_space<smem>>
    %1315 = vector.broadcast %1314 : f32 to vector<8x128xf32>
    %1316 = arith.mulf %1315, %1305 : vector<8x128xf32>
    %1317 = arith.addf %1299, %1316 : vector<8x128xf32>
    %c513 = arith.constant 513 : index
    %1318 = memref.load %arg1[%c513] : memref<588xf32, #tpu.memory_space<smem>>
    %1319 = vector.broadcast %1318 : f32 to vector<8x128xf32>
    %1320 = arith.mulf %1319, %1305 : vector<8x128xf32>
    %1321 = arith.addf %1303, %1320 : vector<8x128xf32>
    %c73 = arith.constant 73 : index
    %c0_223 = arith.constant 0 : index
    %c0_224 = arith.constant 0 : index
    %1322 = vector.load %arg3[%c73, %c0_223, %c0_224] : memref<147x8x128xf32, #tpu.memory_space<vmem>>, vector<1x8x128xf32>
    %1323 = vector.shape_cast %1322 : vector<1x8x128xf32> to vector<8x128xf32>
    %c73_225 = arith.constant 73 : index
    %1324 = memref.load %arg1[%c73_225] : memref<588xf32, #tpu.memory_space<smem>>
    %1325 = vector.broadcast %1324 : f32 to vector<8x128xf32>
    %1326 = arith.mulf %1325, %1323 : vector<8x128xf32>
    %1327 = arith.addf %1309, %1326 : vector<8x128xf32>
    %c220 = arith.constant 220 : index
    %1328 = memref.load %arg1[%c220] : memref<588xf32, #tpu.memory_space<smem>>
    %1329 = vector.broadcast %1328 : f32 to vector<8x128xf32>
    %1330 = arith.mulf %1329, %1323 : vector<8x128xf32>
    %1331 = arith.addf %1313, %1330 : vector<8x128xf32>
    %c367 = arith.constant 367 : index
    %1332 = memref.load %arg1[%c367] : memref<588xf32, #tpu.memory_space<smem>>
    %1333 = vector.broadcast %1332 : f32 to vector<8x128xf32>
    %1334 = arith.mulf %1333, %1323 : vector<8x128xf32>
    %1335 = arith.addf %1317, %1334 : vector<8x128xf32>
    %c514 = arith.constant 514 : index
    %1336 = memref.load %arg1[%c514] : memref<588xf32, #tpu.memory_space<smem>>
    %1337 = vector.broadcast %1336 : f32 to vector<8x128xf32>
    %1338 = arith.mulf %1337, %1323 : vector<8x128xf32>
    %1339 = arith.addf %1321, %1338 : vector<8x128xf32>
    %c74 = arith.constant 74 : index
    %c0_226 = arith.constant 0 : index
    %c0_227 = arith.constant 0 : index
    %1340 = vector.load %arg3[%c74, %c0_226, %c0_227] : memref<147x8x128xf32, #tpu.memory_space<vmem>>, vector<1x8x128xf32>
    %1341 = vector.shape_cast %1340 : vector<1x8x128xf32> to vector<8x128xf32>
    %c74_228 = arith.constant 74 : index
    %1342 = memref.load %arg1[%c74_228] : memref<588xf32, #tpu.memory_space<smem>>
    %1343 = vector.broadcast %1342 : f32 to vector<8x128xf32>
    %1344 = arith.mulf %1343, %1341 : vector<8x128xf32>
    %1345 = arith.addf %1327, %1344 : vector<8x128xf32>
    %c221 = arith.constant 221 : index
    %1346 = memref.load %arg1[%c221] : memref<588xf32, #tpu.memory_space<smem>>
    %1347 = vector.broadcast %1346 : f32 to vector<8x128xf32>
    %1348 = arith.mulf %1347, %1341 : vector<8x128xf32>
    %1349 = arith.addf %1331, %1348 : vector<8x128xf32>
    %c368 = arith.constant 368 : index
    %1350 = memref.load %arg1[%c368] : memref<588xf32, #tpu.memory_space<smem>>
    %1351 = vector.broadcast %1350 : f32 to vector<8x128xf32>
    %1352 = arith.mulf %1351, %1341 : vector<8x128xf32>
    %1353 = arith.addf %1335, %1352 : vector<8x128xf32>
    %c515 = arith.constant 515 : index
    %1354 = memref.load %arg1[%c515] : memref<588xf32, #tpu.memory_space<smem>>
    %1355 = vector.broadcast %1354 : f32 to vector<8x128xf32>
    %1356 = arith.mulf %1355, %1341 : vector<8x128xf32>
    %1357 = arith.addf %1339, %1356 : vector<8x128xf32>
    %c75 = arith.constant 75 : index
    %c0_229 = arith.constant 0 : index
    %c0_230 = arith.constant 0 : index
    %1358 = vector.load %arg3[%c75, %c0_229, %c0_230] : memref<147x8x128xf32, #tpu.memory_space<vmem>>, vector<1x8x128xf32>
    %1359 = vector.shape_cast %1358 : vector<1x8x128xf32> to vector<8x128xf32>
    %c75_231 = arith.constant 75 : index
    %1360 = memref.load %arg1[%c75_231] : memref<588xf32, #tpu.memory_space<smem>>
    %1361 = vector.broadcast %1360 : f32 to vector<8x128xf32>
    %1362 = arith.mulf %1361, %1359 : vector<8x128xf32>
    %1363 = arith.addf %1345, %1362 : vector<8x128xf32>
    %c222 = arith.constant 222 : index
    %1364 = memref.load %arg1[%c222] : memref<588xf32, #tpu.memory_space<smem>>
    %1365 = vector.broadcast %1364 : f32 to vector<8x128xf32>
    %1366 = arith.mulf %1365, %1359 : vector<8x128xf32>
    %1367 = arith.addf %1349, %1366 : vector<8x128xf32>
    %c369 = arith.constant 369 : index
    %1368 = memref.load %arg1[%c369] : memref<588xf32, #tpu.memory_space<smem>>
    %1369 = vector.broadcast %1368 : f32 to vector<8x128xf32>
    %1370 = arith.mulf %1369, %1359 : vector<8x128xf32>
    %1371 = arith.addf %1353, %1370 : vector<8x128xf32>
    %c516 = arith.constant 516 : index
    %1372 = memref.load %arg1[%c516] : memref<588xf32, #tpu.memory_space<smem>>
    %1373 = vector.broadcast %1372 : f32 to vector<8x128xf32>
    %1374 = arith.mulf %1373, %1359 : vector<8x128xf32>
    %1375 = arith.addf %1357, %1374 : vector<8x128xf32>
    %c76 = arith.constant 76 : index
    %c0_232 = arith.constant 0 : index
    %c0_233 = arith.constant 0 : index
    %1376 = vector.load %arg3[%c76, %c0_232, %c0_233] : memref<147x8x128xf32, #tpu.memory_space<vmem>>, vector<1x8x128xf32>
    %1377 = vector.shape_cast %1376 : vector<1x8x128xf32> to vector<8x128xf32>
    %c76_234 = arith.constant 76 : index
    %1378 = memref.load %arg1[%c76_234] : memref<588xf32, #tpu.memory_space<smem>>
    %1379 = vector.broadcast %1378 : f32 to vector<8x128xf32>
    %1380 = arith.mulf %1379, %1377 : vector<8x128xf32>
    %1381 = arith.addf %1363, %1380 : vector<8x128xf32>
    %c223 = arith.constant 223 : index
    %1382 = memref.load %arg1[%c223] : memref<588xf32, #tpu.memory_space<smem>>
    %1383 = vector.broadcast %1382 : f32 to vector<8x128xf32>
    %1384 = arith.mulf %1383, %1377 : vector<8x128xf32>
    %1385 = arith.addf %1367, %1384 : vector<8x128xf32>
    %c370 = arith.constant 370 : index
    %1386 = memref.load %arg1[%c370] : memref<588xf32, #tpu.memory_space<smem>>
    %1387 = vector.broadcast %1386 : f32 to vector<8x128xf32>
    %1388 = arith.mulf %1387, %1377 : vector<8x128xf32>
    %1389 = arith.addf %1371, %1388 : vector<8x128xf32>
    %c517 = arith.constant 517 : index
    %1390 = memref.load %arg1[%c517] : memref<588xf32, #tpu.memory_space<smem>>
    %1391 = vector.broadcast %1390 : f32 to vector<8x128xf32>
    %1392 = arith.mulf %1391, %1377 : vector<8x128xf32>
    %1393 = arith.addf %1375, %1392 : vector<8x128xf32>
    %c77 = arith.constant 77 : index
    %c0_235 = arith.constant 0 : index
    %c0_236 = arith.constant 0 : index
    %1394 = vector.load %arg3[%c77, %c0_235, %c0_236] : memref<147x8x128xf32, #tpu.memory_space<vmem>>, vector<1x8x128xf32>
    %1395 = vector.shape_cast %1394 : vector<1x8x128xf32> to vector<8x128xf32>
    %c77_237 = arith.constant 77 : index
    %1396 = memref.load %arg1[%c77_237] : memref<588xf32, #tpu.memory_space<smem>>
    %1397 = vector.broadcast %1396 : f32 to vector<8x128xf32>
    %1398 = arith.mulf %1397, %1395 : vector<8x128xf32>
    %1399 = arith.addf %1381, %1398 : vector<8x128xf32>
    %c224 = arith.constant 224 : index
    %1400 = memref.load %arg1[%c224] : memref<588xf32, #tpu.memory_space<smem>>
    %1401 = vector.broadcast %1400 : f32 to vector<8x128xf32>
    %1402 = arith.mulf %1401, %1395 : vector<8x128xf32>
    %1403 = arith.addf %1385, %1402 : vector<8x128xf32>
    %c371 = arith.constant 371 : index
    %1404 = memref.load %arg1[%c371] : memref<588xf32, #tpu.memory_space<smem>>
    %1405 = vector.broadcast %1404 : f32 to vector<8x128xf32>
    %1406 = arith.mulf %1405, %1395 : vector<8x128xf32>
    %1407 = arith.addf %1389, %1406 : vector<8x128xf32>
    %c518 = arith.constant 518 : index
    %1408 = memref.load %arg1[%c518] : memref<588xf32, #tpu.memory_space<smem>>
    %1409 = vector.broadcast %1408 : f32 to vector<8x128xf32>
    %1410 = arith.mulf %1409, %1395 : vector<8x128xf32>
    %1411 = arith.addf %1393, %1410 : vector<8x128xf32>
    %c78 = arith.constant 78 : index
    %c0_238 = arith.constant 0 : index
    %c0_239 = arith.constant 0 : index
    %1412 = vector.load %arg3[%c78, %c0_238, %c0_239] : memref<147x8x128xf32, #tpu.memory_space<vmem>>, vector<1x8x128xf32>
    %1413 = vector.shape_cast %1412 : vector<1x8x128xf32> to vector<8x128xf32>
    %c78_240 = arith.constant 78 : index
    %1414 = memref.load %arg1[%c78_240] : memref<588xf32, #tpu.memory_space<smem>>
    %1415 = vector.broadcast %1414 : f32 to vector<8x128xf32>
    %1416 = arith.mulf %1415, %1413 : vector<8x128xf32>
    %1417 = arith.addf %1399, %1416 : vector<8x128xf32>
    %c225 = arith.constant 225 : index
    %1418 = memref.load %arg1[%c225] : memref<588xf32, #tpu.memory_space<smem>>
    %1419 = vector.broadcast %1418 : f32 to vector<8x128xf32>
    %1420 = arith.mulf %1419, %1413 : vector<8x128xf32>
    %1421 = arith.addf %1403, %1420 : vector<8x128xf32>
    %c372 = arith.constant 372 : index
    %1422 = memref.load %arg1[%c372] : memref<588xf32, #tpu.memory_space<smem>>
    %1423 = vector.broadcast %1422 : f32 to vector<8x128xf32>
    %1424 = arith.mulf %1423, %1413 : vector<8x128xf32>
    %1425 = arith.addf %1407, %1424 : vector<8x128xf32>
    %c519 = arith.constant 519 : index
    %1426 = memref.load %arg1[%c519] : memref<588xf32, #tpu.memory_space<smem>>
    %1427 = vector.broadcast %1426 : f32 to vector<8x128xf32>
    %1428 = arith.mulf %1427, %1413 : vector<8x128xf32>
    %1429 = arith.addf %1411, %1428 : vector<8x128xf32>
    %c79 = arith.constant 79 : index
    %c0_241 = arith.constant 0 : index
    %c0_242 = arith.constant 0 : index
    %1430 = vector.load %arg3[%c79, %c0_241, %c0_242] : memref<147x8x128xf32, #tpu.memory_space<vmem>>, vector<1x8x128xf32>
    %1431 = vector.shape_cast %1430 : vector<1x8x128xf32> to vector<8x128xf32>
    %c79_243 = arith.constant 79 : index
    %1432 = memref.load %arg1[%c79_243] : memref<588xf32, #tpu.memory_space<smem>>
    %1433 = vector.broadcast %1432 : f32 to vector<8x128xf32>
    %1434 = arith.mulf %1433, %1431 : vector<8x128xf32>
    %1435 = arith.addf %1417, %1434 : vector<8x128xf32>
    %c226 = arith.constant 226 : index
    %1436 = memref.load %arg1[%c226] : memref<588xf32, #tpu.memory_space<smem>>
    %1437 = vector.broadcast %1436 : f32 to vector<8x128xf32>
    %1438 = arith.mulf %1437, %1431 : vector<8x128xf32>
    %1439 = arith.addf %1421, %1438 : vector<8x128xf32>
    %c373 = arith.constant 373 : index
    %1440 = memref.load %arg1[%c373] : memref<588xf32, #tpu.memory_space<smem>>
    %1441 = vector.broadcast %1440 : f32 to vector<8x128xf32>
    %1442 = arith.mulf %1441, %1431 : vector<8x128xf32>
    %1443 = arith.addf %1425, %1442 : vector<8x128xf32>
    %c520 = arith.constant 520 : index
    %1444 = memref.load %arg1[%c520] : memref<588xf32, #tpu.memory_space<smem>>
    %1445 = vector.broadcast %1444 : f32 to vector<8x128xf32>
    %1446 = arith.mulf %1445, %1431 : vector<8x128xf32>
    %1447 = arith.addf %1429, %1446 : vector<8x128xf32>
    %c80 = arith.constant 80 : index
    %c0_244 = arith.constant 0 : index
    %c0_245 = arith.constant 0 : index
    %1448 = vector.load %arg3[%c80, %c0_244, %c0_245] : memref<147x8x128xf32, #tpu.memory_space<vmem>>, vector<1x8x128xf32>
    %1449 = vector.shape_cast %1448 : vector<1x8x128xf32> to vector<8x128xf32>
    %c80_246 = arith.constant 80 : index
    %1450 = memref.load %arg1[%c80_246] : memref<588xf32, #tpu.memory_space<smem>>
    %1451 = vector.broadcast %1450 : f32 to vector<8x128xf32>
    %1452 = arith.mulf %1451, %1449 : vector<8x128xf32>
    %1453 = arith.addf %1435, %1452 : vector<8x128xf32>
    %c227 = arith.constant 227 : index
    %1454 = memref.load %arg1[%c227] : memref<588xf32, #tpu.memory_space<smem>>
    %1455 = vector.broadcast %1454 : f32 to vector<8x128xf32>
    %1456 = arith.mulf %1455, %1449 : vector<8x128xf32>
    %1457 = arith.addf %1439, %1456 : vector<8x128xf32>
    %c374 = arith.constant 374 : index
    %1458 = memref.load %arg1[%c374] : memref<588xf32, #tpu.memory_space<smem>>
    %1459 = vector.broadcast %1458 : f32 to vector<8x128xf32>
    %1460 = arith.mulf %1459, %1449 : vector<8x128xf32>
    %1461 = arith.addf %1443, %1460 : vector<8x128xf32>
    %c521 = arith.constant 521 : index
    %1462 = memref.load %arg1[%c521] : memref<588xf32, #tpu.memory_space<smem>>
    %1463 = vector.broadcast %1462 : f32 to vector<8x128xf32>
    %1464 = arith.mulf %1463, %1449 : vector<8x128xf32>
    %1465 = arith.addf %1447, %1464 : vector<8x128xf32>
    %c81 = arith.constant 81 : index
    %c0_247 = arith.constant 0 : index
    %c0_248 = arith.constant 0 : index
    %1466 = vector.load %arg3[%c81, %c0_247, %c0_248] : memref<147x8x128xf32, #tpu.memory_space<vmem>>, vector<1x8x128xf32>
    %1467 = vector.shape_cast %1466 : vector<1x8x128xf32> to vector<8x128xf32>
    %c81_249 = arith.constant 81 : index
    %1468 = memref.load %arg1[%c81_249] : memref<588xf32, #tpu.memory_space<smem>>
    %1469 = vector.broadcast %1468 : f32 to vector<8x128xf32>
    %1470 = arith.mulf %1469, %1467 : vector<8x128xf32>
    %1471 = arith.addf %1453, %1470 : vector<8x128xf32>
    %c228 = arith.constant 228 : index
    %1472 = memref.load %arg1[%c228] : memref<588xf32, #tpu.memory_space<smem>>
    %1473 = vector.broadcast %1472 : f32 to vector<8x128xf32>
    %1474 = arith.mulf %1473, %1467 : vector<8x128xf32>
    %1475 = arith.addf %1457, %1474 : vector<8x128xf32>
    %c375 = arith.constant 375 : index
    %1476 = memref.load %arg1[%c375] : memref<588xf32, #tpu.memory_space<smem>>
    %1477 = vector.broadcast %1476 : f32 to vector<8x128xf32>
    %1478 = arith.mulf %1477, %1467 : vector<8x128xf32>
    %1479 = arith.addf %1461, %1478 : vector<8x128xf32>
    %c522 = arith.constant 522 : index
    %1480 = memref.load %arg1[%c522] : memref<588xf32, #tpu.memory_space<smem>>
    %1481 = vector.broadcast %1480 : f32 to vector<8x128xf32>
    %1482 = arith.mulf %1481, %1467 : vector<8x128xf32>
    %1483 = arith.addf %1465, %1482 : vector<8x128xf32>
    %c82 = arith.constant 82 : index
    %c0_250 = arith.constant 0 : index
    %c0_251 = arith.constant 0 : index
    %1484 = vector.load %arg3[%c82, %c0_250, %c0_251] : memref<147x8x128xf32, #tpu.memory_space<vmem>>, vector<1x8x128xf32>
    %1485 = vector.shape_cast %1484 : vector<1x8x128xf32> to vector<8x128xf32>
    %c82_252 = arith.constant 82 : index
    %1486 = memref.load %arg1[%c82_252] : memref<588xf32, #tpu.memory_space<smem>>
    %1487 = vector.broadcast %1486 : f32 to vector<8x128xf32>
    %1488 = arith.mulf %1487, %1485 : vector<8x128xf32>
    %1489 = arith.addf %1471, %1488 : vector<8x128xf32>
    %c229 = arith.constant 229 : index
    %1490 = memref.load %arg1[%c229] : memref<588xf32, #tpu.memory_space<smem>>
    %1491 = vector.broadcast %1490 : f32 to vector<8x128xf32>
    %1492 = arith.mulf %1491, %1485 : vector<8x128xf32>
    %1493 = arith.addf %1475, %1492 : vector<8x128xf32>
    %c376 = arith.constant 376 : index
    %1494 = memref.load %arg1[%c376] : memref<588xf32, #tpu.memory_space<smem>>
    %1495 = vector.broadcast %1494 : f32 to vector<8x128xf32>
    %1496 = arith.mulf %1495, %1485 : vector<8x128xf32>
    %1497 = arith.addf %1479, %1496 : vector<8x128xf32>
    %c523 = arith.constant 523 : index
    %1498 = memref.load %arg1[%c523] : memref<588xf32, #tpu.memory_space<smem>>
    %1499 = vector.broadcast %1498 : f32 to vector<8x128xf32>
    %1500 = arith.mulf %1499, %1485 : vector<8x128xf32>
    %1501 = arith.addf %1483, %1500 : vector<8x128xf32>
    %c83 = arith.constant 83 : index
    %c0_253 = arith.constant 0 : index
    %c0_254 = arith.constant 0 : index
    %1502 = vector.load %arg3[%c83, %c0_253, %c0_254] : memref<147x8x128xf32, #tpu.memory_space<vmem>>, vector<1x8x128xf32>
    %1503 = vector.shape_cast %1502 : vector<1x8x128xf32> to vector<8x128xf32>
    %c83_255 = arith.constant 83 : index
    %1504 = memref.load %arg1[%c83_255] : memref<588xf32, #tpu.memory_space<smem>>
    %1505 = vector.broadcast %1504 : f32 to vector<8x128xf32>
    %1506 = arith.mulf %1505, %1503 : vector<8x128xf32>
    %1507 = arith.addf %1489, %1506 : vector<8x128xf32>
    %c230 = arith.constant 230 : index
    %1508 = memref.load %arg1[%c230] : memref<588xf32, #tpu.memory_space<smem>>
    %1509 = vector.broadcast %1508 : f32 to vector<8x128xf32>
    %1510 = arith.mulf %1509, %1503 : vector<8x128xf32>
    %1511 = arith.addf %1493, %1510 : vector<8x128xf32>
    %c377 = arith.constant 377 : index
    %1512 = memref.load %arg1[%c377] : memref<588xf32, #tpu.memory_space<smem>>
    %1513 = vector.broadcast %1512 : f32 to vector<8x128xf32>
    %1514 = arith.mulf %1513, %1503 : vector<8x128xf32>
    %1515 = arith.addf %1497, %1514 : vector<8x128xf32>
    %c524 = arith.constant 524 : index
    %1516 = memref.load %arg1[%c524] : memref<588xf32, #tpu.memory_space<smem>>
    %1517 = vector.broadcast %1516 : f32 to vector<8x128xf32>
    %1518 = arith.mulf %1517, %1503 : vector<8x128xf32>
    %1519 = arith.addf %1501, %1518 : vector<8x128xf32>
    %c84 = arith.constant 84 : index
    %c0_256 = arith.constant 0 : index
    %c0_257 = arith.constant 0 : index
    %1520 = vector.load %arg3[%c84, %c0_256, %c0_257] : memref<147x8x128xf32, #tpu.memory_space<vmem>>, vector<1x8x128xf32>
    %1521 = vector.shape_cast %1520 : vector<1x8x128xf32> to vector<8x128xf32>
    %c84_258 = arith.constant 84 : index
    %1522 = memref.load %arg1[%c84_258] : memref<588xf32, #tpu.memory_space<smem>>
    %1523 = vector.broadcast %1522 : f32 to vector<8x128xf32>
    %1524 = arith.mulf %1523, %1521 : vector<8x128xf32>
    %1525 = arith.addf %1507, %1524 : vector<8x128xf32>
    %c231 = arith.constant 231 : index
    %1526 = memref.load %arg1[%c231] : memref<588xf32, #tpu.memory_space<smem>>
    %1527 = vector.broadcast %1526 : f32 to vector<8x128xf32>
    %1528 = arith.mulf %1527, %1521 : vector<8x128xf32>
    %1529 = arith.addf %1511, %1528 : vector<8x128xf32>
    %c378 = arith.constant 378 : index
    %1530 = memref.load %arg1[%c378] : memref<588xf32, #tpu.memory_space<smem>>
    %1531 = vector.broadcast %1530 : f32 to vector<8x128xf32>
    %1532 = arith.mulf %1531, %1521 : vector<8x128xf32>
    %1533 = arith.addf %1515, %1532 : vector<8x128xf32>
    %c525 = arith.constant 525 : index
    %1534 = memref.load %arg1[%c525] : memref<588xf32, #tpu.memory_space<smem>>
    %1535 = vector.broadcast %1534 : f32 to vector<8x128xf32>
    %1536 = arith.mulf %1535, %1521 : vector<8x128xf32>
    %1537 = arith.addf %1519, %1536 : vector<8x128xf32>
    %c85 = arith.constant 85 : index
    %c0_259 = arith.constant 0 : index
    %c0_260 = arith.constant 0 : index
    %1538 = vector.load %arg3[%c85, %c0_259, %c0_260] : memref<147x8x128xf32, #tpu.memory_space<vmem>>, vector<1x8x128xf32>
    %1539 = vector.shape_cast %1538 : vector<1x8x128xf32> to vector<8x128xf32>
    %c85_261 = arith.constant 85 : index
    %1540 = memref.load %arg1[%c85_261] : memref<588xf32, #tpu.memory_space<smem>>
    %1541 = vector.broadcast %1540 : f32 to vector<8x128xf32>
    %1542 = arith.mulf %1541, %1539 : vector<8x128xf32>
    %1543 = arith.addf %1525, %1542 : vector<8x128xf32>
    %c232 = arith.constant 232 : index
    %1544 = memref.load %arg1[%c232] : memref<588xf32, #tpu.memory_space<smem>>
    %1545 = vector.broadcast %1544 : f32 to vector<8x128xf32>
    %1546 = arith.mulf %1545, %1539 : vector<8x128xf32>
    %1547 = arith.addf %1529, %1546 : vector<8x128xf32>
    %c379 = arith.constant 379 : index
    %1548 = memref.load %arg1[%c379] : memref<588xf32, #tpu.memory_space<smem>>
    %1549 = vector.broadcast %1548 : f32 to vector<8x128xf32>
    %1550 = arith.mulf %1549, %1539 : vector<8x128xf32>
    %1551 = arith.addf %1533, %1550 : vector<8x128xf32>
    %c526 = arith.constant 526 : index
    %1552 = memref.load %arg1[%c526] : memref<588xf32, #tpu.memory_space<smem>>
    %1553 = vector.broadcast %1552 : f32 to vector<8x128xf32>
    %1554 = arith.mulf %1553, %1539 : vector<8x128xf32>
    %1555 = arith.addf %1537, %1554 : vector<8x128xf32>
    %c86 = arith.constant 86 : index
    %c0_262 = arith.constant 0 : index
    %c0_263 = arith.constant 0 : index
    %1556 = vector.load %arg3[%c86, %c0_262, %c0_263] : memref<147x8x128xf32, #tpu.memory_space<vmem>>, vector<1x8x128xf32>
    %1557 = vector.shape_cast %1556 : vector<1x8x128xf32> to vector<8x128xf32>
    %c86_264 = arith.constant 86 : index
    %1558 = memref.load %arg1[%c86_264] : memref<588xf32, #tpu.memory_space<smem>>
    %1559 = vector.broadcast %1558 : f32 to vector<8x128xf32>
    %1560 = arith.mulf %1559, %1557 : vector<8x128xf32>
    %1561 = arith.addf %1543, %1560 : vector<8x128xf32>
    %c233 = arith.constant 233 : index
    %1562 = memref.load %arg1[%c233] : memref<588xf32, #tpu.memory_space<smem>>
    %1563 = vector.broadcast %1562 : f32 to vector<8x128xf32>
    %1564 = arith.mulf %1563, %1557 : vector<8x128xf32>
    %1565 = arith.addf %1547, %1564 : vector<8x128xf32>
    %c380 = arith.constant 380 : index
    %1566 = memref.load %arg1[%c380] : memref<588xf32, #tpu.memory_space<smem>>
    %1567 = vector.broadcast %1566 : f32 to vector<8x128xf32>
    %1568 = arith.mulf %1567, %1557 : vector<8x128xf32>
    %1569 = arith.addf %1551, %1568 : vector<8x128xf32>
    %c527 = arith.constant 527 : index
    %1570 = memref.load %arg1[%c527] : memref<588xf32, #tpu.memory_space<smem>>
    %1571 = vector.broadcast %1570 : f32 to vector<8x128xf32>
    %1572 = arith.mulf %1571, %1557 : vector<8x128xf32>
    %1573 = arith.addf %1555, %1572 : vector<8x128xf32>
    %c87 = arith.constant 87 : index
    %c0_265 = arith.constant 0 : index
    %c0_266 = arith.constant 0 : index
    %1574 = vector.load %arg3[%c87, %c0_265, %c0_266] : memref<147x8x128xf32, #tpu.memory_space<vmem>>, vector<1x8x128xf32>
    %1575 = vector.shape_cast %1574 : vector<1x8x128xf32> to vector<8x128xf32>
    %c87_267 = arith.constant 87 : index
    %1576 = memref.load %arg1[%c87_267] : memref<588xf32, #tpu.memory_space<smem>>
    %1577 = vector.broadcast %1576 : f32 to vector<8x128xf32>
    %1578 = arith.mulf %1577, %1575 : vector<8x128xf32>
    %1579 = arith.addf %1561, %1578 : vector<8x128xf32>
    %c234 = arith.constant 234 : index
    %1580 = memref.load %arg1[%c234] : memref<588xf32, #tpu.memory_space<smem>>
    %1581 = vector.broadcast %1580 : f32 to vector<8x128xf32>
    %1582 = arith.mulf %1581, %1575 : vector<8x128xf32>
    %1583 = arith.addf %1565, %1582 : vector<8x128xf32>
    %c381 = arith.constant 381 : index
    %1584 = memref.load %arg1[%c381] : memref<588xf32, #tpu.memory_space<smem>>
    %1585 = vector.broadcast %1584 : f32 to vector<8x128xf32>
    %1586 = arith.mulf %1585, %1575 : vector<8x128xf32>
    %1587 = arith.addf %1569, %1586 : vector<8x128xf32>
    %c528 = arith.constant 528 : index
    %1588 = memref.load %arg1[%c528] : memref<588xf32, #tpu.memory_space<smem>>
    %1589 = vector.broadcast %1588 : f32 to vector<8x128xf32>
    %1590 = arith.mulf %1589, %1575 : vector<8x128xf32>
    %1591 = arith.addf %1573, %1590 : vector<8x128xf32>
    %c88 = arith.constant 88 : index
    %c0_268 = arith.constant 0 : index
    %c0_269 = arith.constant 0 : index
    %1592 = vector.load %arg3[%c88, %c0_268, %c0_269] : memref<147x8x128xf32, #tpu.memory_space<vmem>>, vector<1x8x128xf32>
    %1593 = vector.shape_cast %1592 : vector<1x8x128xf32> to vector<8x128xf32>
    %c88_270 = arith.constant 88 : index
    %1594 = memref.load %arg1[%c88_270] : memref<588xf32, #tpu.memory_space<smem>>
    %1595 = vector.broadcast %1594 : f32 to vector<8x128xf32>
    %1596 = arith.mulf %1595, %1593 : vector<8x128xf32>
    %1597 = arith.addf %1579, %1596 : vector<8x128xf32>
    %c235 = arith.constant 235 : index
    %1598 = memref.load %arg1[%c235] : memref<588xf32, #tpu.memory_space<smem>>
    %1599 = vector.broadcast %1598 : f32 to vector<8x128xf32>
    %1600 = arith.mulf %1599, %1593 : vector<8x128xf32>
    %1601 = arith.addf %1583, %1600 : vector<8x128xf32>
    %c382 = arith.constant 382 : index
    %1602 = memref.load %arg1[%c382] : memref<588xf32, #tpu.memory_space<smem>>
    %1603 = vector.broadcast %1602 : f32 to vector<8x128xf32>
    %1604 = arith.mulf %1603, %1593 : vector<8x128xf32>
    %1605 = arith.addf %1587, %1604 : vector<8x128xf32>
    %c529 = arith.constant 529 : index
    %1606 = memref.load %arg1[%c529] : memref<588xf32, #tpu.memory_space<smem>>
    %1607 = vector.broadcast %1606 : f32 to vector<8x128xf32>
    %1608 = arith.mulf %1607, %1593 : vector<8x128xf32>
    %1609 = arith.addf %1591, %1608 : vector<8x128xf32>
    %c89 = arith.constant 89 : index
    %c0_271 = arith.constant 0 : index
    %c0_272 = arith.constant 0 : index
    %1610 = vector.load %arg3[%c89, %c0_271, %c0_272] : memref<147x8x128xf32, #tpu.memory_space<vmem>>, vector<1x8x128xf32>
    %1611 = vector.shape_cast %1610 : vector<1x8x128xf32> to vector<8x128xf32>
    %c89_273 = arith.constant 89 : index
    %1612 = memref.load %arg1[%c89_273] : memref<588xf32, #tpu.memory_space<smem>>
    %1613 = vector.broadcast %1612 : f32 to vector<8x128xf32>
    %1614 = arith.mulf %1613, %1611 : vector<8x128xf32>
    %1615 = arith.addf %1597, %1614 : vector<8x128xf32>
    %c236 = arith.constant 236 : index
    %1616 = memref.load %arg1[%c236] : memref<588xf32, #tpu.memory_space<smem>>
    %1617 = vector.broadcast %1616 : f32 to vector<8x128xf32>
    %1618 = arith.mulf %1617, %1611 : vector<8x128xf32>
    %1619 = arith.addf %1601, %1618 : vector<8x128xf32>
    %c383 = arith.constant 383 : index
    %1620 = memref.load %arg1[%c383] : memref<588xf32, #tpu.memory_space<smem>>
    %1621 = vector.broadcast %1620 : f32 to vector<8x128xf32>
    %1622 = arith.mulf %1621, %1611 : vector<8x128xf32>
    %1623 = arith.addf %1605, %1622 : vector<8x128xf32>
    %c530 = arith.constant 530 : index
    %1624 = memref.load %arg1[%c530] : memref<588xf32, #tpu.memory_space<smem>>
    %1625 = vector.broadcast %1624 : f32 to vector<8x128xf32>
    %1626 = arith.mulf %1625, %1611 : vector<8x128xf32>
    %1627 = arith.addf %1609, %1626 : vector<8x128xf32>
    %c90 = arith.constant 90 : index
    %c0_274 = arith.constant 0 : index
    %c0_275 = arith.constant 0 : index
    %1628 = vector.load %arg3[%c90, %c0_274, %c0_275] : memref<147x8x128xf32, #tpu.memory_space<vmem>>, vector<1x8x128xf32>
    %1629 = vector.shape_cast %1628 : vector<1x8x128xf32> to vector<8x128xf32>
    %c90_276 = arith.constant 90 : index
    %1630 = memref.load %arg1[%c90_276] : memref<588xf32, #tpu.memory_space<smem>>
    %1631 = vector.broadcast %1630 : f32 to vector<8x128xf32>
    %1632 = arith.mulf %1631, %1629 : vector<8x128xf32>
    %1633 = arith.addf %1615, %1632 : vector<8x128xf32>
    %c237 = arith.constant 237 : index
    %1634 = memref.load %arg1[%c237] : memref<588xf32, #tpu.memory_space<smem>>
    %1635 = vector.broadcast %1634 : f32 to vector<8x128xf32>
    %1636 = arith.mulf %1635, %1629 : vector<8x128xf32>
    %1637 = arith.addf %1619, %1636 : vector<8x128xf32>
    %c384 = arith.constant 384 : index
    %1638 = memref.load %arg1[%c384] : memref<588xf32, #tpu.memory_space<smem>>
    %1639 = vector.broadcast %1638 : f32 to vector<8x128xf32>
    %1640 = arith.mulf %1639, %1629 : vector<8x128xf32>
    %1641 = arith.addf %1623, %1640 : vector<8x128xf32>
    %c531 = arith.constant 531 : index
    %1642 = memref.load %arg1[%c531] : memref<588xf32, #tpu.memory_space<smem>>
    %1643 = vector.broadcast %1642 : f32 to vector<8x128xf32>
    %1644 = arith.mulf %1643, %1629 : vector<8x128xf32>
    %1645 = arith.addf %1627, %1644 : vector<8x128xf32>
    %c91 = arith.constant 91 : index
    %c0_277 = arith.constant 0 : index
    %c0_278 = arith.constant 0 : index
    %1646 = vector.load %arg3[%c91, %c0_277, %c0_278] : memref<147x8x128xf32, #tpu.memory_space<vmem>>, vector<1x8x128xf32>
    %1647 = vector.shape_cast %1646 : vector<1x8x128xf32> to vector<8x128xf32>
    %c91_279 = arith.constant 91 : index
    %1648 = memref.load %arg1[%c91_279] : memref<588xf32, #tpu.memory_space<smem>>
    %1649 = vector.broadcast %1648 : f32 to vector<8x128xf32>
    %1650 = arith.mulf %1649, %1647 : vector<8x128xf32>
    %1651 = arith.addf %1633, %1650 : vector<8x128xf32>
    %c238 = arith.constant 238 : index
    %1652 = memref.load %arg1[%c238] : memref<588xf32, #tpu.memory_space<smem>>
    %1653 = vector.broadcast %1652 : f32 to vector<8x128xf32>
    %1654 = arith.mulf %1653, %1647 : vector<8x128xf32>
    %1655 = arith.addf %1637, %1654 : vector<8x128xf32>
    %c385 = arith.constant 385 : index
    %1656 = memref.load %arg1[%c385] : memref<588xf32, #tpu.memory_space<smem>>
    %1657 = vector.broadcast %1656 : f32 to vector<8x128xf32>
    %1658 = arith.mulf %1657, %1647 : vector<8x128xf32>
    %1659 = arith.addf %1641, %1658 : vector<8x128xf32>
    %c532 = arith.constant 532 : index
    %1660 = memref.load %arg1[%c532] : memref<588xf32, #tpu.memory_space<smem>>
    %1661 = vector.broadcast %1660 : f32 to vector<8x128xf32>
    %1662 = arith.mulf %1661, %1647 : vector<8x128xf32>
    %1663 = arith.addf %1645, %1662 : vector<8x128xf32>
    %c92 = arith.constant 92 : index
    %c0_280 = arith.constant 0 : index
    %c0_281 = arith.constant 0 : index
    %1664 = vector.load %arg3[%c92, %c0_280, %c0_281] : memref<147x8x128xf32, #tpu.memory_space<vmem>>, vector<1x8x128xf32>
    %1665 = vector.shape_cast %1664 : vector<1x8x128xf32> to vector<8x128xf32>
    %c92_282 = arith.constant 92 : index
    %1666 = memref.load %arg1[%c92_282] : memref<588xf32, #tpu.memory_space<smem>>
    %1667 = vector.broadcast %1666 : f32 to vector<8x128xf32>
    %1668 = arith.mulf %1667, %1665 : vector<8x128xf32>
    %1669 = arith.addf %1651, %1668 : vector<8x128xf32>
    %c239 = arith.constant 239 : index
    %1670 = memref.load %arg1[%c239] : memref<588xf32, #tpu.memory_space<smem>>
    %1671 = vector.broadcast %1670 : f32 to vector<8x128xf32>
    %1672 = arith.mulf %1671, %1665 : vector<8x128xf32>
    %1673 = arith.addf %1655, %1672 : vector<8x128xf32>
    %c386 = arith.constant 386 : index
    %1674 = memref.load %arg1[%c386] : memref<588xf32, #tpu.memory_space<smem>>
    %1675 = vector.broadcast %1674 : f32 to vector<8x128xf32>
    %1676 = arith.mulf %1675, %1665 : vector<8x128xf32>
    %1677 = arith.addf %1659, %1676 : vector<8x128xf32>
    %c533 = arith.constant 533 : index
    %1678 = memref.load %arg1[%c533] : memref<588xf32, #tpu.memory_space<smem>>
    %1679 = vector.broadcast %1678 : f32 to vector<8x128xf32>
    %1680 = arith.mulf %1679, %1665 : vector<8x128xf32>
    %1681 = arith.addf %1663, %1680 : vector<8x128xf32>
    %c93 = arith.constant 93 : index
    %c0_283 = arith.constant 0 : index
    %c0_284 = arith.constant 0 : index
    %1682 = vector.load %arg3[%c93, %c0_283, %c0_284] : memref<147x8x128xf32, #tpu.memory_space<vmem>>, vector<1x8x128xf32>
    %1683 = vector.shape_cast %1682 : vector<1x8x128xf32> to vector<8x128xf32>
    %c93_285 = arith.constant 93 : index
    %1684 = memref.load %arg1[%c93_285] : memref<588xf32, #tpu.memory_space<smem>>
    %1685 = vector.broadcast %1684 : f32 to vector<8x128xf32>
    %1686 = arith.mulf %1685, %1683 : vector<8x128xf32>
    %1687 = arith.addf %1669, %1686 : vector<8x128xf32>
    %c240 = arith.constant 240 : index
    %1688 = memref.load %arg1[%c240] : memref<588xf32, #tpu.memory_space<smem>>
    %1689 = vector.broadcast %1688 : f32 to vector<8x128xf32>
    %1690 = arith.mulf %1689, %1683 : vector<8x128xf32>
    %1691 = arith.addf %1673, %1690 : vector<8x128xf32>
    %c387 = arith.constant 387 : index
    %1692 = memref.load %arg1[%c387] : memref<588xf32, #tpu.memory_space<smem>>
    %1693 = vector.broadcast %1692 : f32 to vector<8x128xf32>
    %1694 = arith.mulf %1693, %1683 : vector<8x128xf32>
    %1695 = arith.addf %1677, %1694 : vector<8x128xf32>
    %c534 = arith.constant 534 : index
    %1696 = memref.load %arg1[%c534] : memref<588xf32, #tpu.memory_space<smem>>
    %1697 = vector.broadcast %1696 : f32 to vector<8x128xf32>
    %1698 = arith.mulf %1697, %1683 : vector<8x128xf32>
    %1699 = arith.addf %1681, %1698 : vector<8x128xf32>
    %c94 = arith.constant 94 : index
    %c0_286 = arith.constant 0 : index
    %c0_287 = arith.constant 0 : index
    %1700 = vector.load %arg3[%c94, %c0_286, %c0_287] : memref<147x8x128xf32, #tpu.memory_space<vmem>>, vector<1x8x128xf32>
    %1701 = vector.shape_cast %1700 : vector<1x8x128xf32> to vector<8x128xf32>
    %c94_288 = arith.constant 94 : index
    %1702 = memref.load %arg1[%c94_288] : memref<588xf32, #tpu.memory_space<smem>>
    %1703 = vector.broadcast %1702 : f32 to vector<8x128xf32>
    %1704 = arith.mulf %1703, %1701 : vector<8x128xf32>
    %1705 = arith.addf %1687, %1704 : vector<8x128xf32>
    %c241 = arith.constant 241 : index
    %1706 = memref.load %arg1[%c241] : memref<588xf32, #tpu.memory_space<smem>>
    %1707 = vector.broadcast %1706 : f32 to vector<8x128xf32>
    %1708 = arith.mulf %1707, %1701 : vector<8x128xf32>
    %1709 = arith.addf %1691, %1708 : vector<8x128xf32>
    %c388 = arith.constant 388 : index
    %1710 = memref.load %arg1[%c388] : memref<588xf32, #tpu.memory_space<smem>>
    %1711 = vector.broadcast %1710 : f32 to vector<8x128xf32>
    %1712 = arith.mulf %1711, %1701 : vector<8x128xf32>
    %1713 = arith.addf %1695, %1712 : vector<8x128xf32>
    %c535 = arith.constant 535 : index
    %1714 = memref.load %arg1[%c535] : memref<588xf32, #tpu.memory_space<smem>>
    %1715 = vector.broadcast %1714 : f32 to vector<8x128xf32>
    %1716 = arith.mulf %1715, %1701 : vector<8x128xf32>
    %1717 = arith.addf %1699, %1716 : vector<8x128xf32>
    %c95 = arith.constant 95 : index
    %c0_289 = arith.constant 0 : index
    %c0_290 = arith.constant 0 : index
    %1718 = vector.load %arg3[%c95, %c0_289, %c0_290] : memref<147x8x128xf32, #tpu.memory_space<vmem>>, vector<1x8x128xf32>
    %1719 = vector.shape_cast %1718 : vector<1x8x128xf32> to vector<8x128xf32>
    %c95_291 = arith.constant 95 : index
    %1720 = memref.load %arg1[%c95_291] : memref<588xf32, #tpu.memory_space<smem>>
    %1721 = vector.broadcast %1720 : f32 to vector<8x128xf32>
    %1722 = arith.mulf %1721, %1719 : vector<8x128xf32>
    %1723 = arith.addf %1705, %1722 : vector<8x128xf32>
    %c242 = arith.constant 242 : index
    %1724 = memref.load %arg1[%c242] : memref<588xf32, #tpu.memory_space<smem>>
    %1725 = vector.broadcast %1724 : f32 to vector<8x128xf32>
    %1726 = arith.mulf %1725, %1719 : vector<8x128xf32>
    %1727 = arith.addf %1709, %1726 : vector<8x128xf32>
    %c389 = arith.constant 389 : index
    %1728 = memref.load %arg1[%c389] : memref<588xf32, #tpu.memory_space<smem>>
    %1729 = vector.broadcast %1728 : f32 to vector<8x128xf32>
    %1730 = arith.mulf %1729, %1719 : vector<8x128xf32>
    %1731 = arith.addf %1713, %1730 : vector<8x128xf32>
    %c536 = arith.constant 536 : index
    %1732 = memref.load %arg1[%c536] : memref<588xf32, #tpu.memory_space<smem>>
    %1733 = vector.broadcast %1732 : f32 to vector<8x128xf32>
    %1734 = arith.mulf %1733, %1719 : vector<8x128xf32>
    %1735 = arith.addf %1717, %1734 : vector<8x128xf32>
    %c96 = arith.constant 96 : index
    %c0_292 = arith.constant 0 : index
    %c0_293 = arith.constant 0 : index
    %1736 = vector.load %arg3[%c96, %c0_292, %c0_293] : memref<147x8x128xf32, #tpu.memory_space<vmem>>, vector<1x8x128xf32>
    %1737 = vector.shape_cast %1736 : vector<1x8x128xf32> to vector<8x128xf32>
    %c96_294 = arith.constant 96 : index
    %1738 = memref.load %arg1[%c96_294] : memref<588xf32, #tpu.memory_space<smem>>
    %1739 = vector.broadcast %1738 : f32 to vector<8x128xf32>
    %1740 = arith.mulf %1739, %1737 : vector<8x128xf32>
    %1741 = arith.addf %1723, %1740 : vector<8x128xf32>
    %c243 = arith.constant 243 : index
    %1742 = memref.load %arg1[%c243] : memref<588xf32, #tpu.memory_space<smem>>
    %1743 = vector.broadcast %1742 : f32 to vector<8x128xf32>
    %1744 = arith.mulf %1743, %1737 : vector<8x128xf32>
    %1745 = arith.addf %1727, %1744 : vector<8x128xf32>
    %c390 = arith.constant 390 : index
    %1746 = memref.load %arg1[%c390] : memref<588xf32, #tpu.memory_space<smem>>
    %1747 = vector.broadcast %1746 : f32 to vector<8x128xf32>
    %1748 = arith.mulf %1747, %1737 : vector<8x128xf32>
    %1749 = arith.addf %1731, %1748 : vector<8x128xf32>
    %c537 = arith.constant 537 : index
    %1750 = memref.load %arg1[%c537] : memref<588xf32, #tpu.memory_space<smem>>
    %1751 = vector.broadcast %1750 : f32 to vector<8x128xf32>
    %1752 = arith.mulf %1751, %1737 : vector<8x128xf32>
    %1753 = arith.addf %1735, %1752 : vector<8x128xf32>
    %c97 = arith.constant 97 : index
    %c0_295 = arith.constant 0 : index
    %c0_296 = arith.constant 0 : index
    %1754 = vector.load %arg3[%c97, %c0_295, %c0_296] : memref<147x8x128xf32, #tpu.memory_space<vmem>>, vector<1x8x128xf32>
    %1755 = vector.shape_cast %1754 : vector<1x8x128xf32> to vector<8x128xf32>
    %c97_297 = arith.constant 97 : index
    %1756 = memref.load %arg1[%c97_297] : memref<588xf32, #tpu.memory_space<smem>>
    %1757 = vector.broadcast %1756 : f32 to vector<8x128xf32>
    %1758 = arith.mulf %1757, %1755 : vector<8x128xf32>
    %1759 = arith.addf %1741, %1758 : vector<8x128xf32>
    %c244 = arith.constant 244 : index
    %1760 = memref.load %arg1[%c244] : memref<588xf32, #tpu.memory_space<smem>>
    %1761 = vector.broadcast %1760 : f32 to vector<8x128xf32>
    %1762 = arith.mulf %1761, %1755 : vector<8x128xf32>
    %1763 = arith.addf %1745, %1762 : vector<8x128xf32>
    %c391 = arith.constant 391 : index
    %1764 = memref.load %arg1[%c391] : memref<588xf32, #tpu.memory_space<smem>>
    %1765 = vector.broadcast %1764 : f32 to vector<8x128xf32>
    %1766 = arith.mulf %1765, %1755 : vector<8x128xf32>
    %1767 = arith.addf %1749, %1766 : vector<8x128xf32>
    %c538 = arith.constant 538 : index
    %1768 = memref.load %arg1[%c538] : memref<588xf32, #tpu.memory_space<smem>>
    %1769 = vector.broadcast %1768 : f32 to vector<8x128xf32>
    %1770 = arith.mulf %1769, %1755 : vector<8x128xf32>
    %1771 = arith.addf %1753, %1770 : vector<8x128xf32>
    %c98 = arith.constant 98 : index
    %c0_298 = arith.constant 0 : index
    %c0_299 = arith.constant 0 : index
    %1772 = vector.load %arg3[%c98, %c0_298, %c0_299] : memref<147x8x128xf32, #tpu.memory_space<vmem>>, vector<1x8x128xf32>
    %1773 = vector.shape_cast %1772 : vector<1x8x128xf32> to vector<8x128xf32>
    %c98_300 = arith.constant 98 : index
    %1774 = memref.load %arg1[%c98_300] : memref<588xf32, #tpu.memory_space<smem>>
    %1775 = vector.broadcast %1774 : f32 to vector<8x128xf32>
    %1776 = arith.mulf %1775, %1773 : vector<8x128xf32>
    %1777 = arith.addf %1759, %1776 : vector<8x128xf32>
    %c245 = arith.constant 245 : index
    %1778 = memref.load %arg1[%c245] : memref<588xf32, #tpu.memory_space<smem>>
    %1779 = vector.broadcast %1778 : f32 to vector<8x128xf32>
    %1780 = arith.mulf %1779, %1773 : vector<8x128xf32>
    %1781 = arith.addf %1763, %1780 : vector<8x128xf32>
    %c392 = arith.constant 392 : index
    %1782 = memref.load %arg1[%c392] : memref<588xf32, #tpu.memory_space<smem>>
    %1783 = vector.broadcast %1782 : f32 to vector<8x128xf32>
    %1784 = arith.mulf %1783, %1773 : vector<8x128xf32>
    %1785 = arith.addf %1767, %1784 : vector<8x128xf32>
    %c539 = arith.constant 539 : index
    %1786 = memref.load %arg1[%c539] : memref<588xf32, #tpu.memory_space<smem>>
    %1787 = vector.broadcast %1786 : f32 to vector<8x128xf32>
    %1788 = arith.mulf %1787, %1773 : vector<8x128xf32>
    %1789 = arith.addf %1771, %1788 : vector<8x128xf32>
    %c99 = arith.constant 99 : index
    %c0_301 = arith.constant 0 : index
    %c0_302 = arith.constant 0 : index
    %1790 = vector.load %arg3[%c99, %c0_301, %c0_302] : memref<147x8x128xf32, #tpu.memory_space<vmem>>, vector<1x8x128xf32>
    %1791 = vector.shape_cast %1790 : vector<1x8x128xf32> to vector<8x128xf32>
    %c99_303 = arith.constant 99 : index
    %1792 = memref.load %arg1[%c99_303] : memref<588xf32, #tpu.memory_space<smem>>
    %1793 = vector.broadcast %1792 : f32 to vector<8x128xf32>
    %1794 = arith.mulf %1793, %1791 : vector<8x128xf32>
    %1795 = arith.addf %1777, %1794 : vector<8x128xf32>
    %c246 = arith.constant 246 : index
    %1796 = memref.load %arg1[%c246] : memref<588xf32, #tpu.memory_space<smem>>
    %1797 = vector.broadcast %1796 : f32 to vector<8x128xf32>
    %1798 = arith.mulf %1797, %1791 : vector<8x128xf32>
    %1799 = arith.addf %1781, %1798 : vector<8x128xf32>
    %c393 = arith.constant 393 : index
    %1800 = memref.load %arg1[%c393] : memref<588xf32, #tpu.memory_space<smem>>
    %1801 = vector.broadcast %1800 : f32 to vector<8x128xf32>
    %1802 = arith.mulf %1801, %1791 : vector<8x128xf32>
    %1803 = arith.addf %1785, %1802 : vector<8x128xf32>
    %c540 = arith.constant 540 : index
    %1804 = memref.load %arg1[%c540] : memref<588xf32, #tpu.memory_space<smem>>
    %1805 = vector.broadcast %1804 : f32 to vector<8x128xf32>
    %1806 = arith.mulf %1805, %1791 : vector<8x128xf32>
    %1807 = arith.addf %1789, %1806 : vector<8x128xf32>
    %c100 = arith.constant 100 : index
    %c0_304 = arith.constant 0 : index
    %c0_305 = arith.constant 0 : index
    %1808 = vector.load %arg3[%c100, %c0_304, %c0_305] : memref<147x8x128xf32, #tpu.memory_space<vmem>>, vector<1x8x128xf32>
    %1809 = vector.shape_cast %1808 : vector<1x8x128xf32> to vector<8x128xf32>
    %c100_306 = arith.constant 100 : index
    %1810 = memref.load %arg1[%c100_306] : memref<588xf32, #tpu.memory_space<smem>>
    %1811 = vector.broadcast %1810 : f32 to vector<8x128xf32>
    %1812 = arith.mulf %1811, %1809 : vector<8x128xf32>
    %1813 = arith.addf %1795, %1812 : vector<8x128xf32>
    %c247 = arith.constant 247 : index
    %1814 = memref.load %arg1[%c247] : memref<588xf32, #tpu.memory_space<smem>>
    %1815 = vector.broadcast %1814 : f32 to vector<8x128xf32>
    %1816 = arith.mulf %1815, %1809 : vector<8x128xf32>
    %1817 = arith.addf %1799, %1816 : vector<8x128xf32>
    %c394 = arith.constant 394 : index
    %1818 = memref.load %arg1[%c394] : memref<588xf32, #tpu.memory_space<smem>>
    %1819 = vector.broadcast %1818 : f32 to vector<8x128xf32>
    %1820 = arith.mulf %1819, %1809 : vector<8x128xf32>
    %1821 = arith.addf %1803, %1820 : vector<8x128xf32>
    %c541 = arith.constant 541 : index
    %1822 = memref.load %arg1[%c541] : memref<588xf32, #tpu.memory_space<smem>>
    %1823 = vector.broadcast %1822 : f32 to vector<8x128xf32>
    %1824 = arith.mulf %1823, %1809 : vector<8x128xf32>
    %1825 = arith.addf %1807, %1824 : vector<8x128xf32>
    %c101 = arith.constant 101 : index
    %c0_307 = arith.constant 0 : index
    %c0_308 = arith.constant 0 : index
    %1826 = vector.load %arg3[%c101, %c0_307, %c0_308] : memref<147x8x128xf32, #tpu.memory_space<vmem>>, vector<1x8x128xf32>
    %1827 = vector.shape_cast %1826 : vector<1x8x128xf32> to vector<8x128xf32>
    %c101_309 = arith.constant 101 : index
    %1828 = memref.load %arg1[%c101_309] : memref<588xf32, #tpu.memory_space<smem>>
    %1829 = vector.broadcast %1828 : f32 to vector<8x128xf32>
    %1830 = arith.mulf %1829, %1827 : vector<8x128xf32>
    %1831 = arith.addf %1813, %1830 : vector<8x128xf32>
    %c248 = arith.constant 248 : index
    %1832 = memref.load %arg1[%c248] : memref<588xf32, #tpu.memory_space<smem>>
    %1833 = vector.broadcast %1832 : f32 to vector<8x128xf32>
    %1834 = arith.mulf %1833, %1827 : vector<8x128xf32>
    %1835 = arith.addf %1817, %1834 : vector<8x128xf32>
    %c395 = arith.constant 395 : index
    %1836 = memref.load %arg1[%c395] : memref<588xf32, #tpu.memory_space<smem>>
    %1837 = vector.broadcast %1836 : f32 to vector<8x128xf32>
    %1838 = arith.mulf %1837, %1827 : vector<8x128xf32>
    %1839 = arith.addf %1821, %1838 : vector<8x128xf32>
    %c542 = arith.constant 542 : index
    %1840 = memref.load %arg1[%c542] : memref<588xf32, #tpu.memory_space<smem>>
    %1841 = vector.broadcast %1840 : f32 to vector<8x128xf32>
    %1842 = arith.mulf %1841, %1827 : vector<8x128xf32>
    %1843 = arith.addf %1825, %1842 : vector<8x128xf32>
    %c102 = arith.constant 102 : index
    %c0_310 = arith.constant 0 : index
    %c0_311 = arith.constant 0 : index
    %1844 = vector.load %arg3[%c102, %c0_310, %c0_311] : memref<147x8x128xf32, #tpu.memory_space<vmem>>, vector<1x8x128xf32>
    %1845 = vector.shape_cast %1844 : vector<1x8x128xf32> to vector<8x128xf32>
    %c102_312 = arith.constant 102 : index
    %1846 = memref.load %arg1[%c102_312] : memref<588xf32, #tpu.memory_space<smem>>
    %1847 = vector.broadcast %1846 : f32 to vector<8x128xf32>
    %1848 = arith.mulf %1847, %1845 : vector<8x128xf32>
    %1849 = arith.addf %1831, %1848 : vector<8x128xf32>
    %c249 = arith.constant 249 : index
    %1850 = memref.load %arg1[%c249] : memref<588xf32, #tpu.memory_space<smem>>
    %1851 = vector.broadcast %1850 : f32 to vector<8x128xf32>
    %1852 = arith.mulf %1851, %1845 : vector<8x128xf32>
    %1853 = arith.addf %1835, %1852 : vector<8x128xf32>
    %c396 = arith.constant 396 : index
    %1854 = memref.load %arg1[%c396] : memref<588xf32, #tpu.memory_space<smem>>
    %1855 = vector.broadcast %1854 : f32 to vector<8x128xf32>
    %1856 = arith.mulf %1855, %1845 : vector<8x128xf32>
    %1857 = arith.addf %1839, %1856 : vector<8x128xf32>
    %c543 = arith.constant 543 : index
    %1858 = memref.load %arg1[%c543] : memref<588xf32, #tpu.memory_space<smem>>
    %1859 = vector.broadcast %1858 : f32 to vector<8x128xf32>
    %1860 = arith.mulf %1859, %1845 : vector<8x128xf32>
    %1861 = arith.addf %1843, %1860 : vector<8x128xf32>
    %c103 = arith.constant 103 : index
    %c0_313 = arith.constant 0 : index
    %c0_314 = arith.constant 0 : index
    %1862 = vector.load %arg3[%c103, %c0_313, %c0_314] : memref<147x8x128xf32, #tpu.memory_space<vmem>>, vector<1x8x128xf32>
    %1863 = vector.shape_cast %1862 : vector<1x8x128xf32> to vector<8x128xf32>
    %c103_315 = arith.constant 103 : index
    %1864 = memref.load %arg1[%c103_315] : memref<588xf32, #tpu.memory_space<smem>>
    %1865 = vector.broadcast %1864 : f32 to vector<8x128xf32>
    %1866 = arith.mulf %1865, %1863 : vector<8x128xf32>
    %1867 = arith.addf %1849, %1866 : vector<8x128xf32>
    %c250 = arith.constant 250 : index
    %1868 = memref.load %arg1[%c250] : memref<588xf32, #tpu.memory_space<smem>>
    %1869 = vector.broadcast %1868 : f32 to vector<8x128xf32>
    %1870 = arith.mulf %1869, %1863 : vector<8x128xf32>
    %1871 = arith.addf %1853, %1870 : vector<8x128xf32>
    %c397 = arith.constant 397 : index
    %1872 = memref.load %arg1[%c397] : memref<588xf32, #tpu.memory_space<smem>>
    %1873 = vector.broadcast %1872 : f32 to vector<8x128xf32>
    %1874 = arith.mulf %1873, %1863 : vector<8x128xf32>
    %1875 = arith.addf %1857, %1874 : vector<8x128xf32>
    %c544 = arith.constant 544 : index
    %1876 = memref.load %arg1[%c544] : memref<588xf32, #tpu.memory_space<smem>>
    %1877 = vector.broadcast %1876 : f32 to vector<8x128xf32>
    %1878 = arith.mulf %1877, %1863 : vector<8x128xf32>
    %1879 = arith.addf %1861, %1878 : vector<8x128xf32>
    %c104 = arith.constant 104 : index
    %c0_316 = arith.constant 0 : index
    %c0_317 = arith.constant 0 : index
    %1880 = vector.load %arg3[%c104, %c0_316, %c0_317] : memref<147x8x128xf32, #tpu.memory_space<vmem>>, vector<1x8x128xf32>
    %1881 = vector.shape_cast %1880 : vector<1x8x128xf32> to vector<8x128xf32>
    %c104_318 = arith.constant 104 : index
    %1882 = memref.load %arg1[%c104_318] : memref<588xf32, #tpu.memory_space<smem>>
    %1883 = vector.broadcast %1882 : f32 to vector<8x128xf32>
    %1884 = arith.mulf %1883, %1881 : vector<8x128xf32>
    %1885 = arith.addf %1867, %1884 : vector<8x128xf32>
    %c251 = arith.constant 251 : index
    %1886 = memref.load %arg1[%c251] : memref<588xf32, #tpu.memory_space<smem>>
    %1887 = vector.broadcast %1886 : f32 to vector<8x128xf32>
    %1888 = arith.mulf %1887, %1881 : vector<8x128xf32>
    %1889 = arith.addf %1871, %1888 : vector<8x128xf32>
    %c398 = arith.constant 398 : index
    %1890 = memref.load %arg1[%c398] : memref<588xf32, #tpu.memory_space<smem>>
    %1891 = vector.broadcast %1890 : f32 to vector<8x128xf32>
    %1892 = arith.mulf %1891, %1881 : vector<8x128xf32>
    %1893 = arith.addf %1875, %1892 : vector<8x128xf32>
    %c545 = arith.constant 545 : index
    %1894 = memref.load %arg1[%c545] : memref<588xf32, #tpu.memory_space<smem>>
    %1895 = vector.broadcast %1894 : f32 to vector<8x128xf32>
    %1896 = arith.mulf %1895, %1881 : vector<8x128xf32>
    %1897 = arith.addf %1879, %1896 : vector<8x128xf32>
    %c105 = arith.constant 105 : index
    %c0_319 = arith.constant 0 : index
    %c0_320 = arith.constant 0 : index
    %1898 = vector.load %arg3[%c105, %c0_319, %c0_320] : memref<147x8x128xf32, #tpu.memory_space<vmem>>, vector<1x8x128xf32>
    %1899 = vector.shape_cast %1898 : vector<1x8x128xf32> to vector<8x128xf32>
    %c105_321 = arith.constant 105 : index
    %1900 = memref.load %arg1[%c105_321] : memref<588xf32, #tpu.memory_space<smem>>
    %1901 = vector.broadcast %1900 : f32 to vector<8x128xf32>
    %1902 = arith.mulf %1901, %1899 : vector<8x128xf32>
    %1903 = arith.addf %1885, %1902 : vector<8x128xf32>
    %c252 = arith.constant 252 : index
    %1904 = memref.load %arg1[%c252] : memref<588xf32, #tpu.memory_space<smem>>
    %1905 = vector.broadcast %1904 : f32 to vector<8x128xf32>
    %1906 = arith.mulf %1905, %1899 : vector<8x128xf32>
    %1907 = arith.addf %1889, %1906 : vector<8x128xf32>
    %c399 = arith.constant 399 : index
    %1908 = memref.load %arg1[%c399] : memref<588xf32, #tpu.memory_space<smem>>
    %1909 = vector.broadcast %1908 : f32 to vector<8x128xf32>
    %1910 = arith.mulf %1909, %1899 : vector<8x128xf32>
    %1911 = arith.addf %1893, %1910 : vector<8x128xf32>
    %c546 = arith.constant 546 : index
    %1912 = memref.load %arg1[%c546] : memref<588xf32, #tpu.memory_space<smem>>
    %1913 = vector.broadcast %1912 : f32 to vector<8x128xf32>
    %1914 = arith.mulf %1913, %1899 : vector<8x128xf32>
    %1915 = arith.addf %1897, %1914 : vector<8x128xf32>
    %c106 = arith.constant 106 : index
    %c0_322 = arith.constant 0 : index
    %c0_323 = arith.constant 0 : index
    %1916 = vector.load %arg3[%c106, %c0_322, %c0_323] : memref<147x8x128xf32, #tpu.memory_space<vmem>>, vector<1x8x128xf32>
    %1917 = vector.shape_cast %1916 : vector<1x8x128xf32> to vector<8x128xf32>
    %c106_324 = arith.constant 106 : index
    %1918 = memref.load %arg1[%c106_324] : memref<588xf32, #tpu.memory_space<smem>>
    %1919 = vector.broadcast %1918 : f32 to vector<8x128xf32>
    %1920 = arith.mulf %1919, %1917 : vector<8x128xf32>
    %1921 = arith.addf %1903, %1920 : vector<8x128xf32>
    %c253 = arith.constant 253 : index
    %1922 = memref.load %arg1[%c253] : memref<588xf32, #tpu.memory_space<smem>>
    %1923 = vector.broadcast %1922 : f32 to vector<8x128xf32>
    %1924 = arith.mulf %1923, %1917 : vector<8x128xf32>
    %1925 = arith.addf %1907, %1924 : vector<8x128xf32>
    %c400 = arith.constant 400 : index
    %1926 = memref.load %arg1[%c400] : memref<588xf32, #tpu.memory_space<smem>>
    %1927 = vector.broadcast %1926 : f32 to vector<8x128xf32>
    %1928 = arith.mulf %1927, %1917 : vector<8x128xf32>
    %1929 = arith.addf %1911, %1928 : vector<8x128xf32>
    %c547 = arith.constant 547 : index
    %1930 = memref.load %arg1[%c547] : memref<588xf32, #tpu.memory_space<smem>>
    %1931 = vector.broadcast %1930 : f32 to vector<8x128xf32>
    %1932 = arith.mulf %1931, %1917 : vector<8x128xf32>
    %1933 = arith.addf %1915, %1932 : vector<8x128xf32>
    %c107 = arith.constant 107 : index
    %c0_325 = arith.constant 0 : index
    %c0_326 = arith.constant 0 : index
    %1934 = vector.load %arg3[%c107, %c0_325, %c0_326] : memref<147x8x128xf32, #tpu.memory_space<vmem>>, vector<1x8x128xf32>
    %1935 = vector.shape_cast %1934 : vector<1x8x128xf32> to vector<8x128xf32>
    %c107_327 = arith.constant 107 : index
    %1936 = memref.load %arg1[%c107_327] : memref<588xf32, #tpu.memory_space<smem>>
    %1937 = vector.broadcast %1936 : f32 to vector<8x128xf32>
    %1938 = arith.mulf %1937, %1935 : vector<8x128xf32>
    %1939 = arith.addf %1921, %1938 : vector<8x128xf32>
    %c254 = arith.constant 254 : index
    %1940 = memref.load %arg1[%c254] : memref<588xf32, #tpu.memory_space<smem>>
    %1941 = vector.broadcast %1940 : f32 to vector<8x128xf32>
    %1942 = arith.mulf %1941, %1935 : vector<8x128xf32>
    %1943 = arith.addf %1925, %1942 : vector<8x128xf32>
    %c401 = arith.constant 401 : index
    %1944 = memref.load %arg1[%c401] : memref<588xf32, #tpu.memory_space<smem>>
    %1945 = vector.broadcast %1944 : f32 to vector<8x128xf32>
    %1946 = arith.mulf %1945, %1935 : vector<8x128xf32>
    %1947 = arith.addf %1929, %1946 : vector<8x128xf32>
    %c548 = arith.constant 548 : index
    %1948 = memref.load %arg1[%c548] : memref<588xf32, #tpu.memory_space<smem>>
    %1949 = vector.broadcast %1948 : f32 to vector<8x128xf32>
    %1950 = arith.mulf %1949, %1935 : vector<8x128xf32>
    %1951 = arith.addf %1933, %1950 : vector<8x128xf32>
    %c108 = arith.constant 108 : index
    %c0_328 = arith.constant 0 : index
    %c0_329 = arith.constant 0 : index
    %1952 = vector.load %arg3[%c108, %c0_328, %c0_329] : memref<147x8x128xf32, #tpu.memory_space<vmem>>, vector<1x8x128xf32>
    %1953 = vector.shape_cast %1952 : vector<1x8x128xf32> to vector<8x128xf32>
    %c108_330 = arith.constant 108 : index
    %1954 = memref.load %arg1[%c108_330] : memref<588xf32, #tpu.memory_space<smem>>
    %1955 = vector.broadcast %1954 : f32 to vector<8x128xf32>
    %1956 = arith.mulf %1955, %1953 : vector<8x128xf32>
    %1957 = arith.addf %1939, %1956 : vector<8x128xf32>
    %c255 = arith.constant 255 : index
    %1958 = memref.load %arg1[%c255] : memref<588xf32, #tpu.memory_space<smem>>
    %1959 = vector.broadcast %1958 : f32 to vector<8x128xf32>
    %1960 = arith.mulf %1959, %1953 : vector<8x128xf32>
    %1961 = arith.addf %1943, %1960 : vector<8x128xf32>
    %c402 = arith.constant 402 : index
    %1962 = memref.load %arg1[%c402] : memref<588xf32, #tpu.memory_space<smem>>
    %1963 = vector.broadcast %1962 : f32 to vector<8x128xf32>
    %1964 = arith.mulf %1963, %1953 : vector<8x128xf32>
    %1965 = arith.addf %1947, %1964 : vector<8x128xf32>
    %c549 = arith.constant 549 : index
    %1966 = memref.load %arg1[%c549] : memref<588xf32, #tpu.memory_space<smem>>
    %1967 = vector.broadcast %1966 : f32 to vector<8x128xf32>
    %1968 = arith.mulf %1967, %1953 : vector<8x128xf32>
    %1969 = arith.addf %1951, %1968 : vector<8x128xf32>
    %c109 = arith.constant 109 : index
    %c0_331 = arith.constant 0 : index
    %c0_332 = arith.constant 0 : index
    %1970 = vector.load %arg3[%c109, %c0_331, %c0_332] : memref<147x8x128xf32, #tpu.memory_space<vmem>>, vector<1x8x128xf32>
    %1971 = vector.shape_cast %1970 : vector<1x8x128xf32> to vector<8x128xf32>
    %c109_333 = arith.constant 109 : index
    %1972 = memref.load %arg1[%c109_333] : memref<588xf32, #tpu.memory_space<smem>>
    %1973 = vector.broadcast %1972 : f32 to vector<8x128xf32>
    %1974 = arith.mulf %1973, %1971 : vector<8x128xf32>
    %1975 = arith.addf %1957, %1974 : vector<8x128xf32>
    %c256 = arith.constant 256 : index
    %1976 = memref.load %arg1[%c256] : memref<588xf32, #tpu.memory_space<smem>>
    %1977 = vector.broadcast %1976 : f32 to vector<8x128xf32>
    %1978 = arith.mulf %1977, %1971 : vector<8x128xf32>
    %1979 = arith.addf %1961, %1978 : vector<8x128xf32>
    %c403 = arith.constant 403 : index
    %1980 = memref.load %arg1[%c403] : memref<588xf32, #tpu.memory_space<smem>>
    %1981 = vector.broadcast %1980 : f32 to vector<8x128xf32>
    %1982 = arith.mulf %1981, %1971 : vector<8x128xf32>
    %1983 = arith.addf %1965, %1982 : vector<8x128xf32>
    %c550 = arith.constant 550 : index
    %1984 = memref.load %arg1[%c550] : memref<588xf32, #tpu.memory_space<smem>>
    %1985 = vector.broadcast %1984 : f32 to vector<8x128xf32>
    %1986 = arith.mulf %1985, %1971 : vector<8x128xf32>
    %1987 = arith.addf %1969, %1986 : vector<8x128xf32>
    %c110 = arith.constant 110 : index
    %c0_334 = arith.constant 0 : index
    %c0_335 = arith.constant 0 : index
    %1988 = vector.load %arg3[%c110, %c0_334, %c0_335] : memref<147x8x128xf32, #tpu.memory_space<vmem>>, vector<1x8x128xf32>
    %1989 = vector.shape_cast %1988 : vector<1x8x128xf32> to vector<8x128xf32>
    %c110_336 = arith.constant 110 : index
    %1990 = memref.load %arg1[%c110_336] : memref<588xf32, #tpu.memory_space<smem>>
    %1991 = vector.broadcast %1990 : f32 to vector<8x128xf32>
    %1992 = arith.mulf %1991, %1989 : vector<8x128xf32>
    %1993 = arith.addf %1975, %1992 : vector<8x128xf32>
    %c257 = arith.constant 257 : index
    %1994 = memref.load %arg1[%c257] : memref<588xf32, #tpu.memory_space<smem>>
    %1995 = vector.broadcast %1994 : f32 to vector<8x128xf32>
    %1996 = arith.mulf %1995, %1989 : vector<8x128xf32>
    %1997 = arith.addf %1979, %1996 : vector<8x128xf32>
    %c404 = arith.constant 404 : index
    %1998 = memref.load %arg1[%c404] : memref<588xf32, #tpu.memory_space<smem>>
    %1999 = vector.broadcast %1998 : f32 to vector<8x128xf32>
    %2000 = arith.mulf %1999, %1989 : vector<8x128xf32>
    %2001 = arith.addf %1983, %2000 : vector<8x128xf32>
    %c551 = arith.constant 551 : index
    %2002 = memref.load %arg1[%c551] : memref<588xf32, #tpu.memory_space<smem>>
    %2003 = vector.broadcast %2002 : f32 to vector<8x128xf32>
    %2004 = arith.mulf %2003, %1989 : vector<8x128xf32>
    %2005 = arith.addf %1987, %2004 : vector<8x128xf32>
    %c111 = arith.constant 111 : index
    %c0_337 = arith.constant 0 : index
    %c0_338 = arith.constant 0 : index
    %2006 = vector.load %arg3[%c111, %c0_337, %c0_338] : memref<147x8x128xf32, #tpu.memory_space<vmem>>, vector<1x8x128xf32>
    %2007 = vector.shape_cast %2006 : vector<1x8x128xf32> to vector<8x128xf32>
    %c111_339 = arith.constant 111 : index
    %2008 = memref.load %arg1[%c111_339] : memref<588xf32, #tpu.memory_space<smem>>
    %2009 = vector.broadcast %2008 : f32 to vector<8x128xf32>
    %2010 = arith.mulf %2009, %2007 : vector<8x128xf32>
    %2011 = arith.addf %1993, %2010 : vector<8x128xf32>
    %c258 = arith.constant 258 : index
    %2012 = memref.load %arg1[%c258] : memref<588xf32, #tpu.memory_space<smem>>
    %2013 = vector.broadcast %2012 : f32 to vector<8x128xf32>
    %2014 = arith.mulf %2013, %2007 : vector<8x128xf32>
    %2015 = arith.addf %1997, %2014 : vector<8x128xf32>
    %c405 = arith.constant 405 : index
    %2016 = memref.load %arg1[%c405] : memref<588xf32, #tpu.memory_space<smem>>
    %2017 = vector.broadcast %2016 : f32 to vector<8x128xf32>
    %2018 = arith.mulf %2017, %2007 : vector<8x128xf32>
    %2019 = arith.addf %2001, %2018 : vector<8x128xf32>
    %c552 = arith.constant 552 : index
    %2020 = memref.load %arg1[%c552] : memref<588xf32, #tpu.memory_space<smem>>
    %2021 = vector.broadcast %2020 : f32 to vector<8x128xf32>
    %2022 = arith.mulf %2021, %2007 : vector<8x128xf32>
    %2023 = arith.addf %2005, %2022 : vector<8x128xf32>
    %c112 = arith.constant 112 : index
    %c0_340 = arith.constant 0 : index
    %c0_341 = arith.constant 0 : index
    %2024 = vector.load %arg3[%c112, %c0_340, %c0_341] : memref<147x8x128xf32, #tpu.memory_space<vmem>>, vector<1x8x128xf32>
    %2025 = vector.shape_cast %2024 : vector<1x8x128xf32> to vector<8x128xf32>
    %c112_342 = arith.constant 112 : index
    %2026 = memref.load %arg1[%c112_342] : memref<588xf32, #tpu.memory_space<smem>>
    %2027 = vector.broadcast %2026 : f32 to vector<8x128xf32>
    %2028 = arith.mulf %2027, %2025 : vector<8x128xf32>
    %2029 = arith.addf %2011, %2028 : vector<8x128xf32>
    %c259 = arith.constant 259 : index
    %2030 = memref.load %arg1[%c259] : memref<588xf32, #tpu.memory_space<smem>>
    %2031 = vector.broadcast %2030 : f32 to vector<8x128xf32>
    %2032 = arith.mulf %2031, %2025 : vector<8x128xf32>
    %2033 = arith.addf %2015, %2032 : vector<8x128xf32>
    %c406 = arith.constant 406 : index
    %2034 = memref.load %arg1[%c406] : memref<588xf32, #tpu.memory_space<smem>>
    %2035 = vector.broadcast %2034 : f32 to vector<8x128xf32>
    %2036 = arith.mulf %2035, %2025 : vector<8x128xf32>
    %2037 = arith.addf %2019, %2036 : vector<8x128xf32>
    %c553 = arith.constant 553 : index
    %2038 = memref.load %arg1[%c553] : memref<588xf32, #tpu.memory_space<smem>>
    %2039 = vector.broadcast %2038 : f32 to vector<8x128xf32>
    %2040 = arith.mulf %2039, %2025 : vector<8x128xf32>
    %2041 = arith.addf %2023, %2040 : vector<8x128xf32>
    %c113 = arith.constant 113 : index
    %c0_343 = arith.constant 0 : index
    %c0_344 = arith.constant 0 : index
    %2042 = vector.load %arg3[%c113, %c0_343, %c0_344] : memref<147x8x128xf32, #tpu.memory_space<vmem>>, vector<1x8x128xf32>
    %2043 = vector.shape_cast %2042 : vector<1x8x128xf32> to vector<8x128xf32>
    %c113_345 = arith.constant 113 : index
    %2044 = memref.load %arg1[%c113_345] : memref<588xf32, #tpu.memory_space<smem>>
    %2045 = vector.broadcast %2044 : f32 to vector<8x128xf32>
    %2046 = arith.mulf %2045, %2043 : vector<8x128xf32>
    %2047 = arith.addf %2029, %2046 : vector<8x128xf32>
    %c260 = arith.constant 260 : index
    %2048 = memref.load %arg1[%c260] : memref<588xf32, #tpu.memory_space<smem>>
    %2049 = vector.broadcast %2048 : f32 to vector<8x128xf32>
    %2050 = arith.mulf %2049, %2043 : vector<8x128xf32>
    %2051 = arith.addf %2033, %2050 : vector<8x128xf32>
    %c407 = arith.constant 407 : index
    %2052 = memref.load %arg1[%c407] : memref<588xf32, #tpu.memory_space<smem>>
    %2053 = vector.broadcast %2052 : f32 to vector<8x128xf32>
    %2054 = arith.mulf %2053, %2043 : vector<8x128xf32>
    %2055 = arith.addf %2037, %2054 : vector<8x128xf32>
    %c554 = arith.constant 554 : index
    %2056 = memref.load %arg1[%c554] : memref<588xf32, #tpu.memory_space<smem>>
    %2057 = vector.broadcast %2056 : f32 to vector<8x128xf32>
    %2058 = arith.mulf %2057, %2043 : vector<8x128xf32>
    %2059 = arith.addf %2041, %2058 : vector<8x128xf32>
    %c114 = arith.constant 114 : index
    %c0_346 = arith.constant 0 : index
    %c0_347 = arith.constant 0 : index
    %2060 = vector.load %arg3[%c114, %c0_346, %c0_347] : memref<147x8x128xf32, #tpu.memory_space<vmem>>, vector<1x8x128xf32>
    %2061 = vector.shape_cast %2060 : vector<1x8x128xf32> to vector<8x128xf32>
    %c114_348 = arith.constant 114 : index
    %2062 = memref.load %arg1[%c114_348] : memref<588xf32, #tpu.memory_space<smem>>
    %2063 = vector.broadcast %2062 : f32 to vector<8x128xf32>
    %2064 = arith.mulf %2063, %2061 : vector<8x128xf32>
    %2065 = arith.addf %2047, %2064 : vector<8x128xf32>
    %c261 = arith.constant 261 : index
    %2066 = memref.load %arg1[%c261] : memref<588xf32, #tpu.memory_space<smem>>
    %2067 = vector.broadcast %2066 : f32 to vector<8x128xf32>
    %2068 = arith.mulf %2067, %2061 : vector<8x128xf32>
    %2069 = arith.addf %2051, %2068 : vector<8x128xf32>
    %c408 = arith.constant 408 : index
    %2070 = memref.load %arg1[%c408] : memref<588xf32, #tpu.memory_space<smem>>
    %2071 = vector.broadcast %2070 : f32 to vector<8x128xf32>
    %2072 = arith.mulf %2071, %2061 : vector<8x128xf32>
    %2073 = arith.addf %2055, %2072 : vector<8x128xf32>
    %c555 = arith.constant 555 : index
    %2074 = memref.load %arg1[%c555] : memref<588xf32, #tpu.memory_space<smem>>
    %2075 = vector.broadcast %2074 : f32 to vector<8x128xf32>
    %2076 = arith.mulf %2075, %2061 : vector<8x128xf32>
    %2077 = arith.addf %2059, %2076 : vector<8x128xf32>
    %c115 = arith.constant 115 : index
    %c0_349 = arith.constant 0 : index
    %c0_350 = arith.constant 0 : index
    %2078 = vector.load %arg3[%c115, %c0_349, %c0_350] : memref<147x8x128xf32, #tpu.memory_space<vmem>>, vector<1x8x128xf32>
    %2079 = vector.shape_cast %2078 : vector<1x8x128xf32> to vector<8x128xf32>
    %c115_351 = arith.constant 115 : index
    %2080 = memref.load %arg1[%c115_351] : memref<588xf32, #tpu.memory_space<smem>>
    %2081 = vector.broadcast %2080 : f32 to vector<8x128xf32>
    %2082 = arith.mulf %2081, %2079 : vector<8x128xf32>
    %2083 = arith.addf %2065, %2082 : vector<8x128xf32>
    %c262 = arith.constant 262 : index
    %2084 = memref.load %arg1[%c262] : memref<588xf32, #tpu.memory_space<smem>>
    %2085 = vector.broadcast %2084 : f32 to vector<8x128xf32>
    %2086 = arith.mulf %2085, %2079 : vector<8x128xf32>
    %2087 = arith.addf %2069, %2086 : vector<8x128xf32>
    %c409 = arith.constant 409 : index
    %2088 = memref.load %arg1[%c409] : memref<588xf32, #tpu.memory_space<smem>>
    %2089 = vector.broadcast %2088 : f32 to vector<8x128xf32>
    %2090 = arith.mulf %2089, %2079 : vector<8x128xf32>
    %2091 = arith.addf %2073, %2090 : vector<8x128xf32>
    %c556 = arith.constant 556 : index
    %2092 = memref.load %arg1[%c556] : memref<588xf32, #tpu.memory_space<smem>>
    %2093 = vector.broadcast %2092 : f32 to vector<8x128xf32>
    %2094 = arith.mulf %2093, %2079 : vector<8x128xf32>
    %2095 = arith.addf %2077, %2094 : vector<8x128xf32>
    %c116 = arith.constant 116 : index
    %c0_352 = arith.constant 0 : index
    %c0_353 = arith.constant 0 : index
    %2096 = vector.load %arg3[%c116, %c0_352, %c0_353] : memref<147x8x128xf32, #tpu.memory_space<vmem>>, vector<1x8x128xf32>
    %2097 = vector.shape_cast %2096 : vector<1x8x128xf32> to vector<8x128xf32>
    %c116_354 = arith.constant 116 : index
    %2098 = memref.load %arg1[%c116_354] : memref<588xf32, #tpu.memory_space<smem>>
    %2099 = vector.broadcast %2098 : f32 to vector<8x128xf32>
    %2100 = arith.mulf %2099, %2097 : vector<8x128xf32>
    %2101 = arith.addf %2083, %2100 : vector<8x128xf32>
    %c263 = arith.constant 263 : index
    %2102 = memref.load %arg1[%c263] : memref<588xf32, #tpu.memory_space<smem>>
    %2103 = vector.broadcast %2102 : f32 to vector<8x128xf32>
    %2104 = arith.mulf %2103, %2097 : vector<8x128xf32>
    %2105 = arith.addf %2087, %2104 : vector<8x128xf32>
    %c410 = arith.constant 410 : index
    %2106 = memref.load %arg1[%c410] : memref<588xf32, #tpu.memory_space<smem>>
    %2107 = vector.broadcast %2106 : f32 to vector<8x128xf32>
    %2108 = arith.mulf %2107, %2097 : vector<8x128xf32>
    %2109 = arith.addf %2091, %2108 : vector<8x128xf32>
    %c557 = arith.constant 557 : index
    %2110 = memref.load %arg1[%c557] : memref<588xf32, #tpu.memory_space<smem>>
    %2111 = vector.broadcast %2110 : f32 to vector<8x128xf32>
    %2112 = arith.mulf %2111, %2097 : vector<8x128xf32>
    %2113 = arith.addf %2095, %2112 : vector<8x128xf32>
    %c117 = arith.constant 117 : index
    %c0_355 = arith.constant 0 : index
    %c0_356 = arith.constant 0 : index
    %2114 = vector.load %arg3[%c117, %c0_355, %c0_356] : memref<147x8x128xf32, #tpu.memory_space<vmem>>, vector<1x8x128xf32>
    %2115 = vector.shape_cast %2114 : vector<1x8x128xf32> to vector<8x128xf32>
    %c117_357 = arith.constant 117 : index
    %2116 = memref.load %arg1[%c117_357] : memref<588xf32, #tpu.memory_space<smem>>
    %2117 = vector.broadcast %2116 : f32 to vector<8x128xf32>
    %2118 = arith.mulf %2117, %2115 : vector<8x128xf32>
    %2119 = arith.addf %2101, %2118 : vector<8x128xf32>
    %c264 = arith.constant 264 : index
    %2120 = memref.load %arg1[%c264] : memref<588xf32, #tpu.memory_space<smem>>
    %2121 = vector.broadcast %2120 : f32 to vector<8x128xf32>
    %2122 = arith.mulf %2121, %2115 : vector<8x128xf32>
    %2123 = arith.addf %2105, %2122 : vector<8x128xf32>
    %c411 = arith.constant 411 : index
    %2124 = memref.load %arg1[%c411] : memref<588xf32, #tpu.memory_space<smem>>
    %2125 = vector.broadcast %2124 : f32 to vector<8x128xf32>
    %2126 = arith.mulf %2125, %2115 : vector<8x128xf32>
    %2127 = arith.addf %2109, %2126 : vector<8x128xf32>
    %c558 = arith.constant 558 : index
    %2128 = memref.load %arg1[%c558] : memref<588xf32, #tpu.memory_space<smem>>
    %2129 = vector.broadcast %2128 : f32 to vector<8x128xf32>
    %2130 = arith.mulf %2129, %2115 : vector<8x128xf32>
    %2131 = arith.addf %2113, %2130 : vector<8x128xf32>
    %c118 = arith.constant 118 : index
    %c0_358 = arith.constant 0 : index
    %c0_359 = arith.constant 0 : index
    %2132 = vector.load %arg3[%c118, %c0_358, %c0_359] : memref<147x8x128xf32, #tpu.memory_space<vmem>>, vector<1x8x128xf32>
    %2133 = vector.shape_cast %2132 : vector<1x8x128xf32> to vector<8x128xf32>
    %c118_360 = arith.constant 118 : index
    %2134 = memref.load %arg1[%c118_360] : memref<588xf32, #tpu.memory_space<smem>>
    %2135 = vector.broadcast %2134 : f32 to vector<8x128xf32>
    %2136 = arith.mulf %2135, %2133 : vector<8x128xf32>
    %2137 = arith.addf %2119, %2136 : vector<8x128xf32>
    %c265 = arith.constant 265 : index
    %2138 = memref.load %arg1[%c265] : memref<588xf32, #tpu.memory_space<smem>>
    %2139 = vector.broadcast %2138 : f32 to vector<8x128xf32>
    %2140 = arith.mulf %2139, %2133 : vector<8x128xf32>
    %2141 = arith.addf %2123, %2140 : vector<8x128xf32>
    %c412 = arith.constant 412 : index
    %2142 = memref.load %arg1[%c412] : memref<588xf32, #tpu.memory_space<smem>>
    %2143 = vector.broadcast %2142 : f32 to vector<8x128xf32>
    %2144 = arith.mulf %2143, %2133 : vector<8x128xf32>
    %2145 = arith.addf %2127, %2144 : vector<8x128xf32>
    %c559 = arith.constant 559 : index
    %2146 = memref.load %arg1[%c559] : memref<588xf32, #tpu.memory_space<smem>>
    %2147 = vector.broadcast %2146 : f32 to vector<8x128xf32>
    %2148 = arith.mulf %2147, %2133 : vector<8x128xf32>
    %2149 = arith.addf %2131, %2148 : vector<8x128xf32>
    %c119 = arith.constant 119 : index
    %c0_361 = arith.constant 0 : index
    %c0_362 = arith.constant 0 : index
    %2150 = vector.load %arg3[%c119, %c0_361, %c0_362] : memref<147x8x128xf32, #tpu.memory_space<vmem>>, vector<1x8x128xf32>
    %2151 = vector.shape_cast %2150 : vector<1x8x128xf32> to vector<8x128xf32>
    %c119_363 = arith.constant 119 : index
    %2152 = memref.load %arg1[%c119_363] : memref<588xf32, #tpu.memory_space<smem>>
    %2153 = vector.broadcast %2152 : f32 to vector<8x128xf32>
    %2154 = arith.mulf %2153, %2151 : vector<8x128xf32>
    %2155 = arith.addf %2137, %2154 : vector<8x128xf32>
    %c266 = arith.constant 266 : index
    %2156 = memref.load %arg1[%c266] : memref<588xf32, #tpu.memory_space<smem>>
    %2157 = vector.broadcast %2156 : f32 to vector<8x128xf32>
    %2158 = arith.mulf %2157, %2151 : vector<8x128xf32>
    %2159 = arith.addf %2141, %2158 : vector<8x128xf32>
    %c413 = arith.constant 413 : index
    %2160 = memref.load %arg1[%c413] : memref<588xf32, #tpu.memory_space<smem>>
    %2161 = vector.broadcast %2160 : f32 to vector<8x128xf32>
    %2162 = arith.mulf %2161, %2151 : vector<8x128xf32>
    %2163 = arith.addf %2145, %2162 : vector<8x128xf32>
    %c560 = arith.constant 560 : index
    %2164 = memref.load %arg1[%c560] : memref<588xf32, #tpu.memory_space<smem>>
    %2165 = vector.broadcast %2164 : f32 to vector<8x128xf32>
    %2166 = arith.mulf %2165, %2151 : vector<8x128xf32>
    %2167 = arith.addf %2149, %2166 : vector<8x128xf32>
    %c120 = arith.constant 120 : index
    %c0_364 = arith.constant 0 : index
    %c0_365 = arith.constant 0 : index
    %2168 = vector.load %arg3[%c120, %c0_364, %c0_365] : memref<147x8x128xf32, #tpu.memory_space<vmem>>, vector<1x8x128xf32>
    %2169 = vector.shape_cast %2168 : vector<1x8x128xf32> to vector<8x128xf32>
    %c120_366 = arith.constant 120 : index
    %2170 = memref.load %arg1[%c120_366] : memref<588xf32, #tpu.memory_space<smem>>
    %2171 = vector.broadcast %2170 : f32 to vector<8x128xf32>
    %2172 = arith.mulf %2171, %2169 : vector<8x128xf32>
    %2173 = arith.addf %2155, %2172 : vector<8x128xf32>
    %c267 = arith.constant 267 : index
    %2174 = memref.load %arg1[%c267] : memref<588xf32, #tpu.memory_space<smem>>
    %2175 = vector.broadcast %2174 : f32 to vector<8x128xf32>
    %2176 = arith.mulf %2175, %2169 : vector<8x128xf32>
    %2177 = arith.addf %2159, %2176 : vector<8x128xf32>
    %c414 = arith.constant 414 : index
    %2178 = memref.load %arg1[%c414] : memref<588xf32, #tpu.memory_space<smem>>
    %2179 = vector.broadcast %2178 : f32 to vector<8x128xf32>
    %2180 = arith.mulf %2179, %2169 : vector<8x128xf32>
    %2181 = arith.addf %2163, %2180 : vector<8x128xf32>
    %c561 = arith.constant 561 : index
    %2182 = memref.load %arg1[%c561] : memref<588xf32, #tpu.memory_space<smem>>
    %2183 = vector.broadcast %2182 : f32 to vector<8x128xf32>
    %2184 = arith.mulf %2183, %2169 : vector<8x128xf32>
    %2185 = arith.addf %2167, %2184 : vector<8x128xf32>
    %c121 = arith.constant 121 : index
    %c0_367 = arith.constant 0 : index
    %c0_368 = arith.constant 0 : index
    %2186 = vector.load %arg3[%c121, %c0_367, %c0_368] : memref<147x8x128xf32, #tpu.memory_space<vmem>>, vector<1x8x128xf32>
    %2187 = vector.shape_cast %2186 : vector<1x8x128xf32> to vector<8x128xf32>
    %c121_369 = arith.constant 121 : index
    %2188 = memref.load %arg1[%c121_369] : memref<588xf32, #tpu.memory_space<smem>>
    %2189 = vector.broadcast %2188 : f32 to vector<8x128xf32>
    %2190 = arith.mulf %2189, %2187 : vector<8x128xf32>
    %2191 = arith.addf %2173, %2190 : vector<8x128xf32>
    %c268 = arith.constant 268 : index
    %2192 = memref.load %arg1[%c268] : memref<588xf32, #tpu.memory_space<smem>>
    %2193 = vector.broadcast %2192 : f32 to vector<8x128xf32>
    %2194 = arith.mulf %2193, %2187 : vector<8x128xf32>
    %2195 = arith.addf %2177, %2194 : vector<8x128xf32>
    %c415 = arith.constant 415 : index
    %2196 = memref.load %arg1[%c415] : memref<588xf32, #tpu.memory_space<smem>>
    %2197 = vector.broadcast %2196 : f32 to vector<8x128xf32>
    %2198 = arith.mulf %2197, %2187 : vector<8x128xf32>
    %2199 = arith.addf %2181, %2198 : vector<8x128xf32>
    %c562 = arith.constant 562 : index
    %2200 = memref.load %arg1[%c562] : memref<588xf32, #tpu.memory_space<smem>>
    %2201 = vector.broadcast %2200 : f32 to vector<8x128xf32>
    %2202 = arith.mulf %2201, %2187 : vector<8x128xf32>
    %2203 = arith.addf %2185, %2202 : vector<8x128xf32>
    %c122 = arith.constant 122 : index
    %c0_370 = arith.constant 0 : index
    %c0_371 = arith.constant 0 : index
    %2204 = vector.load %arg3[%c122, %c0_370, %c0_371] : memref<147x8x128xf32, #tpu.memory_space<vmem>>, vector<1x8x128xf32>
    %2205 = vector.shape_cast %2204 : vector<1x8x128xf32> to vector<8x128xf32>
    %c122_372 = arith.constant 122 : index
    %2206 = memref.load %arg1[%c122_372] : memref<588xf32, #tpu.memory_space<smem>>
    %2207 = vector.broadcast %2206 : f32 to vector<8x128xf32>
    %2208 = arith.mulf %2207, %2205 : vector<8x128xf32>
    %2209 = arith.addf %2191, %2208 : vector<8x128xf32>
    %c269 = arith.constant 269 : index
    %2210 = memref.load %arg1[%c269] : memref<588xf32, #tpu.memory_space<smem>>
    %2211 = vector.broadcast %2210 : f32 to vector<8x128xf32>
    %2212 = arith.mulf %2211, %2205 : vector<8x128xf32>
    %2213 = arith.addf %2195, %2212 : vector<8x128xf32>
    %c416 = arith.constant 416 : index
    %2214 = memref.load %arg1[%c416] : memref<588xf32, #tpu.memory_space<smem>>
    %2215 = vector.broadcast %2214 : f32 to vector<8x128xf32>
    %2216 = arith.mulf %2215, %2205 : vector<8x128xf32>
    %2217 = arith.addf %2199, %2216 : vector<8x128xf32>
    %c563 = arith.constant 563 : index
    %2218 = memref.load %arg1[%c563] : memref<588xf32, #tpu.memory_space<smem>>
    %2219 = vector.broadcast %2218 : f32 to vector<8x128xf32>
    %2220 = arith.mulf %2219, %2205 : vector<8x128xf32>
    %2221 = arith.addf %2203, %2220 : vector<8x128xf32>
    %c123 = arith.constant 123 : index
    %c0_373 = arith.constant 0 : index
    %c0_374 = arith.constant 0 : index
    %2222 = vector.load %arg3[%c123, %c0_373, %c0_374] : memref<147x8x128xf32, #tpu.memory_space<vmem>>, vector<1x8x128xf32>
    %2223 = vector.shape_cast %2222 : vector<1x8x128xf32> to vector<8x128xf32>
    %c123_375 = arith.constant 123 : index
    %2224 = memref.load %arg1[%c123_375] : memref<588xf32, #tpu.memory_space<smem>>
    %2225 = vector.broadcast %2224 : f32 to vector<8x128xf32>
    %2226 = arith.mulf %2225, %2223 : vector<8x128xf32>
    %2227 = arith.addf %2209, %2226 : vector<8x128xf32>
    %c270 = arith.constant 270 : index
    %2228 = memref.load %arg1[%c270] : memref<588xf32, #tpu.memory_space<smem>>
    %2229 = vector.broadcast %2228 : f32 to vector<8x128xf32>
    %2230 = arith.mulf %2229, %2223 : vector<8x128xf32>
    %2231 = arith.addf %2213, %2230 : vector<8x128xf32>
    %c417 = arith.constant 417 : index
    %2232 = memref.load %arg1[%c417] : memref<588xf32, #tpu.memory_space<smem>>
    %2233 = vector.broadcast %2232 : f32 to vector<8x128xf32>
    %2234 = arith.mulf %2233, %2223 : vector<8x128xf32>
    %2235 = arith.addf %2217, %2234 : vector<8x128xf32>
    %c564 = arith.constant 564 : index
    %2236 = memref.load %arg1[%c564] : memref<588xf32, #tpu.memory_space<smem>>
    %2237 = vector.broadcast %2236 : f32 to vector<8x128xf32>
    %2238 = arith.mulf %2237, %2223 : vector<8x128xf32>
    %2239 = arith.addf %2221, %2238 : vector<8x128xf32>
    %c124 = arith.constant 124 : index
    %c0_376 = arith.constant 0 : index
    %c0_377 = arith.constant 0 : index
    %2240 = vector.load %arg3[%c124, %c0_376, %c0_377] : memref<147x8x128xf32, #tpu.memory_space<vmem>>, vector<1x8x128xf32>
    %2241 = vector.shape_cast %2240 : vector<1x8x128xf32> to vector<8x128xf32>
    %c124_378 = arith.constant 124 : index
    %2242 = memref.load %arg1[%c124_378] : memref<588xf32, #tpu.memory_space<smem>>
    %2243 = vector.broadcast %2242 : f32 to vector<8x128xf32>
    %2244 = arith.mulf %2243, %2241 : vector<8x128xf32>
    %2245 = arith.addf %2227, %2244 : vector<8x128xf32>
    %c271 = arith.constant 271 : index
    %2246 = memref.load %arg1[%c271] : memref<588xf32, #tpu.memory_space<smem>>
    %2247 = vector.broadcast %2246 : f32 to vector<8x128xf32>
    %2248 = arith.mulf %2247, %2241 : vector<8x128xf32>
    %2249 = arith.addf %2231, %2248 : vector<8x128xf32>
    %c418 = arith.constant 418 : index
    %2250 = memref.load %arg1[%c418] : memref<588xf32, #tpu.memory_space<smem>>
    %2251 = vector.broadcast %2250 : f32 to vector<8x128xf32>
    %2252 = arith.mulf %2251, %2241 : vector<8x128xf32>
    %2253 = arith.addf %2235, %2252 : vector<8x128xf32>
    %c565 = arith.constant 565 : index
    %2254 = memref.load %arg1[%c565] : memref<588xf32, #tpu.memory_space<smem>>
    %2255 = vector.broadcast %2254 : f32 to vector<8x128xf32>
    %2256 = arith.mulf %2255, %2241 : vector<8x128xf32>
    %2257 = arith.addf %2239, %2256 : vector<8x128xf32>
    %c125 = arith.constant 125 : index
    %c0_379 = arith.constant 0 : index
    %c0_380 = arith.constant 0 : index
    %2258 = vector.load %arg3[%c125, %c0_379, %c0_380] : memref<147x8x128xf32, #tpu.memory_space<vmem>>, vector<1x8x128xf32>
    %2259 = vector.shape_cast %2258 : vector<1x8x128xf32> to vector<8x128xf32>
    %c125_381 = arith.constant 125 : index
    %2260 = memref.load %arg1[%c125_381] : memref<588xf32, #tpu.memory_space<smem>>
    %2261 = vector.broadcast %2260 : f32 to vector<8x128xf32>
    %2262 = arith.mulf %2261, %2259 : vector<8x128xf32>
    %2263 = arith.addf %2245, %2262 : vector<8x128xf32>
    %c272 = arith.constant 272 : index
    %2264 = memref.load %arg1[%c272] : memref<588xf32, #tpu.memory_space<smem>>
    %2265 = vector.broadcast %2264 : f32 to vector<8x128xf32>
    %2266 = arith.mulf %2265, %2259 : vector<8x128xf32>
    %2267 = arith.addf %2249, %2266 : vector<8x128xf32>
    %c419 = arith.constant 419 : index
    %2268 = memref.load %arg1[%c419] : memref<588xf32, #tpu.memory_space<smem>>
    %2269 = vector.broadcast %2268 : f32 to vector<8x128xf32>
    %2270 = arith.mulf %2269, %2259 : vector<8x128xf32>
    %2271 = arith.addf %2253, %2270 : vector<8x128xf32>
    %c566 = arith.constant 566 : index
    %2272 = memref.load %arg1[%c566] : memref<588xf32, #tpu.memory_space<smem>>
    %2273 = vector.broadcast %2272 : f32 to vector<8x128xf32>
    %2274 = arith.mulf %2273, %2259 : vector<8x128xf32>
    %2275 = arith.addf %2257, %2274 : vector<8x128xf32>
    %c126 = arith.constant 126 : index
    %c0_382 = arith.constant 0 : index
    %c0_383 = arith.constant 0 : index
    %2276 = vector.load %arg3[%c126, %c0_382, %c0_383] : memref<147x8x128xf32, #tpu.memory_space<vmem>>, vector<1x8x128xf32>
    %2277 = vector.shape_cast %2276 : vector<1x8x128xf32> to vector<8x128xf32>
    %c126_384 = arith.constant 126 : index
    %2278 = memref.load %arg1[%c126_384] : memref<588xf32, #tpu.memory_space<smem>>
    %2279 = vector.broadcast %2278 : f32 to vector<8x128xf32>
    %2280 = arith.mulf %2279, %2277 : vector<8x128xf32>
    %2281 = arith.addf %2263, %2280 : vector<8x128xf32>
    %c273 = arith.constant 273 : index
    %2282 = memref.load %arg1[%c273] : memref<588xf32, #tpu.memory_space<smem>>
    %2283 = vector.broadcast %2282 : f32 to vector<8x128xf32>
    %2284 = arith.mulf %2283, %2277 : vector<8x128xf32>
    %2285 = arith.addf %2267, %2284 : vector<8x128xf32>
    %c420 = arith.constant 420 : index
    %2286 = memref.load %arg1[%c420] : memref<588xf32, #tpu.memory_space<smem>>
    %2287 = vector.broadcast %2286 : f32 to vector<8x128xf32>
    %2288 = arith.mulf %2287, %2277 : vector<8x128xf32>
    %2289 = arith.addf %2271, %2288 : vector<8x128xf32>
    %c567 = arith.constant 567 : index
    %2290 = memref.load %arg1[%c567] : memref<588xf32, #tpu.memory_space<smem>>
    %2291 = vector.broadcast %2290 : f32 to vector<8x128xf32>
    %2292 = arith.mulf %2291, %2277 : vector<8x128xf32>
    %2293 = arith.addf %2275, %2292 : vector<8x128xf32>
    %c127 = arith.constant 127 : index
    %c0_385 = arith.constant 0 : index
    %c0_386 = arith.constant 0 : index
    %2294 = vector.load %arg3[%c127, %c0_385, %c0_386] : memref<147x8x128xf32, #tpu.memory_space<vmem>>, vector<1x8x128xf32>
    %2295 = vector.shape_cast %2294 : vector<1x8x128xf32> to vector<8x128xf32>
    %c127_387 = arith.constant 127 : index
    %2296 = memref.load %arg1[%c127_387] : memref<588xf32, #tpu.memory_space<smem>>
    %2297 = vector.broadcast %2296 : f32 to vector<8x128xf32>
    %2298 = arith.mulf %2297, %2295 : vector<8x128xf32>
    %2299 = arith.addf %2281, %2298 : vector<8x128xf32>
    %c274 = arith.constant 274 : index
    %2300 = memref.load %arg1[%c274] : memref<588xf32, #tpu.memory_space<smem>>
    %2301 = vector.broadcast %2300 : f32 to vector<8x128xf32>
    %2302 = arith.mulf %2301, %2295 : vector<8x128xf32>
    %2303 = arith.addf %2285, %2302 : vector<8x128xf32>
    %c421 = arith.constant 421 : index
    %2304 = memref.load %arg1[%c421] : memref<588xf32, #tpu.memory_space<smem>>
    %2305 = vector.broadcast %2304 : f32 to vector<8x128xf32>
    %2306 = arith.mulf %2305, %2295 : vector<8x128xf32>
    %2307 = arith.addf %2289, %2306 : vector<8x128xf32>
    %c568 = arith.constant 568 : index
    %2308 = memref.load %arg1[%c568] : memref<588xf32, #tpu.memory_space<smem>>
    %2309 = vector.broadcast %2308 : f32 to vector<8x128xf32>
    %2310 = arith.mulf %2309, %2295 : vector<8x128xf32>
    %2311 = arith.addf %2293, %2310 : vector<8x128xf32>
    %c128 = arith.constant 128 : index
    %c0_388 = arith.constant 0 : index
    %c0_389 = arith.constant 0 : index
    %2312 = vector.load %arg3[%c128, %c0_388, %c0_389] : memref<147x8x128xf32, #tpu.memory_space<vmem>>, vector<1x8x128xf32>
    %2313 = vector.shape_cast %2312 : vector<1x8x128xf32> to vector<8x128xf32>
    %c128_390 = arith.constant 128 : index
    %2314 = memref.load %arg1[%c128_390] : memref<588xf32, #tpu.memory_space<smem>>
    %2315 = vector.broadcast %2314 : f32 to vector<8x128xf32>
    %2316 = arith.mulf %2315, %2313 : vector<8x128xf32>
    %2317 = arith.addf %2299, %2316 : vector<8x128xf32>
    %c275 = arith.constant 275 : index
    %2318 = memref.load %arg1[%c275] : memref<588xf32, #tpu.memory_space<smem>>
    %2319 = vector.broadcast %2318 : f32 to vector<8x128xf32>
    %2320 = arith.mulf %2319, %2313 : vector<8x128xf32>
    %2321 = arith.addf %2303, %2320 : vector<8x128xf32>
    %c422 = arith.constant 422 : index
    %2322 = memref.load %arg1[%c422] : memref<588xf32, #tpu.memory_space<smem>>
    %2323 = vector.broadcast %2322 : f32 to vector<8x128xf32>
    %2324 = arith.mulf %2323, %2313 : vector<8x128xf32>
    %2325 = arith.addf %2307, %2324 : vector<8x128xf32>
    %c569 = arith.constant 569 : index
    %2326 = memref.load %arg1[%c569] : memref<588xf32, #tpu.memory_space<smem>>
    %2327 = vector.broadcast %2326 : f32 to vector<8x128xf32>
    %2328 = arith.mulf %2327, %2313 : vector<8x128xf32>
    %2329 = arith.addf %2311, %2328 : vector<8x128xf32>
    %c129 = arith.constant 129 : index
    %c0_391 = arith.constant 0 : index
    %c0_392 = arith.constant 0 : index
    %2330 = vector.load %arg3[%c129, %c0_391, %c0_392] : memref<147x8x128xf32, #tpu.memory_space<vmem>>, vector<1x8x128xf32>
    %2331 = vector.shape_cast %2330 : vector<1x8x128xf32> to vector<8x128xf32>
    %c129_393 = arith.constant 129 : index
    %2332 = memref.load %arg1[%c129_393] : memref<588xf32, #tpu.memory_space<smem>>
    %2333 = vector.broadcast %2332 : f32 to vector<8x128xf32>
    %2334 = arith.mulf %2333, %2331 : vector<8x128xf32>
    %2335 = arith.addf %2317, %2334 : vector<8x128xf32>
    %c276 = arith.constant 276 : index
    %2336 = memref.load %arg1[%c276] : memref<588xf32, #tpu.memory_space<smem>>
    %2337 = vector.broadcast %2336 : f32 to vector<8x128xf32>
    %2338 = arith.mulf %2337, %2331 : vector<8x128xf32>
    %2339 = arith.addf %2321, %2338 : vector<8x128xf32>
    %c423 = arith.constant 423 : index
    %2340 = memref.load %arg1[%c423] : memref<588xf32, #tpu.memory_space<smem>>
    %2341 = vector.broadcast %2340 : f32 to vector<8x128xf32>
    %2342 = arith.mulf %2341, %2331 : vector<8x128xf32>
    %2343 = arith.addf %2325, %2342 : vector<8x128xf32>
    %c570 = arith.constant 570 : index
    %2344 = memref.load %arg1[%c570] : memref<588xf32, #tpu.memory_space<smem>>
    %2345 = vector.broadcast %2344 : f32 to vector<8x128xf32>
    %2346 = arith.mulf %2345, %2331 : vector<8x128xf32>
    %2347 = arith.addf %2329, %2346 : vector<8x128xf32>
    %c130 = arith.constant 130 : index
    %c0_394 = arith.constant 0 : index
    %c0_395 = arith.constant 0 : index
    %2348 = vector.load %arg3[%c130, %c0_394, %c0_395] : memref<147x8x128xf32, #tpu.memory_space<vmem>>, vector<1x8x128xf32>
    %2349 = vector.shape_cast %2348 : vector<1x8x128xf32> to vector<8x128xf32>
    %c130_396 = arith.constant 130 : index
    %2350 = memref.load %arg1[%c130_396] : memref<588xf32, #tpu.memory_space<smem>>
    %2351 = vector.broadcast %2350 : f32 to vector<8x128xf32>
    %2352 = arith.mulf %2351, %2349 : vector<8x128xf32>
    %2353 = arith.addf %2335, %2352 : vector<8x128xf32>
    %c277 = arith.constant 277 : index
    %2354 = memref.load %arg1[%c277] : memref<588xf32, #tpu.memory_space<smem>>
    %2355 = vector.broadcast %2354 : f32 to vector<8x128xf32>
    %2356 = arith.mulf %2355, %2349 : vector<8x128xf32>
    %2357 = arith.addf %2339, %2356 : vector<8x128xf32>
    %c424 = arith.constant 424 : index
    %2358 = memref.load %arg1[%c424] : memref<588xf32, #tpu.memory_space<smem>>
    %2359 = vector.broadcast %2358 : f32 to vector<8x128xf32>
    %2360 = arith.mulf %2359, %2349 : vector<8x128xf32>
    %2361 = arith.addf %2343, %2360 : vector<8x128xf32>
    %c571 = arith.constant 571 : index
    %2362 = memref.load %arg1[%c571] : memref<588xf32, #tpu.memory_space<smem>>
    %2363 = vector.broadcast %2362 : f32 to vector<8x128xf32>
    %2364 = arith.mulf %2363, %2349 : vector<8x128xf32>
    %2365 = arith.addf %2347, %2364 : vector<8x128xf32>
    %c131 = arith.constant 131 : index
    %c0_397 = arith.constant 0 : index
    %c0_398 = arith.constant 0 : index
    %2366 = vector.load %arg3[%c131, %c0_397, %c0_398] : memref<147x8x128xf32, #tpu.memory_space<vmem>>, vector<1x8x128xf32>
    %2367 = vector.shape_cast %2366 : vector<1x8x128xf32> to vector<8x128xf32>
    %c131_399 = arith.constant 131 : index
    %2368 = memref.load %arg1[%c131_399] : memref<588xf32, #tpu.memory_space<smem>>
    %2369 = vector.broadcast %2368 : f32 to vector<8x128xf32>
    %2370 = arith.mulf %2369, %2367 : vector<8x128xf32>
    %2371 = arith.addf %2353, %2370 : vector<8x128xf32>
    %c278 = arith.constant 278 : index
    %2372 = memref.load %arg1[%c278] : memref<588xf32, #tpu.memory_space<smem>>
    %2373 = vector.broadcast %2372 : f32 to vector<8x128xf32>
    %2374 = arith.mulf %2373, %2367 : vector<8x128xf32>
    %2375 = arith.addf %2357, %2374 : vector<8x128xf32>
    %c425 = arith.constant 425 : index
    %2376 = memref.load %arg1[%c425] : memref<588xf32, #tpu.memory_space<smem>>
    %2377 = vector.broadcast %2376 : f32 to vector<8x128xf32>
    %2378 = arith.mulf %2377, %2367 : vector<8x128xf32>
    %2379 = arith.addf %2361, %2378 : vector<8x128xf32>
    %c572 = arith.constant 572 : index
    %2380 = memref.load %arg1[%c572] : memref<588xf32, #tpu.memory_space<smem>>
    %2381 = vector.broadcast %2380 : f32 to vector<8x128xf32>
    %2382 = arith.mulf %2381, %2367 : vector<8x128xf32>
    %2383 = arith.addf %2365, %2382 : vector<8x128xf32>
    %c132 = arith.constant 132 : index
    %c0_400 = arith.constant 0 : index
    %c0_401 = arith.constant 0 : index
    %2384 = vector.load %arg3[%c132, %c0_400, %c0_401] : memref<147x8x128xf32, #tpu.memory_space<vmem>>, vector<1x8x128xf32>
    %2385 = vector.shape_cast %2384 : vector<1x8x128xf32> to vector<8x128xf32>
    %c132_402 = arith.constant 132 : index
    %2386 = memref.load %arg1[%c132_402] : memref<588xf32, #tpu.memory_space<smem>>
    %2387 = vector.broadcast %2386 : f32 to vector<8x128xf32>
    %2388 = arith.mulf %2387, %2385 : vector<8x128xf32>
    %2389 = arith.addf %2371, %2388 : vector<8x128xf32>
    %c279 = arith.constant 279 : index
    %2390 = memref.load %arg1[%c279] : memref<588xf32, #tpu.memory_space<smem>>
    %2391 = vector.broadcast %2390 : f32 to vector<8x128xf32>
    %2392 = arith.mulf %2391, %2385 : vector<8x128xf32>
    %2393 = arith.addf %2375, %2392 : vector<8x128xf32>
    %c426 = arith.constant 426 : index
    %2394 = memref.load %arg1[%c426] : memref<588xf32, #tpu.memory_space<smem>>
    %2395 = vector.broadcast %2394 : f32 to vector<8x128xf32>
    %2396 = arith.mulf %2395, %2385 : vector<8x128xf32>
    %2397 = arith.addf %2379, %2396 : vector<8x128xf32>
    %c573 = arith.constant 573 : index
    %2398 = memref.load %arg1[%c573] : memref<588xf32, #tpu.memory_space<smem>>
    %2399 = vector.broadcast %2398 : f32 to vector<8x128xf32>
    %2400 = arith.mulf %2399, %2385 : vector<8x128xf32>
    %2401 = arith.addf %2383, %2400 : vector<8x128xf32>
    %c133 = arith.constant 133 : index
    %c0_403 = arith.constant 0 : index
    %c0_404 = arith.constant 0 : index
    %2402 = vector.load %arg3[%c133, %c0_403, %c0_404] : memref<147x8x128xf32, #tpu.memory_space<vmem>>, vector<1x8x128xf32>
    %2403 = vector.shape_cast %2402 : vector<1x8x128xf32> to vector<8x128xf32>
    %c133_405 = arith.constant 133 : index
    %2404 = memref.load %arg1[%c133_405] : memref<588xf32, #tpu.memory_space<smem>>
    %2405 = vector.broadcast %2404 : f32 to vector<8x128xf32>
    %2406 = arith.mulf %2405, %2403 : vector<8x128xf32>
    %2407 = arith.addf %2389, %2406 : vector<8x128xf32>
    %c280 = arith.constant 280 : index
    %2408 = memref.load %arg1[%c280] : memref<588xf32, #tpu.memory_space<smem>>
    %2409 = vector.broadcast %2408 : f32 to vector<8x128xf32>
    %2410 = arith.mulf %2409, %2403 : vector<8x128xf32>
    %2411 = arith.addf %2393, %2410 : vector<8x128xf32>
    %c427 = arith.constant 427 : index
    %2412 = memref.load %arg1[%c427] : memref<588xf32, #tpu.memory_space<smem>>
    %2413 = vector.broadcast %2412 : f32 to vector<8x128xf32>
    %2414 = arith.mulf %2413, %2403 : vector<8x128xf32>
    %2415 = arith.addf %2397, %2414 : vector<8x128xf32>
    %c574 = arith.constant 574 : index
    %2416 = memref.load %arg1[%c574] : memref<588xf32, #tpu.memory_space<smem>>
    %2417 = vector.broadcast %2416 : f32 to vector<8x128xf32>
    %2418 = arith.mulf %2417, %2403 : vector<8x128xf32>
    %2419 = arith.addf %2401, %2418 : vector<8x128xf32>
    %c134 = arith.constant 134 : index
    %c0_406 = arith.constant 0 : index
    %c0_407 = arith.constant 0 : index
    %2420 = vector.load %arg3[%c134, %c0_406, %c0_407] : memref<147x8x128xf32, #tpu.memory_space<vmem>>, vector<1x8x128xf32>
    %2421 = vector.shape_cast %2420 : vector<1x8x128xf32> to vector<8x128xf32>
    %c134_408 = arith.constant 134 : index
    %2422 = memref.load %arg1[%c134_408] : memref<588xf32, #tpu.memory_space<smem>>
    %2423 = vector.broadcast %2422 : f32 to vector<8x128xf32>
    %2424 = arith.mulf %2423, %2421 : vector<8x128xf32>
    %2425 = arith.addf %2407, %2424 : vector<8x128xf32>
    %c281 = arith.constant 281 : index
    %2426 = memref.load %arg1[%c281] : memref<588xf32, #tpu.memory_space<smem>>
    %2427 = vector.broadcast %2426 : f32 to vector<8x128xf32>
    %2428 = arith.mulf %2427, %2421 : vector<8x128xf32>
    %2429 = arith.addf %2411, %2428 : vector<8x128xf32>
    %c428 = arith.constant 428 : index
    %2430 = memref.load %arg1[%c428] : memref<588xf32, #tpu.memory_space<smem>>
    %2431 = vector.broadcast %2430 : f32 to vector<8x128xf32>
    %2432 = arith.mulf %2431, %2421 : vector<8x128xf32>
    %2433 = arith.addf %2415, %2432 : vector<8x128xf32>
    %c575 = arith.constant 575 : index
    %2434 = memref.load %arg1[%c575] : memref<588xf32, #tpu.memory_space<smem>>
    %2435 = vector.broadcast %2434 : f32 to vector<8x128xf32>
    %2436 = arith.mulf %2435, %2421 : vector<8x128xf32>
    %2437 = arith.addf %2419, %2436 : vector<8x128xf32>
    %c135 = arith.constant 135 : index
    %c0_409 = arith.constant 0 : index
    %c0_410 = arith.constant 0 : index
    %2438 = vector.load %arg3[%c135, %c0_409, %c0_410] : memref<147x8x128xf32, #tpu.memory_space<vmem>>, vector<1x8x128xf32>
    %2439 = vector.shape_cast %2438 : vector<1x8x128xf32> to vector<8x128xf32>
    %c135_411 = arith.constant 135 : index
    %2440 = memref.load %arg1[%c135_411] : memref<588xf32, #tpu.memory_space<smem>>
    %2441 = vector.broadcast %2440 : f32 to vector<8x128xf32>
    %2442 = arith.mulf %2441, %2439 : vector<8x128xf32>
    %2443 = arith.addf %2425, %2442 : vector<8x128xf32>
    %c282 = arith.constant 282 : index
    %2444 = memref.load %arg1[%c282] : memref<588xf32, #tpu.memory_space<smem>>
    %2445 = vector.broadcast %2444 : f32 to vector<8x128xf32>
    %2446 = arith.mulf %2445, %2439 : vector<8x128xf32>
    %2447 = arith.addf %2429, %2446 : vector<8x128xf32>
    %c429 = arith.constant 429 : index
    %2448 = memref.load %arg1[%c429] : memref<588xf32, #tpu.memory_space<smem>>
    %2449 = vector.broadcast %2448 : f32 to vector<8x128xf32>
    %2450 = arith.mulf %2449, %2439 : vector<8x128xf32>
    %2451 = arith.addf %2433, %2450 : vector<8x128xf32>
    %c576 = arith.constant 576 : index
    %2452 = memref.load %arg1[%c576] : memref<588xf32, #tpu.memory_space<smem>>
    %2453 = vector.broadcast %2452 : f32 to vector<8x128xf32>
    %2454 = arith.mulf %2453, %2439 : vector<8x128xf32>
    %2455 = arith.addf %2437, %2454 : vector<8x128xf32>
    %c136 = arith.constant 136 : index
    %c0_412 = arith.constant 0 : index
    %c0_413 = arith.constant 0 : index
    %2456 = vector.load %arg3[%c136, %c0_412, %c0_413] : memref<147x8x128xf32, #tpu.memory_space<vmem>>, vector<1x8x128xf32>
    %2457 = vector.shape_cast %2456 : vector<1x8x128xf32> to vector<8x128xf32>
    %c136_414 = arith.constant 136 : index
    %2458 = memref.load %arg1[%c136_414] : memref<588xf32, #tpu.memory_space<smem>>
    %2459 = vector.broadcast %2458 : f32 to vector<8x128xf32>
    %2460 = arith.mulf %2459, %2457 : vector<8x128xf32>
    %2461 = arith.addf %2443, %2460 : vector<8x128xf32>
    %c283 = arith.constant 283 : index
    %2462 = memref.load %arg1[%c283] : memref<588xf32, #tpu.memory_space<smem>>
    %2463 = vector.broadcast %2462 : f32 to vector<8x128xf32>
    %2464 = arith.mulf %2463, %2457 : vector<8x128xf32>
    %2465 = arith.addf %2447, %2464 : vector<8x128xf32>
    %c430 = arith.constant 430 : index
    %2466 = memref.load %arg1[%c430] : memref<588xf32, #tpu.memory_space<smem>>
    %2467 = vector.broadcast %2466 : f32 to vector<8x128xf32>
    %2468 = arith.mulf %2467, %2457 : vector<8x128xf32>
    %2469 = arith.addf %2451, %2468 : vector<8x128xf32>
    %c577 = arith.constant 577 : index
    %2470 = memref.load %arg1[%c577] : memref<588xf32, #tpu.memory_space<smem>>
    %2471 = vector.broadcast %2470 : f32 to vector<8x128xf32>
    %2472 = arith.mulf %2471, %2457 : vector<8x128xf32>
    %2473 = arith.addf %2455, %2472 : vector<8x128xf32>
    %c137 = arith.constant 137 : index
    %c0_415 = arith.constant 0 : index
    %c0_416 = arith.constant 0 : index
    %2474 = vector.load %arg3[%c137, %c0_415, %c0_416] : memref<147x8x128xf32, #tpu.memory_space<vmem>>, vector<1x8x128xf32>
    %2475 = vector.shape_cast %2474 : vector<1x8x128xf32> to vector<8x128xf32>
    %c137_417 = arith.constant 137 : index
    %2476 = memref.load %arg1[%c137_417] : memref<588xf32, #tpu.memory_space<smem>>
    %2477 = vector.broadcast %2476 : f32 to vector<8x128xf32>
    %2478 = arith.mulf %2477, %2475 : vector<8x128xf32>
    %2479 = arith.addf %2461, %2478 : vector<8x128xf32>
    %c284 = arith.constant 284 : index
    %2480 = memref.load %arg1[%c284] : memref<588xf32, #tpu.memory_space<smem>>
    %2481 = vector.broadcast %2480 : f32 to vector<8x128xf32>
    %2482 = arith.mulf %2481, %2475 : vector<8x128xf32>
    %2483 = arith.addf %2465, %2482 : vector<8x128xf32>
    %c431 = arith.constant 431 : index
    %2484 = memref.load %arg1[%c431] : memref<588xf32, #tpu.memory_space<smem>>
    %2485 = vector.broadcast %2484 : f32 to vector<8x128xf32>
    %2486 = arith.mulf %2485, %2475 : vector<8x128xf32>
    %2487 = arith.addf %2469, %2486 : vector<8x128xf32>
    %c578 = arith.constant 578 : index
    %2488 = memref.load %arg1[%c578] : memref<588xf32, #tpu.memory_space<smem>>
    %2489 = vector.broadcast %2488 : f32 to vector<8x128xf32>
    %2490 = arith.mulf %2489, %2475 : vector<8x128xf32>
    %2491 = arith.addf %2473, %2490 : vector<8x128xf32>
    %c138 = arith.constant 138 : index
    %c0_418 = arith.constant 0 : index
    %c0_419 = arith.constant 0 : index
    %2492 = vector.load %arg3[%c138, %c0_418, %c0_419] : memref<147x8x128xf32, #tpu.memory_space<vmem>>, vector<1x8x128xf32>
    %2493 = vector.shape_cast %2492 : vector<1x8x128xf32> to vector<8x128xf32>
    %c138_420 = arith.constant 138 : index
    %2494 = memref.load %arg1[%c138_420] : memref<588xf32, #tpu.memory_space<smem>>
    %2495 = vector.broadcast %2494 : f32 to vector<8x128xf32>
    %2496 = arith.mulf %2495, %2493 : vector<8x128xf32>
    %2497 = arith.addf %2479, %2496 : vector<8x128xf32>
    %c285 = arith.constant 285 : index
    %2498 = memref.load %arg1[%c285] : memref<588xf32, #tpu.memory_space<smem>>
    %2499 = vector.broadcast %2498 : f32 to vector<8x128xf32>
    %2500 = arith.mulf %2499, %2493 : vector<8x128xf32>
    %2501 = arith.addf %2483, %2500 : vector<8x128xf32>
    %c432 = arith.constant 432 : index
    %2502 = memref.load %arg1[%c432] : memref<588xf32, #tpu.memory_space<smem>>
    %2503 = vector.broadcast %2502 : f32 to vector<8x128xf32>
    %2504 = arith.mulf %2503, %2493 : vector<8x128xf32>
    %2505 = arith.addf %2487, %2504 : vector<8x128xf32>
    %c579 = arith.constant 579 : index
    %2506 = memref.load %arg1[%c579] : memref<588xf32, #tpu.memory_space<smem>>
    %2507 = vector.broadcast %2506 : f32 to vector<8x128xf32>
    %2508 = arith.mulf %2507, %2493 : vector<8x128xf32>
    %2509 = arith.addf %2491, %2508 : vector<8x128xf32>
    %c139 = arith.constant 139 : index
    %c0_421 = arith.constant 0 : index
    %c0_422 = arith.constant 0 : index
    %2510 = vector.load %arg3[%c139, %c0_421, %c0_422] : memref<147x8x128xf32, #tpu.memory_space<vmem>>, vector<1x8x128xf32>
    %2511 = vector.shape_cast %2510 : vector<1x8x128xf32> to vector<8x128xf32>
    %c139_423 = arith.constant 139 : index
    %2512 = memref.load %arg1[%c139_423] : memref<588xf32, #tpu.memory_space<smem>>
    %2513 = vector.broadcast %2512 : f32 to vector<8x128xf32>
    %2514 = arith.mulf %2513, %2511 : vector<8x128xf32>
    %2515 = arith.addf %2497, %2514 : vector<8x128xf32>
    %c286 = arith.constant 286 : index
    %2516 = memref.load %arg1[%c286] : memref<588xf32, #tpu.memory_space<smem>>
    %2517 = vector.broadcast %2516 : f32 to vector<8x128xf32>
    %2518 = arith.mulf %2517, %2511 : vector<8x128xf32>
    %2519 = arith.addf %2501, %2518 : vector<8x128xf32>
    %c433 = arith.constant 433 : index
    %2520 = memref.load %arg1[%c433] : memref<588xf32, #tpu.memory_space<smem>>
    %2521 = vector.broadcast %2520 : f32 to vector<8x128xf32>
    %2522 = arith.mulf %2521, %2511 : vector<8x128xf32>
    %2523 = arith.addf %2505, %2522 : vector<8x128xf32>
    %c580 = arith.constant 580 : index
    %2524 = memref.load %arg1[%c580] : memref<588xf32, #tpu.memory_space<smem>>
    %2525 = vector.broadcast %2524 : f32 to vector<8x128xf32>
    %2526 = arith.mulf %2525, %2511 : vector<8x128xf32>
    %2527 = arith.addf %2509, %2526 : vector<8x128xf32>
    %c140 = arith.constant 140 : index
    %c0_424 = arith.constant 0 : index
    %c0_425 = arith.constant 0 : index
    %2528 = vector.load %arg3[%c140, %c0_424, %c0_425] : memref<147x8x128xf32, #tpu.memory_space<vmem>>, vector<1x8x128xf32>
    %2529 = vector.shape_cast %2528 : vector<1x8x128xf32> to vector<8x128xf32>
    %c140_426 = arith.constant 140 : index
    %2530 = memref.load %arg1[%c140_426] : memref<588xf32, #tpu.memory_space<smem>>
    %2531 = vector.broadcast %2530 : f32 to vector<8x128xf32>
    %2532 = arith.mulf %2531, %2529 : vector<8x128xf32>
    %2533 = arith.addf %2515, %2532 : vector<8x128xf32>
    %c287 = arith.constant 287 : index
    %2534 = memref.load %arg1[%c287] : memref<588xf32, #tpu.memory_space<smem>>
    %2535 = vector.broadcast %2534 : f32 to vector<8x128xf32>
    %2536 = arith.mulf %2535, %2529 : vector<8x128xf32>
    %2537 = arith.addf %2519, %2536 : vector<8x128xf32>
    %c434 = arith.constant 434 : index
    %2538 = memref.load %arg1[%c434] : memref<588xf32, #tpu.memory_space<smem>>
    %2539 = vector.broadcast %2538 : f32 to vector<8x128xf32>
    %2540 = arith.mulf %2539, %2529 : vector<8x128xf32>
    %2541 = arith.addf %2523, %2540 : vector<8x128xf32>
    %c581 = arith.constant 581 : index
    %2542 = memref.load %arg1[%c581] : memref<588xf32, #tpu.memory_space<smem>>
    %2543 = vector.broadcast %2542 : f32 to vector<8x128xf32>
    %2544 = arith.mulf %2543, %2529 : vector<8x128xf32>
    %2545 = arith.addf %2527, %2544 : vector<8x128xf32>
    %c141 = arith.constant 141 : index
    %c0_427 = arith.constant 0 : index
    %c0_428 = arith.constant 0 : index
    %2546 = vector.load %arg3[%c141, %c0_427, %c0_428] : memref<147x8x128xf32, #tpu.memory_space<vmem>>, vector<1x8x128xf32>
    %2547 = vector.shape_cast %2546 : vector<1x8x128xf32> to vector<8x128xf32>
    %c141_429 = arith.constant 141 : index
    %2548 = memref.load %arg1[%c141_429] : memref<588xf32, #tpu.memory_space<smem>>
    %2549 = vector.broadcast %2548 : f32 to vector<8x128xf32>
    %2550 = arith.mulf %2549, %2547 : vector<8x128xf32>
    %2551 = arith.addf %2533, %2550 : vector<8x128xf32>
    %c288 = arith.constant 288 : index
    %2552 = memref.load %arg1[%c288] : memref<588xf32, #tpu.memory_space<smem>>
    %2553 = vector.broadcast %2552 : f32 to vector<8x128xf32>
    %2554 = arith.mulf %2553, %2547 : vector<8x128xf32>
    %2555 = arith.addf %2537, %2554 : vector<8x128xf32>
    %c435 = arith.constant 435 : index
    %2556 = memref.load %arg1[%c435] : memref<588xf32, #tpu.memory_space<smem>>
    %2557 = vector.broadcast %2556 : f32 to vector<8x128xf32>
    %2558 = arith.mulf %2557, %2547 : vector<8x128xf32>
    %2559 = arith.addf %2541, %2558 : vector<8x128xf32>
    %c582 = arith.constant 582 : index
    %2560 = memref.load %arg1[%c582] : memref<588xf32, #tpu.memory_space<smem>>
    %2561 = vector.broadcast %2560 : f32 to vector<8x128xf32>
    %2562 = arith.mulf %2561, %2547 : vector<8x128xf32>
    %2563 = arith.addf %2545, %2562 : vector<8x128xf32>
    %c142 = arith.constant 142 : index
    %c0_430 = arith.constant 0 : index
    %c0_431 = arith.constant 0 : index
    %2564 = vector.load %arg3[%c142, %c0_430, %c0_431] : memref<147x8x128xf32, #tpu.memory_space<vmem>>, vector<1x8x128xf32>
    %2565 = vector.shape_cast %2564 : vector<1x8x128xf32> to vector<8x128xf32>
    %c142_432 = arith.constant 142 : index
    %2566 = memref.load %arg1[%c142_432] : memref<588xf32, #tpu.memory_space<smem>>
    %2567 = vector.broadcast %2566 : f32 to vector<8x128xf32>
    %2568 = arith.mulf %2567, %2565 : vector<8x128xf32>
    %2569 = arith.addf %2551, %2568 : vector<8x128xf32>
    %c289 = arith.constant 289 : index
    %2570 = memref.load %arg1[%c289] : memref<588xf32, #tpu.memory_space<smem>>
    %2571 = vector.broadcast %2570 : f32 to vector<8x128xf32>
    %2572 = arith.mulf %2571, %2565 : vector<8x128xf32>
    %2573 = arith.addf %2555, %2572 : vector<8x128xf32>
    %c436 = arith.constant 436 : index
    %2574 = memref.load %arg1[%c436] : memref<588xf32, #tpu.memory_space<smem>>
    %2575 = vector.broadcast %2574 : f32 to vector<8x128xf32>
    %2576 = arith.mulf %2575, %2565 : vector<8x128xf32>
    %2577 = arith.addf %2559, %2576 : vector<8x128xf32>
    %c583 = arith.constant 583 : index
    %2578 = memref.load %arg1[%c583] : memref<588xf32, #tpu.memory_space<smem>>
    %2579 = vector.broadcast %2578 : f32 to vector<8x128xf32>
    %2580 = arith.mulf %2579, %2565 : vector<8x128xf32>
    %2581 = arith.addf %2563, %2580 : vector<8x128xf32>
    %c143 = arith.constant 143 : index
    %c0_433 = arith.constant 0 : index
    %c0_434 = arith.constant 0 : index
    %2582 = vector.load %arg3[%c143, %c0_433, %c0_434] : memref<147x8x128xf32, #tpu.memory_space<vmem>>, vector<1x8x128xf32>
    %2583 = vector.shape_cast %2582 : vector<1x8x128xf32> to vector<8x128xf32>
    %c143_435 = arith.constant 143 : index
    %2584 = memref.load %arg1[%c143_435] : memref<588xf32, #tpu.memory_space<smem>>
    %2585 = vector.broadcast %2584 : f32 to vector<8x128xf32>
    %2586 = arith.mulf %2585, %2583 : vector<8x128xf32>
    %2587 = arith.addf %2569, %2586 : vector<8x128xf32>
    %c290 = arith.constant 290 : index
    %2588 = memref.load %arg1[%c290] : memref<588xf32, #tpu.memory_space<smem>>
    %2589 = vector.broadcast %2588 : f32 to vector<8x128xf32>
    %2590 = arith.mulf %2589, %2583 : vector<8x128xf32>
    %2591 = arith.addf %2573, %2590 : vector<8x128xf32>
    %c437 = arith.constant 437 : index
    %2592 = memref.load %arg1[%c437] : memref<588xf32, #tpu.memory_space<smem>>
    %2593 = vector.broadcast %2592 : f32 to vector<8x128xf32>
    %2594 = arith.mulf %2593, %2583 : vector<8x128xf32>
    %2595 = arith.addf %2577, %2594 : vector<8x128xf32>
    %c584 = arith.constant 584 : index
    %2596 = memref.load %arg1[%c584] : memref<588xf32, #tpu.memory_space<smem>>
    %2597 = vector.broadcast %2596 : f32 to vector<8x128xf32>
    %2598 = arith.mulf %2597, %2583 : vector<8x128xf32>
    %2599 = arith.addf %2581, %2598 : vector<8x128xf32>
    %c144 = arith.constant 144 : index
    %c0_436 = arith.constant 0 : index
    %c0_437 = arith.constant 0 : index
    %2600 = vector.load %arg3[%c144, %c0_436, %c0_437] : memref<147x8x128xf32, #tpu.memory_space<vmem>>, vector<1x8x128xf32>
    %2601 = vector.shape_cast %2600 : vector<1x8x128xf32> to vector<8x128xf32>
    %c144_438 = arith.constant 144 : index
    %2602 = memref.load %arg1[%c144_438] : memref<588xf32, #tpu.memory_space<smem>>
    %2603 = vector.broadcast %2602 : f32 to vector<8x128xf32>
    %2604 = arith.mulf %2603, %2601 : vector<8x128xf32>
    %2605 = arith.addf %2587, %2604 : vector<8x128xf32>
    %c291 = arith.constant 291 : index
    %2606 = memref.load %arg1[%c291] : memref<588xf32, #tpu.memory_space<smem>>
    %2607 = vector.broadcast %2606 : f32 to vector<8x128xf32>
    %2608 = arith.mulf %2607, %2601 : vector<8x128xf32>
    %2609 = arith.addf %2591, %2608 : vector<8x128xf32>
    %c438 = arith.constant 438 : index
    %2610 = memref.load %arg1[%c438] : memref<588xf32, #tpu.memory_space<smem>>
    %2611 = vector.broadcast %2610 : f32 to vector<8x128xf32>
    %2612 = arith.mulf %2611, %2601 : vector<8x128xf32>
    %2613 = arith.addf %2595, %2612 : vector<8x128xf32>
    %c585 = arith.constant 585 : index
    %2614 = memref.load %arg1[%c585] : memref<588xf32, #tpu.memory_space<smem>>
    %2615 = vector.broadcast %2614 : f32 to vector<8x128xf32>
    %2616 = arith.mulf %2615, %2601 : vector<8x128xf32>
    %2617 = arith.addf %2599, %2616 : vector<8x128xf32>
    %c145 = arith.constant 145 : index
    %c0_439 = arith.constant 0 : index
    %c0_440 = arith.constant 0 : index
    %2618 = vector.load %arg3[%c145, %c0_439, %c0_440] : memref<147x8x128xf32, #tpu.memory_space<vmem>>, vector<1x8x128xf32>
    %2619 = vector.shape_cast %2618 : vector<1x8x128xf32> to vector<8x128xf32>
    %c145_441 = arith.constant 145 : index
    %2620 = memref.load %arg1[%c145_441] : memref<588xf32, #tpu.memory_space<smem>>
    %2621 = vector.broadcast %2620 : f32 to vector<8x128xf32>
    %2622 = arith.mulf %2621, %2619 : vector<8x128xf32>
    %2623 = arith.addf %2605, %2622 : vector<8x128xf32>
    %c292 = arith.constant 292 : index
    %2624 = memref.load %arg1[%c292] : memref<588xf32, #tpu.memory_space<smem>>
    %2625 = vector.broadcast %2624 : f32 to vector<8x128xf32>
    %2626 = arith.mulf %2625, %2619 : vector<8x128xf32>
    %2627 = arith.addf %2609, %2626 : vector<8x128xf32>
    %c439 = arith.constant 439 : index
    %2628 = memref.load %arg1[%c439] : memref<588xf32, #tpu.memory_space<smem>>
    %2629 = vector.broadcast %2628 : f32 to vector<8x128xf32>
    %2630 = arith.mulf %2629, %2619 : vector<8x128xf32>
    %2631 = arith.addf %2613, %2630 : vector<8x128xf32>
    %c586 = arith.constant 586 : index
    %2632 = memref.load %arg1[%c586] : memref<588xf32, #tpu.memory_space<smem>>
    %2633 = vector.broadcast %2632 : f32 to vector<8x128xf32>
    %2634 = arith.mulf %2633, %2619 : vector<8x128xf32>
    %2635 = arith.addf %2617, %2634 : vector<8x128xf32>
    %c146 = arith.constant 146 : index
    %c0_442 = arith.constant 0 : index
    %c0_443 = arith.constant 0 : index
    %2636 = vector.load %arg3[%c146, %c0_442, %c0_443] : memref<147x8x128xf32, #tpu.memory_space<vmem>>, vector<1x8x128xf32>
    %2637 = vector.shape_cast %2636 : vector<1x8x128xf32> to vector<8x128xf32>
    %c146_444 = arith.constant 146 : index
    %2638 = memref.load %arg1[%c146_444] : memref<588xf32, #tpu.memory_space<smem>>
    %2639 = vector.broadcast %2638 : f32 to vector<8x128xf32>
    %2640 = arith.mulf %2639, %2637 : vector<8x128xf32>
    %2641 = arith.addf %2623, %2640 : vector<8x128xf32>
    %c293 = arith.constant 293 : index
    %2642 = memref.load %arg1[%c293] : memref<588xf32, #tpu.memory_space<smem>>
    %2643 = vector.broadcast %2642 : f32 to vector<8x128xf32>
    %2644 = arith.mulf %2643, %2637 : vector<8x128xf32>
    %2645 = arith.addf %2627, %2644 : vector<8x128xf32>
    %c440 = arith.constant 440 : index
    %2646 = memref.load %arg1[%c440] : memref<588xf32, #tpu.memory_space<smem>>
    %2647 = vector.broadcast %2646 : f32 to vector<8x128xf32>
    %2648 = arith.mulf %2647, %2637 : vector<8x128xf32>
    %2649 = arith.addf %2631, %2648 : vector<8x128xf32>
    %c587 = arith.constant 587 : index
    %2650 = memref.load %arg1[%c587] : memref<588xf32, #tpu.memory_space<smem>>
    %2651 = vector.broadcast %2650 : f32 to vector<8x128xf32>
    %2652 = arith.mulf %2651, %2637 : vector<8x128xf32>
    %2653 = arith.addf %2635, %2652 : vector<8x128xf32>
    %c0_445 = arith.constant 0 : index
    %c0_446 = arith.constant 0 : index
    %c0_447 = arith.constant 0 : index
    %2654 = vector.load %arg4[%c0_445, %c0_446, %c0_447] : memref<4x8x128xf32, #tpu.memory_space<vmem>>, vector<1x8x128xf32>
    %2655 = vector.shape_cast %2654 : vector<1x8x128xf32> to vector<8x128xf32>
    %2656 = vector.shape_cast %2641 : vector<8x128xf32> to vector<1x8x128xf32>
    tpu.vector_store %arg4[%c0_445, %c0_446, %c0_447], %2656 {strides = array<i32>} : memref<4x8x128xf32, #tpu.memory_space<vmem>>, vector<1x8x128xf32>,
    %c1_448 = arith.constant 1 : index
    %c0_449 = arith.constant 0 : index
    %c0_450 = arith.constant 0 : index
    %2657 = vector.load %arg4[%c1_448, %c0_449, %c0_450] : memref<4x8x128xf32, #tpu.memory_space<vmem>>, vector<1x8x128xf32>
    %2658 = vector.shape_cast %2657 : vector<1x8x128xf32> to vector<8x128xf32>
    %2659 = vector.shape_cast %2645 : vector<8x128xf32> to vector<1x8x128xf32>
    tpu.vector_store %arg4[%c1_448, %c0_449, %c0_450], %2659 {strides = array<i32>} : memref<4x8x128xf32, #tpu.memory_space<vmem>>, vector<1x8x128xf32>,
    %c2_451 = arith.constant 2 : index
    %c0_452 = arith.constant 0 : index
    %c0_453 = arith.constant 0 : index
    %2660 = vector.load %arg4[%c2_451, %c0_452, %c0_453] : memref<4x8x128xf32, #tpu.memory_space<vmem>>, vector<1x8x128xf32>
    %2661 = vector.shape_cast %2660 : vector<1x8x128xf32> to vector<8x128xf32>
    %2662 = vector.shape_cast %2649 : vector<8x128xf32> to vector<1x8x128xf32>
    tpu.vector_store %arg4[%c2_451, %c0_452, %c0_453], %2662 {strides = array<i32>} : memref<4x8x128xf32, #tpu.memory_space<vmem>>, vector<1x8x128xf32>,
    %c3_454 = arith.constant 3 : index
    %c0_455 = arith.constant 0 : index
    %c0_456 = arith.constant 0 : index
    %2663 = vector.load %arg4[%c3_454, %c0_455, %c0_456] : memref<4x8x128xf32, #tpu.memory_space<vmem>>, vector<1x8x128xf32>
    %2664 = vector.shape_cast %2663 : vector<1x8x128xf32> to vector<8x128xf32>
    %2665 = vector.shape_cast %2653 : vector<8x128xf32> to vector<1x8x128xf32>
    tpu.vector_store %arg4[%c3_454, %c0_455, %c0_456], %2665 {strides = array<i32>} : memref<4x8x128xf32, #tpu.memory_space<vmem>>, vector<1x8x128xf32>,
    return
  }
  func.func @transform_0(%arg0: i32) -> i32 {
    %c0_i32 = arith.constant 0 : i32
    %c0_i32_0 = arith.constant 0 : i32
    return %c0_i32 : i32
  }
  func.func @transform_1(%arg0: i32) -> i32 {
    %c0_i32 = arith.constant 0 : i32
    %c0_i32_0 = arith.constant 0 : i32
    return %c0_i32 : i32
  }
  func.func @transform_2(%arg0: i32) -> (i32, i32, i32) {
    %c0_i32 = arith.constant 0 : i32
    %c0_i32_0 = arith.constant 0 : i32
    %c0_i32_1 = arith.constant 0 : i32
    return %c0_i32, %arg0, %c0_i32_0 : i32, i32, i32
  }
  func.func @transform_3(%arg0: i32) -> (i32, i32, i32) {
    %c0_i32 = arith.constant 0 : i32
    %c0_i32_0 = arith.constant 0 : i32
    %c0_i32_1 = arith.constant 0 : i32
    return %c0_i32, %arg0, %c0_i32_0 : i32, i32, i32
  }
}

</mosaic_0001>

<llo_original>
// kernel: squeeze.148
$region0: #{squeeze.148}
  %s0 = inlined_call_operand.vmem [shape: f32[1,1,16,16], index: 0, kind: input, shape index: {}]
  %s1 = inlined_call_operand.vmem [shape: f32[1,256], index: 1, kind: output, shape index: {}]
  $region1: #{squeeze.148} parent=0
    #allocation0 [shape = 'u8[8192]{0}', space=vmem, size = 0x2000, scoped, tag = 'scoped mem for output reshape']
    %s2 = smov 3
    %v3 = vld [vmem:[%s0] ss:$8 sm:%s2]
    %vm4 = vcmask 130048
    %5 = vst.msk [vmem:[#allocation0] ss:$8 sm:$0x3] %vm4, %v3
    %s6 = scalar_lea.vmem %s0, 7
    %s7 = smov 3
    %v8 = vld [vmem:[%s6] ss:$8 sm:%s7]
    %9 = vrot.lane.b32.xlu0 %v8, 112
    %v10 = vpop.permute.xlu0 %9
    %vm11 = vcmask 1048448
    %12 = vst.msk [vmem:[#allocation0] ss:$8 sm:$0x3] %vm11, %v10
    %s13 = scalar_lea.vmem %s0, 6
    %s14 = smov 3
    %v15 = vld [vmem:[%s13] ss:$8 sm:%s14]
    %16 = vrot.lane.b32.xlu0 %v15, 96
    %v17 = vpop.permute.xlu0 %16
    %vm18 = vcmask 917248
    %19 = vst.msk [vmem:[#allocation0] ss:$8 sm:$0x3] %vm18, %v17
    %s20 = scalar_lea.vmem %s0, 5
    %s21 = smov 3
    %v22 = vld [vmem:[%s20] ss:$8 sm:%s21]
    %23 = vrot.lane.b32.xlu0 %v22, 80
    %v24 = vpop.permute.xlu0 %23
    %vm25 = vcmask 786048
    %26 = vst.msk [vmem:[#allocation0] ss:$8 sm:$0x3] %vm25, %v24
    %s27 = scalar_lea.vmem %s0, 4
    %s28 = smov 3
    %v29 = vld [vmem:[%s27] ss:$8 sm:%s28]
    %30 = vrot.lane.b32.xlu0 %v29, 64
    %v31 = vpop.permute.xlu0 %30
    %vm32 = vcmask 654848
    %33 = vst.msk [vmem:[#allocation0] ss:$8 sm:$0x3] %vm32, %v31
    %s34 = scalar_lea.vmem %s0, 3
    %s35 = smov 3
    %v36 = vld [vmem:[%s34] ss:$8 sm:%s35]
    %37 = vrot.lane.b32.xlu0 %v36, 48
    %v38 = vpop.permute.xlu0 %37
    %vm39 = vcmask 523648
    %40 = vst.msk [vmem:[#allocation0] ss:$8 sm:$0x3] %vm39, %v38
    %s41 = scalar_lea.vmem %s0, 2
    %s42 = smov 3
    %v43 = vld [vmem:[%s41] ss:$8 sm:%s42]
    %44 = vrot.lane.b32.xlu0 %v43, 32
    %v45 = vpop.permute.xlu0 %44
    %vm46 = vcmask 392448
    %47 = vst.msk [vmem:[#allocation0] ss:$8 sm:$0x3] %vm46, %v45
    %s48 = scalar_lea.vmem %s0, 1
    %s49 = smov 3
    %v50 = vld [vmem:[%s48] ss:$8 sm:%s49]
    %51 = vrot.lane.b32.xlu0 %v50, 16
    %v52 = vpop.permute.xlu0 %51
    %vm53 = vcmask 261248
    %54 = vst.msk [vmem:[#allocation0] ss:$8 sm:$0x3] %vm53, %v52
    %s56 = ssub.s32 2, 1
    %v57 = vld [vmem:[#allocation0] sm:%s56]
    %s59 = ssub.s32 2, 1
    %60 = vst [vmem:[%s1] sm:%s59] %v57
    %s61 = scalar_lea.vmem [#allocation0], 8
    %v62 = vld [vmem:[%s61] sm:%s56]
    %s64 = ssub.s32 2, 1
    %s65 = scalar_lea.vmem %s1, 1
    %66 = vst [vmem:[%s65] sm:%s64] %v62

// kernel: model_forward.1
$region0: #{model_forward.1}
  #allocation0 [shape = 'u32[]', space=smem, size = 0x4, offset = 0x4, fixed_abs, tag = 'smem constant byte address 0x4 - core index']
  #allocation1 [shape = 'u32[72,128]{1,0:T(1,128)}', space=vmem, size = 0x9000, scoped, tag = 'internal scratch']
  %s0 = inlined_call_operand.vmem [shape: f32[588], index: 0, kind: input, shape index: {}]
  %s1 = inlined_call_operand.vmem [shape: f32[4], index: 1, kind: input, shape index: {}]
  %s2 = inlined_call_operand.vmem [shape: f32[147,8,128], index: 2, kind: input, shape index: {}]
  %s3 = inlined_call_operand.vmem [shape: f32[4,8,128], index: 3, kind: output, shape index: {}]
  %s4 = sld [smem:[#allocation0]]
  $region30: #{model_forward.1} parent=0
    _
  %s6 = ssub.s32 1, %s4
  %s7 = scalar_select 0, %s6, %s4
  $region1: #{model_forward.1} parent=0
    #allocation2 [shape = 'u8[2560]{0}', space=smem, size = 0xa00, scoped, tag = 'input window, operand 0, single buffered']
    #allocation3 [shape = 's32[1]{0}', space=sflag, size = 0x4, scoped, tag = 'scoped memory for model_forward.1']
    #allocation4 [shape = 'u8[512]{0}', space=smem, size = 0x200, scoped, tag = 'input window, operand 1, single buffered']
    #allocation5 [shape = 's32[1]{0}', space=sflag, size = 0x4, scoped, tag = 'scoped memory for model_forward.1']
    %8 = vsyncpa [#allocation3], 0
    %9 = vsyncpa [#allocation5], 0
    // Predicated region
    $region2: #{model_forward.1} parent=1 // pred_check
      _
    $region3: #{model_forward.1} parent=1 // pred_check_branch
      %11 = sbr.rel (0) target = $region5
    $region4: #{model_forward.1} parent=1 // pred_region
      %13 = vsyncadd [#allocation3], 0
      %s15 = sshll.u32 %s0, 4
      %s16 = int_to_ptr.vmem [resolvable:$true] %s15
      %18 = dma.vmem_to_smem %s16, 80, [#allocation2], [#allocation3]
    $region5: #{model_forward.1} parent=1 // pred_fallthru
      _
    // Predicated region
    $region6: #{model_forward.1} parent=1 // pred_check
      _
    $region7: #{model_forward.1} parent=1 // pred_check_branch
      %20 = sbr.rel (0) target = $region9
    $region8: #{model_forward.1} parent=1 // pred_region
      %22 = vsyncadd [#allocation5], 0
      %s24 = sshll.u32 %s1, 4
      %s25 = int_to_ptr.vmem [resolvable:$true] %s24
      %27 = dma.vmem_to_smem %s25, 16, [#allocation4], [#allocation5]
    $region9: #{model_forward.1} parent=1 // pred_fallthru
      _
    // Predicated region
    $region10: #{model_forward.1} parent=1 // pred_check
      _
    $region11: #{model_forward.1} parent=1 // pred_check_branch
      %29 = sbr.rel (0) target = $region13
    $region12: #{model_forward.1} parent=1 // pred_region
      _
    $region13: #{model_forward.1} parent=1 // pred_fallthru
      _
    // Predicated region
    $region14: #{model_forward.1} parent=1 // pred_check
      _
    $region15: #{model_forward.1} parent=1 // pred_check_branch
      %31 = sbr.rel (0) target = $region17
    $region16: #{model_forward.1} parent=1 // pred_region
      %33 = dma.done [#allocation3], 80
    $region17: #{model_forward.1} parent=1 // pred_fallthru
      _
    // Predicated region
    $region18: #{model_forward.1} parent=1 // pred_check
      _
    $region19: #{model_forward.1} parent=1 // pred_check_branch
      %35 = sbr.rel (0) target = $region21
    $region20: #{model_forward.1} parent=1 // pred_region
      %37 = dma.done [#allocation5], 16
    $region21: #{model_forward.1} parent=1 // pred_fallthru
      _
    %38 = sfence
    %s39 = sld [smem:[#allocation4]]
    %v40 = vstv %s39
    %s41 = sld [smem:[#allocation4 + $0x1]]
    %v42 = vstv %s41
    %s43 = sld [smem:[#allocation4 + $0x2]]
    %v44 = vstv %s43
    %s45 = sld [smem:[#allocation4 + $0x3]]
    %v46 = vstv %s45
    %v47 = vld [vmem:[%s2] sm:$0xff]
    %s48 = sld [smem:[#allocation2]]
    %v49 = vstv %s48
    %v50 = vmul.f32 %v49, %v47
    %v51 = vadd.f32 %v40, %v50
    %s52 = sld [smem:[#allocation2 + $0x93]]
    %v53 = vstv %s52
    %v54 = vmul.f32 %v53, %v47
    %v55 = vadd.f32 %v42, %v54
    %s56 = sld [smem:[#allocation2 + $0x126]]
    %v57 = vstv %s56
    %v58 = vmul.f32 %v57, %v47
    %v59 = vadd.f32 %v44, %v58
    %s60 = sld [smem:[#allocation2 + $0x1b9]]
    %v61 = vstv %s60
    %v62 = vmul.f32 %v61, %v47
    %v63 = vadd.f32 %v46, %v62
    %s64 = scalar_lea.vmem %s2, 8
    %v65 = vld [vmem:[%s64] sm:$0xff]
    %s66 = sld [smem:[#allocation2 + $0x1]]
    %v67 = vstv %s66
    %v68 = vmul.f32 %v67, %v65
    %v69 = vadd.f32 %v51, %v68
    %s70 = sld [smem:[#allocation2 + $0x94]]
    %v71 = vstv %s70
    %v72 = vmul.f32 %v71, %v65
    %v73 = vadd.f32 %v55, %v72
    %s74 = sld [smem:[#allocation2 + $0x127]]
    %v75 = vstv %s74
    %v76 = vmul.f32 %v75, %v65
    %v77 = vadd.f32 %v59, %v76
    %s78 = sld [smem:[#allocation2 + $0x1ba]]
    %v79 = vstv %s78
    %v80 = vmul.f32 %v79, %v65
    %v81 = vadd.f32 %v63, %v80
    %s82 = scalar_lea.vmem %s2, 16
    %v83 = vld [vmem:[%s82] sm:$0xff]
    %s84 = sld [smem:[#allocation2 + $0x2]]
    %v85 = vstv %s84
    %v86 = vmul.f32 %v85, %v83
    %v87 = vadd.f32 %v69, %v86
    %s88 = sld [smem:[#allocation2 + $0x95]]
    %v89 = vstv %s88
    %v90 = vmul.f32 %v89, %v83
    %v91 = vadd.f32 %v73, %v90
    %s92 = sld [smem:[#allocation2 + $0x128]]
    %v93 = vstv %s92
    %v94 = vmul.f32 %v93, %v83
    %v95 = vadd.f32 %v77, %v94
    %s96 = sld [smem:[#allocation2 + $0x1bb]]
    %v97 = vstv %s96
    %v98 = vmul.f32 %v97, %v83
    %v99 = vadd.f32 %v81, %v98
    %s100 = scalar_lea.vmem %s2, 24
    %v101 = vld [vmem:[%s100] sm:$0xff]
    %s102 = sld [smem:[#allocation2 + $0x3]]
    %v103 = vstv %s102
    %v104 = vmul.f32 %v103, %v101
    %v105 = vadd.f32 %v87, %v104
    %s106 = sld [smem:[#allocation2 + $0x96]]
    %v107 = vstv %s106
    %v108 = vmul.f32 %v107, %v101
    %v109 = vadd.f32 %v91, %v108
    %s110 = sld [smem:[#allocation2 + $0x129]]
    %v111 = vstv %s110
    %v112 = vmul.f32 %v111, %v101
    %v113 = vadd.f32 %v95, %v112
    %s114 = sld [smem:[#allocation2 + $0x1bc]]
    %v115 = vstv %s114
    %v116 = vmul.f32 %v115, %v101
    %v117 = vadd.f32 %v99, %v116
    %s118 = scalar_lea.vmem %s2, 32
    %v119 = vld [vmem:[%s118] sm:$0xff]
    %s120 = sld [smem:[#allocation2 + $0x4]]
    %v121 = vstv %s120
    %v122 = vmul.f32 %v121, %v119
    %v123 = vadd.f32 %v105, %v122
    %s124 = sld [smem:[#allocation2 + $0x97]]
    %v125 = vstv %s124
    %v126 = vmul.f32 %v125, %v119
    %v127 = vadd.f32 %v109, %v126
    %s128 = sld [smem:[#allocation2 + $0x12a]]
    %v129 = vstv %s128
    %v130 = vmul.f32 %v129, %v119
    %v131 = vadd.f32 %v113, %v130
    %s132 = sld [smem:[#allocation2 + $0x1bd]]
    %v133 = vstv %s132
    %v134 = vmul.f32 %v133, %v119
    %v135 = vadd.f32 %v117, %v134
    %s136 = scalar_lea.vmem %s2, 40
    %v137 = vld [vmem:[%s136] sm:$0xff]
    %s138 = sld [smem:[#allocation2 + $0x5]]
    %v139 = vstv %s138
    %v140 = vmul.f32 %v139, %v137
    %v141 = vadd.f32 %v123, %v140
    %s142 = sld [smem:[#allocation2 + $0x98]]
    %v143 = vstv %s142
    %v144 = vmul.f32 %v143, %v137
    %v145 = vadd.f32 %v127, %v144
    %s146 = sld [smem:[#allocation2 + $0x12b]]
    %v147 = vstv %s146
    %v148 = vmul.f32 %v147, %v137
    %v149 = vadd.f32 %v131, %v148
    %s150 = sld [smem:[#allocation2 + $0x1be]]
    %v151 = vstv %s150
    %v152 = vmul.f32 %v151, %v137
    %v153 = vadd.f32 %v135, %v152
    %s154 = scalar_lea.vmem %s2, 48
    %v155 = vld [vmem:[%s154] sm:$0xff]
    %s156 = sld [smem:[#allocation2 + $0x6]]
    %v157 = vstv %s156
    %v158 = vmul.f32 %v157, %v155
    %v159 = vadd.f32 %v141, %v158
    %s160 = sld [smem:[#allocation2 + $0x99]]
    %v161 = vstv %s160
    %v162 = vmul.f32 %v161, %v155
    %v163 = vadd.f32 %v145, %v162
    %s164 = sld [smem:[#allocation2 + $0x12c]]
    %v165 = vstv %s164
    %v166 = vmul.f32 %v165, %v155
    %v167 = vadd.f32 %v149, %v166
    %s168 = sld [smem:[#allocation2 + $0x1bf]]
    %v169 = vstv %s168
    %v170 = vmul.f32 %v169, %v155
    %v171 = vadd.f32 %v153, %v170
    %s172 = scalar_lea.vmem %s2, 56
    %v173 = vld [vmem:[%s172] sm:$0xff]
    %s174 = sld [smem:[#allocation2 + $0x7]]
    %v175 = vstv %s174
    %v176 = vmul.f32 %v175, %v173
    %v177 = vadd.f32 %v159, %v176
    %s178 = sld [smem:[#allocation2 + $0x9a]]
    %v179 = vstv %s178
    %v180 = vmul.f32 %v179, %v173
    %v181 = vadd.f32 %v163, %v180
    %s182 = sld [smem:[#allocation2 + $0x12d]]
    %v183 = vstv %s182
    %v184 = vmul.f32 %v183, %v173
    %v185 = vadd.f32 %v167, %v184
    %s186 = sld [smem:[#allocation2 + $0x1c0]]
    %v187 = vstv %s186
    %v188 = vmul.f32 %v187, %v173
    %v189 = vadd.f32 %v171, %v188
    %s190 = scalar_lea.vmem %s2, 64
    %v191 = vld [vmem:[%s190] sm:$0xff]
    %s192 = sld [smem:[#allocation2 + $0x8]]
    %v193 = vstv %s192
    %v194 = vmul.f32 %v193, %v191
    %v195 = vadd.f32 %v177, %v194
    %s196 = sld [smem:[#allocation2 + $0x9b]]
    %v197 = vstv %s196
    %v198 = vmul.f32 %v197, %v191
    %v199 = vadd.f32 %v181, %v198
    %s200 = sld [smem:[#allocation2 + $0x12e]]
    %v201 = vstv %s200
    %v202 = vmul.f32 %v201, %v191
    %v203 = vadd.f32 %v185, %v202
    %s204 = sld [smem:[#allocation2 + $0x1c1]]
    %v205 = vstv %s204
    %v206 = vmul.f32 %v205, %v191
    %v207 = vadd.f32 %v189, %v206
    %s208 = scalar_lea.vmem %s2, 72
    %v209 = vld [vmem:[%s208] sm:$0xff]
    %s210 = sld [smem:[#allocation2 + $0x9]]
    %v211 = vstv %s210
    %v212 = vmul.f32 %v211, %v209
    %v213 = vadd.f32 %v195, %v212
    %s214 = sld [smem:[#allocation2 + $0x9c]]
    %v215 = vstv %s214
    %v216 = vmul.f32 %v215, %v209
    %v217 = vadd.f32 %v199, %v216
    %s218 = sld [smem:[#allocation2 + $0x12f]]
    %v219 = vstv %s218
    %v220 = vmul.f32 %v219, %v209
    %v221 = vadd.f32 %v203, %v220
    %s222 = sld [smem:[#allocation2 + $0x1c2]]
    %v223 = vstv %s222
    %v224 = vmul.f32 %v223, %v209
    %v225 = vadd.f32 %v207, %v224
    %s226 = scalar_lea.vmem %s2, 80
    %v227 = vld [vmem:[%s226] sm:$0xff]
    %s228 = sld [smem:[#allocation2 + $0xa]]
    %v229 = vstv %s228
    %v230 = vmul.f32 %v229, %v227
    %v231 = vadd.f32 %v213, %v230
    %s232 = sld [smem:[#allocation2 + $0x9d]]
    %v233 = vstv %s232
    %v234 = vmul.f32 %v233, %v227
    %v235 = vadd.f32 %v217, %v234
    %s236 = sld [smem:[#allocation2 + $0x130]]
    %v237 = vstv %s236
    %v238 = vmul.f32 %v237, %v227
    %v239 = vadd.f32 %v221, %v238
    %s240 = sld [smem:[#allocation2 + $0x1c3]]
    %v241 = vstv %s240
    %v242 = vmul.f32 %v241, %v227
    %v243 = vadd.f32 %v225, %v242
    %s244 = scalar_lea.vmem %s2, 88
    %v245 = vld [vmem:[%s244] sm:$0xff]
    %s246 = sld [smem:[#allocation2 + $0xb]]
    %v247 = vstv %s246
    %v248 = vmul.f32 %v247, %v245
    %v249 = vadd.f32 %v231, %v248
    %s250 = sld [smem:[#allocation2 + $0x9e]]
    %v251 = vstv %s250
    %v252 = vmul.f32 %v251, %v245
    %v253 = vadd.f32 %v235, %v252
    %s254 = sld [smem:[#allocation2 + $0x131]]
    %v255 = vstv %s254
    %v256 = vmul.f32 %v255, %v245
    %v257 = vadd.f32 %v239, %v256
    %s258 = sld [smem:[#allocation2 + $0x1c4]]
    %v259 = vstv %s258
    %v260 = vmul.f32 %v259, %v245
    %v261 = vadd.f32 %v243, %v260
    %s262 = scalar_lea.vmem %s2, 96
    %v263 = vld [vmem:[%s262] sm:$0xff]
    %s264 = sld [smem:[#allocation2 + $0xc]]
    %v265 = vstv %s264
    %v266 = vmul.f32 %v265, %v263
    %v267 = vadd.f32 %v249, %v266
    %s268 = sld [smem:[#allocation2 + $0x9f]]
    %v269 = vstv %s268
    %v270 = vmul.f32 %v269, %v263
    %v271 = vadd.f32 %v253, %v270
    %s272 = sld [smem:[#allocation2 + $0x132]]
    %v273 = vstv %s272
    %v274 = vmul.f32 %v273, %v263
    %v275 = vadd.f32 %v257, %v274
    %s276 = sld [smem:[#allocation2 + $0x1c5]]
    %v277 = vstv %s276
    %v278 = vmul.f32 %v277, %v263
    %v279 = vadd.f32 %v261, %v278
    %s280 = scalar_lea.vmem %s2, 104
    %v281 = vld [vmem:[%s280] sm:$0xff]
    %s282 = sld [smem:[#allocation2 + $0xd]]
    %v283 = vstv %s282
    %v284 = vmul.f32 %v283, %v281
    %v285 = vadd.f32 %v267, %v284
    %s286 = sld [smem:[#allocation2 + $0xa0]]
    %v287 = vstv %s286
    %v288 = vmul.f32 %v287, %v281
    %v289 = vadd.f32 %v271, %v288
    %s290 = sld [smem:[#allocation2 + $0x133]]
    %v291 = vstv %s290
    %v292 = vmul.f32 %v291, %v281
    %v293 = vadd.f32 %v275, %v292
    %s294 = sld [smem:[#allocation2 + $0x1c6]]
    %v295 = vstv %s294
    %v296 = vmul.f32 %v295, %v281
    %v297 = vadd.f32 %v279, %v296
    %s298 = scalar_lea.vmem %s2, 112
    %v299 = vld [vmem:[%s298] sm:$0xff]
    %s300 = sld [smem:[#allocation2 + $0xe]]
    %v301 = vstv %s300
    %v302 = vmul.f32 %v301, %v299
    %v303 = vadd.f32 %v285, %v302
    %s304 = sld [smem:[#allocation2 + $0xa1]]
    %v305 = vstv %s304
    %v306 = vmul.f32 %v305, %v299
    %v307 = vadd.f32 %v289, %v306
    %s308 = sld [smem:[#allocation2 + $0x134]]
    %v309 = vstv %s308
    %v310 = vmul.f32 %v309, %v299
    %v311 = vadd.f32 %v293, %v310
    %s312 = sld [smem:[#allocation2 + $0x1c7]]
    %v313 = vstv %s312
    %v314 = vmul.f32 %v313, %v299
    %v315 = vadd.f32 %v297, %v314
    %s316 = scalar_lea.vmem %s2, 120
    %v317 = vld [vmem:[%s316] sm:$0xff]
    %s318 = sld [smem:[#allocation2 + $0xf]]
    %v319 = vstv %s318
    %v320 = vmul.f32 %v319, %v317
    %v321 = vadd.f32 %v303, %v320
    %s322 = sld [smem:[#allocation2 + $0xa2]]
    %v323 = vstv %s322
    %v324 = vmul.f32 %v323, %v317
    %v325 = vadd.f32 %v307, %v324
    %s326 = sld [smem:[#allocation2 + $0x135]]
    %v327 = vstv %s326
    %v328 = vmul.f32 %v327, %v317
    %v329 = vadd.f32 %v311, %v328
    %s330 = sld [smem:[#allocation2 + $0x1c8]]
    %v331 = vstv %s330
    %v332 = vmul.f32 %v331, %v317
    %v333 = vadd.f32 %v315, %v332
    %s334 = scalar_lea.vmem %s2, 128
    %v335 = vld [vmem:[%s334] sm:$0xff]
    %s336 = sld [smem:[#allocation2 + $0x10]]
    %v337 = vstv %s336
    %v338 = vmul.f32 %v337, %v335
    %v339 = vadd.f32 %v321, %v338
    %s340 = sld [smem:[#allocation2 + $0xa3]]
    %v341 = vstv %s340
    %v342 = vmul.f32 %v341, %v335
    %v343 = vadd.f32 %v325, %v342
    %s344 = sld [smem:[#allocation2 + $0x136]]
    %v345 = vstv %s344
    %v346 = vmul.f32 %v345, %v335
    %v347 = vadd.f32 %v329, %v346
    %s348 = sld [smem:[#allocation2 + $0x1c9]]
    %v349 = vstv %s348
    %v350 = vmul.f32 %v349, %v335
    %v351 = vadd.f32 %v333, %v350
    %s352 = scalar_lea.vmem %s2, 136
    %v353 = vld [vmem:[%s352] sm:$0xff]
    %s354 = sld [smem:[#allocation2 + $0x11]]
    %v355 = vstv %s354
    %v356 = vmul.f32 %v355, %v353
    %v357 = vadd.f32 %v339, %v356
    %s358 = sld [smem:[#allocation2 + $0xa4]]
    %v359 = vstv %s358
    %v360 = vmul.f32 %v359, %v353
    %v361 = vadd.f32 %v343, %v360
    %s362 = sld [smem:[#allocation2 + $0x137]]
    %v363 = vstv %s362
    %v364 = vmul.f32 %v363, %v353
    %v365 = vadd.f32 %v347, %v364
    %s366 = sld [smem:[#allocation2 + $0x1ca]]
    %v367 = vstv %s366
    %v368 = vmul.f32 %v367, %v353
    %v369 = vadd.f32 %v351, %v368
    %s370 = scalar_lea.vmem %s2, 144
    %v371 = vld [vmem:[%s370] sm:$0xff]
    %s372 = sld [smem:[#allocation2 + $0x12]]
    %v373 = vstv %s372
    %v374 = vmul.f32 %v373, %v371
    %v375 = vadd.f32 %v357, %v374
    %s376 = sld [smem:[#allocation2 + $0xa5]]
    %v377 = vstv %s376
    %v378 = vmul.f32 %v377, %v371
    %v379 = vadd.f32 %v361, %v378
    %s380 = sld [smem:[#allocation2 + $0x138]]
    %v381 = vstv %s380
    %v382 = vmul.f32 %v381, %v371
    %v383 = vadd.f32 %v365, %v382
    %s384 = sld [smem:[#allocation2 + $0x1cb]]
    %v385 = vstv %s384
    %v386 = vmul.f32 %v385, %v371
    %v387 = vadd.f32 %v369, %v386
    %s388 = scalar_lea.vmem %s2, 152
    %v389 = vld [vmem:[%s388] sm:$0xff]
    %s390 = sld [smem:[#allocation2 + $0x13]]
    %v391 = vstv %s390
    %v392 = vmul.f32 %v391, %v389
    %v393 = vadd.f32 %v375, %v392
    %s394 = sld [smem:[#allocation2 + $0xa6]]
    %v395 = vstv %s394
    %v396 = vmul.f32 %v395, %v389
    %v397 = vadd.f32 %v379, %v396
    %s398 = sld [smem:[#allocation2 + $0x139]]
    %v399 = vstv %s398
    %v400 = vmul.f32 %v399, %v389
    %v401 = vadd.f32 %v383, %v400
    %s402 = sld [smem:[#allocation2 + $0x1cc]]
    %v403 = vstv %s402
    %v404 = vmul.f32 %v403, %v389
    %v405 = vadd.f32 %v387, %v404
    %s406 = scalar_lea.vmem %s2, 160
    %v407 = vld [vmem:[%s406] sm:$0xff]
    %s408 = sld [smem:[#allocation2 + $0x14]]
    %v409 = vstv %s408
    %v410 = vmul.f32 %v409, %v407
    %v411 = vadd.f32 %v393, %v410
    %s412 = sld [smem:[#allocation2 + $0xa7]]
    %v413 = vstv %s412
    %v414 = vmul.f32 %v413, %v407
    %v415 = vadd.f32 %v397, %v414
    %s416 = sld [smem:[#allocation2 + $0x13a]]
    %v417 = vstv %s416
    %v418 = vmul.f32 %v417, %v407
    %v419 = vadd.f32 %v401, %v418
    %s420 = sld [smem:[#allocation2 + $0x1cd]]
    %v421 = vstv %s420
    %v422 = vmul.f32 %v421, %v407
    %v423 = vadd.f32 %v405, %v422
    %s424 = scalar_lea.vmem %s2, 168
    %v425 = vld [vmem:[%s424] sm:$0xff]
    %s426 = sld [smem:[#allocation2 + $0x15]]
    %v427 = vstv %s426
    %v428 = vmul.f32 %v427, %v425
    %v429 = vadd.f32 %v411, %v428
    %s430 = sld [smem:[#allocation2 + $0xa8]]
    %v431 = vstv %s430
    %v432 = vmul.f32 %v431, %v425
    %v433 = vadd.f32 %v415, %v432
    %s434 = sld [smem:[#allocation2 + $0x13b]]
    %v435 = vstv %s434
    %v436 = vmul.f32 %v435, %v425
    %v437 = vadd.f32 %v419, %v436
    %s438 = sld [smem:[#allocation2 + $0x1ce]]
    %v439 = vstv %s438
    %v440 = vmul.f32 %v439, %v425
    %v441 = vadd.f32 %v423, %v440
    %s442 = scalar_lea.vmem %s2, 176
    %v443 = vld [vmem:[%s442] sm:$0xff]
    %s444 = sld [smem:[#allocation2 + $0x16]]
    %v445 = vstv %s444
    %v446 = vmul.f32 %v445, %v443
    %v447 = vadd.f32 %v429, %v446
    %s448 = sld [smem:[#allocation2 + $0xa9]]
    %v449 = vstv %s448
    %v450 = vmul.f32 %v449, %v443
    %v451 = vadd.f32 %v433, %v450
    %s452 = sld [smem:[#allocation2 + $0x13c]]
    %v453 = vstv %s452
    %v454 = vmul.f32 %v453, %v443
    %v455 = vadd.f32 %v437, %v454
    %s456 = sld [smem:[#allocation2 + $0x1cf]]
    %v457 = vstv %s456
    %v458 = vmul.f32 %v457, %v443
    %v459 = vadd.f32 %v441, %v458
    %s460 = scalar_lea.vmem %s2, 184
    %v461 = vld [vmem:[%s460] sm:$0xff]
    %s462 = sld [smem:[#allocation2 + $0x17]]
    %v463 = vstv %s462
    %v464 = vmul.f32 %v463, %v461
    %v465 = vadd.f32 %v447, %v464
    %s466 = sld [smem:[#allocation2 + $0xaa]]
    %v467 = vstv %s466
    %v468 = vmul.f32 %v467, %v461
    %v469 = vadd.f32 %v451, %v468
    %s470 = sld [smem:[#allocation2 + $0x13d]]
    %v471 = vstv %s470
    %v472 = vmul.f32 %v471, %v461
    %v473 = vadd.f32 %v455, %v472
    %s474 = sld [smem:[#allocation2 + $0x1d0]]
    %v475 = vstv %s474
    %v476 = vmul.f32 %v475, %v461
    %v477 = vadd.f32 %v459, %v476
    %s478 = scalar_lea.vmem %s2, 192
    %v479 = vld [vmem:[%s478] sm:$0xff]
    %s480 = sld [smem:[#allocation2 + $0x18]]
    %v481 = vstv %s480
    %v482 = vmul.f32 %v481, %v479
    %v483 = vadd.f32 %v465, %v482
    %s484 = sld [smem:[#allocation2 + $0xab]]
    %v485 = vstv %s484
    %v486 = vmul.f32 %v485, %v479
    %v487 = vadd.f32 %v469, %v486
    %s488 = sld [smem:[#allocation2 + $0x13e]]
    %v489 = vstv %s488
    %v490 = vmul.f32 %v489, %v479
    %v491 = vadd.f32 %v473, %v490
    %s492 = sld [smem:[#allocation2 + $0x1d1]]
    %v493 = vstv %s492
    %v494 = vmul.f32 %v493, %v479
    %v495 = vadd.f32 %v477, %v494
    %s496 = scalar_lea.vmem %s2, 200
    %v497 = vld [vmem:[%s496] sm:$0xff]
    %s498 = sld [smem:[#allocation2 + $0x19]]
    %v499 = vstv %s498
    %v500 = vmul.f32 %v499, %v497
    %v501 = vadd.f32 %v483, %v500
    %s502 = sld [smem:[#allocation2 + $0xac]]
    %v503 = vstv %s502
    %v504 = vmul.f32 %v503, %v497
    %v505 = vadd.f32 %v487, %v504
    %s506 = sld [smem:[#allocation2 + $0x13f]]
    %v507 = vstv %s506
    %v508 = vmul.f32 %v507, %v497
    %v509 = vadd.f32 %v491, %v508
    %s510 = sld [smem:[#allocation2 + $0x1d2]]
    %v511 = vstv %s510
    %v512 = vmul.f32 %v511, %v497
    %v513 = vadd.f32 %v495, %v512
    %s514 = scalar_lea.vmem %s2, 208
    %v515 = vld [vmem:[%s514] sm:$0xff]
    %s516 = sld [smem:[#allocation2 + $0x1a]]
    %v517 = vstv %s516
    %v518 = vmul.f32 %v517, %v515
    %v519 = vadd.f32 %v501, %v518
    %s520 = sld [smem:[#allocation2 + $0xad]]
    %v521 = vstv %s520
    %v522 = vmul.f32 %v521, %v515
    %v523 = vadd.f32 %v505, %v522
    %s524 = sld [smem:[#allocation2 + $0x140]]
    %v525 = vstv %s524
    %v526 = vmul.f32 %v525, %v515
    %v527 = vadd.f32 %v509, %v526
    %s528 = sld [smem:[#allocation2 + $0x1d3]]
    %v529 = vstv %s528
    %v530 = vmul.f32 %v529, %v515
    %v531 = vadd.f32 %v513, %v530
    %s532 = scalar_lea.vmem %s2, 216
    %v533 = vld [vmem:[%s532] sm:$0xff]
    %s534 = sld [smem:[#allocation2 + $0x1b]]
    %v535 = vstv %s534
    %v536 = vmul.f32 %v535, %v533
    %v537 = vadd.f32 %v519, %v536
    %s538 = sld [smem:[#allocation2 + $0xae]]
    %v539 = vstv %s538
    %v540 = vmul.f32 %v539, %v533
    %v541 = vadd.f32 %v523, %v540
    %s542 = sld [smem:[#allocation2 + $0x141]]
    %v543 = vstv %s542
    %v544 = vmul.f32 %v543, %v533
    %v545 = vadd.f32 %v527, %v544
    %s546 = sld [smem:[#allocation2 + $0x1d4]]
    %v547 = vstv %s546
    %v548 = vmul.f32 %v547, %v533
    %v549 = vadd.f32 %v531, %v548
    %s550 = scalar_lea.vmem %s2, 224
    %v551 = vld [vmem:[%s550] sm:$0xff]
    %s552 = sld [smem:[#allocation2 + $0x1c]]
    %v553 = vstv %s552
    %v554 = vmul.f32 %v553, %v551
    %v555 = vadd.f32 %v537, %v554
    %s556 = sld [smem:[#allocation2 + $0xaf]]
    %v557 = vstv %s556
    %v558 = vmul.f32 %v557, %v551
    %v559 = vadd.f32 %v541, %v558
    %s560 = sld [smem:[#allocation2 + $0x142]]
    %v561 = vstv %s560
    %v562 = vmul.f32 %v561, %v551
    %v563 = vadd.f32 %v545, %v562
    %s564 = sld [smem:[#allocation2 + $0x1d5]]
    %v565 = vstv %s564
    %v566 = vmul.f32 %v565, %v551
    %v567 = vadd.f32 %v549, %v566
    %s568 = scalar_lea.vmem %s2, 232
    %v569 = vld [vmem:[%s568] sm:$0xff]
    %s570 = sld [smem:[#allocation2 + $0x1d]]
    %v571 = vstv %s570
    %v572 = vmul.f32 %v571, %v569
    %v573 = vadd.f32 %v555, %v572
    %s574 = sld [smem:[#allocation2 + $0xb0]]
    %v575 = vstv %s574
    %v576 = vmul.f32 %v575, %v569
    %v577 = vadd.f32 %v559, %v576
    %s578 = sld [smem:[#allocation2 + $0x143]]
    %v579 = vstv %s578
    %v580 = vmul.f32 %v579, %v569
    %v581 = vadd.f32 %v563, %v580
    %s582 = sld [smem:[#allocation2 + $0x1d6]]
    %v583 = vstv %s582
    %v584 = vmul.f32 %v583, %v569
    %v585 = vadd.f32 %v567, %v584
    %s586 = scalar_lea.vmem %s2, 240
    %v587 = vld [vmem:[%s586] sm:$0xff]
    %s588 = sld [smem:[#allocation2 + $0x1e]]
    %v589 = vstv %s588
    %v590 = vmul.f32 %v589, %v587
    %v591 = vadd.f32 %v573, %v590
    %s592 = sld [smem:[#allocation2 + $0xb1]]
    %v593 = vstv %s592
    %v594 = vmul.f32 %v593, %v587
    %v595 = vadd.f32 %v577, %v594
    %s596 = sld [smem:[#allocation2 + $0x144]]
    %v597 = vstv %s596
    %v598 = vmul.f32 %v597, %v587
    %v599 = vadd.f32 %v581, %v598
    %s600 = sld [smem:[#allocation2 + $0x1d7]]
    %v601 = vstv %s600
    %v602 = vmul.f32 %v601, %v587
    %v603 = vadd.f32 %v585, %v602
    %s604 = scalar_lea.vmem %s2, 248
    %v605 = vld [vmem:[%s604] sm:$0xff]
    %s606 = sld [smem:[#allocation2 + $0x1f]]
    %v607 = vstv %s606
    %v608 = vmul.f32 %v607, %v605
    %v609 = vadd.f32 %v591, %v608
    %s610 = sld [smem:[#allocation2 + $0xb2]]
    %v611 = vstv %s610
    %v612 = vmul.f32 %v611, %v605
    %v613 = vadd.f32 %v595, %v612
    %s614 = sld [smem:[#allocation2 + $0x145]]
    %v615 = vstv %s614
    %v616 = vmul.f32 %v615, %v605
    %v617 = vadd.f32 %v599, %v616
    %s618 = sld [smem:[#allocation2 + $0x1d8]]
    %v619 = vstv %s618
    %v620 = vmul.f32 %v619, %v605
    %v621 = vadd.f32 %v603, %v620
    %s622 = scalar_lea.vmem %s2, 256
    %v623 = vld [vmem:[%s622] sm:$0xff]
    %s624 = sld [smem:[#allocation2 + $0x20]]
    %v625 = vstv %s624
    %v626 = vmul.f32 %v625, %v623
    %v627 = vadd.f32 %v609, %v626
    %s628 = sld [smem:[#allocation2 + $0xb3]]
    %v629 = vstv %s628
    %v630 = vmul.f32 %v629, %v623
    %v631 = vadd.f32 %v613, %v630
    %s632 = sld [smem:[#allocation2 + $0x146]]
    %v633 = vstv %s632
    %v634 = vmul.f32 %v633, %v623
    %v635 = vadd.f32 %v617, %v634
    %s636 = sld [smem:[#allocation2 + $0x1d9]]
    %v637 = vstv %s636
    %v638 = vmul.f32 %v637, %v623
    %v639 = vadd.f32 %v621, %v638
    %s640 = scalar_lea.vmem %s2, 264
    %v641 = vld [vmem:[%s640] sm:$0xff]
    %s642 = sld [smem:[#allocation2 + $0x21]]
    %v643 = vstv %s642
    %v644 = vmul.f32 %v643, %v641
    %v645 = vadd.f32 %v627, %v644
    %s646 = sld [smem:[#allocation2 + $0xb4]]
    %v647 = vstv %s646
    %v648 = vmul.f32 %v647, %v641
    %v649 = vadd.f32 %v631, %v648
    %s650 = sld [smem:[#allocation2 + $0x147]]
    %v651 = vstv %s650
    %v652 = vmul.f32 %v651, %v641
    %v653 = vadd.f32 %v635, %v652
    %s654 = sld [smem:[#allocation2 + $0x1da]]
    %v655 = vstv %s654
    %v656 = vmul.f32 %v655, %v641
    %v657 = vadd.f32 %v639, %v656
    %s658 = scalar_lea.vmem %s2, 272
    %v659 = vld [vmem:[%s658] sm:$0xff]
    %s660 = sld [smem:[#allocation2 + $0x22]]
    %v661 = vstv %s660
    %v662 = vmul.f32 %v661, %v659
    %v663 = vadd.f32 %v645, %v662
    %s664 = sld [smem:[#allocation2 + $0xb5]]
    %v665 = vstv %s664
    %v666 = vmul.f32 %v665, %v659
    %v667 = vadd.f32 %v649, %v666
    %s668 = sld [smem:[#allocation2 + $0x148]]
    %v669 = vstv %s668
    %v670 = vmul.f32 %v669, %v659
    %v671 = vadd.f32 %v653, %v670
    %s672 = sld [smem:[#allocation2 + $0x1db]]
    %v673 = vstv %s672
    %v674 = vmul.f32 %v673, %v659
    %v675 = vadd.f32 %v657, %v674
    %s676 = scalar_lea.vmem %s2, 280
    %v677 = vld [vmem:[%s676] sm:$0xff]
    %s678 = sld [smem:[#allocation2 + $0x23]]
    %v679 = vstv %s678
    %v680 = vmul.f32 %v679, %v677
    %v681 = vadd.f32 %v663, %v680
    %s682 = sld [smem:[#allocation2 + $0xb6]]
    %v683 = vstv %s682
    %v684 = vmul.f32 %v683, %v677
    %v685 = vadd.f32 %v667, %v684
    %s686 = sld [smem:[#allocation2 + $0x149]]
    %v687 = vstv %s686
    %v688 = vmul.f32 %v687, %v677
    %v689 = vadd.f32 %v671, %v688
    %s690 = sld [smem:[#allocation2 + $0x1dc]]
    %v691 = vstv %s690
    %v692 = vmul.f32 %v691, %v677
    %v693 = vadd.f32 %v675, %v692
    %s694 = scalar_lea.vmem %s2, 288
    %v695 = vld [vmem:[%s694] sm:$0xff]
    %s696 = sld [smem:[#allocation2 + $0x24]]
    %v697 = vstv %s696
    %v698 = vmul.f32 %v697, %v695
    %v699 = vadd.f32 %v681, %v698
    %s700 = sld [smem:[#allocation2 + $0xb7]]
    %v701 = vstv %s700
    %v702 = vmul.f32 %v701, %v695
    %v703 = vadd.f32 %v685, %v702
    %s704 = sld [smem:[#allocation2 + $0x14a]]
    %v705 = vstv %s704
    %v706 = vmul.f32 %v705, %v695
    %v707 = vadd.f32 %v689, %v706
    %s708 = sld [smem:[#allocation2 + $0x1dd]]
    %v709 = vstv %s708
    %v710 = vmul.f32 %v709, %v695
    %v711 = vadd.f32 %v693, %v710
    %s712 = scalar_lea.vmem %s2, 296
    %v713 = vld [vmem:[%s712] sm:$0xff]
    %s714 = sld [smem:[#allocation2 + $0x25]]
    %v715 = vstv %s714
    %v716 = vmul.f32 %v715, %v713
    %v717 = vadd.f32 %v699, %v716
    %s718 = sld [smem:[#allocation2 + $0xb8]]
    %v719 = vstv %s718
    %v720 = vmul.f32 %v719, %v713
    %v721 = vadd.f32 %v703, %v720
    %s722 = sld [smem:[#allocation2 + $0x14b]]
    %v723 = vstv %s722
    %v724 = vmul.f32 %v723, %v713
    %v725 = vadd.f32 %v707, %v724
    %s726 = sld [smem:[#allocation2 + $0x1de]]
    %v727 = vstv %s726
    %v728 = vmul.f32 %v727, %v713
    %v729 = vadd.f32 %v711, %v728
    %s730 = scalar_lea.vmem %s2, 304
    %v731 = vld [vmem:[%s730] sm:$0xff]
    %s732 = sld [smem:[#allocation2 + $0x26]]
    %v733 = vstv %s732
    %v734 = vmul.f32 %v733, %v731
    %v735 = vadd.f32 %v717, %v734
    %s736 = sld [smem:[#allocation2 + $0xb9]]
    %v737 = vstv %s736
    %v738 = vmul.f32 %v737, %v731
    %v739 = vadd.f32 %v721, %v738
    %s740 = sld [smem:[#allocation2 + $0x14c]]
    %v741 = vstv %s740
    %v742 = vmul.f32 %v741, %v731
    %v743 = vadd.f32 %v725, %v742
    %s744 = sld [smem:[#allocation2 + $0x1df]]
    %v745 = vstv %s744
    %v746 = vmul.f32 %v745, %v731
    %v747 = vadd.f32 %v729, %v746
    %s748 = scalar_lea.vmem %s2, 312
    %v749 = vld [vmem:[%s748] sm:$0xff]
    %s750 = sld [smem:[#allocation2 + $0x27]]
    %v751 = vstv %s750
    %v752 = vmul.f32 %v751, %v749
    %v753 = vadd.f32 %v735, %v752
    %s754 = sld [smem:[#allocation2 + $0xba]]
    %v755 = vstv %s754
    %v756 = vmul.f32 %v755, %v749
    %v757 = vadd.f32 %v739, %v756
    %s758 = sld [smem:[#allocation2 + $0x14d]]
    %v759 = vstv %s758
    %v760 = vmul.f32 %v759, %v749
    %v761 = vadd.f32 %v743, %v760
    %s762 = sld [smem:[#allocation2 + $0x1e0]]
    %v763 = vstv %s762
    %v764 = vmul.f32 %v763, %v749
    %v765 = vadd.f32 %v747, %v764
    %s766 = scalar_lea.vmem %s2, 320
    %v767 = vld [vmem:[%s766] sm:$0xff]
    %s768 = sld [smem:[#allocation2 + $0x28]]
    %v769 = vstv %s768
    %v770 = vmul.f32 %v769, %v767
    %v771 = vadd.f32 %v753, %v770
    %s772 = sld [smem:[#allocation2 + $0xbb]]
    %v773 = vstv %s772
    %v774 = vmul.f32 %v773, %v767
    %v775 = vadd.f32 %v757, %v774
    %s776 = sld [smem:[#allocation2 + $0x14e]]
    %v777 = vstv %s776
    %v778 = vmul.f32 %v777, %v767
    %v779 = vadd.f32 %v761, %v778
    %s780 = sld [smem:[#allocation2 + $0x1e1]]
    %v781 = vstv %s780
    %v782 = vmul.f32 %v781, %v767
    %v783 = vadd.f32 %v765, %v782
    %s784 = scalar_lea.vmem %s2, 328
    %v785 = vld [vmem:[%s784] sm:$0xff]
    %s786 = sld [smem:[#allocation2 + $0x29]]
    %v787 = vstv %s786
    %v788 = vmul.f32 %v787, %v785
    %v789 = vadd.f32 %v771, %v788
    %s790 = sld [smem:[#allocation2 + $0xbc]]
    %v791 = vstv %s790
    %v792 = vmul.f32 %v791, %v785
    %v793 = vadd.f32 %v775, %v792
    %s794 = sld [smem:[#allocation2 + $0x14f]]
    %v795 = vstv %s794
    %v796 = vmul.f32 %v795, %v785
    %v797 = vadd.f32 %v779, %v796
    %s798 = sld [smem:[#allocation2 + $0x1e2]]
    %v799 = vstv %s798
    %v800 = vmul.f32 %v799, %v785
    %v801 = vadd.f32 %v783, %v800
    %s802 = scalar_lea.vmem %s2, 336
    %v803 = vld [vmem:[%s802] sm:$0xff]
    %s804 = sld [smem:[#allocation2 + $0x2a]]
    %v805 = vstv %s804
    %v806 = vmul.f32 %v805, %v803
    %v807 = vadd.f32 %v789, %v806
    %s808 = sld [smem:[#allocation2 + $0xbd]]
    %v809 = vstv %s808
    %v810 = vmul.f32 %v809, %v803
    %v811 = vadd.f32 %v793, %v810
    %s812 = sld [smem:[#allocation2 + $0x150]]
    %v813 = vstv %s812
    %v814 = vmul.f32 %v813, %v803
    %v815 = vadd.f32 %v797, %v814
    %s816 = sld [smem:[#allocation2 + $0x1e3]]
    %v817 = vstv %s816
    %v818 = vmul.f32 %v817, %v803
    %v819 = vadd.f32 %v801, %v818
    %s820 = scalar_lea.vmem %s2, 344
    %v821 = vld [vmem:[%s820] sm:$0xff]
    %s822 = sld [smem:[#allocation2 + $0x2b]]
    %v823 = vstv %s822
    %v824 = vmul.f32 %v823, %v821
    %v825 = vadd.f32 %v807, %v824
    %s826 = sld [smem:[#allocation2 + $0xbe]]
    %v827 = vstv %s826
    %v828 = vmul.f32 %v827, %v821
    %v829 = vadd.f32 %v811, %v828
    %s830 = sld [smem:[#allocation2 + $0x151]]
    %v831 = vstv %s830
    %v832 = vmul.f32 %v831, %v821
    %v833 = vadd.f32 %v815, %v832
    %s834 = sld [smem:[#allocation2 + $0x1e4]]
    %v835 = vstv %s834
    %v836 = vmul.f32 %v835, %v821
    %v837 = vadd.f32 %v819, %v836
    %s838 = scalar_lea.vmem %s2, 352
    %v839 = vld [vmem:[%s838] sm:$0xff]
    %s840 = sld [smem:[#allocation2 + $0x2c]]
    %v841 = vstv %s840
    %v842 = vmul.f32 %v841, %v839
    %v843 = vadd.f32 %v825, %v842
    %s844 = sld [smem:[#allocation2 + $0xbf]]
    %v845 = vstv %s844
    %v846 = vmul.f32 %v845, %v839
    %v847 = vadd.f32 %v829, %v846
    %s848 = sld [smem:[#allocation2 + $0x152]]
    %v849 = vstv %s848
    %v850 = vmul.f32 %v849, %v839
    %v851 = vadd.f32 %v833, %v850
    %s852 = sld [smem:[#allocation2 + $0x1e5]]
    %v853 = vstv %s852
    %v854 = vmul.f32 %v853, %v839
    %v855 = vadd.f32 %v837, %v854
    %s856 = scalar_lea.vmem %s2, 360
    %v857 = vld [vmem:[%s856] sm:$0xff]
    %s858 = sld [smem:[#allocation2 + $0x2d]]
    %v859 = vstv %s858
    %v860 = vmul.f32 %v859, %v857
    %v861 = vadd.f32 %v843, %v860
    %s862 = sld [smem:[#allocation2 + $0xc0]]
    %v863 = vstv %s862
    %v864 = vmul.f32 %v863, %v857
    %v865 = vadd.f32 %v847, %v864
    %s866 = sld [smem:[#allocation2 + $0x153]]
    %v867 = vstv %s866
    %v868 = vmul.f32 %v867, %v857
    %v869 = vadd.f32 %v851, %v868
    %s870 = sld [smem:[#allocation2 + $0x1e6]]
    %v871 = vstv %s870
    %v872 = vmul.f32 %v871, %v857
    %v873 = vadd.f32 %v855, %v872
    %s874 = scalar_lea.vmem %s2, 368
    %v875 = vld [vmem:[%s874] sm:$0xff]
    %s876 = sld [smem:[#allocation2 + $0x2e]]
    %v877 = vstv %s876
    %v878 = vmul.f32 %v877, %v875
    %v879 = vadd.f32 %v861, %v878
    %s880 = sld [smem:[#allocation2 + $0xc1]]
    %v881 = vstv %s880
    %v882 = vmul.f32 %v881, %v875
    %v883 = vadd.f32 %v865, %v882
    %s884 = sld [smem:[#allocation2 + $0x154]]
    %v885 = vstv %s884
    %v886 = vmul.f32 %v885, %v875
    %v887 = vadd.f32 %v869, %v886
    %s888 = sld [smem:[#allocation2 + $0x1e7]]
    %v889 = vstv %s888
    %v890 = vmul.f32 %v889, %v875
    %v891 = vadd.f32 %v873, %v890
    %s892 = scalar_lea.vmem %s2, 376
    %v893 = vld [vmem:[%s892] sm:$0xff]
    %s894 = sld [smem:[#allocation2 + $0x2f]]
    %v895 = vstv %s894
    %v896 = vmul.f32 %v895, %v893
    %v897 = vadd.f32 %v879, %v896
    %s898 = sld [smem:[#allocation2 + $0xc2]]
    %v899 = vstv %s898
    %v900 = vmul.f32 %v899, %v893
    %v901 = vadd.f32 %v883, %v900
    %s902 = sld [smem:[#allocation2 + $0x155]]
    %v903 = vstv %s902
    %v904 = vmul.f32 %v903, %v893
    %v905 = vadd.f32 %v887, %v904
    %s906 = sld [smem:[#allocation2 + $0x1e8]]
    %v907 = vstv %s906
    %v908 = vmul.f32 %v907, %v893
    %v909 = vadd.f32 %v891, %v908
    %s910 = scalar_lea.vmem %s2, 384
    %v911 = vld [vmem:[%s910] sm:$0xff]
    %s912 = sld [smem:[#allocation2 + $0x30]]
    %v913 = vstv %s912
    %v914 = vmul.f32 %v913, %v911
    %v915 = vadd.f32 %v897, %v914
    %s916 = sld [smem:[#allocation2 + $0xc3]]
    %v917 = vstv %s916
    %v918 = vmul.f32 %v917, %v911
    %v919 = vadd.f32 %v901, %v918
    %s920 = sld [smem:[#allocation2 + $0x156]]
    %v921 = vstv %s920
    %v922 = vmul.f32 %v921, %v911
    %v923 = vadd.f32 %v905, %v922
    %s924 = sld [smem:[#allocation2 + $0x1e9]]
    %v925 = vstv %s924
    %v926 = vmul.f32 %v925, %v911
    %v927 = vadd.f32 %v909, %v926
    %s928 = scalar_lea.vmem %s2, 392
    %v929 = vld [vmem:[%s928] sm:$0xff]
    %s930 = sld [smem:[#allocation2 + $0x31]]
    %v931 = vstv %s930
    %v932 = vmul.f32 %v931, %v929
    %v933 = vadd.f32 %v915, %v932
    %s934 = sld [smem:[#allocation2 + $0xc4]]
    %v935 = vstv %s934
    %v936 = vmul.f32 %v935, %v929
    %v937 = vadd.f32 %v919, %v936
    %s938 = sld [smem:[#allocation2 + $0x157]]
    %v939 = vstv %s938
    %v940 = vmul.f32 %v939, %v929
    %v941 = vadd.f32 %v923, %v940
    %s942 = sld [smem:[#allocation2 + $0x1ea]]
    %v943 = vstv %s942
    %v944 = vmul.f32 %v943, %v929
    %v945 = vadd.f32 %v927, %v944
    %s946 = scalar_lea.vmem %s2, 400
    %v947 = vld [vmem:[%s946] sm:$0xff]
    %s948 = sld [smem:[#allocation2 + $0x32]]
    %v949 = vstv %s948
    %v950 = vmul.f32 %v949, %v947
    %v951 = vadd.f32 %v933, %v950
    %s952 = sld [smem:[#allocation2 + $0xc5]]
    %v953 = vstv %s952
    %v954 = vmul.f32 %v953, %v947
    %v955 = vadd.f32 %v937, %v954
    %s956 = sld [smem:[#allocation2 + $0x158]]
    %v957 = vstv %s956
    %v958 = vmul.f32 %v957, %v947
    %v959 = vadd.f32 %v941, %v958
    %s960 = sld [smem:[#allocation2 + $0x1eb]]
    %v961 = vstv %s960
    %v962 = vmul.f32 %v961, %v947
    %v963 = vadd.f32 %v945, %v962
    %s964 = scalar_lea.vmem %s2, 408
    %v965 = vld [vmem:[%s964] sm:$0xff]
    %s966 = sld [smem:[#allocation2 + $0x33]]
    %v967 = vstv %s966
    %v968 = vmul.f32 %v967, %v965
    %v969 = vadd.f32 %v951, %v968
    %s970 = sld [smem:[#allocation2 + $0xc6]]
    %v971 = vstv %s970
    %v972 = vmul.f32 %v971, %v965
    %v973 = vadd.f32 %v955, %v972
    %s974 = sld [smem:[#allocation2 + $0x159]]
    %v975 = vstv %s974
    %v976 = vmul.f32 %v975, %v965
    %v977 = vadd.f32 %v959, %v976
    %s978 = sld [smem:[#allocation2 + $0x1ec]]
    %v979 = vstv %s978
    %v980 = vmul.f32 %v979, %v965
    %v981 = vadd.f32 %v963, %v980
    %s982 = scalar_lea.vmem %s2, 416
    %v983 = vld [vmem:[%s982] sm:$0xff]
    %s984 = sld [smem:[#allocation2 + $0x34]]
    %v985 = vstv %s984
    %v986 = vmul.f32 %v985, %v983
    %v987 = vadd.f32 %v969, %v986
    %s988 = sld [smem:[#allocation2 + $0xc7]]
    %v989 = vstv %s988
    %v990 = vmul.f32 %v989, %v983
    %v991 = vadd.f32 %v973, %v990
    %s992 = sld [smem:[#allocation2 + $0x15a]]
    %v993 = vstv %s992
    %v994 = vmul.f32 %v993, %v983
    %v995 = vadd.f32 %v977, %v994
    %s996 = sld [smem:[#allocation2 + $0x1ed]]
    %v997 = vstv %s996
    %v998 = vmul.f32 %v997, %v983
    %v999 = vadd.f32 %v981, %v998
    %s1000 = scalar_lea.vmem %s2, 424
    %v1001 = vld [vmem:[%s1000] sm:$0xff]
    %s1002 = sld [smem:[#allocation2 + $0x35]]
    %v1003 = vstv %s1002
    %v1004 = vmul.f32 %v1003, %v1001
    %v1005 = vadd.f32 %v987, %v1004
    %s1006 = sld [smem:[#allocation2 + $0xc8]]
    %v1007 = vstv %s1006
    %v1008 = vmul.f32 %v1007, %v1001
    %v1009 = vadd.f32 %v991, %v1008
    %s1010 = sld [smem:[#allocation2 + $0x15b]]
    %v1011 = vstv %s1010
    %v1012 = vmul.f32 %v1011, %v1001
    %v1013 = vadd.f32 %v995, %v1012
    %s1014 = sld [smem:[#allocation2 + $0x1ee]]
    %v1015 = vstv %s1014
    %v1016 = vmul.f32 %v1015, %v1001
    %v1017 = vadd.f32 %v999, %v1016
    %s1018 = scalar_lea.vmem %s2, 432
    %v1019 = vld [vmem:[%s1018] sm:$0xff]
    %s1020 = sld [smem:[#allocation2 + $0x36]]
    %v1021 = vstv %s1020
    %v1022 = vmul.f32 %v1021, %v1019
    %v1023 = vadd.f32 %v1005, %v1022
    %s1024 = sld [smem:[#allocation2 + $0xc9]]
    %v1025 = vstv %s1024
    %v1026 = vmul.f32 %v1025, %v1019
    %v1027 = vadd.f32 %v1009, %v1026
    %s1028 = sld [smem:[#allocation2 + $0x15c]]
    %v1029 = vstv %s1028
    %v1030 = vmul.f32 %v1029, %v1019
    %v1031 = vadd.f32 %v1013, %v1030
    %s1032 = sld [smem:[#allocation2 + $0x1ef]]
    %v1033 = vstv %s1032
    %v1034 = vmul.f32 %v1033, %v1019
    %v1035 = vadd.f32 %v1017, %v1034
    %s1036 = scalar_lea.vmem %s2, 440
    %v1037 = vld [vmem:[%s1036] sm:$0xff]
    %s1038 = sld [smem:[#allocation2 + $0x37]]
    %v1039 = vstv %s1038
    %v1040 = vmul.f32 %v1039, %v1037
    %v1041 = vadd.f32 %v1023, %v1040
    %s1042 = sld [smem:[#allocation2 + $0xca]]
    %v1043 = vstv %s1042
    %v1044 = vmul.f32 %v1043, %v1037
    %v1045 = vadd.f32 %v1027, %v1044
    %s1046 = sld [smem:[#allocation2 + $0x15d]]
    %v1047 = vstv %s1046
    %v1048 = vmul.f32 %v1047, %v1037
    %v1049 = vadd.f32 %v1031, %v1048
    %s1050 = sld [smem:[#allocation2 + $0x1f0]]
    %v1051 = vstv %s1050
    %v1052 = vmul.f32 %v1051, %v1037
    %v1053 = vadd.f32 %v1035, %v1052
    %s1054 = scalar_lea.vmem %s2, 448
    %v1055 = vld [vmem:[%s1054] sm:$0xff]
    %s1056 = sld [smem:[#allocation2 + $0x38]]
    %v1057 = vstv %s1056
    %v1058 = vmul.f32 %v1057, %v1055
    %v1059 = vadd.f32 %v1041, %v1058
    %s1060 = sld [smem:[#allocation2 + $0xcb]]
    %v1061 = vstv %s1060
    %v1062 = vmul.f32 %v1061, %v1055
    %v1063 = vadd.f32 %v1045, %v1062
    %s1064 = sld [smem:[#allocation2 + $0x15e]]
    %v1065 = vstv %s1064
    %v1066 = vmul.f32 %v1065, %v1055
    %v1067 = vadd.f32 %v1049, %v1066
    %s1068 = sld [smem:[#allocation2 + $0x1f1]]
    %v1069 = vstv %s1068
    %v1070 = vmul.f32 %v1069, %v1055
    %v1071 = vadd.f32 %v1053, %v1070
    %s1072 = scalar_lea.vmem %s2, 456
    %v1073 = vld [vmem:[%s1072] sm:$0xff]
    %s1074 = sld [smem:[#allocation2 + $0x39]]
    %v1075 = vstv %s1074
    %v1076 = vmul.f32 %v1075, %v1073
    %v1077 = vadd.f32 %v1059, %v1076
    %s1078 = sld [smem:[#allocation2 + $0xcc]]
    %v1079 = vstv %s1078
    %v1080 = vmul.f32 %v1079, %v1073
    %v1081 = vadd.f32 %v1063, %v1080
    %s1082 = sld [smem:[#allocation2 + $0x15f]]
    %v1083 = vstv %s1082
    %v1084 = vmul.f32 %v1083, %v1073
    %v1085 = vadd.f32 %v1067, %v1084
    %s1086 = sld [smem:[#allocation2 + $0x1f2]]
    %v1087 = vstv %s1086
    %v1088 = vmul.f32 %v1087, %v1073
    %v1089 = vadd.f32 %v1071, %v1088
    %s1090 = scalar_lea.vmem %s2, 464
    %v1091 = vld [vmem:[%s1090] sm:$0xff]
    %s1092 = sld [smem:[#allocation2 + $0x3a]]
    %v1093 = vstv %s1092
    %v1094 = vmul.f32 %v1093, %v1091
    %v1095 = vadd.f32 %v1077, %v1094
    %s1096 = sld [smem:[#allocation2 + $0xcd]]
    %v1097 = vstv %s1096
    %v1098 = vmul.f32 %v1097, %v1091
    %v1099 = vadd.f32 %v1081, %v1098
    %s1100 = sld [smem:[#allocation2 + $0x160]]
    %v1101 = vstv %s1100
    %v1102 = vmul.f32 %v1101, %v1091
    %v1103 = vadd.f32 %v1085, %v1102
    %s1104 = sld [smem:[#allocation2 + $0x1f3]]
    %v1105 = vstv %s1104
    %v1106 = vmul.f32 %v1105, %v1091
    %v1107 = vadd.f32 %v1089, %v1106
    %s1108 = scalar_lea.vmem %s2, 472
    %v1109 = vld [vmem:[%s1108] sm:$0xff]
    %s1110 = sld [smem:[#allocation2 + $0x3b]]
    %v1111 = vstv %s1110
    %v1112 = vmul.f32 %v1111, %v1109
    %v1113 = vadd.f32 %v1095, %v1112
    %s1114 = sld [smem:[#allocation2 + $0xce]]
    %v1115 = vstv %s1114
    %v1116 = vmul.f32 %v1115, %v1109
    %v1117 = vadd.f32 %v1099, %v1116
    %s1118 = sld [smem:[#allocation2 + $0x161]]
    %v1119 = vstv %s1118
    %v1120 = vmul.f32 %v1119, %v1109
    %v1121 = vadd.f32 %v1103, %v1120
    %s1122 = sld [smem:[#allocation2 + $0x1f4]]
    %v1123 = vstv %s1122
    %v1124 = vmul.f32 %v1123, %v1109
    %v1125 = vadd.f32 %v1107, %v1124
    %s1126 = scalar_lea.vmem %s2, 480
    %v1127 = vld [vmem:[%s1126] sm:$0xff]
    %s1128 = sld [smem:[#allocation2 + $0x3c]]
    %v1129 = vstv %s1128
    %v1130 = vmul.f32 %v1129, %v1127
    %v1131 = vadd.f32 %v1113, %v1130
    %s1132 = sld [smem:[#allocation2 + $0xcf]]
    %v1133 = vstv %s1132
    %v1134 = vmul.f32 %v1133, %v1127
    %v1135 = vadd.f32 %v1117, %v1134
    %s1136 = sld [smem:[#allocation2 + $0x162]]
    %v1137 = vstv %s1136
    %v1138 = vmul.f32 %v1137, %v1127
    %v1139 = vadd.f32 %v1121, %v1138
    %s1140 = sld [smem:[#allocation2 + $0x1f5]]
    %v1141 = vstv %s1140
    %v1142 = vmul.f32 %v1141, %v1127
    %v1143 = vadd.f32 %v1125, %v1142
    %s1144 = scalar_lea.vmem %s2, 488
    %v1145 = vld [vmem:[%s1144] sm:$0xff]
    %s1146 = sld [smem:[#allocation2 + $0x3d]]
    %v1147 = vstv %s1146
    %v1148 = vmul.f32 %v1147, %v1145
    %v1149 = vadd.f32 %v1131, %v1148
    %s1150 = sld [smem:[#allocation2 + $0xd0]]
    %v1151 = vstv %s1150
    %v1152 = vmul.f32 %v1151, %v1145
    %v1153 = vadd.f32 %v1135, %v1152
    %s1154 = sld [smem:[#allocation2 + $0x163]]
    %v1155 = vstv %s1154
    %v1156 = vmul.f32 %v1155, %v1145
    %v1157 = vadd.f32 %v1139, %v1156
    %s1158 = sld [smem:[#allocation2 + $0x1f6]]
    %v1159 = vstv %s1158
    %v1160 = vmul.f32 %v1159, %v1145
    %v1161 = vadd.f32 %v1143, %v1160
    %s1162 = scalar_lea.vmem %s2, 496
    %v1163 = vld [vmem:[%s1162] sm:$0xff]
    %s1164 = sld [smem:[#allocation2 + $0x3e]]
    %v1165 = vstv %s1164
    %v1166 = vmul.f32 %v1165, %v1163
    %v1167 = vadd.f32 %v1149, %v1166
    %s1168 = sld [smem:[#allocation2 + $0xd1]]
    %v1169 = vstv %s1168
    %v1170 = vmul.f32 %v1169, %v1163
    %v1171 = vadd.f32 %v1153, %v1170
    %s1172 = sld [smem:[#allocation2 + $0x164]]
    %v1173 = vstv %s1172
    %v1174 = vmul.f32 %v1173, %v1163
    %v1175 = vadd.f32 %v1157, %v1174
    %s1176 = sld [smem:[#allocation2 + $0x1f7]]
    %v1177 = vstv %s1176
    %v1178 = vmul.f32 %v1177, %v1163
    %v1179 = vadd.f32 %v1161, %v1178
    %s1180 = scalar_lea.vmem %s2, 504
    %v1181 = vld [vmem:[%s1180] sm:$0xff]
    %s1182 = sld [smem:[#allocation2 + $0x3f]]
    %v1183 = vstv %s1182
    %v1184 = vmul.f32 %v1183, %v1181
    %v1185 = vadd.f32 %v1167, %v1184
    %s1186 = sld [smem:[#allocation2 + $0xd2]]
    %v1187 = vstv %s1186
    %v1188 = vmul.f32 %v1187, %v1181
    %v1189 = vadd.f32 %v1171, %v1188
    %s1190 = sld [smem:[#allocation2 + $0x165]]
    %v1191 = vstv %s1190
    %v1192 = vmul.f32 %v1191, %v1181
    %v1193 = vadd.f32 %v1175, %v1192
    %s1194 = sld [smem:[#allocation2 + $0x1f8]]
    %v1195 = vstv %s1194
    %v1196 = vmul.f32 %v1195, %v1181
    %v1197 = vadd.f32 %v1179, %v1196
    %s1198 = scalar_lea.vmem %s2, 512
    %v1199 = vld [vmem:[%s1198] sm:$0xff]
    %s1200 = sld [smem:[#allocation2 + $0x40]]
    %v1201 = vstv %s1200
    %v1202 = vmul.f32 %v1201, %v1199
    %v1203 = vadd.f32 %v1185, %v1202
    %s1204 = sld [smem:[#allocation2 + $0xd3]]
    %v1205 = vstv %s1204
    %v1206 = vmul.f32 %v1205, %v1199
    %v1207 = vadd.f32 %v1189, %v1206
    %s1208 = sld [smem:[#allocation2 + $0x166]]
    %v1209 = vstv %s1208
    %v1210 = vmul.f32 %v1209, %v1199
    %v1211 = vadd.f32 %v1193, %v1210
    %s1212 = sld [smem:[#allocation2 + $0x1f9]]
    %v1213 = vstv %s1212
    %v1214 = vmul.f32 %v1213, %v1199
    %v1215 = vadd.f32 %v1197, %v1214
    %s1216 = scalar_lea.vmem %s2, 520
    %v1217 = vld [vmem:[%s1216] sm:$0xff]
    %s1218 = sld [smem:[#allocation2 + $0x41]]
    %v1219 = vstv %s1218
    %v1220 = vmul.f32 %v1219, %v1217
    %v1221 = vadd.f32 %v1203, %v1220
    %s1222 = sld [smem:[#allocation2 + $0xd4]]
    %v1223 = vstv %s1222
    %v1224 = vmul.f32 %v1223, %v1217
    %v1225 = vadd.f32 %v1207, %v1224
    %s1226 = sld [smem:[#allocation2 + $0x167]]
    %v1227 = vstv %s1226
    %v1228 = vmul.f32 %v1227, %v1217
    %v1229 = vadd.f32 %v1211, %v1228
    %s1230 = sld [smem:[#allocation2 + $0x1fa]]
    %v1231 = vstv %s1230
    %v1232 = vmul.f32 %v1231, %v1217
    %v1233 = vadd.f32 %v1215, %v1232
    %s1234 = scalar_lea.vmem %s2, 528
    %v1235 = vld [vmem:[%s1234] sm:$0xff]
    %s1236 = sld [smem:[#allocation2 + $0x42]]
    %v1237 = vstv %s1236
    %v1238 = vmul.f32 %v1237, %v1235
    %v1239 = vadd.f32 %v1221, %v1238
    %s1240 = sld [smem:[#allocation2 + $0xd5]]
    %v1241 = vstv %s1240
    %v1242 = vmul.f32 %v1241, %v1235
    %v1243 = vadd.f32 %v1225, %v1242
    %s1244 = sld [smem:[#allocation2 + $0x168]]
    %v1245 = vstv %s1244
    %v1246 = vmul.f32 %v1245, %v1235
    %v1247 = vadd.f32 %v1229, %v1246
    %s1248 = sld [smem:[#allocation2 + $0x1fb]]
    %v1249 = vstv %s1248
    %v1250 = vmul.f32 %v1249, %v1235
    %v1251 = vadd.f32 %v1233, %v1250
    %s1252 = scalar_lea.vmem %s2, 536
    %v1253 = vld [vmem:[%s1252] sm:$0xff]
    %s1254 = sld [smem:[#allocation2 + $0x43]]
    %v1255 = vstv %s1254
    %v1256 = vmul.f32 %v1255, %v1253
    %v1257 = vadd.f32 %v1239, %v1256
    %s1258 = sld [smem:[#allocation2 + $0xd6]]
    %v1259 = vstv %s1258
    %v1260 = vmul.f32 %v1259, %v1253
    %v1261 = vadd.f32 %v1243, %v1260
    %s1262 = sld [smem:[#allocation2 + $0x169]]
    %v1263 = vstv %s1262
    %v1264 = vmul.f32 %v1263, %v1253
    %v1265 = vadd.f32 %v1247, %v1264
    %s1266 = sld [smem:[#allocation2 + $0x1fc]]
    %v1267 = vstv %s1266
    %v1268 = vmul.f32 %v1267, %v1253
    %v1269 = vadd.f32 %v1251, %v1268
    %s1270 = scalar_lea.vmem %s2, 544
    %v1271 = vld [vmem:[%s1270] sm:$0xff]
    %s1272 = sld [smem:[#allocation2 + $0x44]]
    %v1273 = vstv %s1272
    %v1274 = vmul.f32 %v1273, %v1271
    %v1275 = vadd.f32 %v1257, %v1274
    %s1276 = sld [smem:[#allocation2 + $0xd7]]
    %v1277 = vstv %s1276
    %v1278 = vmul.f32 %v1277, %v1271
    %v1279 = vadd.f32 %v1261, %v1278
    %s1280 = sld [smem:[#allocation2 + $0x16a]]
    %v1281 = vstv %s1280
    %v1282 = vmul.f32 %v1281, %v1271
    %v1283 = vadd.f32 %v1265, %v1282
    %s1284 = sld [smem:[#allocation2 + $0x1fd]]
    %v1285 = vstv %s1284
    %v1286 = vmul.f32 %v1285, %v1271
    %v1287 = vadd.f32 %v1269, %v1286
    %s1288 = scalar_lea.vmem %s2, 552
    %v1289 = vld [vmem:[%s1288] sm:$0xff]
    %s1290 = sld [smem:[#allocation2 + $0x45]]
    %v1291 = vstv %s1290
    %v1292 = vmul.f32 %v1291, %v1289
    %v1293 = vadd.f32 %v1275, %v1292
    %s1294 = sld [smem:[#allocation2 + $0xd8]]
    %v1295 = vstv %s1294
    %v1296 = vmul.f32 %v1295, %v1289
    %v1297 = vadd.f32 %v1279, %v1296
    %s1298 = sld [smem:[#allocation2 + $0x16b]]
    %v1299 = vstv %s1298
    %v1300 = vmul.f32 %v1299, %v1289
    %v1301 = vadd.f32 %v1283, %v1300
    %s1302 = sld [smem:[#allocation2 + $0x1fe]]
    %v1303 = vstv %s1302
    %v1304 = vmul.f32 %v1303, %v1289
    %v1305 = vadd.f32 %v1287, %v1304
    %s1306 = scalar_lea.vmem %s2, 560
    %v1307 = vld [vmem:[%s1306] sm:$0xff]
    %s1308 = sld [smem:[#allocation2 + $0x46]]
    %v1309 = vstv %s1308
    %v1310 = vmul.f32 %v1309, %v1307
    %v1311 = vadd.f32 %v1293, %v1310
    %s1312 = sld [smem:[#allocation2 + $0xd9]]
    %v1313 = vstv %s1312
    %v1314 = vmul.f32 %v1313, %v1307
    %v1315 = vadd.f32 %v1297, %v1314
    %s1316 = sld [smem:[#allocation2 + $0x16c]]
    %v1317 = vstv %s1316
    %v1318 = vmul.f32 %v1317, %v1307
    %v1319 = vadd.f32 %v1301, %v1318
    %s1320 = sld [smem:[#allocation2 + $0x1ff]]
    %v1321 = vstv %s1320
    %v1322 = vmul.f32 %v1321, %v1307
    %v1323 = vadd.f32 %v1305, %v1322
    %s1324 = scalar_lea.vmem %s2, 568
    %v1325 = vld [vmem:[%s1324] sm:$0xff]
    %s1326 = sld [smem:[#allocation2 + $0x47]]
    %v1327 = vstv %s1326
    %v1328 = vmul.f32 %v1327, %v1325
    %v1329 = vadd.f32 %v1311, %v1328
    %s1330 = sld [smem:[#allocation2 + $0xda]]
    %v1331 = vstv %s1330
    %v1332 = vmul.f32 %v1331, %v1325
    %v1333 = vadd.f32 %v1315, %v1332
    %s1334 = sld [smem:[#allocation2 + $0x16d]]
    %v1335 = vstv %s1334
    %v1336 = vmul.f32 %v1335, %v1325
    %v1337 = vadd.f32 %v1319, %v1336
    %s1338 = sld [smem:[#allocation2 + $0x200]]
    %v1339 = vstv %s1338
    %v1340 = vmul.f32 %v1339, %v1325
    %v1341 = vadd.f32 %v1323, %v1340
    %s1342 = scalar_lea.vmem %s2, 576
    %v1343 = vld [vmem:[%s1342] sm:$0xff]
    %s1344 = sld [smem:[#allocation2 + $0x48]]
    %v1345 = vstv %s1344
    %v1346 = vmul.f32 %v1345, %v1343
    %v1347 = vadd.f32 %v1329, %v1346
    %s1348 = sld [smem:[#allocation2 + $0xdb]]
    %v1349 = vstv %s1348
    %v1350 = vmul.f32 %v1349, %v1343
    %v1351 = vadd.f32 %v1333, %v1350
    %s1352 = sld [smem:[#allocation2 + $0x16e]]
    %v1353 = vstv %s1352
    %v1354 = vmul.f32 %v1353, %v1343
    %v1355 = vadd.f32 %v1337, %v1354
    %s1356 = sld [smem:[#allocation2 + $0x201]]
    %v1357 = vstv %s1356
    %v1358 = vmul.f32 %v1357, %v1343
    %v1359 = vadd.f32 %v1341, %v1358
    %s1360 = scalar_lea.vmem %s2, 584
    %v1361 = vld [vmem:[%s1360] sm:$0xff]
    %s1362 = sld [smem:[#allocation2 + $0x49]]
    %v1363 = vstv %s1362
    %v1364 = vmul.f32 %v1363, %v1361
    %v1365 = vadd.f32 %v1347, %v1364
    %s1366 = sld [smem:[#allocation2 + $0xdc]]
    %v1367 = vstv %s1366
    %v1368 = vmul.f32 %v1367, %v1361
    %v1369 = vadd.f32 %v1351, %v1368
    %s1370 = sld [smem:[#allocation2 + $0x16f]]
    %v1371 = vstv %s1370
    %v1372 = vmul.f32 %v1371, %v1361
    %v1373 = vadd.f32 %v1355, %v1372
    %s1374 = sld [smem:[#allocation2 + $0x202]]
    %v1375 = vstv %s1374
    %v1376 = vmul.f32 %v1375, %v1361
    %v1377 = vadd.f32 %v1359, %v1376
    %s1378 = scalar_lea.vmem %s2, 592
    %v1379 = vld [vmem:[%s1378] sm:$0xff]
    %s1380 = sld [smem:[#allocation2 + $0x4a]]
    %v1381 = vstv %s1380
    %v1382 = vmul.f32 %v1381, %v1379
    %v1383 = vadd.f32 %v1365, %v1382
    %s1384 = sld [smem:[#allocation2 + $0xdd]]
    %v1385 = vstv %s1384
    %v1386 = vmul.f32 %v1385, %v1379
    %v1387 = vadd.f32 %v1369, %v1386
    %s1388 = sld [smem:[#allocation2 + $0x170]]
    %v1389 = vstv %s1388
    %v1390 = vmul.f32 %v1389, %v1379
    %v1391 = vadd.f32 %v1373, %v1390
    %s1392 = sld [smem:[#allocation2 + $0x203]]
    %v1393 = vstv %s1392
    %v1394 = vmul.f32 %v1393, %v1379
    %v1395 = vadd.f32 %v1377, %v1394
    %s1396 = scalar_lea.vmem %s2, 600
    %v1397 = vld [vmem:[%s1396] sm:$0xff]
    %s1398 = sld [smem:[#allocation2 + $0x4b]]
    %v1399 = vstv %s1398
    %v1400 = vmul.f32 %v1399, %v1397
    %v1401 = vadd.f32 %v1383, %v1400
    %s1402 = sld [smem:[#allocation2 + $0xde]]
    %v1403 = vstv %s1402
    %v1404 = vmul.f32 %v1403, %v1397
    %v1405 = vadd.f32 %v1387, %v1404
    %s1406 = sld [smem:[#allocation2 + $0x171]]
    %v1407 = vstv %s1406
    %v1408 = vmul.f32 %v1407, %v1397
    %v1409 = vadd.f32 %v1391, %v1408
    %s1410 = sld [smem:[#allocation2 + $0x204]]
    %v1411 = vstv %s1410
    %v1412 = vmul.f32 %v1411, %v1397
    %v1413 = vadd.f32 %v1395, %v1412
    %s1414 = scalar_lea.vmem %s2, 608
    %v1415 = vld [vmem:[%s1414] sm:$0xff]
    %s1416 = sld [smem:[#allocation2 + $0x4c]]
    %v1417 = vstv %s1416
    %v1418 = vmul.f32 %v1417, %v1415
    %v1419 = vadd.f32 %v1401, %v1418
    %s1420 = sld [smem:[#allocation2 + $0xdf]]
    %v1421 = vstv %s1420
    %v1422 = vmul.f32 %v1421, %v1415
    %v1423 = vadd.f32 %v1405, %v1422
    %s1424 = sld [smem:[#allocation2 + $0x172]]
    %v1425 = vstv %s1424
    %v1426 = vmul.f32 %v1425, %v1415
    %v1427 = vadd.f32 %v1409, %v1426
    %s1428 = sld [smem:[#allocation2 + $0x205]]
    %v1429 = vstv %s1428
    %v1430 = vmul.f32 %v1429, %v1415
    %v1431 = vadd.f32 %v1413, %v1430
    %s1432 = scalar_lea.vmem %s2, 616
    %v1433 = vld [vmem:[%s1432] sm:$0xff]
    %s1434 = sld [smem:[#allocation2 + $0x4d]]
    %v1435 = vstv %s1434
    %v1436 = vmul.f32 %v1435, %v1433
    %v1437 = vadd.f32 %v1419, %v1436
    %s1438 = sld [smem:[#allocation2 + $0xe0]]
    %v1439 = vstv %s1438
    %v1440 = vmul.f32 %v1439, %v1433
    %v1441 = vadd.f32 %v1423, %v1440
    %s1442 = sld [smem:[#allocation2 + $0x173]]
    %v1443 = vstv %s1442
    %v1444 = vmul.f32 %v1443, %v1433
    %v1445 = vadd.f32 %v1427, %v1444
    %s1446 = sld [smem:[#allocation2 + $0x206]]
    %v1447 = vstv %s1446
    %v1448 = vmul.f32 %v1447, %v1433
    %v1449 = vadd.f32 %v1431, %v1448
    %s1450 = scalar_lea.vmem %s2, 624
    %v1451 = vld [vmem:[%s1450] sm:$0xff]
    %s1452 = sld [smem:[#allocation2 + $0x4e]]
    %v1453 = vstv %s1452
    %v1454 = vmul.f32 %v1453, %v1451
    %v1455 = vadd.f32 %v1437, %v1454
    %s1456 = sld [smem:[#allocation2 + $0xe1]]
    %v1457 = vstv %s1456
    %v1458 = vmul.f32 %v1457, %v1451
    %v1459 = vadd.f32 %v1441, %v1458
    %s1460 = sld [smem:[#allocation2 + $0x174]]
    %v1461 = vstv %s1460
    %v1462 = vmul.f32 %v1461, %v1451
    %v1463 = vadd.f32 %v1445, %v1462
    %s1464 = sld [smem:[#allocation2 + $0x207]]
    %v1465 = vstv %s1464
    %v1466 = vmul.f32 %v1465, %v1451
    %v1467 = vadd.f32 %v1449, %v1466
    %s1468 = scalar_lea.vmem %s2, 632
    %v1469 = vld [vmem:[%s1468] sm:$0xff]
    %s1470 = sld [smem:[#allocation2 + $0x4f]]
    %v1471 = vstv %s1470
    %v1472 = vmul.f32 %v1471, %v1469
    %v1473 = vadd.f32 %v1455, %v1472
    %s1474 = sld [smem:[#allocation2 + $0xe2]]
    %v1475 = vstv %s1474
    %v1476 = vmul.f32 %v1475, %v1469
    %v1477 = vadd.f32 %v1459, %v1476
    %s1478 = sld [smem:[#allocation2 + $0x175]]
    %v1479 = vstv %s1478
    %v1480 = vmul.f32 %v1479, %v1469
    %v1481 = vadd.f32 %v1463, %v1480
    %s1482 = sld [smem:[#allocation2 + $0x208]]
    %v1483 = vstv %s1482
    %v1484 = vmul.f32 %v1483, %v1469
    %v1485 = vadd.f32 %v1467, %v1484
    %s1486 = scalar_lea.vmem %s2, 640
    %v1487 = vld [vmem:[%s1486] sm:$0xff]
    %s1488 = sld [smem:[#allocation2 + $0x50]]
    %v1489 = vstv %s1488
    %v1490 = vmul.f32 %v1489, %v1487
    %v1491 = vadd.f32 %v1473, %v1490
    %s1492 = sld [smem:[#allocation2 + $0xe3]]
    %v1493 = vstv %s1492
    %v1494 = vmul.f32 %v1493, %v1487
    %v1495 = vadd.f32 %v1477, %v1494
    %s1496 = sld [smem:[#allocation2 + $0x176]]
    %v1497 = vstv %s1496
    %v1498 = vmul.f32 %v1497, %v1487
    %v1499 = vadd.f32 %v1481, %v1498
    %s1500 = sld [smem:[#allocation2 + $0x209]]
    %v1501 = vstv %s1500
    %v1502 = vmul.f32 %v1501, %v1487
    %v1503 = vadd.f32 %v1485, %v1502
    %s1504 = scalar_lea.vmem %s2, 648
    %v1505 = vld [vmem:[%s1504] sm:$0xff]
    %s1506 = sld [smem:[#allocation2 + $0x51]]
    %v1507 = vstv %s1506
    %v1508 = vmul.f32 %v1507, %v1505
    %v1509 = vadd.f32 %v1491, %v1508
    %s1510 = sld [smem:[#allocation2 + $0xe4]]
    %v1511 = vstv %s1510
    %v1512 = vmul.f32 %v1511, %v1505
    %v1513 = vadd.f32 %v1495, %v1512
    %s1514 = sld [smem:[#allocation2 + $0x177]]
    %v1515 = vstv %s1514
    %v1516 = vmul.f32 %v1515, %v1505
    %v1517 = vadd.f32 %v1499, %v1516
    %s1518 = sld [smem:[#allocation2 + $0x20a]]
    %v1519 = vstv %s1518
    %v1520 = vmul.f32 %v1519, %v1505
    %v1521 = vadd.f32 %v1503, %v1520
    %s1522 = scalar_lea.vmem %s2, 656
    %v1523 = vld [vmem:[%s1522] sm:$0xff]
    %s1524 = sld [smem:[#allocation2 + $0x52]]
    %v1525 = vstv %s1524
    %v1526 = vmul.f32 %v1525, %v1523
    %v1527 = vadd.f32 %v1509, %v1526
    %s1528 = sld [smem:[#allocation2 + $0xe5]]
    %v1529 = vstv %s1528
    %v1530 = vmul.f32 %v1529, %v1523
    %v1531 = vadd.f32 %v1513, %v1530
    %s1532 = sld [smem:[#allocation2 + $0x178]]
    %v1533 = vstv %s1532
    %v1534 = vmul.f32 %v1533, %v1523
    %v1535 = vadd.f32 %v1517, %v1534
    %s1536 = sld [smem:[#allocation2 + $0x20b]]
    %v1537 = vstv %s1536
    %v1538 = vmul.f32 %v1537, %v1523
    %v1539 = vadd.f32 %v1521, %v1538
    %s1540 = scalar_lea.vmem %s2, 664
    %v1541 = vld [vmem:[%s1540] sm:$0xff]
    %s1542 = sld [smem:[#allocation2 + $0x53]]
    %v1543 = vstv %s1542
    %v1544 = vmul.f32 %v1543, %v1541
    %v1545 = vadd.f32 %v1527, %v1544
    %s1546 = sld [smem:[#allocation2 + $0xe6]]
    %v1547 = vstv %s1546
    %v1548 = vmul.f32 %v1547, %v1541
    %v1549 = vadd.f32 %v1531, %v1548
    %s1550 = sld [smem:[#allocation2 + $0x179]]
    %v1551 = vstv %s1550
    %v1552 = vmul.f32 %v1551, %v1541
    %v1553 = vadd.f32 %v1535, %v1552
    %s1554 = sld [smem:[#allocation2 + $0x20c]]
    %v1555 = vstv %s1554
    %v1556 = vmul.f32 %v1555, %v1541
    %v1557 = vadd.f32 %v1539, %v1556
    %s1558 = scalar_lea.vmem %s2, 672
    %v1559 = vld [vmem:[%s1558] sm:$0xff]
    %s1560 = sld [smem:[#allocation2 + $0x54]]
    %v1561 = vstv %s1560
    %v1562 = vmul.f32 %v1561, %v1559
    %v1563 = vadd.f32 %v1545, %v1562
    %s1564 = sld [smem:[#allocation2 + $0xe7]]
    %v1565 = vstv %s1564
    %v1566 = vmul.f32 %v1565, %v1559
    %v1567 = vadd.f32 %v1549, %v1566
    %s1568 = sld [smem:[#allocation2 + $0x17a]]
    %v1569 = vstv %s1568
    %v1570 = vmul.f32 %v1569, %v1559
    %v1571 = vadd.f32 %v1553, %v1570
    %s1572 = sld [smem:[#allocation2 + $0x20d]]
    %v1573 = vstv %s1572
    %v1574 = vmul.f32 %v1573, %v1559
    %v1575 = vadd.f32 %v1557, %v1574
    %s1576 = scalar_lea.vmem %s2, 680
    %v1577 = vld [vmem:[%s1576] sm:$0xff]
    %s1578 = sld [smem:[#allocation2 + $0x55]]
    %v1579 = vstv %s1578
    %v1580 = vmul.f32 %v1579, %v1577
    %v1581 = vadd.f32 %v1563, %v1580
    %s1582 = sld [smem:[#allocation2 + $0xe8]]
    %v1583 = vstv %s1582
    %v1584 = vmul.f32 %v1583, %v1577
    %v1585 = vadd.f32 %v1567, %v1584
    %s1586 = sld [smem:[#allocation2 + $0x17b]]
    %v1587 = vstv %s1586
    %v1588 = vmul.f32 %v1587, %v1577
    %v1589 = vadd.f32 %v1571, %v1588
    %s1590 = sld [smem:[#allocation2 + $0x20e]]
    %v1591 = vstv %s1590
    %v1592 = vmul.f32 %v1591, %v1577
    %v1593 = vadd.f32 %v1575, %v1592
    %s1594 = scalar_lea.vmem %s2, 688
    %v1595 = vld [vmem:[%s1594] sm:$0xff]
    %s1596 = sld [smem:[#allocation2 + $0x56]]
    %v1597 = vstv %s1596
    %v1598 = vmul.f32 %v1597, %v1595
    %v1599 = vadd.f32 %v1581, %v1598
    %s1600 = sld [smem:[#allocation2 + $0xe9]]
    %v1601 = vstv %s1600
    %v1602 = vmul.f32 %v1601, %v1595
    %v1603 = vadd.f32 %v1585, %v1602
    %s1604 = sld [smem:[#allocation2 + $0x17c]]
    %v1605 = vstv %s1604
    %v1606 = vmul.f32 %v1605, %v1595
    %v1607 = vadd.f32 %v1589, %v1606
    %s1608 = sld [smem:[#allocation2 + $0x20f]]
    %v1609 = vstv %s1608
    %v1610 = vmul.f32 %v1609, %v1595
    %v1611 = vadd.f32 %v1593, %v1610
    %s1612 = scalar_lea.vmem %s2, 696
    %v1613 = vld [vmem:[%s1612] sm:$0xff]
    %s1614 = sld [smem:[#allocation2 + $0x57]]
    %v1615 = vstv %s1614
    %v1616 = vmul.f32 %v1615, %v1613
    %v1617 = vadd.f32 %v1599, %v1616
    %s1618 = sld [smem:[#allocation2 + $0xea]]
    %v1619 = vstv %s1618
    %v1620 = vmul.f32 %v1619, %v1613
    %v1621 = vadd.f32 %v1603, %v1620
    %s1622 = sld [smem:[#allocation2 + $0x17d]]
    %v1623 = vstv %s1622
    %v1624 = vmul.f32 %v1623, %v1613
    %v1625 = vadd.f32 %v1607, %v1624
    %s1626 = sld [smem:[#allocation2 + $0x210]]
    %v1627 = vstv %s1626
    %v1628 = vmul.f32 %v1627, %v1613
    %v1629 = vadd.f32 %v1611, %v1628
    %s1630 = scalar_lea.vmem %s2, 704
    %v1631 = vld [vmem:[%s1630] sm:$0xff]
    %s1632 = sld [smem:[#allocation2 + $0x58]]
    %v1633 = vstv %s1632
    %v1634 = vmul.f32 %v1633, %v1631
    %v1635 = vadd.f32 %v1617, %v1634
    %s1636 = sld [smem:[#allocation2 + $0xeb]]
    %v1637 = vstv %s1636
    %v1638 = vmul.f32 %v1637, %v1631
    %v1639 = vadd.f32 %v1621, %v1638
    %s1640 = sld [smem:[#allocation2 + $0x17e]]
    %v1641 = vstv %s1640
    %v1642 = vmul.f32 %v1641, %v1631
    %v1643 = vadd.f32 %v1625, %v1642
    %s1644 = sld [smem:[#allocation2 + $0x211]]
    %v1645 = vstv %s1644
    %v1646 = vmul.f32 %v1645, %v1631
    %v1647 = vadd.f32 %v1629, %v1646
    %s1648 = scalar_lea.vmem %s2, 712
    %v1649 = vld [vmem:[%s1648] sm:$0xff]
    %s1650 = sld [smem:[#allocation2 + $0x59]]
    %v1651 = vstv %s1650
    %v1652 = vmul.f32 %v1651, %v1649
    %v1653 = vadd.f32 %v1635, %v1652
    %s1654 = sld [smem:[#allocation2 + $0xec]]
    %v1655 = vstv %s1654
    %v1656 = vmul.f32 %v1655, %v1649
    %v1657 = vadd.f32 %v1639, %v1656
    %s1658 = sld [smem:[#allocation2 + $0x17f]]
    %v1659 = vstv %s1658
    %v1660 = vmul.f32 %v1659, %v1649
    %v1661 = vadd.f32 %v1643, %v1660
    %s1662 = sld [smem:[#allocation2 + $0x212]]
    %v1663 = vstv %s1662
    %v1664 = vmul.f32 %v1663, %v1649
    %v1665 = vadd.f32 %v1647, %v1664
    %s1666 = scalar_lea.vmem %s2, 720
    %v1667 = vld [vmem:[%s1666] sm:$0xff]
    %s1668 = sld [smem:[#allocation2 + $0x5a]]
    %v1669 = vstv %s1668
    %v1670 = vmul.f32 %v1669, %v1667
    %v1671 = vadd.f32 %v1653, %v1670
    %s1672 = sld [smem:[#allocation2 + $0xed]]
    %v1673 = vstv %s1672
    %v1674 = vmul.f32 %v1673, %v1667
    %v1675 = vadd.f32 %v1657, %v1674
    %s1676 = sld [smem:[#allocation2 + $0x180]]
    %v1677 = vstv %s1676
    %v1678 = vmul.f32 %v1677, %v1667
    %v1679 = vadd.f32 %v1661, %v1678
    %s1680 = sld [smem:[#allocation2 + $0x213]]
    %v1681 = vstv %s1680
    %v1682 = vmul.f32 %v1681, %v1667
    %v1683 = vadd.f32 %v1665, %v1682
    %s1684 = scalar_lea.vmem %s2, 728
    %v1685 = vld [vmem:[%s1684] sm:$0xff]
    %s1686 = sld [smem:[#allocation2 + $0x5b]]
    %v1687 = vstv %s1686
    %v1688 = vmul.f32 %v1687, %v1685
    %v1689 = vadd.f32 %v1671, %v1688
    %s1690 = sld [smem:[#allocation2 + $0xee]]
    %v1691 = vstv %s1690
    %v1692 = vmul.f32 %v1691, %v1685
    %v1693 = vadd.f32 %v1675, %v1692
    %s1694 = sld [smem:[#allocation2 + $0x181]]
    %v1695 = vstv %s1694
    %v1696 = vmul.f32 %v1695, %v1685
    %v1697 = vadd.f32 %v1679, %v1696
    %s1698 = sld [smem:[#allocation2 + $0x214]]
    %v1699 = vstv %s1698
    %v1700 = vmul.f32 %v1699, %v1685
    %v1701 = vadd.f32 %v1683, %v1700
    %s1702 = scalar_lea.vmem %s2, 736
    %v1703 = vld [vmem:[%s1702] sm:$0xff]
    %s1704 = sld [smem:[#allocation2 + $0x5c]]
    %v1705 = vstv %s1704
    %v1706 = vmul.f32 %v1705, %v1703
    %v1707 = vadd.f32 %v1689, %v1706
    %s1708 = sld [smem:[#allocation2 + $0xef]]
    %v1709 = vstv %s1708
    %v1710 = vmul.f32 %v1709, %v1703
    %v1711 = vadd.f32 %v1693, %v1710
    %s1712 = sld [smem:[#allocation2 + $0x182]]
    %v1713 = vstv %s1712
    %v1714 = vmul.f32 %v1713, %v1703
    %v1715 = vadd.f32 %v1697, %v1714
    %s1716 = sld [smem:[#allocation2 + $0x215]]
    %v1717 = vstv %s1716
    %v1718 = vmul.f32 %v1717, %v1703
    %v1719 = vadd.f32 %v1701, %v1718
    %s1720 = scalar_lea.vmem %s2, 744
    %v1721 = vld [vmem:[%s1720] sm:$0xff]
    %s1722 = sld [smem:[#allocation2 + $0x5d]]
    %v1723 = vstv %s1722
    %v1724 = vmul.f32 %v1723, %v1721
    %v1725 = vadd.f32 %v1707, %v1724
    %s1726 = sld [smem:[#allocation2 + $0xf0]]
    %v1727 = vstv %s1726
    %v1728 = vmul.f32 %v1727, %v1721
    %v1729 = vadd.f32 %v1711, %v1728
    %s1730 = sld [smem:[#allocation2 + $0x183]]
    %v1731 = vstv %s1730
    %v1732 = vmul.f32 %v1731, %v1721
    %v1733 = vadd.f32 %v1715, %v1732
    %s1734 = sld [smem:[#allocation2 + $0x216]]
    %v1735 = vstv %s1734
    %v1736 = vmul.f32 %v1735, %v1721
    %v1737 = vadd.f32 %v1719, %v1736
    %s1738 = scalar_lea.vmem %s2, 752
    %v1739 = vld [vmem:[%s1738] sm:$0xff]
    %s1740 = sld [smem:[#allocation2 + $0x5e]]
    %v1741 = vstv %s1740
    %v1742 = vmul.f32 %v1741, %v1739
    %v1743 = vadd.f32 %v1725, %v1742
    %s1744 = sld [smem:[#allocation2 + $0xf1]]
    %v1745 = vstv %s1744
    %v1746 = vmul.f32 %v1745, %v1739
    %v1747 = vadd.f32 %v1729, %v1746
    %s1748 = sld [smem:[#allocation2 + $0x184]]
    %v1749 = vstv %s1748
    %v1750 = vmul.f32 %v1749, %v1739
    %v1751 = vadd.f32 %v1733, %v1750
    %s1752 = sld [smem:[#allocation2 + $0x217]]
    %v1753 = vstv %s1752
    %v1754 = vmul.f32 %v1753, %v1739
    %v1755 = vadd.f32 %v1737, %v1754
    %s1756 = scalar_lea.vmem %s2, 760
    %v1757 = vld [vmem:[%s1756] sm:$0xff]
    %s1758 = sld [smem:[#allocation2 + $0x5f]]
    %v1759 = vstv %s1758
    %v1760 = vmul.f32 %v1759, %v1757
    %v1761 = vadd.f32 %v1743, %v1760
    %s1762 = sld [smem:[#allocation2 + $0xf2]]
    %v1763 = vstv %s1762
    %v1764 = vmul.f32 %v1763, %v1757
    %v1765 = vadd.f32 %v1747, %v1764
    %s1766 = sld [smem:[#allocation2 + $0x185]]
    %v1767 = vstv %s1766
    %v1768 = vmul.f32 %v1767, %v1757
    %v1769 = vadd.f32 %v1751, %v1768
    %s1770 = sld [smem:[#allocation2 + $0x218]]
    %v1771 = vstv %s1770
    %v1772 = vmul.f32 %v1771, %v1757
    %v1773 = vadd.f32 %v1755, %v1772
    %s1774 = scalar_lea.vmem %s2, 768
    %v1775 = vld [vmem:[%s1774] sm:$0xff]
    %s1776 = sld [smem:[#allocation2 + $0x60]]
    %v1777 = vstv %s1776
    %v1778 = vmul.f32 %v1777, %v1775
    %v1779 = vadd.f32 %v1761, %v1778
    %s1780 = sld [smem:[#allocation2 + $0xf3]]
    %v1781 = vstv %s1780
    %v1782 = vmul.f32 %v1781, %v1775
    %v1783 = vadd.f32 %v1765, %v1782
    %s1784 = sld [smem:[#allocation2 + $0x186]]
    %v1785 = vstv %s1784
    %v1786 = vmul.f32 %v1785, %v1775
    %v1787 = vadd.f32 %v1769, %v1786
    %s1788 = sld [smem:[#allocation2 + $0x219]]
    %v1789 = vstv %s1788
    %v1790 = vmul.f32 %v1789, %v1775
    %v1791 = vadd.f32 %v1773, %v1790
    %s1792 = scalar_lea.vmem %s2, 776
    %v1793 = vld [vmem:[%s1792] sm:$0xff]
    %s1794 = sld [smem:[#allocation2 + $0x61]]
    %v1795 = vstv %s1794
    %v1796 = vmul.f32 %v1795, %v1793
    %v1797 = vadd.f32 %v1779, %v1796
    %s1798 = sld [smem:[#allocation2 + $0xf4]]
    %v1799 = vstv %s1798
    %v1800 = vmul.f32 %v1799, %v1793
    %v1801 = vadd.f32 %v1783, %v1800
    %s1802 = sld [smem:[#allocation2 + $0x187]]
    %v1803 = vstv %s1802
    %v1804 = vmul.f32 %v1803, %v1793
    %v1805 = vadd.f32 %v1787, %v1804
    %s1806 = sld [smem:[#allocation2 + $0x21a]]
    %v1807 = vstv %s1806
    %v1808 = vmul.f32 %v1807, %v1793
    %v1809 = vadd.f32 %v1791, %v1808
    %s1810 = scalar_lea.vmem %s2, 784
    %v1811 = vld [vmem:[%s1810] sm:$0xff]
    %s1812 = sld [smem:[#allocation2 + $0x62]]
    %v1813 = vstv %s1812
    %v1814 = vmul.f32 %v1813, %v1811
    %v1815 = vadd.f32 %v1797, %v1814
    %s1816 = sld [smem:[#allocation2 + $0xf5]]
    %v1817 = vstv %s1816
    %v1818 = vmul.f32 %v1817, %v1811
    %v1819 = vadd.f32 %v1801, %v1818
    %s1820 = sld [smem:[#allocation2 + $0x188]]
    %v1821 = vstv %s1820
    %v1822 = vmul.f32 %v1821, %v1811
    %v1823 = vadd.f32 %v1805, %v1822
    %s1824 = sld [smem:[#allocation2 + $0x21b]]
    %v1825 = vstv %s1824
    %v1826 = vmul.f32 %v1825, %v1811
    %v1827 = vadd.f32 %v1809, %v1826
    %s1828 = scalar_lea.vmem %s2, 792
    %v1829 = vld [vmem:[%s1828] sm:$0xff]
    %s1830 = sld [smem:[#allocation2 + $0x63]]
    %v1831 = vstv %s1830
    %v1832 = vmul.f32 %v1831, %v1829
    %v1833 = vadd.f32 %v1815, %v1832
    %s1834 = sld [smem:[#allocation2 + $0xf6]]
    %v1835 = vstv %s1834
    %v1836 = vmul.f32 %v1835, %v1829
    %v1837 = vadd.f32 %v1819, %v1836
    %s1838 = sld [smem:[#allocation2 + $0x189]]
    %v1839 = vstv %s1838
    %v1840 = vmul.f32 %v1839, %v1829
    %v1841 = vadd.f32 %v1823, %v1840
    %s1842 = sld [smem:[#allocation2 + $0x21c]]
    %v1843 = vstv %s1842
    %v1844 = vmul.f32 %v1843, %v1829
    %v1845 = vadd.f32 %v1827, %v1844
    %s1846 = scalar_lea.vmem %s2, 800
    %v1847 = vld [vmem:[%s1846] sm:$0xff]
    %s1848 = sld [smem:[#allocation2 + $0x64]]
    %v1849 = vstv %s1848
    %v1850 = vmul.f32 %v1849, %v1847
    %v1851 = vadd.f32 %v1833, %v1850
    %s1852 = sld [smem:[#allocation2 + $0xf7]]
    %v1853 = vstv %s1852
    %v1854 = vmul.f32 %v1853, %v1847
    %v1855 = vadd.f32 %v1837, %v1854
    %s1856 = sld [smem:[#allocation2 + $0x18a]]
    %v1857 = vstv %s1856
    %v1858 = vmul.f32 %v1857, %v1847
    %v1859 = vadd.f32 %v1841, %v1858
    %s1860 = sld [smem:[#allocation2 + $0x21d]]
    %v1861 = vstv %s1860
    %v1862 = vmul.f32 %v1861, %v1847
    %v1863 = vadd.f32 %v1845, %v1862
    %s1864 = scalar_lea.vmem %s2, 808
    %v1865 = vld [vmem:[%s1864] sm:$0xff]
    %s1866 = sld [smem:[#allocation2 + $0x65]]
    %v1867 = vstv %s1866
    %v1868 = vmul.f32 %v1867, %v1865
    %v1869 = vadd.f32 %v1851, %v1868
    %s1870 = sld [smem:[#allocation2 + $0xf8]]
    %v1871 = vstv %s1870
    %v1872 = vmul.f32 %v1871, %v1865
    %v1873 = vadd.f32 %v1855, %v1872
    %s1874 = sld [smem:[#allocation2 + $0x18b]]
    %v1875 = vstv %s1874
    %v1876 = vmul.f32 %v1875, %v1865
    %v1877 = vadd.f32 %v1859, %v1876
    %s1878 = sld [smem:[#allocation2 + $0x21e]]
    %v1879 = vstv %s1878
    %v1880 = vmul.f32 %v1879, %v1865
    %v1881 = vadd.f32 %v1863, %v1880
    %s1882 = scalar_lea.vmem %s2, 816
    %v1883 = vld [vmem:[%s1882] sm:$0xff]
    %s1884 = sld [smem:[#allocation2 + $0x66]]
    %v1885 = vstv %s1884
    %v1886 = vmul.f32 %v1885, %v1883
    %v1887 = vadd.f32 %v1869, %v1886
    %s1888 = sld [smem:[#allocation2 + $0xf9]]
    %v1889 = vstv %s1888
    %v1890 = vmul.f32 %v1889, %v1883
    %v1891 = vadd.f32 %v1873, %v1890
    %s1892 = sld [smem:[#allocation2 + $0x18c]]
    %v1893 = vstv %s1892
    %v1894 = vmul.f32 %v1893, %v1883
    %v1895 = vadd.f32 %v1877, %v1894
    %s1896 = sld [smem:[#allocation2 + $0x21f]]
    %v1897 = vstv %s1896
    %v1898 = vmul.f32 %v1897, %v1883
    %v1899 = vadd.f32 %v1881, %v1898
    %s1900 = scalar_lea.vmem %s2, 824
    %v1901 = vld [vmem:[%s1900] sm:$0xff]
    %s1902 = sld [smem:[#allocation2 + $0x67]]
    %v1903 = vstv %s1902
    %v1904 = vmul.f32 %v1903, %v1901
    %v1905 = vadd.f32 %v1887, %v1904
    %s1906 = sld [smem:[#allocation2 + $0xfa]]
    %v1907 = vstv %s1906
    %v1908 = vmul.f32 %v1907, %v1901
    %v1909 = vadd.f32 %v1891, %v1908
    %s1910 = sld [smem:[#allocation2 + $0x18d]]
    %v1911 = vstv %s1910
    %v1912 = vmul.f32 %v1911, %v1901
    %v1913 = vadd.f32 %v1895, %v1912
    %s1914 = sld [smem:[#allocation2 + $0x220]]
    %v1915 = vstv %s1914
    %v1916 = vmul.f32 %v1915, %v1901
    %v1917 = vadd.f32 %v1899, %v1916
    %s1918 = scalar_lea.vmem %s2, 832
    %v1919 = vld [vmem:[%s1918] sm:$0xff]
    %s1920 = sld [smem:[#allocation2 + $0x68]]
    %v1921 = vstv %s1920
    %v1922 = vmul.f32 %v1921, %v1919
    %v1923 = vadd.f32 %v1905, %v1922
    %s1924 = sld [smem:[#allocation2 + $0xfb]]
    %v1925 = vstv %s1924
    %v1926 = vmul.f32 %v1925, %v1919
    %v1927 = vadd.f32 %v1909, %v1926
    %s1928 = sld [smem:[#allocation2 + $0x18e]]
    %v1929 = vstv %s1928
    %v1930 = vmul.f32 %v1929, %v1919
    %v1931 = vadd.f32 %v1913, %v1930
    %s1932 = sld [smem:[#allocation2 + $0x221]]
    %v1933 = vstv %s1932
    %v1934 = vmul.f32 %v1933, %v1919
    %v1935 = vadd.f32 %v1917, %v1934
    %s1936 = scalar_lea.vmem %s2, 840
    %v1937 = vld [vmem:[%s1936] sm:$0xff]
    %s1938 = sld [smem:[#allocation2 + $0x69]]
    %v1939 = vstv %s1938
    %v1940 = vmul.f32 %v1939, %v1937
    %v1941 = vadd.f32 %v1923, %v1940
    %s1942 = sld [smem:[#allocation2 + $0xfc]]
    %v1943 = vstv %s1942
    %v1944 = vmul.f32 %v1943, %v1937
    %v1945 = vadd.f32 %v1927, %v1944
    %s1946 = sld [smem:[#allocation2 + $0x18f]]
    %v1947 = vstv %s1946
    %v1948 = vmul.f32 %v1947, %v1937
    %v1949 = vadd.f32 %v1931, %v1948
    %s1950 = sld [smem:[#allocation2 + $0x222]]
    %v1951 = vstv %s1950
    %v1952 = vmul.f32 %v1951, %v1937
    %v1953 = vadd.f32 %v1935, %v1952
    %s1954 = scalar_lea.vmem %s2, 848
    %v1955 = vld [vmem:[%s1954] sm:$0xff]
    %s1956 = sld [smem:[#allocation2 + $0x6a]]
    %v1957 = vstv %s1956
    %v1958 = vmul.f32 %v1957, %v1955
    %v1959 = vadd.f32 %v1941, %v1958
    %s1960 = sld [smem:[#allocation2 + $0xfd]]
    %v1961 = vstv %s1960
    %v1962 = vmul.f32 %v1961, %v1955
    %v1963 = vadd.f32 %v1945, %v1962
    %s1964 = sld [smem:[#allocation2 + $0x190]]
    %v1965 = vstv %s1964
    %v1966 = vmul.f32 %v1965, %v1955
    %v1967 = vadd.f32 %v1949, %v1966
    %s1968 = sld [smem:[#allocation2 + $0x223]]
    %v1969 = vstv %s1968
    %v1970 = vmul.f32 %v1969, %v1955
    %v1971 = vadd.f32 %v1953, %v1970
    %s1972 = scalar_lea.vmem %s2, 856
    %v1973 = vld [vmem:[%s1972] sm:$0xff]
    %s1974 = sld [smem:[#allocation2 + $0x6b]]
    %v1975 = vstv %s1974
    %v1976 = vmul.f32 %v1975, %v1973
    %v1977 = vadd.f32 %v1959, %v1976
    %s1978 = sld [smem:[#allocation2 + $0xfe]]
    %v1979 = vstv %s1978
    %v1980 = vmul.f32 %v1979, %v1973
    %v1981 = vadd.f32 %v1963, %v1980
    %s1982 = sld [smem:[#allocation2 + $0x191]]
    %v1983 = vstv %s1982
    %v1984 = vmul.f32 %v1983, %v1973
    %v1985 = vadd.f32 %v1967, %v1984
    %s1986 = sld [smem:[#allocation2 + $0x224]]
    %v1987 = vstv %s1986
    %v1988 = vmul.f32 %v1987, %v1973
    %v1989 = vadd.f32 %v1971, %v1988
    %s1990 = scalar_lea.vmem %s2, 864
    %v1991 = vld [vmem:[%s1990] sm:$0xff]
    %s1992 = sld [smem:[#allocation2 + $0x6c]]
    %v1993 = vstv %s1992
    %v1994 = vmul.f32 %v1993, %v1991
    %v1995 = vadd.f32 %v1977, %v1994
    %s1996 = sld [smem:[#allocation2 + $0xff]]
    %v1997 = vstv %s1996
    %v1998 = vmul.f32 %v1997, %v1991
    %v1999 = vadd.f32 %v1981, %v1998
    %s2000 = sld [smem:[#allocation2 + $0x192]]
    %v2001 = vstv %s2000
    %v2002 = vmul.f32 %v2001, %v1991
    %v2003 = vadd.f32 %v1985, %v2002
    %s2004 = sld [smem:[#allocation2 + $0x225]]
    %v2005 = vstv %s2004
    %v2006 = vmul.f32 %v2005, %v1991
    %v2007 = vadd.f32 %v1989, %v2006
    %s2008 = scalar_lea.vmem %s2, 872
    %v2009 = vld [vmem:[%s2008] sm:$0xff]
    %s2010 = sld [smem:[#allocation2 + $0x6d]]
    %v2011 = vstv %s2010
    %v2012 = vmul.f32 %v2011, %v2009
    %v2013 = vadd.f32 %v1995, %v2012
    %s2014 = sld [smem:[#allocation2 + $0x100]]
    %v2015 = vstv %s2014
    %v2016 = vmul.f32 %v2015, %v2009
    %v2017 = vadd.f32 %v1999, %v2016
    %s2018 = sld [smem:[#allocation2 + $0x193]]
    %v2019 = vstv %s2018
    %v2020 = vmul.f32 %v2019, %v2009
    %v2021 = vadd.f32 %v2003, %v2020
    %s2022 = sld [smem:[#allocation2 + $0x226]]
    %v2023 = vstv %s2022
    %v2024 = vmul.f32 %v2023, %v2009
    %v2025 = vadd.f32 %v2007, %v2024
    %s2026 = scalar_lea.vmem %s2, 880
    %v2027 = vld [vmem:[%s2026] sm:$0xff]
    %s2028 = sld [smem:[#allocation2 + $0x6e]]
    %v2029 = vstv %s2028
    %v2030 = vmul.f32 %v2029, %v2027
    %v2031 = vadd.f32 %v2013, %v2030
    %s2032 = sld [smem:[#allocation2 + $0x101]]
    %v2033 = vstv %s2032
    %v2034 = vmul.f32 %v2033, %v2027
    %v2035 = vadd.f32 %v2017, %v2034
    %s2036 = sld [smem:[#allocation2 + $0x194]]
    %v2037 = vstv %s2036
    %v2038 = vmul.f32 %v2037, %v2027
    %v2039 = vadd.f32 %v2021, %v2038
    %s2040 = sld [smem:[#allocation2 + $0x227]]
    %v2041 = vstv %s2040
    %v2042 = vmul.f32 %v2041, %v2027
    %v2043 = vadd.f32 %v2025, %v2042
    %s2044 = scalar_lea.vmem %s2, 888
    %v2045 = vld [vmem:[%s2044] sm:$0xff]
    %s2046 = sld [smem:[#allocation2 + $0x6f]]
    %v2047 = vstv %s2046
    %v2048 = vmul.f32 %v2047, %v2045
    %v2049 = vadd.f32 %v2031, %v2048
    %s2050 = sld [smem:[#allocation2 + $0x102]]
    %v2051 = vstv %s2050
    %v2052 = vmul.f32 %v2051, %v2045
    %v2053 = vadd.f32 %v2035, %v2052
    %s2054 = sld [smem:[#allocation2 + $0x195]]
    %v2055 = vstv %s2054
    %v2056 = vmul.f32 %v2055, %v2045
    %v2057 = vadd.f32 %v2039, %v2056
    %s2058 = sld [smem:[#allocation2 + $0x228]]
    %v2059 = vstv %s2058
    %v2060 = vmul.f32 %v2059, %v2045
    %v2061 = vadd.f32 %v2043, %v2060
    %s2062 = scalar_lea.vmem %s2, 896
    %v2063 = vld [vmem:[%s2062] sm:$0xff]
    %s2064 = sld [smem:[#allocation2 + $0x70]]
    %v2065 = vstv %s2064
    %v2066 = vmul.f32 %v2065, %v2063
    %v2067 = vadd.f32 %v2049, %v2066
    %s2068 = sld [smem:[#allocation2 + $0x103]]
    %v2069 = vstv %s2068
    %v2070 = vmul.f32 %v2069, %v2063
    %v2071 = vadd.f32 %v2053, %v2070
    %s2072 = sld [smem:[#allocation2 + $0x196]]
    %v2073 = vstv %s2072
    %v2074 = vmul.f32 %v2073, %v2063
    %v2075 = vadd.f32 %v2057, %v2074
    %s2076 = sld [smem:[#allocation2 + $0x229]]
    %v2077 = vstv %s2076
    %v2078 = vmul.f32 %v2077, %v2063
    %v2079 = vadd.f32 %v2061, %v2078
    %s2080 = scalar_lea.vmem %s2, 904
    %v2081 = vld [vmem:[%s2080] sm:$0xff]
    %s2082 = sld [smem:[#allocation2 + $0x71]]
    %v2083 = vstv %s2082
    %v2084 = vmul.f32 %v2083, %v2081
    %v2085 = vadd.f32 %v2067, %v2084
    %s2086 = sld [smem:[#allocation2 + $0x104]]
    %v2087 = vstv %s2086
    %v2088 = vmul.f32 %v2087, %v2081
    %v2089 = vadd.f32 %v2071, %v2088
    %s2090 = sld [smem:[#allocation2 + $0x197]]
    %v2091 = vstv %s2090
    %v2092 = vmul.f32 %v2091, %v2081
    %v2093 = vadd.f32 %v2075, %v2092
    %s2094 = sld [smem:[#allocation2 + $0x22a]]
    %v2095 = vstv %s2094
    %v2096 = vmul.f32 %v2095, %v2081
    %v2097 = vadd.f32 %v2079, %v2096
    %s2098 = scalar_lea.vmem %s2, 912
    %v2099 = vld [vmem:[%s2098] sm:$0xff]
    %s2100 = sld [smem:[#allocation2 + $0x72]]
    %v2101 = vstv %s2100
    %v2102 = vmul.f32 %v2101, %v2099
    %v2103 = vadd.f32 %v2085, %v2102
    %s2104 = sld [smem:[#allocation2 + $0x105]]
    %v2105 = vstv %s2104
    %v2106 = vmul.f32 %v2105, %v2099
    %v2107 = vadd.f32 %v2089, %v2106
    %s2108 = sld [smem:[#allocation2 + $0x198]]
    %v2109 = vstv %s2108
    %v2110 = vmul.f32 %v2109, %v2099
    %v2111 = vadd.f32 %v2093, %v2110
    %s2112 = sld [smem:[#allocation2 + $0x22b]]
    %v2113 = vstv %s2112
    %v2114 = vmul.f32 %v2113, %v2099
    %v2115 = vadd.f32 %v2097, %v2114
    %s2116 = scalar_lea.vmem %s2, 920
    %v2117 = vld [vmem:[%s2116] sm:$0xff]
    %s2118 = sld [smem:[#allocation2 + $0x73]]
    %v2119 = vstv %s2118
    %v2120 = vmul.f32 %v2119, %v2117
    %v2121 = vadd.f32 %v2103, %v2120
    %s2122 = sld [smem:[#allocation2 + $0x106]]
    %v2123 = vstv %s2122
    %v2124 = vmul.f32 %v2123, %v2117
    %v2125 = vadd.f32 %v2107, %v2124
    %s2126 = sld [smem:[#allocation2 + $0x199]]
    %v2127 = vstv %s2126
    %v2128 = vmul.f32 %v2127, %v2117
    %v2129 = vadd.f32 %v2111, %v2128
    %s2130 = sld [smem:[#allocation2 + $0x22c]]
    %v2131 = vstv %s2130
    %v2132 = vmul.f32 %v2131, %v2117
    %v2133 = vadd.f32 %v2115, %v2132
    %s2134 = scalar_lea.vmem %s2, 928
    %v2135 = vld [vmem:[%s2134] sm:$0xff]
    %s2136 = sld [smem:[#allocation2 + $0x74]]
    %v2137 = vstv %s2136
    %v2138 = vmul.f32 %v2137, %v2135
    %v2139 = vadd.f32 %v2121, %v2138
    %s2140 = sld [smem:[#allocation2 + $0x107]]
    %v2141 = vstv %s2140
    %v2142 = vmul.f32 %v2141, %v2135
    %v2143 = vadd.f32 %v2125, %v2142
    %s2144 = sld [smem:[#allocation2 + $0x19a]]
    %v2145 = vstv %s2144
    %v2146 = vmul.f32 %v2145, %v2135
    %v2147 = vadd.f32 %v2129, %v2146
    %s2148 = sld [smem:[#allocation2 + $0x22d]]
    %v2149 = vstv %s2148
    %v2150 = vmul.f32 %v2149, %v2135
    %v2151 = vadd.f32 %v2133, %v2150
    %s2152 = scalar_lea.vmem %s2, 936
    %v2153 = vld [vmem:[%s2152] sm:$0xff]
    %s2154 = sld [smem:[#allocation2 + $0x75]]
    %v2155 = vstv %s2154
    %v2156 = vmul.f32 %v2155, %v2153
    %v2157 = vadd.f32 %v2139, %v2156
    %s2158 = sld [smem:[#allocation2 + $0x108]]
    %v2159 = vstv %s2158
    %v2160 = vmul.f32 %v2159, %v2153
    %v2161 = vadd.f32 %v2143, %v2160
    %s2162 = sld [smem:[#allocation2 + $0x19b]]
    %v2163 = vstv %s2162
    %v2164 = vmul.f32 %v2163, %v2153
    %v2165 = vadd.f32 %v2147, %v2164
    %s2166 = sld [smem:[#allocation2 + $0x22e]]
    %v2167 = vstv %s2166
    %v2168 = vmul.f32 %v2167, %v2153
    %v2169 = vadd.f32 %v2151, %v2168
    %s2170 = scalar_lea.vmem %s2, 944
    %v2171 = vld [vmem:[%s2170] sm:$0xff]
    %s2172 = sld [smem:[#allocation2 + $0x76]]
    %v2173 = vstv %s2172
    %v2174 = vmul.f32 %v2173, %v2171
    %v2175 = vadd.f32 %v2157, %v2174
    %s2176 = sld [smem:[#allocation2 + $0x109]]
    %v2177 = vstv %s2176
    %v2178 = vmul.f32 %v2177, %v2171
    %v2179 = vadd.f32 %v2161, %v2178
    %s2180 = sld [smem:[#allocation2 + $0x19c]]
    %v2181 = vstv %s2180
    %v2182 = vmul.f32 %v2181, %v2171
    %v2183 = vadd.f32 %v2165, %v2182
    %s2184 = sld [smem:[#allocation2 + $0x22f]]
    %v2185 = vstv %s2184
    %v2186 = vmul.f32 %v2185, %v2171
    %v2187 = vadd.f32 %v2169, %v2186
    %s2188 = scalar_lea.vmem %s2, 952
    %v2189 = vld [vmem:[%s2188] sm:$0xff]
    %s2190 = sld [smem:[#allocation2 + $0x77]]
    %v2191 = vstv %s2190
    %v2192 = vmul.f32 %v2191, %v2189
    %v2193 = vadd.f32 %v2175, %v2192
    %s2194 = sld [smem:[#allocation2 + $0x10a]]
    %v2195 = vstv %s2194
    %v2196 = vmul.f32 %v2195, %v2189
    %v2197 = vadd.f32 %v2179, %v2196
    %s2198 = sld [smem:[#allocation2 + $0x19d]]
    %v2199 = vstv %s2198
    %v2200 = vmul.f32 %v2199, %v2189
    %v2201 = vadd.f32 %v2183, %v2200
    %s2202 = sld [smem:[#allocation2 + $0x230]]
    %v2203 = vstv %s2202
    %v2204 = vmul.f32 %v2203, %v2189
    %v2205 = vadd.f32 %v2187, %v2204
    %s2206 = scalar_lea.vmem %s2, 960
    %v2207 = vld [vmem:[%s2206] sm:$0xff]
    %s2208 = sld [smem:[#allocation2 + $0x78]]
    %v2209 = vstv %s2208
    %v2210 = vmul.f32 %v2209, %v2207
    %v2211 = vadd.f32 %v2193, %v2210
    %s2212 = sld [smem:[#allocation2 + $0x10b]]
    %v2213 = vstv %s2212
    %v2214 = vmul.f32 %v2213, %v2207
    %v2215 = vadd.f32 %v2197, %v2214
    %s2216 = sld [smem:[#allocation2 + $0x19e]]
    %v2217 = vstv %s2216
    %v2218 = vmul.f32 %v2217, %v2207
    %v2219 = vadd.f32 %v2201, %v2218
    %s2220 = sld [smem:[#allocation2 + $0x231]]
    %v2221 = vstv %s2220
    %v2222 = vmul.f32 %v2221, %v2207
    %v2223 = vadd.f32 %v2205, %v2222
    %s2224 = scalar_lea.vmem %s2, 968
    %v2225 = vld [vmem:[%s2224] sm:$0xff]
    %s2226 = sld [smem:[#allocation2 + $0x79]]
    %v2227 = vstv %s2226
    %v2228 = vmul.f32 %v2227, %v2225
    %v2229 = vadd.f32 %v2211, %v2228
    %s2230 = sld [smem:[#allocation2 + $0x10c]]
    %v2231 = vstv %s2230
    %v2232 = vmul.f32 %v2231, %v2225
    %v2233 = vadd.f32 %v2215, %v2232
    %s2234 = sld [smem:[#allocation2 + $0x19f]]
    %v2235 = vstv %s2234
    %v2236 = vmul.f32 %v2235, %v2225
    %v2237 = vadd.f32 %v2219, %v2236
    %s2238 = sld [smem:[#allocation2 + $0x232]]
    %v2239 = vstv %s2238
    %v2240 = vmul.f32 %v2239, %v2225
    %v2241 = vadd.f32 %v2223, %v2240
    %s2242 = scalar_lea.vmem %s2, 976
    %v2243 = vld [vmem:[%s2242] sm:$0xff]
    %s2244 = sld [smem:[#allocation2 + $0x7a]]
    %v2245 = vstv %s2244
    %v2246 = vmul.f32 %v2245, %v2243
    %v2247 = vadd.f32 %v2229, %v2246
    %s2248 = sld [smem:[#allocation2 + $0x10d]]
    %v2249 = vstv %s2248
    %v2250 = vmul.f32 %v2249, %v2243
    %v2251 = vadd.f32 %v2233, %v2250
    %s2252 = sld [smem:[#allocation2 + $0x1a0]]
    %v2253 = vstv %s2252
    %v2254 = vmul.f32 %v2253, %v2243
    %v2255 = vadd.f32 %v2237, %v2254
    %s2256 = sld [smem:[#allocation2 + $0x233]]
    %v2257 = vstv %s2256
    %v2258 = vmul.f32 %v2257, %v2243
    %v2259 = vadd.f32 %v2241, %v2258
    %s2260 = scalar_lea.vmem %s2, 984
    %v2261 = vld [vmem:[%s2260] sm:$0xff]
    %s2262 = sld [smem:[#allocation2 + $0x7b]]
    %v2263 = vstv %s2262
    %v2264 = vmul.f32 %v2263, %v2261
    %v2265 = vadd.f32 %v2247, %v2264
    %s2266 = sld [smem:[#allocation2 + $0x10e]]
    %v2267 = vstv %s2266
    %v2268 = vmul.f32 %v2267, %v2261
    %v2269 = vadd.f32 %v2251, %v2268
    %s2270 = sld [smem:[#allocation2 + $0x1a1]]
    %v2271 = vstv %s2270
    %v2272 = vmul.f32 %v2271, %v2261
    %v2273 = vadd.f32 %v2255, %v2272
    %s2274 = sld [smem:[#allocation2 + $0x234]]
    %v2275 = vstv %s2274
    %v2276 = vmul.f32 %v2275, %v2261
    %v2277 = vadd.f32 %v2259, %v2276
    %s2278 = scalar_lea.vmem %s2, 992
    %v2279 = vld [vmem:[%s2278] sm:$0xff]
    %s2280 = sld [smem:[#allocation2 + $0x7c]]
    %v2281 = vstv %s2280
    %v2282 = vmul.f32 %v2281, %v2279
    %v2283 = vadd.f32 %v2265, %v2282
    %s2284 = sld [smem:[#allocation2 + $0x10f]]
    %v2285 = vstv %s2284
    %v2286 = vmul.f32 %v2285, %v2279
    %v2287 = vadd.f32 %v2269, %v2286
    %s2288 = sld [smem:[#allocation2 + $0x1a2]]
    %v2289 = vstv %s2288
    %v2290 = vmul.f32 %v2289, %v2279
    %v2291 = vadd.f32 %v2273, %v2290
    %s2292 = sld [smem:[#allocation2 + $0x235]]
    %v2293 = vstv %s2292
    %v2294 = vmul.f32 %v2293, %v2279
    %v2295 = vadd.f32 %v2277, %v2294
    %s2296 = scalar_lea.vmem %s2, 1000
    %v2297 = vld [vmem:[%s2296] sm:$0xff]
    %s2298 = sld [smem:[#allocation2 + $0x7d]]
    %v2299 = vstv %s2298
    %v2300 = vmul.f32 %v2299, %v2297
    %v2301 = vadd.f32 %v2283, %v2300
    %s2302 = sld [smem:[#allocation2 + $0x110]]
    %v2303 = vstv %s2302
    %v2304 = vmul.f32 %v2303, %v2297
    %v2305 = vadd.f32 %v2287, %v2304
    %s2306 = sld [smem:[#allocation2 + $0x1a3]]
    %v2307 = vstv %s2306
    %v2308 = vmul.f32 %v2307, %v2297
    %v2309 = vadd.f32 %v2291, %v2308
    %s2310 = sld [smem:[#allocation2 + $0x236]]
    %v2311 = vstv %s2310
    %v2312 = vmul.f32 %v2311, %v2297
    %v2313 = vadd.f32 %v2295, %v2312
    %s2314 = scalar_lea.vmem %s2, 1008
    %v2315 = vld [vmem:[%s2314] sm:$0xff]
    %s2316 = sld [smem:[#allocation2 + $0x7e]]
    %v2317 = vstv %s2316
    %v2318 = vmul.f32 %v2317, %v2315
    %v2319 = vadd.f32 %v2301, %v2318
    %s2320 = sld [smem:[#allocation2 + $0x111]]
    %v2321 = vstv %s2320
    %v2322 = vmul.f32 %v2321, %v2315
    %v2323 = vadd.f32 %v2305, %v2322
    %s2324 = sld [smem:[#allocation2 + $0x1a4]]
    %v2325 = vstv %s2324
    %v2326 = vmul.f32 %v2325, %v2315
    %v2327 = vadd.f32 %v2309, %v2326
    %s2328 = sld [smem:[#allocation2 + $0x237]]
    %v2329 = vstv %s2328
    %v2330 = vmul.f32 %v2329, %v2315
    %v2331 = vadd.f32 %v2313, %v2330
    %s2332 = scalar_lea.vmem %s2, 1016
    %v2333 = vld [vmem:[%s2332] sm:$0xff]
    %s2334 = sld [smem:[#allocation2 + $0x7f]]
    %v2335 = vstv %s2334
    %v2336 = vmul.f32 %v2335, %v2333
    %v2337 = vadd.f32 %v2319, %v2336
    %s2338 = sld [smem:[#allocation2 + $0x112]]
    %v2339 = vstv %s2338
    %v2340 = vmul.f32 %v2339, %v2333
    %v2341 = vadd.f32 %v2323, %v2340
    %s2342 = sld [smem:[#allocation2 + $0x1a5]]
    %v2343 = vstv %s2342
    %v2344 = vmul.f32 %v2343, %v2333
    %v2345 = vadd.f32 %v2327, %v2344
    %s2346 = sld [smem:[#allocation2 + $0x238]]
    %v2347 = vstv %s2346
    %v2348 = vmul.f32 %v2347, %v2333
    %v2349 = vadd.f32 %v2331, %v2348
    %s2350 = scalar_lea.vmem %s2, 1024
    %v2351 = vld [vmem:[%s2350] sm:$0xff]
    %s2352 = sld [smem:[#allocation2 + $0x80]]
    %v2353 = vstv %s2352
    %v2354 = vmul.f32 %v2353, %v2351
    %v2355 = vadd.f32 %v2337, %v2354
    %s2356 = sld [smem:[#allocation2 + $0x113]]
    %v2357 = vstv %s2356
    %v2358 = vmul.f32 %v2357, %v2351
    %v2359 = vadd.f32 %v2341, %v2358
    %s2360 = sld [smem:[#allocation2 + $0x1a6]]
    %v2361 = vstv %s2360
    %v2362 = vmul.f32 %v2361, %v2351
    %v2363 = vadd.f32 %v2345, %v2362
    %s2364 = sld [smem:[#allocation2 + $0x239]]
    %v2365 = vstv %s2364
    %v2366 = vmul.f32 %v2365, %v2351
    %v2367 = vadd.f32 %v2349, %v2366
    %s2368 = scalar_lea.vmem %s2, 1032
    %v2369 = vld [vmem:[%s2368] sm:$0xff]
    %s2370 = sld [smem:[#allocation2 + $0x81]]
    %v2371 = vstv %s2370
    %v2372 = vmul.f32 %v2371, %v2369
    %v2373 = vadd.f32 %v2355, %v2372
    %s2374 = sld [smem:[#allocation2 + $0x114]]
    %v2375 = vstv %s2374
    %v2376 = vmul.f32 %v2375, %v2369
    %v2377 = vadd.f32 %v2359, %v2376
    %s2378 = sld [smem:[#allocation2 + $0x1a7]]
    %v2379 = vstv %s2378
    %v2380 = vmul.f32 %v2379, %v2369
    %v2381 = vadd.f32 %v2363, %v2380
    %s2382 = sld [smem:[#allocation2 + $0x23a]]
    %v2383 = vstv %s2382
    %v2384 = vmul.f32 %v2383, %v2369
    %v2385 = vadd.f32 %v2367, %v2384
    %s2386 = scalar_lea.vmem %s2, 1040
    %v2387 = vld [vmem:[%s2386] sm:$0xff]
    %s2388 = sld [smem:[#allocation2 + $0x82]]
    %v2389 = vstv %s2388
    %v2390 = vmul.f32 %v2389, %v2387
    %v2391 = vadd.f32 %v2373, %v2390
    %s2392 = sld [smem:[#allocation2 + $0x115]]
    %v2393 = vstv %s2392
    %v2394 = vmul.f32 %v2393, %v2387
    %v2395 = vadd.f32 %v2377, %v2394
    %s2396 = sld [smem:[#allocation2 + $0x1a8]]
    %v2397 = vstv %s2396
    %v2398 = vmul.f32 %v2397, %v2387
    %v2399 = vadd.f32 %v2381, %v2398
    %s2400 = sld [smem:[#allocation2 + $0x23b]]
    %v2401 = vstv %s2400
    %v2402 = vmul.f32 %v2401, %v2387
    %v2403 = vadd.f32 %v2385, %v2402
    %s2404 = scalar_lea.vmem %s2, 1048
    %v2405 = vld [vmem:[%s2404] sm:$0xff]
    %s2406 = sld [smem:[#allocation2 + $0x83]]
    %v2407 = vstv %s2406
    %v2408 = vmul.f32 %v2407, %v2405
    %v2409 = vadd.f32 %v2391, %v2408
    %s2410 = sld [smem:[#allocation2 + $0x116]]
    %v2411 = vstv %s2410
    %v2412 = vmul.f32 %v2411, %v2405
    %v2413 = vadd.f32 %v2395, %v2412
    %s2414 = sld [smem:[#allocation2 + $0x1a9]]
    %v2415 = vstv %s2414
    %v2416 = vmul.f32 %v2415, %v2405
    %v2417 = vadd.f32 %v2399, %v2416
    %s2418 = sld [smem:[#allocation2 + $0x23c]]
    %v2419 = vstv %s2418
    %v2420 = vmul.f32 %v2419, %v2405
    %v2421 = vadd.f32 %v2403, %v2420
    %s2422 = scalar_lea.vmem %s2, 1056
    %v2423 = vld [vmem:[%s2422] sm:$0xff]
    %s2424 = sld [smem:[#allocation2 + $0x84]]
    %v2425 = vstv %s2424
    %v2426 = vmul.f32 %v2425, %v2423
    %v2427 = vadd.f32 %v2409, %v2426
    %s2428 = sld [smem:[#allocation2 + $0x117]]
    %v2429 = vstv %s2428
    %v2430 = vmul.f32 %v2429, %v2423
    %v2431 = vadd.f32 %v2413, %v2430
    %s2432 = sld [smem:[#allocation2 + $0x1aa]]
    %v2433 = vstv %s2432
    %v2434 = vmul.f32 %v2433, %v2423
    %v2435 = vadd.f32 %v2417, %v2434
    %s2436 = sld [smem:[#allocation2 + $0x23d]]
    %v2437 = vstv %s2436
    %v2438 = vmul.f32 %v2437, %v2423
    %v2439 = vadd.f32 %v2421, %v2438
    %s2440 = scalar_lea.vmem %s2, 1064
    %v2441 = vld [vmem:[%s2440] sm:$0xff]
    %s2442 = sld [smem:[#allocation2 + $0x85]]
    %v2443 = vstv %s2442
    %v2444 = vmul.f32 %v2443, %v2441
    %v2445 = vadd.f32 %v2427, %v2444
    %s2446 = sld [smem:[#allocation2 + $0x118]]
    %v2447 = vstv %s2446
    %v2448 = vmul.f32 %v2447, %v2441
    %v2449 = vadd.f32 %v2431, %v2448
    %s2450 = sld [smem:[#allocation2 + $0x1ab]]
    %v2451 = vstv %s2450
    %v2452 = vmul.f32 %v2451, %v2441
    %v2453 = vadd.f32 %v2435, %v2452
    %s2454 = sld [smem:[#allocation2 + $0x23e]]
    %v2455 = vstv %s2454
    %v2456 = vmul.f32 %v2455, %v2441
    %v2457 = vadd.f32 %v2439, %v2456
    %s2458 = scalar_lea.vmem %s2, 1072
    %v2459 = vld [vmem:[%s2458] sm:$0xff]
    %s2460 = sld [smem:[#allocation2 + $0x86]]
    %v2461 = vstv %s2460
    %v2462 = vmul.f32 %v2461, %v2459
    %v2463 = vadd.f32 %v2445, %v2462
    %s2464 = sld [smem:[#allocation2 + $0x119]]
    %v2465 = vstv %s2464
    %v2466 = vmul.f32 %v2465, %v2459
    %v2467 = vadd.f32 %v2449, %v2466
    %s2468 = sld [smem:[#allocation2 + $0x1ac]]
    %v2469 = vstv %s2468
    %v2470 = vmul.f32 %v2469, %v2459
    %v2471 = vadd.f32 %v2453, %v2470
    %s2472 = sld [smem:[#allocation2 + $0x23f]]
    %v2473 = vstv %s2472
    %v2474 = vmul.f32 %v2473, %v2459
    %v2475 = vadd.f32 %v2457, %v2474
    %s2476 = scalar_lea.vmem %s2, 1080
    %v2477 = vld [vmem:[%s2476] sm:$0xff]
    %s2478 = sld [smem:[#allocation2 + $0x87]]
    %v2479 = vstv %s2478
    %v2480 = vmul.f32 %v2479, %v2477
    %v2481 = vadd.f32 %v2463, %v2480
    %s2482 = sld [smem:[#allocation2 + $0x11a]]
    %v2483 = vstv %s2482
    %v2484 = vmul.f32 %v2483, %v2477
    %v2485 = vadd.f32 %v2467, %v2484
    %s2486 = sld [smem:[#allocation2 + $0x1ad]]
    %v2487 = vstv %s2486
    %v2488 = vmul.f32 %v2487, %v2477
    %v2489 = vadd.f32 %v2471, %v2488
    %s2490 = sld [smem:[#allocation2 + $0x240]]
    %v2491 = vstv %s2490
    %v2492 = vmul.f32 %v2491, %v2477
    %v2493 = vadd.f32 %v2475, %v2492
    %s2494 = scalar_lea.vmem %s2, 1088
    %v2495 = vld [vmem:[%s2494] sm:$0xff]
    %s2496 = sld [smem:[#allocation2 + $0x88]]
    %v2497 = vstv %s2496
    %v2498 = vmul.f32 %v2497, %v2495
    %v2499 = vadd.f32 %v2481, %v2498
    %s2500 = sld [smem:[#allocation2 + $0x11b]]
    %v2501 = vstv %s2500
    %v2502 = vmul.f32 %v2501, %v2495
    %v2503 = vadd.f32 %v2485, %v2502
    %s2504 = sld [smem:[#allocation2 + $0x1ae]]
    %v2505 = vstv %s2504
    %v2506 = vmul.f32 %v2505, %v2495
    %v2507 = vadd.f32 %v2489, %v2506
    %s2508 = sld [smem:[#allocation2 + $0x241]]
    %v2509 = vstv %s2508
    %v2510 = vmul.f32 %v2509, %v2495
    %v2511 = vadd.f32 %v2493, %v2510
    %s2512 = scalar_lea.vmem %s2, 1096
    %v2513 = vld [vmem:[%s2512] sm:$0xff]
    %s2514 = sld [smem:[#allocation2 + $0x89]]
    %v2515 = vstv %s2514
    %v2516 = vmul.f32 %v2515, %v2513
    %v2517 = vadd.f32 %v2499, %v2516
    %s2518 = sld [smem:[#allocation2 + $0x11c]]
    %v2519 = vstv %s2518
    %v2520 = vmul.f32 %v2519, %v2513
    %v2521 = vadd.f32 %v2503, %v2520
    %s2522 = sld [smem:[#allocation2 + $0x1af]]
    %v2523 = vstv %s2522
    %v2524 = vmul.f32 %v2523, %v2513
    %v2525 = vadd.f32 %v2507, %v2524
    %s2526 = sld [smem:[#allocation2 + $0x242]]
    %v2527 = vstv %s2526
    %v2528 = vmul.f32 %v2527, %v2513
    %v2529 = vadd.f32 %v2511, %v2528
    %s2530 = scalar_lea.vmem %s2, 1104
    %v2531 = vld [vmem:[%s2530] sm:$0xff]
    %s2532 = sld [smem:[#allocation2 + $0x8a]]
    %v2533 = vstv %s2532
    %v2534 = vmul.f32 %v2533, %v2531
    %v2535 = vadd.f32 %v2517, %v2534
    %s2536 = sld [smem:[#allocation2 + $0x11d]]
    %v2537 = vstv %s2536
    %v2538 = vmul.f32 %v2537, %v2531
    %v2539 = vadd.f32 %v2521, %v2538
    %s2540 = sld [smem:[#allocation2 + $0x1b0]]
    %v2541 = vstv %s2540
    %v2542 = vmul.f32 %v2541, %v2531
    %v2543 = vadd.f32 %v2525, %v2542
    %s2544 = sld [smem:[#allocation2 + $0x243]]
    %v2545 = vstv %s2544
    %v2546 = vmul.f32 %v2545, %v2531
    %v2547 = vadd.f32 %v2529, %v2546
    %s2548 = scalar_lea.vmem %s2, 1112
    %v2549 = vld [vmem:[%s2548] sm:$0xff]
    %s2550 = sld [smem:[#allocation2 + $0x8b]]
    %v2551 = vstv %s2550
    %v2552 = vmul.f32 %v2551, %v2549
    %v2553 = vadd.f32 %v2535, %v2552
    %s2554 = sld [smem:[#allocation2 + $0x11e]]
    %v2555 = vstv %s2554
    %v2556 = vmul.f32 %v2555, %v2549
    %v2557 = vadd.f32 %v2539, %v2556
    %s2558 = sld [smem:[#allocation2 + $0x1b1]]
    %v2559 = vstv %s2558
    %v2560 = vmul.f32 %v2559, %v2549
    %v2561 = vadd.f32 %v2543, %v2560
    %s2562 = sld [smem:[#allocation2 + $0x244]]
    %v2563 = vstv %s2562
    %v2564 = vmul.f32 %v2563, %v2549
    %v2565 = vadd.f32 %v2547, %v2564
    %s2566 = scalar_lea.vmem %s2, 1120
    %v2567 = vld [vmem:[%s2566] sm:$0xff]
    %s2568 = sld [smem:[#allocation2 + $0x8c]]
    %v2569 = vstv %s2568
    %v2570 = vmul.f32 %v2569, %v2567
    %v2571 = vadd.f32 %v2553, %v2570
    %s2572 = sld [smem:[#allocation2 + $0x11f]]
    %v2573 = vstv %s2572
    %v2574 = vmul.f32 %v2573, %v2567
    %v2575 = vadd.f32 %v2557, %v2574
    %s2576 = sld [smem:[#allocation2 + $0x1b2]]
    %v2577 = vstv %s2576
    %v2578 = vmul.f32 %v2577, %v2567
    %v2579 = vadd.f32 %v2561, %v2578
    %s2580 = sld [smem:[#allocation2 + $0x245]]
    %v2581 = vstv %s2580
    %v2582 = vmul.f32 %v2581, %v2567
    %v2583 = vadd.f32 %v2565, %v2582
    %s2584 = scalar_lea.vmem %s2, 1128
    %v2585 = vld [vmem:[%s2584] sm:$0xff]
    %s2586 = sld [smem:[#allocation2 + $0x8d]]
    %v2587 = vstv %s2586
    %v2588 = vmul.f32 %v2587, %v2585
    %v2589 = vadd.f32 %v2571, %v2588
    %s2590 = sld [smem:[#allocation2 + $0x120]]
    %v2591 = vstv %s2590
    %v2592 = vmul.f32 %v2591, %v2585
    %v2593 = vadd.f32 %v2575, %v2592
    %s2594 = sld [smem:[#allocation2 + $0x1b3]]
    %v2595 = vstv %s2594
    %v2596 = vmul.f32 %v2595, %v2585
    %v2597 = vadd.f32 %v2579, %v2596
    %s2598 = sld [smem:[#allocation2 + $0x246]]
    %v2599 = vstv %s2598
    %v2600 = vmul.f32 %v2599, %v2585
    %v2601 = vadd.f32 %v2583, %v2600
    %s2602 = scalar_lea.vmem %s2, 1136
    %v2603 = vld [vmem:[%s2602] sm:$0xff]
    %s2604 = sld [smem:[#allocation2 + $0x8e]]
    %v2605 = vstv %s2604
    %v2606 = vmul.f32 %v2605, %v2603
    %v2607 = vadd.f32 %v2589, %v2606
    %s2608 = sld [smem:[#allocation2 + $0x121]]
    %v2609 = vstv %s2608
    %v2610 = vmul.f32 %v2609, %v2603
    %v2611 = vadd.f32 %v2593, %v2610
    %s2612 = sld [smem:[#allocation2 + $0x1b4]]
    %v2613 = vstv %s2612
    %v2614 = vmul.f32 %v2613, %v2603
    %v2615 = vadd.f32 %v2597, %v2614
    %s2616 = sld [smem:[#allocation2 + $0x247]]
    %v2617 = vstv %s2616
    %v2618 = vmul.f32 %v2617, %v2603
    %v2619 = vadd.f32 %v2601, %v2618
    %s2620 = scalar_lea.vmem %s2, 1144
    %v2621 = vld [vmem:[%s2620] sm:$0xff]
    %s2622 = sld [smem:[#allocation2 + $0x8f]]
    %v2623 = vstv %s2622
    %v2624 = vmul.f32 %v2623, %v2621
    %v2625 = vadd.f32 %v2607, %v2624
    %s2626 = sld [smem:[#allocation2 + $0x122]]
    %v2627 = vstv %s2626
    %v2628 = vmul.f32 %v2627, %v2621
    %v2629 = vadd.f32 %v2611, %v2628
    %s2630 = sld [smem:[#allocation2 + $0x1b5]]
    %v2631 = vstv %s2630
    %v2632 = vmul.f32 %v2631, %v2621
    %v2633 = vadd.f32 %v2615, %v2632
    %s2634 = sld [smem:[#allocation2 + $0x248]]
    %v2635 = vstv %s2634
    %v2636 = vmul.f32 %v2635, %v2621
    %v2637 = vadd.f32 %v2619, %v2636
    %s2638 = scalar_lea.vmem %s2, 1152
    %v2639 = vld [vmem:[%s2638] sm:$0xff]
    %s2640 = sld [smem:[#allocation2 + $0x90]]
    %v2641 = vstv %s2640
    %v2642 = vmul.f32 %v2641, %v2639
    %v2643 = vadd.f32 %v2625, %v2642
    %s2644 = sld [smem:[#allocation2 + $0x123]]
    %v2645 = vstv %s2644
    %v2646 = vmul.f32 %v2645, %v2639
    %v2647 = vadd.f32 %v2629, %v2646
    %s2648 = sld [smem:[#allocation2 + $0x1b6]]
    %v2649 = vstv %s2648
    %v2650 = vmul.f32 %v2649, %v2639
    %v2651 = vadd.f32 %v2633, %v2650
    %s2652 = sld [smem:[#allocation2 + $0x249]]
    %v2653 = vstv %s2652
    %v2654 = vmul.f32 %v2653, %v2639
    %v2655 = vadd.f32 %v2637, %v2654
    %s2656 = scalar_lea.vmem %s2, 1160
    %v2657 = vld [vmem:[%s2656] sm:$0xff]
    %s2658 = sld [smem:[#allocation2 + $0x91]]
    %v2659 = vstv %s2658
    %v2660 = vmul.f32 %v2659, %v2657
    %v2661 = vadd.f32 %v2643, %v2660
    %s2662 = sld [smem:[#allocation2 + $0x124]]
    %v2663 = vstv %s2662
    %v2664 = vmul.f32 %v2663, %v2657
    %v2665 = vadd.f32 %v2647, %v2664
    %s2666 = sld [smem:[#allocation2 + $0x1b7]]
    %v2667 = vstv %s2666
    %v2668 = vmul.f32 %v2667, %v2657
    %v2669 = vadd.f32 %v2651, %v2668
    %s2670 = sld [smem:[#allocation2 + $0x24a]]
    %v2671 = vstv %s2670
    %v2672 = vmul.f32 %v2671, %v2657
    %v2673 = vadd.f32 %v2655, %v2672
    %s2674 = scalar_lea.vmem %s2, 1168
    %v2675 = vld [vmem:[%s2674] sm:$0xff]
    %s2676 = sld [smem:[#allocation2 + $0x92]]
    %v2677 = vstv %s2676
    %v2678 = vmul.f32 %v2677, %v2675
    %v2679 = vadd.f32 %v2661, %v2678
    %s2680 = sld [smem:[#allocation2 + $0x125]]
    %v2681 = vstv %s2680
    %v2682 = vmul.f32 %v2681, %v2675
    %v2683 = vadd.f32 %v2665, %v2682
    %s2684 = sld [smem:[#allocation2 + $0x1b8]]
    %v2685 = vstv %s2684
    %v2686 = vmul.f32 %v2685, %v2675
    %v2687 = vadd.f32 %v2669, %v2686
    %s2688 = sld [smem:[#allocation2 + $0x24b]]
    %v2689 = vstv %s2688
    %v2690 = vmul.f32 %v2689, %v2675
    %v2691 = vadd.f32 %v2673, %v2690
    %2692 = vst [vmem:[%s3] sm:$0xff] %v2679
    %s2693 = scalar_lea.vmem %s3, 8
    %2694 = vst [vmem:[%s2693] sm:$0xff] %v2683
    %s2695 = scalar_lea.vmem %s3, 16
    %2696 = vst [vmem:[%s2695] sm:$0xff] %v2687
    %s2697 = scalar_lea.vmem %s3, 24
    %2698 = vst [vmem:[%s2697] sm:$0xff] %v2691
    // Predicated region
    $region22: #{model_forward.1} parent=1 // pred_check
      _
    $region23: #{model_forward.1} parent=1 // pred_check_branch
      %2700 = sbr.rel (0) target = $region25
    $region24: #{model_forward.1} parent=1 // pred_region
      _
    $region25: #{model_forward.1} parent=1 // pred_fallthru
      _
    // Predicated region
    $region26: #{model_forward.1} parent=1 // pred_check
      _
    $region27: #{model_forward.1} parent=1 // pred_check_branch
      %2702 = sbr.rel (0) target = $region29
    $region28: #{model_forward.1} parent=1 // pred_region
      _
    $region29: #{model_forward.1} parent=1 // pred_fallthru
      _
    %2703 = vsyncpa [#allocation3], 1
    %2704 = vsyncpa [#allocation5], 1

</llo_original>
